<compile_context>
chip_gen: v7x
topology: tpu7x:2x2x1
jax: 0.10.0
libtpu: 0.0.40
codegen_flags: <defaults>
</compile_context>

<pallas_src>
import functools

import numpy as np
import jax
import jax.numpy as jnp
from jax.experimental import pallas as pl
from jax.experimental.pallas import tpu as pltpu

CONV_DIM = 4      # cfg.model.ndf (synthetic small value)
REPEAT_NUM = 6
LEAKY_SLOPE = 0.01


def _round_up(x, m):
    return (x + m - 1) // m * m


def _pick_tm(mp, tm_max=1024):
    """Largest row tile that divides mp, is a multiple of 16 (bf16 sublane
    packing), is <= tm_max, and leaves >=2 grid steps when mp is big enough
    (keeps both v7x TensorCores busy)."""
    cap = min(tm_max, mp)
    if mp >= 128:
        cap = min(cap, mp // 2)
    tm = max(16, cap - cap % 16)
    while mp % tm:
        tm -= 16
    return tm


# ----------------------------------------------------------------------------
# Pallas kernel: fused (patches @ W + bias) with optional LeakyReLU.
# ----------------------------------------------------------------------------
def _mm_bias_act_kernel(a_ref, b_ref, bias_ref, o_ref, *, negative_slope):
    acc = jnp.dot(a_ref[...], b_ref[...], preferred_element_type=jnp.float32)
    acc = acc + bias_ref[...]                       # (1, N) broadcast over rows
    if negative_slope is not None:
        acc = jnp.where(acc >= 0.0, acc, negative_slope * acc)
    o_ref[...] = acc.astype(o_ref.dtype)


def fused_matmul(a, b, bias, *, negative_slope=None, tm_max=1024,
                 out_dtype=jnp.bfloat16):
    """out = act(a @ b + bias).  a:(M,K) bf16, b:(K,N) bf16, bias:(N,) f32.

    No K / N padding: those dims ride as full-extent blocks.  Only M is
    rounded up to a multiple of 16 (bf16 sublane granularity) when needed.
    """
    M, K = a.shape
    _, N = b.shape

    Mp = _round_up(M, 16)
    if Mp != M:
        a = jnp.pad(a, ((0, Mp - M), (0, 0)))
    tm = _pick_tm(Mp, tm_max)

    bias2 = bias.reshape(1, N).astype(jnp.float32)

    out = pl.pallas_call(
        functools.partial(_mm_bias_act_kernel, negative_slope=negative_slope),
        out_shape=jax.ShapeDtypeStruct((Mp, N), out_dtype),
        grid_spec=pltpu.PrefetchScalarGridSpec(
            num_scalar_prefetch=0,
            grid=(Mp // tm,),
            in_specs=[
                pl.BlockSpec((tm, K), lambda i: (i, 0)),   # patch rows, true K
                pl.BlockSpec((K, N), lambda i: (0, 0)),    # full weight, true N
                pl.BlockSpec((1, N), lambda i: (0, 0)),    # bias row
            ],
            out_specs=pl.BlockSpec((tm, N), lambda i: (i, 0)),
        ),
        compiler_params=pltpu.CompilerParams(
            dimension_semantics=("parallel",)),
    )(a, b, bias2)
    if Mp != M:
        out = out[:M]
    return out


# ----------------------------------------------------------------------------
# im2col glue (plain JAX, bf16) + conv wrapper.
# ----------------------------------------------------------------------------
def _im2col(x, kh, kw, stride, pad):
    """x: (N,H,W,C) -> (N*OH*OW, kh*kw*C), OH, OW  (patch order kh, kw, C)."""
    sh, sw = stride
    ph, pw = pad
    x = jnp.pad(x, ((0, 0), (ph, ph), (pw, pw), (0, 0)))
    N, H, W, C = x.shape
    OH = (H - kh) // sh + 1
    OW = (W - kw) // sw + 1
    patches = []
    for i in range(kh):
        for j in range(kw):
            patches.append(x[:, i:i + sh * OH:sh, j:j + sw * OW:sw, :])
    cols = jnp.stack(patches, axis=3)               # (N, OH, OW, kh*kw, C)
    return cols.reshape(N * OH * OW, kh * kw * C), OH, OW


def conv2d_pallas(x, w, bias, *, stride, pad, negative_slope=None,
                  tm_max=1024, out_dtype=jnp.bfloat16):
    """x:(N,H,W,Cin) bf16  w:(kh,kw,Cin,Cout) f32  bias:(Cout,) or None."""
    kh, kw, cin, cout = w.shape
    cols, OH, OW = _im2col(x, kh, kw, stride, pad)
    w2 = w.reshape(kh * kw * cin, cout).astype(jnp.bfloat16)
    if bias is None:
        bias = jnp.zeros((cout,), jnp.float32)
    out = fused_matmul(cols, w2, bias, negative_slope=negative_slope,
                       tm_max=tm_max, out_dtype=out_dtype)
    return out.reshape(x.shape[0], OH, OW, cout)


# ----------------------------------------------------------------------------
# starGAN discriminator forward.
# ----------------------------------------------------------------------------
def stargan_discriminator(x_nchw, params):
    x = jnp.transpose(x_nchw, (0, 2, 3, 1)).astype(jnp.bfloat16)  # NCHW -> NHWC
    h = x
    for w, b in params["main"]:
        h = conv2d_pallas(h, w, b, stride=(2, 2), pad=(1, 1),
                          negative_slope=LEAKY_SLOPE)
    # conv1 & conv2 (kernel (3,8), no bias) share the same input: fuse them
    # into one matmul with Cout = 2, then split columns (valid because each
    # conv has a single output channel).
    wcat = jnp.concatenate([params["conv1"], params["conv2"]], axis=-1)
    out = conv2d_pallas(h, wcat, None, stride=(1, 1), pad=(0, 0),
                        out_dtype=jnp.float32)
    n = x.shape[0]
    out = out.reshape(n, -1, 2)
    out_src = out[:, :, 0]                            # == Flatten(conv1(h))
    out_cond = out[:, :, 1]                           # == Flatten(conv2(h))
    return out_src, out_cond


# ----------------------------------------------------------------------------
# Deterministic parameter init (shapes from the PyTorch __init__).
# ----------------------------------------------------------------------------
def init_params(key, conv_dim=CONV_DIM, repeat_num=REPEAT_NUM):
    params = {"main": []}
    cin, cout = 1, conv_dim
    for _ in range(repeat_num):
        key, k_w, k_b = jax.random.split(key, 3)
        w = jax.random.normal(k_w, (4, 4, cin, cout), jnp.float32) * 0.05
        b = jax.random.normal(k_b, (cout,), jnp.float32) * 0.01
        params["main"].append((w, b))
        cin, cout = cout, cout * 2
    curr_dim = cin
    key, k1, k2 = jax.random.split(key, 3)
    params["conv1"] = jax.random.normal(k1, (3, 8, curr_dim, 1), jnp.float32) * 0.05
    params["conv2"] = jax.random.normal(k2, (3, 8, curr_dim, 1), jnp.float32) * 0.05
    return params


# ----------------------------------------------------------------------------
# Pure-JAX f32 reference (lax.conv) for a correctness check.
# ----------------------------------------------------------------------------
def ref_forward(x_nchw, params):
    h = jnp.transpose(x_nchw, (0, 2, 3, 1))
    for w, b in params["main"]:
        h = jax.lax.conv_general_dilated(
            h, w, window_strides=(2, 2), padding=((1, 1), (1, 1)),
            dimension_numbers=("NHWC", "HWIO", "NHWC"),
            precision=jax.lax.Precision.HIGHEST) + b
        h = jnp.where(h >= 0, h, LEAKY_SLOPE * h)

    def final(w):
        o = jax.lax.conv_general_dilated(
            h, w, window_strides=(1, 1), padding=((0, 0), (0, 0)),
            dimension_numbers=("NHWC", "HWIO", "NHWC"),
            precision=jax.lax.Precision.HIGHEST)
        return o.reshape(o.shape[0], -1)              # C == 1, matches NCHW flatten

    return final(params["conv1"]), final(params["conv2"])


if __name__ == "__main__":
    key = jax.random.PRNGKey(0)
    k_params, k_x = jax.random.split(key)
    params = init_params(k_params)

    # Smallest spatial size compatible with 6 stride-2 convs followed by a
    # valid (3, 8) conv:  192 / 2^6 = 3,  512 / 2^6 = 8.
    x = jax.random.normal(k_x, (2, 1, 192, 512), jnp.float32)

    fwd = jax.jit(stargan_discriminator)
    out_src, out_cond = fwd(x, params)
    jax.block_until_ready((out_src, out_cond))

    assert out_src.shape == (2, 1) and out_cond.shape == (2, 1)

    r_src, r_cond = jax.jit(ref_forward)(x, params)
    jax.block_until_ready((r_src, r_cond))
    # bf16 inputs with f32 accumulation: keep tolerances loose vs. f32 ref.
    np.testing.assert_allclose(np.asarray(out_src), np.asarray(r_src),
                               rtol=5e-2, atol=1e-2)
    np.testing.assert_allclose(np.asarray(out_cond), np.asarray(r_cond),
                               rtol=5e-2, atol=1e-2)
    print("KERNEL_OK")
</pallas_src>

<mosaic_0001>
module attributes {stable_mosaic.version = 11 : i64} {
  func.func @_mm_bias_act_kernel(%arg0: i32, %arg1: memref<1024x16xbf16, #tpu.memory_space<vmem>>, %arg2: memref<16x4xbf16, #tpu.memory_space<vmem>>, %arg3: memref<1x4xf32, #tpu.memory_space<vmem>>, %arg4: memref<1024x4xbf16, #tpu.memory_space<vmem>>) attributes {dimension_semantics = [#tpu.dimension_semantics<parallel>], iteration_bounds = array<i64: 48>, scalar_prefetch = 0 : i64, scratch_operands = 0 : i64, tpu.core_type = #tpu.core_type<tc>, window_params = [{transform_indices = @transform_0, window_bounds = array<i64: 1024, 16>}, {pipeline_mode = #tpu.pipeline_mode<synchronous>, transform_indices = @transform_1, window_bounds = array<i64: 16, 4>}, {pipeline_mode = #tpu.pipeline_mode<synchronous>, transform_indices = @transform_2, window_bounds = array<i64: 1, 4>}, {transform_indices = @transform_3, window_bounds = array<i64: 1024, 4>}]} {
    %c0 = arith.constant 0 : index
    %c0_0 = arith.constant 0 : index
    %0 = vector.load %arg1[%c0, %c0_0] : memref<1024x16xbf16, #tpu.memory_space<vmem>>, vector<1024x16xbf16>
    %c0_1 = arith.constant 0 : index
    %c0_2 = arith.constant 0 : index
    %1 = vector.load %arg2[%c0_1, %c0_2] : memref<16x4xbf16, #tpu.memory_space<vmem>>, vector<16x4xbf16>
    %cst = arith.constant dense<0.000000e+00> : vector<1024x4xf32>
    %2 = tpu.matmul %0, %1, %cst {dimension_numbers = #tpu.dot_dimension_numbers<[1], [0], [0], [1], [0, 0, 1, 1], [], []>} : vector<1024x16xbf16>, vector<16x4xbf16>, vector<1024x4xf32> -> vector<1024x4xf32>
    %c0_3 = arith.constant 0 : index
    %c0_4 = arith.constant 0 : index
    %3 = vector.load %arg3[%c0_3, %c0_4] : memref<1x4xf32, #tpu.memory_space<vmem>>, vector<1x4xf32>
    %4 = vector.broadcast %3 : vector<1x4xf32> to vector<1024x4xf32>
    %5 = arith.addf %2, %4 : vector<1024x4xf32>
    %cst_5 = arith.constant 0.000000e+00 : f32
    %6 = vector.broadcast %cst_5 : f32 to vector<1024x4xf32>
    %7 = arith.cmpf oge, %5, %6 : vector<1024x4xf32>
    %cst_6 = arith.constant 0.00999999977 : f32
    %8 = vector.broadcast %cst_6 : f32 to vector<1024x4xf32>
    %9 = arith.mulf %8, %5 : vector<1024x4xf32>
    %10 = arith.select %7, %5, %9 : vector<1024x4xi1>, vector<1024x4xf32>
    %11 = arith.truncf %10 : vector<1024x4xf32> to vector<1024x4xbf16>
    %c0_7 = arith.constant 0 : index
    %c0_8 = arith.constant 0 : index
    %12 = vector.load %arg4[%c0_7, %c0_8] : memref<1024x4xbf16, #tpu.memory_space<vmem>>, vector<1024x4xbf16>
    tpu.vector_store %arg4[%c0_7, %c0_8], %11 {strides = array<i32>} : memref<1024x4xbf16, #tpu.memory_space<vmem>>, vector<1024x4xbf16>,
    return
  }
  func.func @transform_0(%arg0: i32) -> (i32, i32) {
    %c0_i32 = arith.constant 0 : i32
    %c0_i32_0 = arith.constant 0 : i32
    return %arg0, %c0_i32 : i32, i32
  }
  func.func @transform_1(%arg0: i32) -> (i32, i32) {
    %c0_i32 = arith.constant 0 : i32
    %c0_i32_0 = arith.constant 0 : i32
    %c0_i32_1 = arith.constant 0 : i32
    return %c0_i32, %c0_i32_0 : i32, i32
  }
  func.func @transform_2(%arg0: i32) -> (i32, i32) {
    %c0_i32 = arith.constant 0 : i32
    %c0_i32_0 = arith.constant 0 : i32
    %c0_i32_1 = arith.constant 0 : i32
    return %c0_i32, %c0_i32_0 : i32, i32
  }
  func.func @transform_3(%arg0: i32) -> (i32, i32) {
    %c0_i32 = arith.constant 0 : i32
    %c0_i32_0 = arith.constant 0 : i32
    return %arg0, %c0_i32 : i32, i32
  }
}

module attributes {stable_mosaic.version = 11 : i64} {
  func.func @_mm_bias_act_kernel(%arg0: i32, %arg1: memref<1024x64xbf16, #tpu.memory_space<vmem>>, %arg2: memref<64x8xbf16, #tpu.memory_space<vmem>>, %arg3: memref<1x8xf32, #tpu.memory_space<vmem>>, %arg4: memref<1024x8xbf16, #tpu.memory_space<vmem>>) attributes {dimension_semantics = [#tpu.dimension_semantics<parallel>], iteration_bounds = array<i64: 12>, scalar_prefetch = 0 : i64, scratch_operands = 0 : i64, tpu.core_type = #tpu.core_type<tc>, window_params = [{transform_indices = @transform_0, window_bounds = array<i64: 1024, 64>}, {pipeline_mode = #tpu.pipeline_mode<synchronous>, transform_indices = @transform_1, window_bounds = array<i64: 64, 8>}, {pipeline_mode = #tpu.pipeline_mode<synchronous>, transform_indices = @transform_2, window_bounds = array<i64: 1, 8>}, {transform_indices = @transform_3, window_bounds = array<i64: 1024, 8>}]} {
    %c0 = arith.constant 0 : index
    %c0_0 = arith.constant 0 : index
    %0 = vector.load %arg1[%c0, %c0_0] : memref<1024x64xbf16, #tpu.memory_space<vmem>>, vector<1024x64xbf16>
    %c0_1 = arith.constant 0 : index
    %c0_2 = arith.constant 0 : index
    %1 = vector.load %arg2[%c0_1, %c0_2] : memref<64x8xbf16, #tpu.memory_space<vmem>>, vector<64x8xbf16>
    %cst = arith.constant dense<0.000000e+00> : vector<1024x8xf32>
    %2 = tpu.matmul %0, %1, %cst {dimension_numbers = #tpu.dot_dimension_numbers<[1], [0], [0], [1], [0, 0, 1, 1], [], []>} : vector<1024x64xbf16>, vector<64x8xbf16>, vector<1024x8xf32> -> vector<1024x8xf32>
    %c0_3 = arith.constant 0 : index
    %c0_4 = arith.constant 0 : index
    %3 = vector.load %arg3[%c0_3, %c0_4] : memref<1x8xf32, #tpu.memory_space<vmem>>, vector<1x8xf32>
    %4 = vector.broadcast %3 : vector<1x8xf32> to vector<1024x8xf32>
    %5 = arith.addf %2, %4 : vector<1024x8xf32>
    %cst_5 = arith.constant 0.000000e+00 : f32
    %6 = vector.broadcast %cst_5 : f32 to vector<1024x8xf32>
    %7 = arith.cmpf oge, %5, %6 : vector<1024x8xf32>
    %cst_6 = arith.constant 0.00999999977 : f32
    %8 = vector.broadcast %cst_6 : f32 to vector<1024x8xf32>
    %9 = arith.mulf %8, %5 : vector<1024x8xf32>
    %10 = arith.select %7, %5, %9 : vector<1024x8xi1>, vector<1024x8xf32>
    %11 = arith.truncf %10 : vector<1024x8xf32> to vector<1024x8xbf16>
    %c0_7 = arith.constant 0 : index
    %c0_8 = arith.constant 0 : index
    %12 = vector.load %arg4[%c0_7, %c0_8] : memref<1024x8xbf16, #tpu.memory_space<vmem>>, vector<1024x8xbf16>
    tpu.vector_store %arg4[%c0_7, %c0_8], %11 {strides = array<i32>} : memref<1024x8xbf16, #tpu.memory_space<vmem>>, vector<1024x8xbf16>,
    return
  }
  func.func @transform_0(%arg0: i32) -> (i32, i32) {
    %c0_i32 = arith.constant 0 : i32
    %c0_i32_0 = arith.constant 0 : i32
    return %arg0, %c0_i32 : i32, i32
  }
  func.func @transform_1(%arg0: i32) -> (i32, i32) {
    %c0_i32 = arith.constant 0 : i32
    %c0_i32_0 = arith.constant 0 : i32
    %c0_i32_1 = arith.constant 0 : i32
    return %c0_i32, %c0_i32_0 : i32, i32
  }
  func.func @transform_2(%arg0: i32) -> (i32, i32) {
    %c0_i32 = arith.constant 0 : i32
    %c0_i32_0 = arith.constant 0 : i32
    %c0_i32_1 = arith.constant 0 : i32
    return %c0_i32, %c0_i32_0 : i32, i32
  }
  func.func @transform_3(%arg0: i32) -> (i32, i32) {
    %c0_i32 = arith.constant 0 : i32
    %c0_i32_0 = arith.constant 0 : i32
    return %arg0, %c0_i32 : i32, i32
  }
}

module attributes {stable_mosaic.version = 11 : i64} {
  func.func @_mm_bias_act_kernel(%arg0: i32, %arg1: memref<1024x128xbf16, #tpu.memory_space<vmem>>, %arg2: memref<128x16xbf16, #tpu.memory_space<vmem>>, %arg3: memref<1x16xf32, #tpu.memory_space<vmem>>, %arg4: memref<1024x16xbf16, #tpu.memory_space<vmem>>) attributes {dimension_semantics = [#tpu.dimension_semantics<parallel>], iteration_bounds = array<i64: 3>, scalar_prefetch = 0 : i64, scratch_operands = 0 : i64, tpu.core_type = #tpu.core_type<tc>, window_params = [{transform_indices = @transform_0, window_bounds = array<i64: 1024, 128>}, {pipeline_mode = #tpu.pipeline_mode<synchronous>, transform_indices = @transform_1, window_bounds = array<i64: 128, 16>}, {pipeline_mode = #tpu.pipeline_mode<synchronous>, transform_indices = @transform_2, window_bounds = array<i64: 1, 16>}, {transform_indices = @transform_3, window_bounds = array<i64: 1024, 16>}]} {
    %c0 = arith.constant 0 : index
    %c0_0 = arith.constant 0 : index
    %0 = vector.load %arg1[%c0, %c0_0] : memref<1024x128xbf16, #tpu.memory_space<vmem>>, vector<1024x128xbf16>
    %c0_1 = arith.constant 0 : index
    %c0_2 = arith.constant 0 : index
    %1 = vector.load %arg2[%c0_1, %c0_2] : memref<128x16xbf16, #tpu.memory_space<vmem>>, vector<128x16xbf16>
    %cst = arith.constant dense<0.000000e+00> : vector<1024x16xf32>
    %2 = tpu.matmul %0, %1, %cst {dimension_numbers = #tpu.dot_dimension_numbers<[1], [0], [0], [1], [0, 0, 1, 1], [], []>} : vector<1024x128xbf16>, vector<128x16xbf16>, vector<1024x16xf32> -> vector<1024x16xf32>
    %c0_3 = arith.constant 0 : index
    %c0_4 = arith.constant 0 : index
    %3 = vector.load %arg3[%c0_3, %c0_4] : memref<1x16xf32, #tpu.memory_space<vmem>>, vector<1x16xf32>
    %4 = vector.broadcast %3 : vector<1x16xf32> to vector<1024x16xf32>
    %5 = arith.addf %2, %4 : vector<1024x16xf32>
    %cst_5 = arith.constant 0.000000e+00 : f32
    %6 = vector.broadcast %cst_5 : f32 to vector<1024x16xf32>
    %7 = arith.cmpf oge, %5, %6 : vector<1024x16xf32>
    %cst_6 = arith.constant 0.00999999977 : f32
    %8 = vector.broadcast %cst_6 : f32 to vector<1024x16xf32>
    %9 = arith.mulf %8, %5 : vector<1024x16xf32>
    %10 = arith.select %7, %5, %9 : vector<1024x16xi1>, vector<1024x16xf32>
    %11 = arith.truncf %10 : vector<1024x16xf32> to vector<1024x16xbf16>
    %c0_7 = arith.constant 0 : index
    %c0_8 = arith.constant 0 : index
    %12 = vector.load %arg4[%c0_7, %c0_8] : memref<1024x16xbf16, #tpu.memory_space<vmem>>, vector<1024x16xbf16>
    tpu.vector_store %arg4[%c0_7, %c0_8], %11 {strides = array<i32>} : memref<1024x16xbf16, #tpu.memory_space<vmem>>, vector<1024x16xbf16>,
    return
  }
  func.func @transform_0(%arg0: i32) -> (i32, i32) {
    %c0_i32 = arith.constant 0 : i32
    %c0_i32_0 = arith.constant 0 : i32
    return %arg0, %c0_i32 : i32, i32
  }
  func.func @transform_1(%arg0: i32) -> (i32, i32) {
    %c0_i32 = arith.constant 0 : i32
    %c0_i32_0 = arith.constant 0 : i32
    %c0_i32_1 = arith.constant 0 : i32
    return %c0_i32, %c0_i32_0 : i32, i32
  }
  func.func @transform_2(%arg0: i32) -> (i32, i32) {
    %c0_i32 = arith.constant 0 : i32
    %c0_i32_0 = arith.constant 0 : i32
    %c0_i32_1 = arith.constant 0 : i32
    return %c0_i32, %c0_i32_0 : i32, i32
  }
  func.func @transform_3(%arg0: i32) -> (i32, i32) {
    %c0_i32 = arith.constant 0 : i32
    %c0_i32_0 = arith.constant 0 : i32
    return %arg0, %c0_i32 : i32, i32
  }
}

module attributes {stable_mosaic.version = 11 : i64} {
  func.func @_mm_bias_act_kernel(%arg0: i32, %arg1: memref<384x256xbf16, #tpu.memory_space<vmem>>, %arg2: memref<256x32xbf16, #tpu.memory_space<vmem>>, %arg3: memref<1x32xf32, #tpu.memory_space<vmem>>, %arg4: memref<384x32xbf16, #tpu.memory_space<vmem>>) attributes {dimension_semantics = [#tpu.dimension_semantics<parallel>], iteration_bounds = array<i64: 2>, scalar_prefetch = 0 : i64, scratch_operands = 0 : i64, tpu.core_type = #tpu.core_type<tc>, window_params = [{transform_indices = @transform_0, window_bounds = array<i64: 384, 256>}, {pipeline_mode = #tpu.pipeline_mode<synchronous>, transform_indices = @transform_1, window_bounds = array<i64: 256, 32>}, {pipeline_mode = #tpu.pipeline_mode<synchronous>, transform_indices = @transform_2, window_bounds = array<i64: 1, 32>}, {transform_indices = @transform_3, window_bounds = array<i64: 384, 32>}]} {
    %c0 = arith.constant 0 : index
    %c0_0 = arith.constant 0 : index
    %0 = vector.load %arg1[%c0, %c0_0] : memref<384x256xbf16, #tpu.memory_space<vmem>>, vector<384x256xbf16>
    %c0_1 = arith.constant 0 : index
    %c0_2 = arith.constant 0 : index
    %1 = vector.load %arg2[%c0_1, %c0_2] : memref<256x32xbf16, #tpu.memory_space<vmem>>, vector<256x32xbf16>
    %cst = arith.constant dense<0.000000e+00> : vector<384x32xf32>
    %2 = tpu.matmul %0, %1, %cst {dimension_numbers = #tpu.dot_dimension_numbers<[1], [0], [0], [1], [0, 0, 1, 1], [], []>} : vector<384x256xbf16>, vector<256x32xbf16>, vector<384x32xf32> -> vector<384x32xf32>
    %c0_3 = arith.constant 0 : index
    %c0_4 = arith.constant 0 : index
    %3 = vector.load %arg3[%c0_3, %c0_4] : memref<1x32xf32, #tpu.memory_space<vmem>>, vector<1x32xf32>
    %4 = vector.broadcast %3 : vector<1x32xf32> to vector<384x32xf32>
    %5 = arith.addf %2, %4 : vector<384x32xf32>
    %cst_5 = arith.constant 0.000000e+00 : f32
    %6 = vector.broadcast %cst_5 : f32 to vector<384x32xf32>
    %7 = arith.cmpf oge, %5, %6 : vector<384x32xf32>
    %cst_6 = arith.constant 0.00999999977 : f32
    %8 = vector.broadcast %cst_6 : f32 to vector<384x32xf32>
    %9 = arith.mulf %8, %5 : vector<384x32xf32>
    %10 = arith.select %7, %5, %9 : vector<384x32xi1>, vector<384x32xf32>
    %11 = arith.truncf %10 : vector<384x32xf32> to vector<384x32xbf16>
    %c0_7 = arith.constant 0 : index
    %c0_8 = arith.constant 0 : index
    %12 = vector.load %arg4[%c0_7, %c0_8] : memref<384x32xbf16, #tpu.memory_space<vmem>>, vector<384x32xbf16>
    tpu.vector_store %arg4[%c0_7, %c0_8], %11 {strides = array<i32>} : memref<384x32xbf16, #tpu.memory_space<vmem>>, vector<384x32xbf16>,
    return
  }
  func.func @transform_0(%arg0: i32) -> (i32, i32) {
    %c0_i32 = arith.constant 0 : i32
    %c0_i32_0 = arith.constant 0 : i32
    return %arg0, %c0_i32 : i32, i32
  }
  func.func @transform_1(%arg0: i32) -> (i32, i32) {
    %c0_i32 = arith.constant 0 : i32
    %c0_i32_0 = arith.constant 0 : i32
    %c0_i32_1 = arith.constant 0 : i32
    return %c0_i32, %c0_i32_0 : i32, i32
  }
  func.func @transform_2(%arg0: i32) -> (i32, i32) {
    %c0_i32 = arith.constant 0 : i32
    %c0_i32_0 = arith.constant 0 : i32
    %c0_i32_1 = arith.constant 0 : i32
    return %c0_i32, %c0_i32_0 : i32, i32
  }
  func.func @transform_3(%arg0: i32) -> (i32, i32) {
    %c0_i32 = arith.constant 0 : i32
    %c0_i32_0 = arith.constant 0 : i32
    return %arg0, %c0_i32 : i32, i32
  }
}

module attributes {stable_mosaic.version = 11 : i64} {
  func.func @_mm_bias_act_kernel(%arg0: i32, %arg1: memref<96x512xbf16, #tpu.memory_space<vmem>>, %arg2: memref<512x64xbf16, #tpu.memory_space<vmem>>, %arg3: memref<1x64xf32, #tpu.memory_space<vmem>>, %arg4: memref<96x64xbf16, #tpu.memory_space<vmem>>) attributes {dimension_semantics = [#tpu.dimension_semantics<parallel>], iteration_bounds = array<i64: 2>, scalar_prefetch = 0 : i64, scratch_operands = 0 : i64, tpu.core_type = #tpu.core_type<tc>, window_params = [{transform_indices = @transform_0, window_bounds = array<i64: 96, 512>}, {pipeline_mode = #tpu.pipeline_mode<synchronous>, transform_indices = @transform_1, window_bounds = array<i64: 512, 64>}, {pipeline_mode = #tpu.pipeline_mode<synchronous>, transform_indices = @transform_2, window_bounds = array<i64: 1, 64>}, {transform_indices = @transform_3, window_bounds = array<i64: 96, 64>}]} {
    %c0 = arith.constant 0 : index
    %c0_0 = arith.constant 0 : index
    %0 = vector.load %arg1[%c0, %c0_0] : memref<96x512xbf16, #tpu.memory_space<vmem>>, vector<96x512xbf16>
    %c0_1 = arith.constant 0 : index
    %c0_2 = arith.constant 0 : index
    %1 = vector.load %arg2[%c0_1, %c0_2] : memref<512x64xbf16, #tpu.memory_space<vmem>>, vector<512x64xbf16>
    %cst = arith.constant dense<0.000000e+00> : vector<96x64xf32>
    %2 = tpu.matmul %0, %1, %cst {dimension_numbers = #tpu.dot_dimension_numbers<[1], [0], [0], [1], [0, 0, 1, 1], [], []>} : vector<96x512xbf16>, vector<512x64xbf16>, vector<96x64xf32> -> vector<96x64xf32>
    %c0_3 = arith.constant 0 : index
    %c0_4 = arith.constant 0 : index
    %3 = vector.load %arg3[%c0_3, %c0_4] : memref<1x64xf32, #tpu.memory_space<vmem>>, vector<1x64xf32>
    %4 = vector.broadcast %3 : vector<1x64xf32> to vector<96x64xf32>
    %5 = arith.addf %2, %4 : vector<96x64xf32>
    %cst_5 = arith.constant 0.000000e+00 : f32
    %6 = vector.broadcast %cst_5 : f32 to vector<96x64xf32>
    %7 = arith.cmpf oge, %5, %6 : vector<96x64xf32>
    %cst_6 = arith.constant 0.00999999977 : f32
    %8 = vector.broadcast %cst_6 : f32 to vector<96x64xf32>
    %9 = arith.mulf %8, %5 : vector<96x64xf32>
    %10 = arith.select %7, %5, %9 : vector<96x64xi1>, vector<96x64xf32>
    %11 = arith.truncf %10 : vector<96x64xf32> to vector<96x64xbf16>
    %c0_7 = arith.constant 0 : index
    %c0_8 = arith.constant 0 : index
    %12 = vector.load %arg4[%c0_7, %c0_8] : memref<96x64xbf16, #tpu.memory_space<vmem>>, vector<96x64xbf16>
    tpu.vector_store %arg4[%c0_7, %c0_8], %11 {strides = array<i32>} : memref<96x64xbf16, #tpu.memory_space<vmem>>, vector<96x64xbf16>,
    return
  }
  func.func @transform_0(%arg0: i32) -> (i32, i32) {
    %c0_i32 = arith.constant 0 : i32
    %c0_i32_0 = arith.constant 0 : i32
    return %arg0, %c0_i32 : i32, i32
  }
  func.func @transform_1(%arg0: i32) -> (i32, i32) {
    %c0_i32 = arith.constant 0 : i32
    %c0_i32_0 = arith.constant 0 : i32
    %c0_i32_1 = arith.constant 0 : i32
    return %c0_i32, %c0_i32_0 : i32, i32
  }
  func.func @transform_2(%arg0: i32) -> (i32, i32) {
    %c0_i32 = arith.constant 0 : i32
    %c0_i32_0 = arith.constant 0 : i32
    %c0_i32_1 = arith.constant 0 : i32
    return %c0_i32, %c0_i32_0 : i32, i32
  }
  func.func @transform_3(%arg0: i32) -> (i32, i32) {
    %c0_i32 = arith.constant 0 : i32
    %c0_i32_0 = arith.constant 0 : i32
    return %arg0, %c0_i32 : i32, i32
  }
}

module attributes {stable_mosaic.version = 11 : i64} {
  func.func @_mm_bias_act_kernel(%arg0: i32, %arg1: memref<48x1024xbf16, #tpu.memory_space<vmem>>, %arg2: memref<1024x128xbf16, #tpu.memory_space<vmem>>, %arg3: memref<1x128xf32, #tpu.memory_space<vmem>>, %arg4: memref<48x128xbf16, #tpu.memory_space<vmem>>) attributes {dimension_semantics = [#tpu.dimension_semantics<parallel>], iteration_bounds = array<i64: 1>, scalar_prefetch = 0 : i64, scratch_operands = 0 : i64, tpu.core_type = #tpu.core_type<tc>, window_params = [{transform_indices = @transform_0, window_bounds = array<i64: 48, 1024>}, {pipeline_mode = #tpu.pipeline_mode<synchronous>, transform_indices = @transform_1, window_bounds = array<i64: 1024, 128>}, {pipeline_mode = #tpu.pipeline_mode<synchronous>, transform_indices = @transform_2, window_bounds = array<i64: 1, 128>}, {transform_indices = @transform_3, window_bounds = array<i64: 48, 128>}]} {
    %c0 = arith.constant 0 : index
    %c0_0 = arith.constant 0 : index
    %0 = vector.load %arg1[%c0, %c0_0] : memref<48x1024xbf16, #tpu.memory_space<vmem>>, vector<48x1024xbf16>
    %c0_1 = arith.constant 0 : index
    %c0_2 = arith.constant 0 : index
    %1 = vector.load %arg2[%c0_1, %c0_2] : memref<1024x128xbf16, #tpu.memory_space<vmem>>, vector<1024x128xbf16>
    %cst = arith.constant dense<0.000000e+00> : vector<48x128xf32>
    %2 = tpu.matmul %0, %1, %cst {dimension_numbers = #tpu.dot_dimension_numbers<[1], [0], [0], [1], [0, 0, 1, 1], [], []>} : vector<48x1024xbf16>, vector<1024x128xbf16>, vector<48x128xf32> -> vector<48x128xf32>
    %c0_3 = arith.constant 0 : index
    %c0_4 = arith.constant 0 : index
    %3 = vector.load %arg3[%c0_3, %c0_4] : memref<1x128xf32, #tpu.memory_space<vmem>>, vector<1x128xf32>
    %4 = vector.broadcast %3 : vector<1x128xf32> to vector<48x128xf32>
    %5 = arith.addf %2, %4 : vector<48x128xf32>
    %cst_5 = arith.constant 0.000000e+00 : f32
    %6 = vector.broadcast %cst_5 : f32 to vector<48x128xf32>
    %7 = arith.cmpf oge, %5, %6 : vector<48x128xf32>
    %cst_6 = arith.constant 0.00999999977 : f32
    %8 = vector.broadcast %cst_6 : f32 to vector<48x128xf32>
    %9 = arith.mulf %8, %5 : vector<48x128xf32>
    %10 = arith.select %7, %5, %9 : vector<48x128xi1>, vector<48x128xf32>
    %11 = arith.truncf %10 : vector<48x128xf32> to vector<48x128xbf16>
    %c0_7 = arith.constant 0 : index
    %c0_8 = arith.constant 0 : index
    %12 = vector.load %arg4[%c0_7, %c0_8] : memref<48x128xbf16, #tpu.memory_space<vmem>>, vector<48x128xbf16>
    tpu.vector_store %arg4[%c0_7, %c0_8], %11 {strides = array<i32>} : memref<48x128xbf16, #tpu.memory_space<vmem>>, vector<48x128xbf16>,
    return
  }
  func.func @transform_0(%arg0: i32) -> (i32, i32) {
    %c0_i32 = arith.constant 0 : i32
    %c0_i32_0 = arith.constant 0 : i32
    return %arg0, %c0_i32 : i32, i32
  }
  func.func @transform_1(%arg0: i32) -> (i32, i32) {
    %c0_i32 = arith.constant 0 : i32
    %c0_i32_0 = arith.constant 0 : i32
    %c0_i32_1 = arith.constant 0 : i32
    return %c0_i32, %c0_i32_0 : i32, i32
  }
  func.func @transform_2(%arg0: i32) -> (i32, i32) {
    %c0_i32 = arith.constant 0 : i32
    %c0_i32_0 = arith.constant 0 : i32
    %c0_i32_1 = arith.constant 0 : i32
    return %c0_i32, %c0_i32_0 : i32, i32
  }
  func.func @transform_3(%arg0: i32) -> (i32, i32) {
    %c0_i32 = arith.constant 0 : i32
    %c0_i32_0 = arith.constant 0 : i32
    return %arg0, %c0_i32 : i32, i32
  }
}

module attributes {stable_mosaic.version = 11 : i64} {
  func.func @_mm_bias_act_kernel(%arg0: i32, %arg1: memref<16x3072xbf16, #tpu.memory_space<vmem>>, %arg2: memref<3072x2xbf16, #tpu.memory_space<vmem>>, %arg3: memref<1x2xf32, #tpu.memory_space<vmem>>, %arg4: memref<16x2xf32, #tpu.memory_space<vmem>>) attributes {dimension_semantics = [#tpu.dimension_semantics<parallel>], iteration_bounds = array<i64: 1>, scalar_prefetch = 0 : i64, scratch_operands = 0 : i64, tpu.core_type = #tpu.core_type<tc>, window_params = [{transform_indices = @transform_0, window_bounds = array<i64: 16, 3072>}, {pipeline_mode = #tpu.pipeline_mode<synchronous>, transform_indices = @transform_1, window_bounds = array<i64: 3072, 2>}, {pipeline_mode = #tpu.pipeline_mode<synchronous>, transform_indices = @transform_2, window_bounds = array<i64: 1, 2>}, {transform_indices = @transform_3, window_bounds = array<i64: 16, 2>}]} {
    %c0 = arith.constant 0 : index
    %c0_0 = arith.constant 0 : index
    %0 = vector.load %arg1[%c0, %c0_0] : memref<16x3072xbf16, #tpu.memory_space<vmem>>, vector<16x3072xbf16>
    %c0_1 = arith.constant 0 : index
    %c0_2 = arith.constant 0 : index
    %1 = vector.load %arg2[%c0_1, %c0_2] : memref<3072x2xbf16, #tpu.memory_space<vmem>>, vector<3072x2xbf16>
    %cst = arith.constant dense<0.000000e+00> : vector<16x2xf32>
    %2 = tpu.matmul %0, %1, %cst {dimension_numbers = #tpu.dot_dimension_numbers<[1], [0], [0], [1], [0, 0, 1, 1], [], []>} : vector<16x3072xbf16>, vector<3072x2xbf16>, vector<16x2xf32> -> vector<16x2xf32>
    %c0_3 = arith.constant 0 : index
    %c0_4 = arith.constant 0 : index
    %3 = vector.load %arg3[%c0_3, %c0_4] : memref<1x2xf32, #tpu.memory_space<vmem>>, vector<1x2xf32>
    %4 = vector.broadcast %3 : vector<1x2xf32> to vector<16x2xf32>
    %5 = arith.addf %2, %4 : vector<16x2xf32>
    %c0_5 = arith.constant 0 : index
    %c0_6 = arith.constant 0 : index
    %6 = vector.load %arg4[%c0_5, %c0_6] : memref<16x2xf32, #tpu.memory_space<vmem>>, vector<16x2xf32>
    tpu.vector_store %arg4[%c0_5, %c0_6], %5 {strides = array<i32>} : memref<16x2xf32, #tpu.memory_space<vmem>>, vector<16x2xf32>,
    return
  }
  func.func @transform_0(%arg0: i32) -> (i32, i32) {
    %c0_i32 = arith.constant 0 : i32
    %c0_i32_0 = arith.constant 0 : i32
    return %arg0, %c0_i32 : i32, i32
  }
  func.func @transform_1(%arg0: i32) -> (i32, i32) {
    %c0_i32 = arith.constant 0 : i32
    %c0_i32_0 = arith.constant 0 : i32
    %c0_i32_1 = arith.constant 0 : i32
    return %c0_i32, %c0_i32_0 : i32, i32
  }
  func.func @transform_2(%arg0: i32) -> (i32, i32) {
    %c0_i32 = arith.constant 0 : i32
    %c0_i32_0 = arith.constant 0 : i32
    %c0_i32_1 = arith.constant 0 : i32
    return %c0_i32, %c0_i32_0 : i32, i32
  }
  func.func @transform_3(%arg0: i32) -> (i32, i32) {
    %c0_i32 = arith.constant 0 : i32
    %c0_i32_0 = arith.constant 0 : i32
    return %arg0, %c0_i32 : i32, i32
  }
}

</mosaic_0001>

<llo_original>
// kernel: stargan_discriminator.7
$region0: #{stargan_discriminator.7}
  #allocation0 [shape = 'u32[]', space=smem, size = 0x4, offset = 0x4, fixed_abs, tag = 'smem constant byte address 0x4 - core index']
  #allocation1 [shape = 'u32[144,128]{1,0:T(1,128)}', space=vmem, size = 0x12000, scoped, tag = 'internal scratch']
  %s0 = inlined_call_operand.vmem [shape: bf16[49152,16], index: 0, kind: input, shape index: {}]
  %s1 = inlined_call_operand.vmem [shape: bf16[16,4], index: 1, kind: input, shape index: {}]
  %s2 = inlined_call_operand.vmem [shape: f32[1,4], index: 2, kind: input, shape index: {}]
  %s3 = inlined_call_operand.vmem [shape: bf16[49152,4], index: 3, kind: output, shape index: {}]
  %s4 = sld [smem:[#allocation0]]
  $region45: #{stargan_discriminator.7} parent=0
    _
  %s6 = ssub.s32 1, %s4
  %s7 = scalar_select 0, %s6, %s4
  loop: start=0, step=1, limit=50
  $region2: #{stargan_discriminator.7} parent=0 // loop_pre_header
    _
  $region3: #{stargan_discriminator.7} parent=0 // loop_header
    %s9 = sphi 0, %s13
    %p10 = scmp.ge.s32.totalorder %s9, 50
    %s19 = sphi 0, %s21
    %s22 = sphi 0, %s19
    %s23 = sphi 0, %s22
    %s39 = sphi 0, %s23
    %s43 = sphi 0, %s43
    %s45 = sphi 0, %s43
    %s46 = sphi 0, %s45
    %s60 = sphi 0, %s46
    %s64 = sphi 0, %s64
    %s66 = sphi 0, %s64
    %s67 = sphi 0, %s66
    %s81 = sphi 0, %s67
    %s87 = sphi 0, %s89
    %s90 = sphi 0, %s87
    %s91 = sphi 0, %s90
    %s107 = sphi 0, %s91
  $region4: #{stargan_discriminator.7} parent=0 // loop_header_branch
    %12 = sbr.rel (%p10) target = $region8
  $region5: #{stargan_discriminator.7} parent=0 // loop_body
    %s14 = ssub.s32 %s9, 1
    %s15 = ssub.s32 %s9, 2
    %s16 = sadd.s32 %s9, 1
    %s17 = ssub.s32 %s9, %s16
    %p18 = scmp.eq.s32.totalorder %s17, 0
    %s20 = sadd.s32 %s19, 1
    %s21 = scalar_select %p18, %s19, %s20
    %p24 = pneg %p18
    %p25 = scmp.eq.s32.totalorder %s9, 47
    %p26 = por %p24, %p25
    %p27 = scmp.ne.s32.totalorder %s19, %s22
    %p28 = scmp.eq.s32.totalorder %s9, 0
    %p29 = por %p27, %p28
    %p30 = scmp.ne.s32.totalorder %s19, %s22
    %p31 = scmp.eq.s32.totalorder %s14, 47
    %p32 = por %p30, %p31
    %p33 = scmp.ne.s32.totalorder %s22, %s23
    %p34 = scmp.eq.s32.totalorder %s14, 0
    %p35 = por %p33, %p34
    %p36 = scmp.ne.s32.totalorder %s22, %s23
    %p37 = scmp.eq.s32.totalorder %s15, 47
    %p38 = por %p36, %p37
    %p40 = scmp.ne.s32.totalorder %s23, %s39
    %p41 = scmp.eq.s32.totalorder %s15, 0
    %p42 = por %p40, %p41
    %s44 = sadd.s32 %s43, 1
    %p47 = scmp.eq.s32.totalorder %s9, 47
    %p48 = scmp.ne.s32.totalorder %s43, %s45
    %p49 = scmp.eq.s32.totalorder %s9, 0
    %p50 = por %p48, %p49
    %p51 = scmp.ne.s32.totalorder %s43, %s45
    %p52 = scmp.eq.s32.totalorder %s14, 47
    %p53 = por %p51, %p52
    %p54 = scmp.ne.s32.totalorder %s45, %s46
    %p55 = scmp.eq.s32.totalorder %s14, 0
    %p56 = por %p54, %p55
    %p57 = scmp.ne.s32.totalorder %s45, %s46
    %p58 = scmp.eq.s32.totalorder %s15, 47
    %p59 = por %p57, %p58
    %p61 = scmp.ne.s32.totalorder %s46, %s60
    %p62 = scmp.eq.s32.totalorder %s15, 0
    %p63 = por %p61, %p62
    %s65 = sadd.s32 %s64, 1
    %p68 = scmp.eq.s32.totalorder %s9, 47
    %p69 = scmp.ne.s32.totalorder %s64, %s66
    %p70 = scmp.eq.s32.totalorder %s9, 0
    %p71 = por %p69, %p70
    %p72 = scmp.ne.s32.totalorder %s64, %s66
    %p73 = scmp.eq.s32.totalorder %s14, 47
    %p74 = por %p72, %p73
    %p75 = scmp.ne.s32.totalorder %s66, %s67
    %p76 = scmp.eq.s32.totalorder %s14, 0
    %p77 = por %p75, %p76
    %p78 = scmp.ne.s32.totalorder %s66, %s67
    %p79 = scmp.eq.s32.totalorder %s15, 47
    %p80 = por %p78, %p79
    %p82 = scmp.ne.s32.totalorder %s67, %s81
    %p83 = scmp.eq.s32.totalorder %s15, 0
    %p84 = por %p82, %p83
    %s85 = ssub.s32 %s9, %s16
    %p86 = scmp.eq.s32.totalorder %s85, 0
    %s88 = sadd.s32 %s87, 1
    %s89 = scalar_select %p86, %s87, %s88
    %p92 = pneg %p86
    %p93 = scmp.eq.s32.totalorder %s9, 47
    %p94 = por %p92, %p93
    %p95 = scmp.ne.s32.totalorder %s87, %s90
    %p96 = scmp.eq.s32.totalorder %s9, 0
    %p97 = por %p95, %p96
    %p98 = scmp.ne.s32.totalorder %s87, %s90
    %p99 = scmp.eq.s32.totalorder %s14, 47
    %p100 = por %p98, %p99
    %p101 = scmp.ne.s32.totalorder %s90, %s91
    %p102 = scmp.eq.s32.totalorder %s14, 0
    %p103 = por %p101, %p102
    %p104 = scmp.ne.s32.totalorder %s90, %s91
    %p105 = scmp.eq.s32.totalorder %s15, 47
    %p106 = por %p104, %p105
    %p108 = scmp.ne.s32.totalorder %s91, %s107
    %p109 = scmp.eq.s32.totalorder %s15, 0
    %p110 = por %p108, %p109
    %p111 = scmp.le.s32.totalorder 1, %s9
    %p112 = scmp.lt.s32.totalorder %s9, 49
    %p113 = pnand %p111, %p112
    %p114 = pneg %p113
    // Predicated region
    $region9: #{stargan_discriminator.7} parent=5 // pred_check
      _
    $region10: #{stargan_discriminator.7} parent=5 // pred_check_branch
      %116 = sbr.rel (%p113) target = $region12
    $region11: #{stargan_discriminator.7} parent=5 // pred_region
      %s117 = ssub.s32 %s9, 1
      // Predicated region
      $region13: #{stargan_discriminator.7} parent=11 // pred_check
        %p118 = pneg %p56
      $region14: #{stargan_discriminator.7} parent=11 // pred_check_branch
        %120 = sbr.rel (%p118) target = $region16
      $region15: #{stargan_discriminator.7} parent=11 // pred_region
        _
      $region16: #{stargan_discriminator.7} parent=11 // pred_fallthru
        _
      // Predicated region
      $region17: #{stargan_discriminator.7} parent=11 // pred_check
        %p121 = pneg %p77
      $region18: #{stargan_discriminator.7} parent=11 // pred_check_branch
        %123 = sbr.rel (%p121) target = $region20
      $region19: #{stargan_discriminator.7} parent=11 // pred_region
        _
      $region20: #{stargan_discriminator.7} parent=11 // pred_fallthru
        _
    $region12: #{stargan_discriminator.7} parent=5 // pred_fallthru
      _
    %p124 = scmp.lt.s32.totalorder %s9, 48
    // Predicated region
    $region21: #{stargan_discriminator.7} parent=5 // pred_check
      %p125 = pneg %p124
    $region22: #{stargan_discriminator.7} parent=5 // pred_check_branch
      %127 = sbr.rel (%p125) target = $region24
    $region23: #{stargan_discriminator.7} parent=5 // pred_region
      // Predicated region
      $region25: #{stargan_discriminator.7} parent=23 // pred_check
        %p128 = pneg %p29
      $region26: #{stargan_discriminator.7} parent=23 // pred_check_branch
        %130 = sbr.rel (%p128) target = $region28
      $region27: #{stargan_discriminator.7} parent=23 // pred_region
        %s131 = smul.u32 128, %s9
        %p132 = scmp.lt.s32.totalorder %s131, 6143
        %s133 = scalar_select %p132, %s131, 6143
        %s134 = smul.addr %s133, 4
        %s135 = scalar_lea.vmem %s0, %s134
        %s136 = smul.u32 128, %s9
      $region28: #{stargan_discriminator.7} parent=23 // pred_fallthru
        _
    $region24: #{stargan_discriminator.7} parent=5 // pred_fallthru
      _
    %p137 = scmp.le.s32.totalorder 1, %s9
    %p138 = scmp.lt.s32.totalorder %s9, 49
    %p139 = pnand %p137, %p138
    %p140 = pneg %p139
    // Predicated region
    $region29: #{stargan_discriminator.7} parent=5 // pred_check
      _
    $region30: #{stargan_discriminator.7} parent=5 // pred_check_branch
      %142 = sbr.rel (%p139) target = $region32
    $region31: #{stargan_discriminator.7} parent=5 // pred_region
      %s143 = ssub.s32 %s9, 1
      %s144 = smul.u32 128, %s14
      %p145 = scmp.lt.s32.totalorder %s144, 6143
      %s146 = scalar_select %p145, %s144, 6143
      %s147 = smul.addr %s146, 4
      %s148 = scalar_lea.vmem %s0, %s147
      %p149 = pneg %p35
      %p150 = pneg %p32
      %p151 = pneg %p56
      %p152 = pneg %p53
      %p153 = pneg %p77
      %p154 = pneg %p74
      %p155 = pneg %p103
      %p156 = pneg %p100
      %s157 = smul.u32 128, %s14
      %p158 = scmp.lt.s32.totalorder %s157, 6143
      %s159 = scalar_select %p158, %s157, 6143
      %s160 = smul.addr %s159, 4
      %s161 = scalar_lea.vmem %s3, %s160
      %s162 = smul.u32 128, %s14
      %p163 = scmp.lt.s32.totalorder %s162, 6143
      %s164 = scalar_select %p163, %s162, 6143
      %s165 = smul.addr %s164, 4
      %s166 = scalar_lea.vmem %s0, %s165
      %s167 = smul.u32 128, %s14
      %s168 = smul.u32 128, %s14
      %p169 = scmp.lt.s32.totalorder %s168, 6143
      %s170 = scalar_select %p169, %s168, 6143
      %s171 = smul.addr %s170, 4
      %s172 = scalar_lea.vmem %s3, %s171
      %s173 = smul.u32 128, %s14
      %v175 = vld [vmem:[%s166] sm:$0xf]
      %v176 = vld [vmem:[%s166 + $0x4] sm:$0xf]
      %v177 = vld [vmem:[%s166 + $0x8] sm:$0xf]
      %v178 = vld [vmem:[%s166 + $0xc] sm:$0xf]
      %v179 = vld [vmem:[%s166 + $0x10] sm:$0xf]
      %v180 = vld [vmem:[%s166 + $0x14] sm:$0xf]
      %v181 = vld [vmem:[%s166 + $0x18] sm:$0xf]
      %v182 = vld [vmem:[%s166 + $0x1c] sm:$0xf]
      %v183 = vld [vmem:[%s166 + $0x20] sm:$0xf]
      %v184 = vld [vmem:[%s166 + $0x24] sm:$0xf]
      %v185 = vld [vmem:[%s166 + $0x28] sm:$0xf]
      %v186 = vld [vmem:[%s166 + $0x2c] sm:$0xf]
      %v187 = vld [vmem:[%s166 + $0x30] sm:$0xf]
      %v188 = vld [vmem:[%s166 + $0x34] sm:$0xf]
      %v189 = vld [vmem:[%s166 + $0x38] sm:$0xf]
      %v190 = vld [vmem:[%s166 + $0x3c] sm:$0xf]
      %v191 = vld [vmem:[%s166 + $0x40] sm:$0xf]
      %v192 = vld [vmem:[%s166 + $0x44] sm:$0xf]
      %v193 = vld [vmem:[%s166 + $0x48] sm:$0xf]
      %v194 = vld [vmem:[%s166 + $0x4c] sm:$0xf]
      %v195 = vld [vmem:[%s166 + $0x50] sm:$0xf]
      %v196 = vld [vmem:[%s166 + $0x54] sm:$0xf]
      %v197 = vld [vmem:[%s166 + $0x58] sm:$0xf]
      %v198 = vld [vmem:[%s166 + $0x5c] sm:$0xf]
      %v199 = vld [vmem:[%s166 + $0x60] sm:$0xf]
      %v200 = vld [vmem:[%s166 + $0x64] sm:$0xf]
      %v201 = vld [vmem:[%s166 + $0x68] sm:$0xf]
      %v202 = vld [vmem:[%s166 + $0x6c] sm:$0xf]
      %v203 = vld [vmem:[%s166 + $0x70] sm:$0xf]
      %v204 = vld [vmem:[%s166 + $0x74] sm:$0xf]
      %v205 = vld [vmem:[%s166 + $0x78] sm:$0xf]
      %v206 = vld [vmem:[%s166 + $0x7c] sm:$0xf]
      %v207 = vld [vmem:[%s166 + $0x80] sm:$0xf]
      %v208 = vld [vmem:[%s166 + $0x84] sm:$0xf]
      %v209 = vld [vmem:[%s166 + $0x88] sm:$0xf]
      %v210 = vld [vmem:[%s166 + $0x8c] sm:$0xf]
      %v211 = vld [vmem:[%s166 + $0x90] sm:$0xf]
      %v212 = vld [vmem:[%s166 + $0x94] sm:$0xf]
      %v213 = vld [vmem:[%s166 + $0x98] sm:$0xf]
      %v214 = vld [vmem:[%s166 + $0x9c] sm:$0xf]
      %v215 = vld [vmem:[%s166 + $0xa0] sm:$0xf]
      %v216 = vld [vmem:[%s166 + $0xa4] sm:$0xf]
      %v217 = vld [vmem:[%s166 + $0xa8] sm:$0xf]
      %v218 = vld [vmem:[%s166 + $0xac] sm:$0xf]
      %v219 = vld [vmem:[%s166 + $0xb0] sm:$0xf]
      %v220 = vld [vmem:[%s166 + $0xb4] sm:$0xf]
      %v221 = vld [vmem:[%s166 + $0xb8] sm:$0xf]
      %v222 = vld [vmem:[%s166 + $0xbc] sm:$0xf]
      %v223 = vld [vmem:[%s166 + $0xc0] sm:$0xf]
      %v224 = vld [vmem:[%s166 + $0xc4] sm:$0xf]
      %v225 = vld [vmem:[%s166 + $0xc8] sm:$0xf]
      %v226 = vld [vmem:[%s166 + $0xcc] sm:$0xf]
      %v227 = vld [vmem:[%s166 + $0xd0] sm:$0xf]
      %v228 = vld [vmem:[%s166 + $0xd4] sm:$0xf]
      %v229 = vld [vmem:[%s166 + $0xd8] sm:$0xf]
      %v230 = vld [vmem:[%s166 + $0xdc] sm:$0xf]
      %v231 = vld [vmem:[%s166 + $0xe0] sm:$0xf]
      %v232 = vld [vmem:[%s166 + $0xe4] sm:$0xf]
      %v233 = vld [vmem:[%s166 + $0xe8] sm:$0xf]
      %v234 = vld [vmem:[%s166 + $0xec] sm:$0xf]
      %v235 = vld [vmem:[%s166 + $0xf0] sm:$0xf]
      %v236 = vld [vmem:[%s166 + $0xf4] sm:$0xf]
      %v237 = vld [vmem:[%s166 + $0xf8] sm:$0xf]
      %v238 = vld [vmem:[%s166 + $0xfc] sm:$0xf]
      %v239 = vld [vmem:[%s166 + $0x100] sm:$0xf]
      %v240 = vld [vmem:[%s166 + $0x104] sm:$0xf]
      %v241 = vld [vmem:[%s166 + $0x108] sm:$0xf]
      %v242 = vld [vmem:[%s166 + $0x10c] sm:$0xf]
      %v243 = vld [vmem:[%s166 + $0x110] sm:$0xf]
      %v244 = vld [vmem:[%s166 + $0x114] sm:$0xf]
      %v245 = vld [vmem:[%s166 + $0x118] sm:$0xf]
      %v246 = vld [vmem:[%s166 + $0x11c] sm:$0xf]
      %v247 = vld [vmem:[%s166 + $0x120] sm:$0xf]
      %v248 = vld [vmem:[%s166 + $0x124] sm:$0xf]
      %v249 = vld [vmem:[%s166 + $0x128] sm:$0xf]
      %v250 = vld [vmem:[%s166 + $0x12c] sm:$0xf]
      %v251 = vld [vmem:[%s166 + $0x130] sm:$0xf]
      %v252 = vld [vmem:[%s166 + $0x134] sm:$0xf]
      %v253 = vld [vmem:[%s166 + $0x138] sm:$0xf]
      %v254 = vld [vmem:[%s166 + $0x13c] sm:$0xf]
      %v255 = vld [vmem:[%s166 + $0x140] sm:$0xf]
      %v256 = vld [vmem:[%s166 + $0x144] sm:$0xf]
      %v257 = vld [vmem:[%s166 + $0x148] sm:$0xf]
      %v258 = vld [vmem:[%s166 + $0x14c] sm:$0xf]
      %v259 = vld [vmem:[%s166 + $0x150] sm:$0xf]
      %v260 = vld [vmem:[%s166 + $0x154] sm:$0xf]
      %v261 = vld [vmem:[%s166 + $0x158] sm:$0xf]
      %v262 = vld [vmem:[%s166 + $0x15c] sm:$0xf]
      %v263 = vld [vmem:[%s166 + $0x160] sm:$0xf]
      %v264 = vld [vmem:[%s166 + $0x164] sm:$0xf]
      %v265 = vld [vmem:[%s166 + $0x168] sm:$0xf]
      %v266 = vld [vmem:[%s166 + $0x16c] sm:$0xf]
      %v267 = vld [vmem:[%s166 + $0x170] sm:$0xf]
      %v268 = vld [vmem:[%s166 + $0x174] sm:$0xf]
      %v269 = vld [vmem:[%s166 + $0x178] sm:$0xf]
      %v270 = vld [vmem:[%s166 + $0x17c] sm:$0xf]
      %v271 = vld [vmem:[%s166 + $0x180] sm:$0xf]
      %v272 = vld [vmem:[%s166 + $0x184] sm:$0xf]
      %v273 = vld [vmem:[%s166 + $0x188] sm:$0xf]
      %v274 = vld [vmem:[%s166 + $0x18c] sm:$0xf]
      %v275 = vld [vmem:[%s166 + $0x190] sm:$0xf]
      %v276 = vld [vmem:[%s166 + $0x194] sm:$0xf]
      %v277 = vld [vmem:[%s166 + $0x198] sm:$0xf]
      %v278 = vld [vmem:[%s166 + $0x19c] sm:$0xf]
      %v279 = vld [vmem:[%s166 + $0x1a0] sm:$0xf]
      %v280 = vld [vmem:[%s166 + $0x1a4] sm:$0xf]
      %v281 = vld [vmem:[%s166 + $0x1a8] sm:$0xf]
      %v282 = vld [vmem:[%s166 + $0x1ac] sm:$0xf]
      %v283 = vld [vmem:[%s166 + $0x1b0] sm:$0xf]
      %v284 = vld [vmem:[%s166 + $0x1b4] sm:$0xf]
      %v285 = vld [vmem:[%s166 + $0x1b8] sm:$0xf]
      %v286 = vld [vmem:[%s166 + $0x1bc] sm:$0xf]
      %v287 = vld [vmem:[%s166 + $0x1c0] sm:$0xf]
      %v288 = vld [vmem:[%s166 + $0x1c4] sm:$0xf]
      %v289 = vld [vmem:[%s166 + $0x1c8] sm:$0xf]
      %v290 = vld [vmem:[%s166 + $0x1cc] sm:$0xf]
      %v291 = vld [vmem:[%s166 + $0x1d0] sm:$0xf]
      %v292 = vld [vmem:[%s166 + $0x1d4] sm:$0xf]
      %v293 = vld [vmem:[%s166 + $0x1d8] sm:$0xf]
      %v294 = vld [vmem:[%s166 + $0x1dc] sm:$0xf]
      %v295 = vld [vmem:[%s166 + $0x1e0] sm:$0xf]
      %v296 = vld [vmem:[%s166 + $0x1e4] sm:$0xf]
      %v297 = vld [vmem:[%s166 + $0x1e8] sm:$0xf]
      %v298 = vld [vmem:[%s166 + $0x1ec] sm:$0xf]
      %v299 = vld [vmem:[%s166 + $0x1f0] sm:$0xf]
      %v300 = vld [vmem:[%s166 + $0x1f4] sm:$0xf]
      %v301 = vld [vmem:[%s166 + $0x1f8] sm:$0xf]
      %v302 = vld [vmem:[%s166 + $0x1fc] sm:$0xf]
      %v303 = vld [vmem:[%s1] sm:$0xf]
      %v304 = vld [vmem:[%s1 + $0x4] sm:$0xf]
      %v305 = vld [vmem:[%s2] sm:$0x1]
      %v307 = vlaneseq
      %v308 = vshrl.u32 %v307, 7
      %v309 = vsub.s32 0, %v308
      %v310 = vrot.slane %v305, %v309
      %v440 = vunpack.c.l.b16 %v175
      %v441 = vunpack.c.l.b16 %v176
      %v442 = vunpack.c.l.b16 %v177
      %v443 = vunpack.c.l.b16 %v178
      %v444 = vunpack.c.l.b16 %v179
      %v445 = vunpack.c.l.b16 %v180
      %v446 = vunpack.c.l.b16 %v181
      %v447 = vunpack.c.l.b16 %v182
      %v448 = vunpack.c.l.b16 %v183
      %v449 = vunpack.c.l.b16 %v184
      %v450 = vunpack.c.l.b16 %v185
      %v451 = vunpack.c.l.b16 %v186
      %v452 = vunpack.c.l.b16 %v187
      %v453 = vunpack.c.l.b16 %v188
      %v454 = vunpack.c.l.b16 %v189
      %v455 = vunpack.c.l.b16 %v190
      %v456 = vunpack.c.l.b16 %v191
      %v457 = vunpack.c.l.b16 %v192
      %v458 = vunpack.c.l.b16 %v193
      %v459 = vunpack.c.l.b16 %v194
      %v460 = vunpack.c.l.b16 %v195
      %v461 = vunpack.c.l.b16 %v196
      %v462 = vunpack.c.l.b16 %v197
      %v463 = vunpack.c.l.b16 %v198
      %v464 = vunpack.c.l.b16 %v199
      %v465 = vunpack.c.l.b16 %v200
      %v466 = vunpack.c.l.b16 %v201
      %v467 = vunpack.c.l.b16 %v202
      %v468 = vunpack.c.l.b16 %v203
      %v469 = vunpack.c.l.b16 %v204
      %v470 = vunpack.c.l.b16 %v205
      %v471 = vunpack.c.l.b16 %v206
      %v472 = vunpack.c.l.b16 %v207
      %v473 = vunpack.c.l.b16 %v208
      %v474 = vunpack.c.l.b16 %v209
      %v475 = vunpack.c.l.b16 %v210
      %v476 = vunpack.c.l.b16 %v211
      %v477 = vunpack.c.l.b16 %v212
      %v478 = vunpack.c.l.b16 %v213
      %v479 = vunpack.c.l.b16 %v214
      %v480 = vunpack.c.l.b16 %v215
      %v481 = vunpack.c.l.b16 %v216
      %v482 = vunpack.c.l.b16 %v217
      %v483 = vunpack.c.l.b16 %v218
      %v484 = vunpack.c.l.b16 %v219
      %v485 = vunpack.c.l.b16 %v220
      %v486 = vunpack.c.l.b16 %v221
      %v487 = vunpack.c.l.b16 %v222
      %v488 = vunpack.c.l.b16 %v223
      %v489 = vunpack.c.l.b16 %v224
      %v490 = vunpack.c.l.b16 %v225
      %v491 = vunpack.c.l.b16 %v226
      %v492 = vunpack.c.l.b16 %v227
      %v493 = vunpack.c.l.b16 %v228
      %v494 = vunpack.c.l.b16 %v229
      %v495 = vunpack.c.l.b16 %v230
      %v496 = vunpack.c.l.b16 %v231
      %v497 = vunpack.c.l.b16 %v232
      %v498 = vunpack.c.l.b16 %v233
      %v499 = vunpack.c.l.b16 %v234
      %v500 = vunpack.c.l.b16 %v235
      %v501 = vunpack.c.l.b16 %v236
      %v502 = vunpack.c.l.b16 %v237
      %v503 = vunpack.c.l.b16 %v238
      %v504 = vunpack.c.l.b16 %v239
      %v505 = vunpack.c.l.b16 %v240
      %v506 = vunpack.c.l.b16 %v241
      %v507 = vunpack.c.l.b16 %v242
      %v508 = vunpack.c.l.b16 %v243
      %v509 = vunpack.c.l.b16 %v244
      %v510 = vunpack.c.l.b16 %v245
      %v511 = vunpack.c.l.b16 %v246
      %v512 = vunpack.c.l.b16 %v247
      %v513 = vunpack.c.l.b16 %v248
      %v514 = vunpack.c.l.b16 %v249
      %v515 = vunpack.c.l.b16 %v250
      %v516 = vunpack.c.l.b16 %v251
      %v517 = vunpack.c.l.b16 %v252
      %v518 = vunpack.c.l.b16 %v253
      %v519 = vunpack.c.l.b16 %v254
      %v520 = vunpack.c.l.b16 %v255
      %v521 = vunpack.c.l.b16 %v256
      %v522 = vunpack.c.l.b16 %v257
      %v523 = vunpack.c.l.b16 %v258
      %v524 = vunpack.c.l.b16 %v259
      %v525 = vunpack.c.l.b16 %v260
      %v526 = vunpack.c.l.b16 %v261
      %v527 = vunpack.c.l.b16 %v262
      %v528 = vunpack.c.l.b16 %v263
      %v529 = vunpack.c.l.b16 %v264
      %v530 = vunpack.c.l.b16 %v265
      %v531 = vunpack.c.l.b16 %v266
      %v532 = vunpack.c.l.b16 %v267
      %v533 = vunpack.c.l.b16 %v268
      %v534 = vunpack.c.l.b16 %v269
      %v535 = vunpack.c.l.b16 %v270
      %v536 = vunpack.c.l.b16 %v271
      %v537 = vunpack.c.l.b16 %v272
      %v538 = vunpack.c.l.b16 %v273
      %v539 = vunpack.c.l.b16 %v274
      %v540 = vunpack.c.l.b16 %v275
      %v541 = vunpack.c.l.b16 %v276
      %v542 = vunpack.c.l.b16 %v277
      %v543 = vunpack.c.l.b16 %v278
      %v544 = vunpack.c.l.b16 %v279
      %v545 = vunpack.c.l.b16 %v280
      %v546 = vunpack.c.l.b16 %v281
      %v547 = vunpack.c.l.b16 %v282
      %v548 = vunpack.c.l.b16 %v283
      %v549 = vunpack.c.l.b16 %v284
      %v550 = vunpack.c.l.b16 %v285
      %v551 = vunpack.c.l.b16 %v286
      %v552 = vunpack.c.l.b16 %v287
      %v553 = vunpack.c.l.b16 %v288
      %v554 = vunpack.c.l.b16 %v289
      %v555 = vunpack.c.l.b16 %v290
      %v556 = vunpack.c.l.b16 %v291
      %v557 = vunpack.c.l.b16 %v292
      %v558 = vunpack.c.l.b16 %v293
      %v559 = vunpack.c.l.b16 %v294
      %v560 = vunpack.c.l.b16 %v295
      %v561 = vunpack.c.l.b16 %v296
      %v562 = vunpack.c.l.b16 %v297
      %v563 = vunpack.c.l.b16 %v298
      %v564 = vunpack.c.l.b16 %v299
      %v565 = vunpack.c.l.b16 %v300
      %v566 = vunpack.c.l.b16 %v301
      %v567 = vunpack.c.l.b16 %v302
      %v568 = vpack.c.b16 %v441, %v440
      %v569 = vpack.c.b16 %v443, %v442
      %v570 = vpack.c.b16 %v445, %v444
      %v571 = vpack.c.b16 %v447, %v446
      %v572 = vpack.c.b16 %v449, %v448
      %v573 = vpack.c.b16 %v451, %v450
      %v574 = vpack.c.b16 %v453, %v452
      %v575 = vpack.c.b16 %v455, %v454
      %v576 = vpack.c.b16 %v457, %v456
      %v577 = vpack.c.b16 %v459, %v458
      %v578 = vpack.c.b16 %v461, %v460
      %v579 = vpack.c.b16 %v463, %v462
      %v580 = vpack.c.b16 %v465, %v464
      %v581 = vpack.c.b16 %v467, %v466
      %v582 = vpack.c.b16 %v469, %v468
      %v583 = vpack.c.b16 %v471, %v470
      %v584 = vpack.c.b16 %v473, %v472
      %v585 = vpack.c.b16 %v475, %v474
      %v586 = vpack.c.b16 %v477, %v476
      %v587 = vpack.c.b16 %v479, %v478
      %v588 = vpack.c.b16 %v481, %v480
      %v589 = vpack.c.b16 %v483, %v482
      %v590 = vpack.c.b16 %v485, %v484
      %v591 = vpack.c.b16 %v487, %v486
      %v592 = vpack.c.b16 %v489, %v488
      %v593 = vpack.c.b16 %v491, %v490
      %v594 = vpack.c.b16 %v493, %v492
      %v595 = vpack.c.b16 %v495, %v494
      %v596 = vpack.c.b16 %v497, %v496
      %v597 = vpack.c.b16 %v499, %v498
      %v598 = vpack.c.b16 %v501, %v500
      %v599 = vpack.c.b16 %v503, %v502
      %v600 = vpack.c.b16 %v505, %v504
      %v601 = vpack.c.b16 %v507, %v506
      %v602 = vpack.c.b16 %v509, %v508
      %v603 = vpack.c.b16 %v511, %v510
      %v604 = vpack.c.b16 %v513, %v512
      %v605 = vpack.c.b16 %v515, %v514
      %v606 = vpack.c.b16 %v517, %v516
      %v607 = vpack.c.b16 %v519, %v518
      %v608 = vpack.c.b16 %v521, %v520
      %v609 = vpack.c.b16 %v523, %v522
      %v610 = vpack.c.b16 %v525, %v524
      %v611 = vpack.c.b16 %v527, %v526
      %v612 = vpack.c.b16 %v529, %v528
      %v613 = vpack.c.b16 %v531, %v530
      %v614 = vpack.c.b16 %v533, %v532
      %v615 = vpack.c.b16 %v535, %v534
      %v616 = vpack.c.b16 %v537, %v536
      %v617 = vpack.c.b16 %v539, %v538
      %v618 = vpack.c.b16 %v541, %v540
      %v619 = vpack.c.b16 %v543, %v542
      %v620 = vpack.c.b16 %v545, %v544
      %v621 = vpack.c.b16 %v547, %v546
      %v622 = vpack.c.b16 %v549, %v548
      %v623 = vpack.c.b16 %v551, %v550
      %v624 = vpack.c.b16 %v553, %v552
      %v625 = vpack.c.b16 %v555, %v554
      %v626 = vpack.c.b16 %v557, %v556
      %v627 = vpack.c.b16 %v559, %v558
      %v628 = vpack.c.b16 %v561, %v560
      %v629 = vpack.c.b16 %v563, %v562
      %v630 = vpack.c.b16 %v565, %v564
      %v631 = vpack.c.b16 %v567, %v566
      %v634 = vunpack.c.l.b16 %v303
      %v635 = vunpack.c.l.b16 %v304
      %v636 = vpack.c.b16 %v635, %v634
      %vm638 = vcmask 130048
      %v640 = vsel %vm638, %v568, 0
      %v643 = vsel %vm638, %v569, 0
      %v646 = vsel %vm638, %v570, 0
      %v649 = vsel %vm638, %v571, 0
      %v652 = vsel %vm638, %v572, 0
      %v655 = vsel %vm638, %v573, 0
      %v658 = vsel %vm638, %v574, 0
      %v661 = vsel %vm638, %v575, 0
      %v664 = vsel %vm638, %v576, 0
      %v667 = vsel %vm638, %v577, 0
      %v670 = vsel %vm638, %v578, 0
      %v673 = vsel %vm638, %v579, 0
      %v676 = vsel %vm638, %v580, 0
      %v679 = vsel %vm638, %v581, 0
      %v682 = vsel %vm638, %v582, 0
      %v685 = vsel %vm638, %v583, 0
      %v688 = vsel %vm638, %v584, 0
      %v691 = vsel %vm638, %v585, 0
      %v694 = vsel %vm638, %v586, 0
      %v697 = vsel %vm638, %v587, 0
      %v700 = vsel %vm638, %v588, 0
      %v703 = vsel %vm638, %v589, 0
      %v706 = vsel %vm638, %v590, 0
      %v709 = vsel %vm638, %v591, 0
      %v712 = vsel %vm638, %v592, 0
      %v715 = vsel %vm638, %v593, 0
      %v718 = vsel %vm638, %v594, 0
      %v721 = vsel %vm638, %v595, 0
      %v724 = vsel %vm638, %v596, 0
      %v727 = vsel %vm638, %v597, 0
      %v730 = vsel %vm638, %v598, 0
      %v733 = vsel %vm638, %v599, 0
      %v736 = vsel %vm638, %v600, 0
      %v739 = vsel %vm638, %v601, 0
      %v742 = vsel %vm638, %v602, 0
      %v745 = vsel %vm638, %v603, 0
      %v748 = vsel %vm638, %v604, 0
      %v751 = vsel %vm638, %v605, 0
      %v754 = vsel %vm638, %v606, 0
      %v757 = vsel %vm638, %v607, 0
      %v760 = vsel %vm638, %v608, 0
      %v763 = vsel %vm638, %v609, 0
      %v766 = vsel %vm638, %v610, 0
      %v769 = vsel %vm638, %v611, 0
      %v772 = vsel %vm638, %v612, 0
      %v775 = vsel %vm638, %v613, 0
      %v778 = vsel %vm638, %v614, 0
      %v781 = vsel %vm638, %v615, 0
      %v784 = vsel %vm638, %v616, 0
      %v787 = vsel %vm638, %v617, 0
      %v790 = vsel %vm638, %v618, 0
      %v793 = vsel %vm638, %v619, 0
      %v796 = vsel %vm638, %v620, 0
      %v799 = vsel %vm638, %v621, 0
      %v802 = vsel %vm638, %v622, 0
      %v805 = vsel %vm638, %v623, 0
      %v808 = vsel %vm638, %v624, 0
      %v811 = vsel %vm638, %v625, 0
      %v814 = vsel %vm638, %v626, 0
      %v817 = vsel %vm638, %v627, 0
      %v820 = vsel %vm638, %v628, 0
      %v823 = vsel %vm638, %v629, 0
      %v826 = vsel %vm638, %v630, 0
      %v829 = vsel %vm638, %v631, 0
      %831 = vmatprep.subr.bf16.mxu0 0
      %832 = vmatpush1.bf16.msra.mxu0 %v636
      %833 = vmatprep.subr.bf16.mxu0 0
      %834 = vmatpush1.bf16.msra.mxu0 0
      %835 = vmatprep.subr.bf16.mxu0 0
      %836 = vmatpush1.bf16.msra.mxu0 0
      %837 = vmatprep.subr.bf16.mxu0 0
      %838 = vmatpush1.bf16.msra.mxu0 0
      %839 = vmatprep.subr.bf16.mxu0 0
      %840 = vmatpush1.bf16.msra.mxu0 0
      %841 = vmatprep.subr.bf16.mxu0 0
      %842 = vmatpush1.bf16.msra.mxu0 0
      %843 = vmatprep.subr.bf16.mxu0 0
      %844 = vmatpush1.bf16.msra.mxu0 0
      %845 = vmatprep.subr.bf16.mxu0 0
      %846 = vmatpush1.bf16.msra.mxu0 0
      %847 = vmatprep.subr.bf16.mxu0 0
      %848 = vmatpush1.bf16.msra.mxu0 0
      %849 = vmatprep.subr.bf16.mxu0 0
      %850 = vmatpush1.bf16.msra.mxu0 0
      %851 = vmatprep.subr.bf16.mxu0 0
      %852 = vmatpush1.bf16.msra.mxu0 0
      %853 = vmatprep.subr.bf16.mxu0 0
      %854 = vmatpush1.bf16.msra.mxu0 0
      %855 = vmatprep.subr.bf16.mxu0 0
      %856 = vmatpush1.bf16.msra.mxu0 0
      %857 = vmatprep.subr.bf16.mxu0 0
      %858 = vmatpush1.bf16.msra.mxu0 0
      %859 = vmatprep.subr.bf16.mxu0 0
      %860 = vmatpush1.bf16.msra.mxu0 0
      %861 = vmatprep.subr.bf16.mxu0 0
      %862 = vmatpush1.bf16.msra.mxu0 0
      %863 = vmatprep.mubr.bf16.mxu0 0
      %864 = vmatmul.mubr.bf16.gmra.mrb[0].mxu0 %v640
      %v865 = vpop.f32.mrb[0].mxu0
      %v866 = vadd.f32 %v310, %v865
      %v867 = vpop.f32.mrb[0].mxu0
      %v868 = vpop.f32.mrb[0].mxu0
      %v869 = vadd.f32 %v310, %v868
      %v870 = vpop.f32.mrb[0].mxu0
      %871 = vmatprep.mubr.bf16.mxu0 0
      %872 = vmatmul.mubr.bf16.gmra.mrb[0].mxu0 %v643
      %v873 = vpop.f32.mrb[0].mxu0
      %v874 = vadd.f32 %v310, %v873
      %v875 = vpop.f32.mrb[0].mxu0
      %v876 = vpop.f32.mrb[0].mxu0
      %v877 = vadd.f32 %v310, %v876
      %v878 = vpop.f32.mrb[0].mxu0
      %879 = vmatprep.mubr.bf16.mxu0 0
      %880 = vmatmul.mubr.bf16.gmra.mrb[0].mxu0 %v646
      %v881 = vpop.f32.mrb[0].mxu0
      %v882 = vadd.f32 %v310, %v881
      %v883 = vpop.f32.mrb[0].mxu0
      %v884 = vpop.f32.mrb[0].mxu0
      %v885 = vadd.f32 %v310, %v884
      %v886 = vpop.f32.mrb[0].mxu0
      %887 = vmatprep.mubr.bf16.mxu0 0
      %888 = vmatmul.mubr.bf16.gmra.mrb[0].mxu0 %v649
      %v889 = vpop.f32.mrb[0].mxu0
      %v890 = vadd.f32 %v310, %v889
      %v891 = vpop.f32.mrb[0].mxu0
      %v892 = vpop.f32.mrb[0].mxu0
      %v893 = vadd.f32 %v310, %v892
      %v894 = vpop.f32.mrb[0].mxu0
      %895 = vmatprep.mubr.bf16.mxu0 0
      %896 = vmatmul.mubr.bf16.gmra.mrb[0].mxu0 %v652
      %v897 = vpop.f32.mrb[0].mxu0
      %v898 = vadd.f32 %v310, %v897
      %v899 = vpop.f32.mrb[0].mxu0
      %v900 = vpop.f32.mrb[0].mxu0
      %v901 = vadd.f32 %v310, %v900
      %v902 = vpop.f32.mrb[0].mxu0
      %903 = vmatprep.mubr.bf16.mxu0 0
      %904 = vmatmul.mubr.bf16.gmra.mrb[0].mxu0 %v655
      %v905 = vpop.f32.mrb[0].mxu0
      %v906 = vadd.f32 %v310, %v905
      %v907 = vpop.f32.mrb[0].mxu0
      %v908 = vpop.f32.mrb[0].mxu0
      %v909 = vadd.f32 %v310, %v908
      %v910 = vpop.f32.mrb[0].mxu0
      %911 = vmatprep.mubr.bf16.mxu0 0
      %912 = vmatmul.mubr.bf16.gmra.mrb[0].mxu0 %v658
      %v913 = vpop.f32.mrb[0].mxu0
      %v914 = vadd.f32 %v310, %v913
      %v915 = vpop.f32.mrb[0].mxu0
      %v916 = vpop.f32.mrb[0].mxu0
      %v917 = vadd.f32 %v310, %v916
      %v918 = vpop.f32.mrb[0].mxu0
      %919 = vmatprep.mubr.bf16.mxu0 0
      %920 = vmatmul.mubr.bf16.gmra.mrb[0].mxu0 %v661
      %v921 = vpop.f32.mrb[0].mxu0
      %v922 = vadd.f32 %v310, %v921
      %v923 = vpop.f32.mrb[0].mxu0
      %v924 = vpop.f32.mrb[0].mxu0
      %v925 = vadd.f32 %v310, %v924
      %v926 = vpop.f32.mrb[0].mxu0
      %927 = vmatprep.mubr.bf16.mxu0 0
      %928 = vmatmul.mubr.bf16.gmra.mrb[0].mxu0 %v664
      %v929 = vpop.f32.mrb[0].mxu0
      %v930 = vadd.f32 %v310, %v929
      %v931 = vpop.f32.mrb[0].mxu0
      %v932 = vpop.f32.mrb[0].mxu0
      %v933 = vadd.f32 %v310, %v932
      %v934 = vpop.f32.mrb[0].mxu0
      %935 = vmatprep.mubr.bf16.mxu0 0
      %936 = vmatmul.mubr.bf16.gmra.mrb[0].mxu0 %v667
      %v937 = vpop.f32.mrb[0].mxu0
      %v938 = vadd.f32 %v310, %v937
      %v939 = vpop.f32.mrb[0].mxu0
      %v940 = vpop.f32.mrb[0].mxu0
      %v941 = vadd.f32 %v310, %v940
      %v942 = vpop.f32.mrb[0].mxu0
      %943 = vmatprep.mubr.bf16.mxu0 0
      %944 = vmatmul.mubr.bf16.gmra.mrb[0].mxu0 %v670
      %v945 = vpop.f32.mrb[0].mxu0
      %v946 = vadd.f32 %v310, %v945
      %v947 = vpop.f32.mrb[0].mxu0
      %v948 = vpop.f32.mrb[0].mxu0
      %v949 = vadd.f32 %v310, %v948
      %v950 = vpop.f32.mrb[0].mxu0
      %951 = vmatprep.mubr.bf16.mxu0 0
      %952 = vmatmul.mubr.bf16.gmra.mrb[0].mxu0 %v673
      %v953 = vpop.f32.mrb[0].mxu0
      %v954 = vadd.f32 %v310, %v953
      %v955 = vpop.f32.mrb[0].mxu0
      %v956 = vpop.f32.mrb[0].mxu0
      %v957 = vadd.f32 %v310, %v956
      %v958 = vpop.f32.mrb[0].mxu0
      %959 = vmatprep.mubr.bf16.mxu0 0
      %960 = vmatmul.mubr.bf16.gmra.mrb[0].mxu0 %v676
      %v961 = vpop.f32.mrb[0].mxu0
      %v962 = vadd.f32 %v310, %v961
      %v963 = vpop.f32.mrb[0].mxu0
      %v964 = vpop.f32.mrb[0].mxu0
      %v965 = vadd.f32 %v310, %v964
      %v966 = vpop.f32.mrb[0].mxu0
      %967 = vmatprep.mubr.bf16.mxu0 0
      %968 = vmatmul.mubr.bf16.gmra.mrb[0].mxu0 %v679
      %v969 = vpop.f32.mrb[0].mxu0
      %v970 = vadd.f32 %v310, %v969
      %v971 = vpop.f32.mrb[0].mxu0
      %v972 = vpop.f32.mrb[0].mxu0
      %v973 = vadd.f32 %v310, %v972
      %v974 = vpop.f32.mrb[0].mxu0
      %975 = vmatprep.mubr.bf16.mxu0 0
      %976 = vmatmul.mubr.bf16.gmra.mrb[0].mxu0 %v682
      %v977 = vpop.f32.mrb[0].mxu0
      %v978 = vadd.f32 %v310, %v977
      %v979 = vpop.f32.mrb[0].mxu0
      %v980 = vpop.f32.mrb[0].mxu0
      %v981 = vadd.f32 %v310, %v980
      %v982 = vpop.f32.mrb[0].mxu0
      %983 = vmatprep.mubr.bf16.mxu0 0
      %984 = vmatmul.mubr.bf16.gmra.mrb[0].mxu0 %v685
      %v985 = vpop.f32.mrb[0].mxu0
      %v986 = vadd.f32 %v310, %v985
      %v987 = vpop.f32.mrb[0].mxu0
      %v988 = vpop.f32.mrb[0].mxu0
      %v989 = vadd.f32 %v310, %v988
      %v990 = vpop.f32.mrb[0].mxu0
      %991 = vmatprep.mubr.bf16.mxu0 0
      %992 = vmatmul.mubr.bf16.gmra.mrb[0].mxu0 %v688
      %v993 = vpop.f32.mrb[0].mxu0
      %v994 = vadd.f32 %v310, %v993
      %v995 = vpop.f32.mrb[0].mxu0
      %v996 = vpop.f32.mrb[0].mxu0
      %v997 = vadd.f32 %v310, %v996
      %v998 = vpop.f32.mrb[0].mxu0
      %999 = vmatprep.mubr.bf16.mxu0 0
      %1000 = vmatmul.mubr.bf16.gmra.mrb[0].mxu0 %v691
      %v1001 = vpop.f32.mrb[0].mxu0
      %v1002 = vadd.f32 %v310, %v1001
      %v1003 = vpop.f32.mrb[0].mxu0
      %v1004 = vpop.f32.mrb[0].mxu0
      %v1005 = vadd.f32 %v310, %v1004
      %v1006 = vpop.f32.mrb[0].mxu0
      %1007 = vmatprep.mubr.bf16.mxu0 0
      %1008 = vmatmul.mubr.bf16.gmra.mrb[0].mxu0 %v694
      %v1009 = vpop.f32.mrb[0].mxu0
      %v1010 = vadd.f32 %v310, %v1009
      %v1011 = vpop.f32.mrb[0].mxu0
      %v1012 = vpop.f32.mrb[0].mxu0
      %v1013 = vadd.f32 %v310, %v1012
      %v1014 = vpop.f32.mrb[0].mxu0
      %1015 = vmatprep.mubr.bf16.mxu0 0
      %1016 = vmatmul.mubr.bf16.gmra.mrb[0].mxu0 %v697
      %v1017 = vpop.f32.mrb[0].mxu0
      %v1018 = vadd.f32 %v310, %v1017
      %v1019 = vpop.f32.mrb[0].mxu0
      %v1020 = vpop.f32.mrb[0].mxu0
      %v1021 = vadd.f32 %v310, %v1020
      %v1022 = vpop.f32.mrb[0].mxu0
      %1023 = vmatprep.mubr.bf16.mxu0 0
      %1024 = vmatmul.mubr.bf16.gmra.mrb[0].mxu0 %v700
      %v1025 = vpop.f32.mrb[0].mxu0
      %v1026 = vadd.f32 %v310, %v1025
      %v1027 = vpop.f32.mrb[0].mxu0
      %v1028 = vpop.f32.mrb[0].mxu0
      %v1029 = vadd.f32 %v310, %v1028
      %v1030 = vpop.f32.mrb[0].mxu0
      %1031 = vmatprep.mubr.bf16.mxu0 0
      %1032 = vmatmul.mubr.bf16.gmra.mrb[0].mxu0 %v703
      %v1033 = vpop.f32.mrb[0].mxu0
      %v1034 = vadd.f32 %v310, %v1033
      %v1035 = vpop.f32.mrb[0].mxu0
      %v1036 = vpop.f32.mrb[0].mxu0
      %v1037 = vadd.f32 %v310, %v1036
      %v1038 = vpop.f32.mrb[0].mxu0
      %1039 = vmatprep.mubr.bf16.mxu0 0
      %1040 = vmatmul.mubr.bf16.gmra.mrb[0].mxu0 %v706
      %v1041 = vpop.f32.mrb[0].mxu0
      %v1042 = vadd.f32 %v310, %v1041
      %v1043 = vpop.f32.mrb[0].mxu0
      %v1044 = vpop.f32.mrb[0].mxu0
      %v1045 = vadd.f32 %v310, %v1044
      %v1046 = vpop.f32.mrb[0].mxu0
      %1047 = vmatprep.mubr.bf16.mxu0 0
      %1048 = vmatmul.mubr.bf16.gmra.mrb[0].mxu0 %v709
      %v1049 = vpop.f32.mrb[0].mxu0
      %v1050 = vadd.f32 %v310, %v1049
      %v1051 = vpop.f32.mrb[0].mxu0
      %v1052 = vpop.f32.mrb[0].mxu0
      %v1053 = vadd.f32 %v310, %v1052
      %v1054 = vpop.f32.mrb[0].mxu0
      %1055 = vmatprep.mubr.bf16.mxu0 0
      %1056 = vmatmul.mubr.bf16.gmra.mrb[0].mxu0 %v712
      %v1057 = vpop.f32.mrb[0].mxu0
      %v1058 = vadd.f32 %v310, %v1057
      %v1059 = vpop.f32.mrb[0].mxu0
      %v1060 = vpop.f32.mrb[0].mxu0
      %v1061 = vadd.f32 %v310, %v1060
      %v1062 = vpop.f32.mrb[0].mxu0
      %1063 = vmatprep.mubr.bf16.mxu0 0
      %1064 = vmatmul.mubr.bf16.gmra.mrb[0].mxu0 %v715
      %v1065 = vpop.f32.mrb[0].mxu0
      %v1066 = vadd.f32 %v310, %v1065
      %v1067 = vpop.f32.mrb[0].mxu0
      %v1068 = vpop.f32.mrb[0].mxu0
      %v1069 = vadd.f32 %v310, %v1068
      %v1070 = vpop.f32.mrb[0].mxu0
      %1071 = vmatprep.mubr.bf16.mxu0 0
      %1072 = vmatmul.mubr.bf16.gmra.mrb[0].mxu0 %v718
      %v1073 = vpop.f32.mrb[0].mxu0
      %v1074 = vadd.f32 %v310, %v1073
      %v1075 = vpop.f32.mrb[0].mxu0
      %v1076 = vpop.f32.mrb[0].mxu0
      %v1077 = vadd.f32 %v310, %v1076
      %v1078 = vpop.f32.mrb[0].mxu0
      %1079 = vmatprep.mubr.bf16.mxu0 0
      %1080 = vmatmul.mubr.bf16.gmra.mrb[0].mxu0 %v721
      %v1081 = vpop.f32.mrb[0].mxu0
      %v1082 = vadd.f32 %v310, %v1081
      %v1083 = vpop.f32.mrb[0].mxu0
      %v1084 = vpop.f32.mrb[0].mxu0
      %v1085 = vadd.f32 %v310, %v1084
      %v1086 = vpop.f32.mrb[0].mxu0
      %1087 = vmatprep.mubr.bf16.mxu0 0
      %1088 = vmatmul.mubr.bf16.gmra.mrb[0].mxu0 %v724
      %v1089 = vpop.f32.mrb[0].mxu0
      %v1090 = vadd.f32 %v310, %v1089
      %v1091 = vpop.f32.mrb[0].mxu0
      %v1092 = vpop.f32.mrb[0].mxu0
      %v1093 = vadd.f32 %v310, %v1092
      %v1094 = vpop.f32.mrb[0].mxu0
      %1095 = vmatprep.mubr.bf16.mxu0 0
      %1096 = vmatmul.mubr.bf16.gmra.mrb[0].mxu0 %v727
      %v1097 = vpop.f32.mrb[0].mxu0
      %v1098 = vadd.f32 %v310, %v1097
      %v1099 = vpop.f32.mrb[0].mxu0
      %v1100 = vpop.f32.mrb[0].mxu0
      %v1101 = vadd.f32 %v310, %v1100
      %v1102 = vpop.f32.mrb[0].mxu0
      %1103 = vmatprep.mubr.bf16.mxu0 0
      %1104 = vmatmul.mubr.bf16.gmra.mrb[0].mxu0 %v730
      %v1105 = vpop.f32.mrb[0].mxu0
      %v1106 = vadd.f32 %v310, %v1105
      %v1107 = vpop.f32.mrb[0].mxu0
      %v1108 = vpop.f32.mrb[0].mxu0
      %v1109 = vadd.f32 %v310, %v1108
      %v1110 = vpop.f32.mrb[0].mxu0
      %1111 = vmatprep.mubr.bf16.mxu0 0
      %1112 = vmatmul.mubr.bf16.gmra.mrb[0].mxu0 %v733
      %v1113 = vpop.f32.mrb[0].mxu0
      %v1114 = vadd.f32 %v310, %v1113
      %v1115 = vpop.f32.mrb[0].mxu0
      %v1116 = vpop.f32.mrb[0].mxu0
      %v1117 = vadd.f32 %v310, %v1116
      %v1118 = vpop.f32.mrb[0].mxu0
      %1119 = vmatprep.mubr.bf16.mxu0 0
      %1120 = vmatmul.mubr.bf16.gmra.mrb[0].mxu0 %v736
      %v1121 = vpop.f32.mrb[0].mxu0
      %v1122 = vadd.f32 %v310, %v1121
      %v1123 = vpop.f32.mrb[0].mxu0
      %v1124 = vpop.f32.mrb[0].mxu0
      %v1125 = vadd.f32 %v310, %v1124
      %v1126 = vpop.f32.mrb[0].mxu0
      %1127 = vmatprep.mubr.bf16.mxu0 0
      %1128 = vmatmul.mubr.bf16.gmra.mrb[0].mxu0 %v739
      %v1129 = vpop.f32.mrb[0].mxu0
      %v1130 = vadd.f32 %v310, %v1129
      %v1131 = vpop.f32.mrb[0].mxu0
      %v1132 = vpop.f32.mrb[0].mxu0
      %v1133 = vadd.f32 %v310, %v1132
      %v1134 = vpop.f32.mrb[0].mxu0
      %1135 = vmatprep.mubr.bf16.mxu0 0
      %1136 = vmatmul.mubr.bf16.gmra.mrb[0].mxu0 %v742
      %v1137 = vpop.f32.mrb[0].mxu0
      %v1138 = vadd.f32 %v310, %v1137
      %v1139 = vpop.f32.mrb[0].mxu0
      %v1140 = vpop.f32.mrb[0].mxu0
      %v1141 = vadd.f32 %v310, %v1140
      %v1142 = vpop.f32.mrb[0].mxu0
      %1143 = vmatprep.mubr.bf16.mxu0 0
      %1144 = vmatmul.mubr.bf16.gmra.mrb[0].mxu0 %v745
      %v1145 = vpop.f32.mrb[0].mxu0
      %v1146 = vadd.f32 %v310, %v1145
      %v1147 = vpop.f32.mrb[0].mxu0
      %v1148 = vpop.f32.mrb[0].mxu0
      %v1149 = vadd.f32 %v310, %v1148
      %v1150 = vpop.f32.mrb[0].mxu0
      %1151 = vmatprep.mubr.bf16.mxu0 0
      %1152 = vmatmul.mubr.bf16.gmra.mrb[0].mxu0 %v748
      %v1153 = vpop.f32.mrb[0].mxu0
      %v1154 = vadd.f32 %v310, %v1153
      %v1155 = vpop.f32.mrb[0].mxu0
      %v1156 = vpop.f32.mrb[0].mxu0
      %v1157 = vadd.f32 %v310, %v1156
      %v1158 = vpop.f32.mrb[0].mxu0
      %1159 = vmatprep.mubr.bf16.mxu0 0
      %1160 = vmatmul.mubr.bf16.gmra.mrb[0].mxu0 %v751
      %v1161 = vpop.f32.mrb[0].mxu0
      %v1162 = vadd.f32 %v310, %v1161
      %v1163 = vpop.f32.mrb[0].mxu0
      %v1164 = vpop.f32.mrb[0].mxu0
      %v1165 = vadd.f32 %v310, %v1164
      %v1166 = vpop.f32.mrb[0].mxu0
      %1167 = vmatprep.mubr.bf16.mxu0 0
      %1168 = vmatmul.mubr.bf16.gmra.mrb[0].mxu0 %v754
      %v1169 = vpop.f32.mrb[0].mxu0
      %v1170 = vadd.f32 %v310, %v1169
      %v1171 = vpop.f32.mrb[0].mxu0
      %v1172 = vpop.f32.mrb[0].mxu0
      %v1173 = vadd.f32 %v310, %v1172
      %v1174 = vpop.f32.mrb[0].mxu0
      %1175 = vmatprep.mubr.bf16.mxu0 0
      %1176 = vmatmul.mubr.bf16.gmra.mrb[0].mxu0 %v757
      %v1177 = vpop.f32.mrb[0].mxu0
      %v1178 = vadd.f32 %v310, %v1177
      %v1179 = vpop.f32.mrb[0].mxu0
      %v1180 = vpop.f32.mrb[0].mxu0
      %v1181 = vadd.f32 %v310, %v1180
      %v1182 = vpop.f32.mrb[0].mxu0
      %1183 = vmatprep.mubr.bf16.mxu0 0
      %1184 = vmatmul.mubr.bf16.gmra.mrb[0].mxu0 %v760
      %v1185 = vpop.f32.mrb[0].mxu0
      %v1186 = vadd.f32 %v310, %v1185
      %v1187 = vpop.f32.mrb[0].mxu0
      %v1188 = vpop.f32.mrb[0].mxu0
      %v1189 = vadd.f32 %v310, %v1188
      %v1190 = vpop.f32.mrb[0].mxu0
      %1191 = vmatprep.mubr.bf16.mxu0 0
      %1192 = vmatmul.mubr.bf16.gmra.mrb[0].mxu0 %v763
      %v1193 = vpop.f32.mrb[0].mxu0
      %v1194 = vadd.f32 %v310, %v1193
      %v1195 = vpop.f32.mrb[0].mxu0
      %v1196 = vpop.f32.mrb[0].mxu0
      %v1197 = vadd.f32 %v310, %v1196
      %v1198 = vpop.f32.mrb[0].mxu0
      %1199 = vmatprep.mubr.bf16.mxu0 0
      %1200 = vmatmul.mubr.bf16.gmra.mrb[0].mxu0 %v766
      %v1201 = vpop.f32.mrb[0].mxu0
      %v1202 = vadd.f32 %v310, %v1201
      %v1203 = vpop.f32.mrb[0].mxu0
      %v1204 = vpop.f32.mrb[0].mxu0
      %v1205 = vadd.f32 %v310, %v1204
      %v1206 = vpop.f32.mrb[0].mxu0
      %1207 = vmatprep.mubr.bf16.mxu0 0
      %1208 = vmatmul.mubr.bf16.gmra.mrb[0].mxu0 %v769
      %v1209 = vpop.f32.mrb[0].mxu0
      %v1210 = vadd.f32 %v310, %v1209
      %v1211 = vpop.f32.mrb[0].mxu0
      %v1212 = vpop.f32.mrb[0].mxu0
      %v1213 = vadd.f32 %v310, %v1212
      %v1214 = vpop.f32.mrb[0].mxu0
      %1215 = vmatprep.mubr.bf16.mxu0 0
      %1216 = vmatmul.mubr.bf16.gmra.mrb[0].mxu0 %v772
      %v1217 = vpop.f32.mrb[0].mxu0
      %v1218 = vadd.f32 %v310, %v1217
      %v1219 = vpop.f32.mrb[0].mxu0
      %v1220 = vpop.f32.mrb[0].mxu0
      %v1221 = vadd.f32 %v310, %v1220
      %v1222 = vpop.f32.mrb[0].mxu0
      %1223 = vmatprep.mubr.bf16.mxu0 0
      %1224 = vmatmul.mubr.bf16.gmra.mrb[0].mxu0 %v775
      %v1225 = vpop.f32.mrb[0].mxu0
      %v1226 = vadd.f32 %v310, %v1225
      %v1227 = vpop.f32.mrb[0].mxu0
      %v1228 = vpop.f32.mrb[0].mxu0
      %v1229 = vadd.f32 %v310, %v1228
      %v1230 = vpop.f32.mrb[0].mxu0
      %1231 = vmatprep.mubr.bf16.mxu0 0
      %1232 = vmatmul.mubr.bf16.gmra.mrb[0].mxu0 %v778
      %v1233 = vpop.f32.mrb[0].mxu0
      %v1234 = vadd.f32 %v310, %v1233
      %v1235 = vpop.f32.mrb[0].mxu0
      %v1236 = vpop.f32.mrb[0].mxu0
      %v1237 = vadd.f32 %v310, %v1236
      %v1238 = vpop.f32.mrb[0].mxu0
      %1239 = vmatprep.mubr.bf16.mxu0 0
      %1240 = vmatmul.mubr.bf16.gmra.mrb[0].mxu0 %v781
      %v1241 = vpop.f32.mrb[0].mxu0
      %v1242 = vadd.f32 %v310, %v1241
      %v1243 = vpop.f32.mrb[0].mxu0
      %v1244 = vpop.f32.mrb[0].mxu0
      %v1245 = vadd.f32 %v310, %v1244
      %v1246 = vpop.f32.mrb[0].mxu0
      %1247 = vmatprep.mubr.bf16.mxu0 0
      %1248 = vmatmul.mubr.bf16.gmra.mrb[0].mxu0 %v784
      %v1249 = vpop.f32.mrb[0].mxu0
      %v1250 = vadd.f32 %v310, %v1249
      %v1251 = vpop.f32.mrb[0].mxu0
      %v1252 = vpop.f32.mrb[0].mxu0
      %v1253 = vadd.f32 %v310, %v1252
      %v1254 = vpop.f32.mrb[0].mxu0
      %1255 = vmatprep.mubr.bf16.mxu0 0
      %1256 = vmatmul.mubr.bf16.gmra.mrb[0].mxu0 %v787
      %v1257 = vpop.f32.mrb[0].mxu0
      %v1258 = vadd.f32 %v310, %v1257
      %v1259 = vpop.f32.mrb[0].mxu0
      %v1260 = vpop.f32.mrb[0].mxu0
      %v1261 = vadd.f32 %v310, %v1260
      %v1262 = vpop.f32.mrb[0].mxu0
      %1263 = vmatprep.mubr.bf16.mxu0 0
      %1264 = vmatmul.mubr.bf16.gmra.mrb[0].mxu0 %v790
      %v1265 = vpop.f32.mrb[0].mxu0
      %v1266 = vadd.f32 %v310, %v1265
      %v1267 = vpop.f32.mrb[0].mxu0
      %v1268 = vpop.f32.mrb[0].mxu0
      %v1269 = vadd.f32 %v310, %v1268
      %v1270 = vpop.f32.mrb[0].mxu0
      %1271 = vmatprep.mubr.bf16.mxu0 0
      %1272 = vmatmul.mubr.bf16.gmra.mrb[0].mxu0 %v793
      %v1273 = vpop.f32.mrb[0].mxu0
      %v1274 = vadd.f32 %v310, %v1273
      %v1275 = vpop.f32.mrb[0].mxu0
      %v1276 = vpop.f32.mrb[0].mxu0
      %v1277 = vadd.f32 %v310, %v1276
      %v1278 = vpop.f32.mrb[0].mxu0
      %1279 = vmatprep.mubr.bf16.mxu0 0
      %1280 = vmatmul.mubr.bf16.gmra.mrb[0].mxu0 %v796
      %v1281 = vpop.f32.mrb[0].mxu0
      %v1282 = vadd.f32 %v310, %v1281
      %v1283 = vpop.f32.mrb[0].mxu0
      %v1284 = vpop.f32.mrb[0].mxu0
      %v1285 = vadd.f32 %v310, %v1284
      %v1286 = vpop.f32.mrb[0].mxu0
      %1287 = vmatprep.mubr.bf16.mxu0 0
      %1288 = vmatmul.mubr.bf16.gmra.mrb[0].mxu0 %v799
      %v1289 = vpop.f32.mrb[0].mxu0
      %v1290 = vadd.f32 %v310, %v1289
      %v1291 = vpop.f32.mrb[0].mxu0
      %v1292 = vpop.f32.mrb[0].mxu0
      %v1293 = vadd.f32 %v310, %v1292
      %v1294 = vpop.f32.mrb[0].mxu0
      %1295 = vmatprep.mubr.bf16.mxu0 0
      %1296 = vmatmul.mubr.bf16.gmra.mrb[0].mxu0 %v802
      %v1297 = vpop.f32.mrb[0].mxu0
      %v1298 = vadd.f32 %v310, %v1297
      %v1299 = vpop.f32.mrb[0].mxu0
      %v1300 = vpop.f32.mrb[0].mxu0
      %v1301 = vadd.f32 %v310, %v1300
      %v1302 = vpop.f32.mrb[0].mxu0
      %1303 = vmatprep.mubr.bf16.mxu0 0
      %1304 = vmatmul.mubr.bf16.gmra.mrb[0].mxu0 %v805
      %v1305 = vpop.f32.mrb[0].mxu0
      %v1306 = vadd.f32 %v310, %v1305
      %v1307 = vpop.f32.mrb[0].mxu0
      %v1308 = vpop.f32.mrb[0].mxu0
      %v1309 = vadd.f32 %v310, %v1308
      %v1310 = vpop.f32.mrb[0].mxu0
      %1311 = vmatprep.mubr.bf16.mxu0 0
      %1312 = vmatmul.mubr.bf16.gmra.mrb[0].mxu0 %v808
      %v1313 = vpop.f32.mrb[0].mxu0
      %v1314 = vadd.f32 %v310, %v1313
      %v1315 = vpop.f32.mrb[0].mxu0
      %v1316 = vpop.f32.mrb[0].mxu0
      %v1317 = vadd.f32 %v310, %v1316
      %v1318 = vpop.f32.mrb[0].mxu0
      %1319 = vmatprep.mubr.bf16.mxu0 0
      %1320 = vmatmul.mubr.bf16.gmra.mrb[0].mxu0 %v811
      %v1321 = vpop.f32.mrb[0].mxu0
      %v1322 = vadd.f32 %v310, %v1321
      %v1323 = vpop.f32.mrb[0].mxu0
      %v1324 = vpop.f32.mrb[0].mxu0
      %v1325 = vadd.f32 %v310, %v1324
      %v1326 = vpop.f32.mrb[0].mxu0
      %1327 = vmatprep.mubr.bf16.mxu0 0
      %1328 = vmatmul.mubr.bf16.gmra.mrb[0].mxu0 %v814
      %v1329 = vpop.f32.mrb[0].mxu0
      %v1330 = vadd.f32 %v310, %v1329
      %v1331 = vpop.f32.mrb[0].mxu0
      %v1332 = vpop.f32.mrb[0].mxu0
      %v1333 = vadd.f32 %v310, %v1332
      %v1334 = vpop.f32.mrb[0].mxu0
      %1335 = vmatprep.mubr.bf16.mxu0 0
      %1336 = vmatmul.mubr.bf16.gmra.mrb[0].mxu0 %v817
      %v1337 = vpop.f32.mrb[0].mxu0
      %v1338 = vadd.f32 %v310, %v1337
      %v1339 = vpop.f32.mrb[0].mxu0
      %v1340 = vpop.f32.mrb[0].mxu0
      %v1341 = vadd.f32 %v310, %v1340
      %v1342 = vpop.f32.mrb[0].mxu0
      %1343 = vmatprep.mubr.bf16.mxu0 0
      %1344 = vmatmul.mubr.bf16.gmra.mrb[0].mxu0 %v820
      %v1345 = vpop.f32.mrb[0].mxu0
      %v1346 = vadd.f32 %v310, %v1345
      %v1347 = vpop.f32.mrb[0].mxu0
      %v1348 = vpop.f32.mrb[0].mxu0
      %v1349 = vadd.f32 %v310, %v1348
      %v1350 = vpop.f32.mrb[0].mxu0
      %1351 = vmatprep.mubr.bf16.mxu0 0
      %1352 = vmatmul.mubr.bf16.gmra.mrb[0].mxu0 %v823
      %v1353 = vpop.f32.mrb[0].mxu0
      %v1354 = vadd.f32 %v310, %v1353
      %v1355 = vpop.f32.mrb[0].mxu0
      %v1356 = vpop.f32.mrb[0].mxu0
      %v1357 = vadd.f32 %v310, %v1356
      %v1358 = vpop.f32.mrb[0].mxu0
      %1359 = vmatprep.mubr.bf16.mxu0 0
      %1360 = vmatmul.mubr.bf16.gmra.mrb[0].mxu0 %v826
      %v1361 = vpop.f32.mrb[0].mxu0
      %v1362 = vadd.f32 %v310, %v1361
      %v1363 = vpop.f32.mrb[0].mxu0
      %v1364 = vpop.f32.mrb[0].mxu0
      %v1365 = vadd.f32 %v310, %v1364
      %v1366 = vpop.f32.mrb[0].mxu0
      %1367 = vmatprep.mubr.bf16.mxu0 0
      %1368 = vmatmul.mubr.bf16.gmra.mrb[0].mxu0 %v829
      %v1369 = vpop.f32.mrb[0].mxu0
      %v1370 = vadd.f32 %v310, %v1369
      %v1371 = vpop.f32.mrb[0].mxu0
      %v1372 = vpop.f32.mrb[0].mxu0
      %v1373 = vadd.f32 %v310, %v1372
      %v1374 = vpop.f32.mrb[0].mxu0
      %1375 = vdwg.mxu0
      %vm1376 = vcmp.ge.f32.partialorder %v866, 0.0
      %vm1377 = vcmp.ge.f32.partialorder %v869, 0.0
      %vm1378 = vcmp.ge.f32.partialorder %v874, 0.0
      %vm1379 = vcmp.ge.f32.partialorder %v877, 0.0
      %vm1380 = vcmp.ge.f32.partialorder %v882, 0.0
      %vm1381 = vcmp.ge.f32.partialorder %v885, 0.0
      %vm1382 = vcmp.ge.f32.partialorder %v890, 0.0
      %vm1383 = vcmp.ge.f32.partialorder %v893, 0.0
      %vm1384 = vcmp.ge.f32.partialorder %v898, 0.0
      %vm1385 = vcmp.ge.f32.partialorder %v901, 0.0
      %vm1386 = vcmp.ge.f32.partialorder %v906, 0.0
      %vm1387 = vcmp.ge.f32.partialorder %v909, 0.0
      %vm1388 = vcmp.ge.f32.partialorder %v914, 0.0
      %vm1389 = vcmp.ge.f32.partialorder %v917, 0.0
      %vm1390 = vcmp.ge.f32.partialorder %v922, 0.0
      %vm1391 = vcmp.ge.f32.partialorder %v925, 0.0
      %vm1392 = vcmp.ge.f32.partialorder %v930, 0.0
      %vm1393 = vcmp.ge.f32.partialorder %v933, 0.0
      %vm1394 = vcmp.ge.f32.partialorder %v938, 0.0
      %vm1395 = vcmp.ge.f32.partialorder %v941, 0.0
      %vm1396 = vcmp.ge.f32.partialorder %v946, 0.0
      %vm1397 = vcmp.ge.f32.partialorder %v949, 0.0
      %vm1398 = vcmp.ge.f32.partialorder %v954, 0.0
      %vm1399 = vcmp.ge.f32.partialorder %v957, 0.0
      %vm1400 = vcmp.ge.f32.partialorder %v962, 0.0
      %vm1401 = vcmp.ge.f32.partialorder %v965, 0.0
      %vm1402 = vcmp.ge.f32.partialorder %v970, 0.0
      %vm1403 = vcmp.ge.f32.partialorder %v973, 0.0
      %vm1404 = vcmp.ge.f32.partialorder %v978, 0.0
      %vm1405 = vcmp.ge.f32.partialorder %v981, 0.0
      %vm1406 = vcmp.ge.f32.partialorder %v986, 0.0
      %vm1407 = vcmp.ge.f32.partialorder %v989, 0.0
      %vm1408 = vcmp.ge.f32.partialorder %v994, 0.0
      %vm1409 = vcmp.ge.f32.partialorder %v997, 0.0
      %vm1410 = vcmp.ge.f32.partialorder %v1002, 0.0
      %vm1411 = vcmp.ge.f32.partialorder %v1005, 0.0
      %vm1412 = vcmp.ge.f32.partialorder %v1010, 0.0
      %vm1413 = vcmp.ge.f32.partialorder %v1013, 0.0
      %vm1414 = vcmp.ge.f32.partialorder %v1018, 0.0
      %vm1415 = vcmp.ge.f32.partialorder %v1021, 0.0
      %vm1416 = vcmp.ge.f32.partialorder %v1026, 0.0
      %vm1417 = vcmp.ge.f32.partialorder %v1029, 0.0
      %vm1418 = vcmp.ge.f32.partialorder %v1034, 0.0
      %vm1419 = vcmp.ge.f32.partialorder %v1037, 0.0
      %vm1420 = vcmp.ge.f32.partialorder %v1042, 0.0
      %vm1421 = vcmp.ge.f32.partialorder %v1045, 0.0
      %vm1422 = vcmp.ge.f32.partialorder %v1050, 0.0
      %vm1423 = vcmp.ge.f32.partialorder %v1053, 0.0
      %vm1424 = vcmp.ge.f32.partialorder %v1058, 0.0
      %vm1425 = vcmp.ge.f32.partialorder %v1061, 0.0
      %vm1426 = vcmp.ge.f32.partialorder %v1066, 0.0
      %vm1427 = vcmp.ge.f32.partialorder %v1069, 0.0
      %vm1428 = vcmp.ge.f32.partialorder %v1074, 0.0
      %vm1429 = vcmp.ge.f32.partialorder %v1077, 0.0
      %vm1430 = vcmp.ge.f32.partialorder %v1082, 0.0
      %vm1431 = vcmp.ge.f32.partialorder %v1085, 0.0
      %vm1432 = vcmp.ge.f32.partialorder %v1090, 0.0
      %vm1433 = vcmp.ge.f32.partialorder %v1093, 0.0
      %vm1434 = vcmp.ge.f32.partialorder %v1098, 0.0
      %vm1435 = vcmp.ge.f32.partialorder %v1101, 0.0
      %vm1436 = vcmp.ge.f32.partialorder %v1106, 0.0
      %vm1437 = vcmp.ge.f32.partialorder %v1109, 0.0
      %vm1438 = vcmp.ge.f32.partialorder %v1114, 0.0
      %vm1439 = vcmp.ge.f32.partialorder %v1117, 0.0
      %vm1440 = vcmp.ge.f32.partialorder %v1122, 0.0
      %vm1441 = vcmp.ge.f32.partialorder %v1125, 0.0
      %vm1442 = vcmp.ge.f32.partialorder %v1130, 0.0
      %vm1443 = vcmp.ge.f32.partialorder %v1133, 0.0
      %vm1444 = vcmp.ge.f32.partialorder %v1138, 0.0
      %vm1445 = vcmp.ge.f32.partialorder %v1141, 0.0
      %vm1446 = vcmp.ge.f32.partialorder %v1146, 0.0
      %vm1447 = vcmp.ge.f32.partialorder %v1149, 0.0
      %vm1448 = vcmp.ge.f32.partialorder %v1154, 0.0
      %vm1449 = vcmp.ge.f32.partialorder %v1157, 0.0
      %vm1450 = vcmp.ge.f32.partialorder %v1162, 0.0
      %vm1451 = vcmp.ge.f32.partialorder %v1165, 0.0
      %vm1452 = vcmp.ge.f32.partialorder %v1170, 0.0
      %vm1453 = vcmp.ge.f32.partialorder %v1173, 0.0
      %vm1454 = vcmp.ge.f32.partialorder %v1178, 0.0
      %vm1455 = vcmp.ge.f32.partialorder %v1181, 0.0
      %vm1456 = vcmp.ge.f32.partialorder %v1186, 0.0
      %vm1457 = vcmp.ge.f32.partialorder %v1189, 0.0
      %vm1458 = vcmp.ge.f32.partialorder %v1194, 0.0
      %vm1459 = vcmp.ge.f32.partialorder %v1197, 0.0
      %vm1460 = vcmp.ge.f32.partialorder %v1202, 0.0
      %vm1461 = vcmp.ge.f32.partialorder %v1205, 0.0
      %vm1462 = vcmp.ge.f32.partialorder %v1210, 0.0
      %vm1463 = vcmp.ge.f32.partialorder %v1213, 0.0
      %vm1464 = vcmp.ge.f32.partialorder %v1218, 0.0
      %vm1465 = vcmp.ge.f32.partialorder %v1221, 0.0
      %vm1466 = vcmp.ge.f32.partialorder %v1226, 0.0
      %vm1467 = vcmp.ge.f32.partialorder %v1229, 0.0
      %vm1468 = vcmp.ge.f32.partialorder %v1234, 0.0
      %vm1469 = vcmp.ge.f32.partialorder %v1237, 0.0
      %vm1470 = vcmp.ge.f32.partialorder %v1242, 0.0
      %vm1471 = vcmp.ge.f32.partialorder %v1245, 0.0
      %vm1472 = vcmp.ge.f32.partialorder %v1250, 0.0
      %vm1473 = vcmp.ge.f32.partialorder %v1253, 0.0
      %vm1474 = vcmp.ge.f32.partialorder %v1258, 0.0
      %vm1475 = vcmp.ge.f32.partialorder %v1261, 0.0
      %vm1476 = vcmp.ge.f32.partialorder %v1266, 0.0
      %vm1477 = vcmp.ge.f32.partialorder %v1269, 0.0
      %vm1478 = vcmp.ge.f32.partialorder %v1274, 0.0
      %vm1479 = vcmp.ge.f32.partialorder %v1277, 0.0
      %vm1480 = vcmp.ge.f32.partialorder %v1282, 0.0
      %vm1481 = vcmp.ge.f32.partialorder %v1285, 0.0
      %vm1482 = vcmp.ge.f32.partialorder %v1290, 0.0
      %vm1483 = vcmp.ge.f32.partialorder %v1293, 0.0
      %vm1484 = vcmp.ge.f32.partialorder %v1298, 0.0
      %vm1485 = vcmp.ge.f32.partialorder %v1301, 0.0
      %vm1486 = vcmp.ge.f32.partialorder %v1306, 0.0
      %vm1487 = vcmp.ge.f32.partialorder %v1309, 0.0
      %vm1488 = vcmp.ge.f32.partialorder %v1314, 0.0
      %vm1489 = vcmp.ge.f32.partialorder %v1317, 0.0
      %vm1490 = vcmp.ge.f32.partialorder %v1322, 0.0
      %vm1491 = vcmp.ge.f32.partialorder %v1325, 0.0
      %vm1492 = vcmp.ge.f32.partialorder %v1330, 0.0
      %vm1493 = vcmp.ge.f32.partialorder %v1333, 0.0
      %vm1494 = vcmp.ge.f32.partialorder %v1338, 0.0
      %vm1495 = vcmp.ge.f32.partialorder %v1341, 0.0
      %vm1496 = vcmp.ge.f32.partialorder %v1346, 0.0
      %vm1497 = vcmp.ge.f32.partialorder %v1349, 0.0
      %vm1498 = vcmp.ge.f32.partialorder %v1354, 0.0
      %vm1499 = vcmp.ge.f32.partialorder %v1357, 0.0
      %vm1500 = vcmp.ge.f32.partialorder %v1362, 0.0
      %vm1501 = vcmp.ge.f32.partialorder %v1365, 0.0
      %vm1502 = vcmp.ge.f32.partialorder %v1370, 0.0
      %vm1503 = vcmp.ge.f32.partialorder %v1373, 0.0
      %v1504 = vmul.f32 %v866, 0.01
      %v1505 = vmul.f32 %v869, 0.01
      %v1506 = vmul.f32 %v874, 0.01
      %v1507 = vmul.f32 %v877, 0.01
      %v1508 = vmul.f32 %v882, 0.01
      %v1509 = vmul.f32 %v885, 0.01
      %v1510 = vmul.f32 %v890, 0.01
      %v1511 = vmul.f32 %v893, 0.01
      %v1512 = vmul.f32 %v898, 0.01
      %v1513 = vmul.f32 %v901, 0.01
      %v1514 = vmul.f32 %v906, 0.01
      %v1515 = vmul.f32 %v909, 0.01
      %v1516 = vmul.f32 %v914, 0.01
      %v1517 = vmul.f32 %v917, 0.01
      %v1518 = vmul.f32 %v922, 0.01
      %v1519 = vmul.f32 %v925, 0.01
      %v1520 = vmul.f32 %v930, 0.01
      %v1521 = vmul.f32 %v933, 0.01
      %v1522 = vmul.f32 %v938, 0.01
      %v1523 = vmul.f32 %v941, 0.01
      %v1524 = vmul.f32 %v946, 0.01
      %v1525 = vmul.f32 %v949, 0.01
      %v1526 = vmul.f32 %v954, 0.01
      %v1527 = vmul.f32 %v957, 0.01
      %v1528 = vmul.f32 %v962, 0.01
      %v1529 = vmul.f32 %v965, 0.01
      %v1530 = vmul.f32 %v970, 0.01
      %v1531 = vmul.f32 %v973, 0.01
      %v1532 = vmul.f32 %v978, 0.01
      %v1533 = vmul.f32 %v981, 0.01
      %v1534 = vmul.f32 %v986, 0.01
      %v1535 = vmul.f32 %v989, 0.01
      %v1536 = vmul.f32 %v994, 0.01
      %v1537 = vmul.f32 %v997, 0.01
      %v1538 = vmul.f32 %v1002, 0.01
      %v1539 = vmul.f32 %v1005, 0.01
      %v1540 = vmul.f32 %v1010, 0.01
      %v1541 = vmul.f32 %v1013, 0.01
      %v1542 = vmul.f32 %v1018, 0.01
      %v1543 = vmul.f32 %v1021, 0.01
      %v1544 = vmul.f32 %v1026, 0.01
      %v1545 = vmul.f32 %v1029, 0.01
      %v1546 = vmul.f32 %v1034, 0.01
      %v1547 = vmul.f32 %v1037, 0.01
      %v1548 = vmul.f32 %v1042, 0.01
      %v1549 = vmul.f32 %v1045, 0.01
      %v1550 = vmul.f32 %v1050, 0.01
      %v1551 = vmul.f32 %v1053, 0.01
      %v1552 = vmul.f32 %v1058, 0.01
      %v1553 = vmul.f32 %v1061, 0.01
      %v1554 = vmul.f32 %v1066, 0.01
      %v1555 = vmul.f32 %v1069, 0.01
      %v1556 = vmul.f32 %v1074, 0.01
      %v1557 = vmul.f32 %v1077, 0.01
      %v1558 = vmul.f32 %v1082, 0.01
      %v1559 = vmul.f32 %v1085, 0.01
      %v1560 = vmul.f32 %v1090, 0.01
      %v1561 = vmul.f32 %v1093, 0.01
      %v1562 = vmul.f32 %v1098, 0.01
      %v1563 = vmul.f32 %v1101, 0.01
      %v1564 = vmul.f32 %v1106, 0.01
      %v1565 = vmul.f32 %v1109, 0.01
      %v1566 = vmul.f32 %v1114, 0.01
      %v1567 = vmul.f32 %v1117, 0.01
      %v1568 = vmul.f32 %v1122, 0.01
      %v1569 = vmul.f32 %v1125, 0.01
      %v1570 = vmul.f32 %v1130, 0.01
      %v1571 = vmul.f32 %v1133, 0.01
      %v1572 = vmul.f32 %v1138, 0.01
      %v1573 = vmul.f32 %v1141, 0.01
      %v1574 = vmul.f32 %v1146, 0.01
      %v1575 = vmul.f32 %v1149, 0.01
      %v1576 = vmul.f32 %v1154, 0.01
      %v1577 = vmul.f32 %v1157, 0.01
      %v1578 = vmul.f32 %v1162, 0.01
      %v1579 = vmul.f32 %v1165, 0.01
      %v1580 = vmul.f32 %v1170, 0.01
      %v1581 = vmul.f32 %v1173, 0.01
      %v1582 = vmul.f32 %v1178, 0.01
      %v1583 = vmul.f32 %v1181, 0.01
      %v1584 = vmul.f32 %v1186, 0.01
      %v1585 = vmul.f32 %v1189, 0.01
      %v1586 = vmul.f32 %v1194, 0.01
      %v1587 = vmul.f32 %v1197, 0.01
      %v1588 = vmul.f32 %v1202, 0.01
      %v1589 = vmul.f32 %v1205, 0.01
      %v1590 = vmul.f32 %v1210, 0.01
      %v1591 = vmul.f32 %v1213, 0.01
      %v1592 = vmul.f32 %v1218, 0.01
      %v1593 = vmul.f32 %v1221, 0.01
      %v1594 = vmul.f32 %v1226, 0.01
      %v1595 = vmul.f32 %v1229, 0.01
      %v1596 = vmul.f32 %v1234, 0.01
      %v1597 = vmul.f32 %v1237, 0.01
      %v1598 = vmul.f32 %v1242, 0.01
      %v1599 = vmul.f32 %v1245, 0.01
      %v1600 = vmul.f32 %v1250, 0.01
      %v1601 = vmul.f32 %v1253, 0.01
      %v1602 = vmul.f32 %v1258, 0.01
      %v1603 = vmul.f32 %v1261, 0.01
      %v1604 = vmul.f32 %v1266, 0.01
      %v1605 = vmul.f32 %v1269, 0.01
      %v1606 = vmul.f32 %v1274, 0.01
      %v1607 = vmul.f32 %v1277, 0.01
      %v1608 = vmul.f32 %v1282, 0.01
      %v1609 = vmul.f32 %v1285, 0.01
      %v1610 = vmul.f32 %v1290, 0.01
      %v1611 = vmul.f32 %v1293, 0.01
      %v1612 = vmul.f32 %v1298, 0.01
      %v1613 = vmul.f32 %v1301, 0.01
      %v1614 = vmul.f32 %v1306, 0.01
      %v1615 = vmul.f32 %v1309, 0.01
      %v1616 = vmul.f32 %v1314, 0.01
      %v1617 = vmul.f32 %v1317, 0.01
      %v1618 = vmul.f32 %v1322, 0.01
      %v1619 = vmul.f32 %v1325, 0.01
      %v1620 = vmul.f32 %v1330, 0.01
      %v1621 = vmul.f32 %v1333, 0.01
      %v1622 = vmul.f32 %v1338, 0.01
      %v1623 = vmul.f32 %v1341, 0.01
      %v1624 = vmul.f32 %v1346, 0.01
      %v1625 = vmul.f32 %v1349, 0.01
      %v1626 = vmul.f32 %v1354, 0.01
      %v1627 = vmul.f32 %v1357, 0.01
      %v1628 = vmul.f32 %v1362, 0.01
      %v1629 = vmul.f32 %v1365, 0.01
      %v1630 = vmul.f32 %v1370, 0.01
      %v1631 = vmul.f32 %v1373, 0.01
      %v1632 = vsel %vm1376, %v866, %v1504
      %v1633 = vsel %vm1377, %v869, %v1505
      %v1634 = vsel %vm1378, %v874, %v1506
      %v1635 = vsel %vm1379, %v877, %v1507
      %v1636 = vsel %vm1380, %v882, %v1508
      %v1637 = vsel %vm1381, %v885, %v1509
      %v1638 = vsel %vm1382, %v890, %v1510
      %v1639 = vsel %vm1383, %v893, %v1511
      %v1640 = vsel %vm1384, %v898, %v1512
      %v1641 = vsel %vm1385, %v901, %v1513
      %v1642 = vsel %vm1386, %v906, %v1514
      %v1643 = vsel %vm1387, %v909, %v1515
      %v1644 = vsel %vm1388, %v914, %v1516
      %v1645 = vsel %vm1389, %v917, %v1517
      %v1646 = vsel %vm1390, %v922, %v1518
      %v1647 = vsel %vm1391, %v925, %v1519
      %v1648 = vsel %vm1392, %v930, %v1520
      %v1649 = vsel %vm1393, %v933, %v1521
      %v1650 = vsel %vm1394, %v938, %v1522
      %v1651 = vsel %vm1395, %v941, %v1523
      %v1652 = vsel %vm1396, %v946, %v1524
      %v1653 = vsel %vm1397, %v949, %v1525
      %v1654 = vsel %vm1398, %v954, %v1526
      %v1655 = vsel %vm1399, %v957, %v1527
      %v1656 = vsel %vm1400, %v962, %v1528
      %v1657 = vsel %vm1401, %v965, %v1529
      %v1658 = vsel %vm1402, %v970, %v1530
      %v1659 = vsel %vm1403, %v973, %v1531
      %v1660 = vsel %vm1404, %v978, %v1532
      %v1661 = vsel %vm1405, %v981, %v1533
      %v1662 = vsel %vm1406, %v986, %v1534
      %v1663 = vsel %vm1407, %v989, %v1535
      %v1664 = vsel %vm1408, %v994, %v1536
      %v1665 = vsel %vm1409, %v997, %v1537
      %v1666 = vsel %vm1410, %v1002, %v1538
      %v1667 = vsel %vm1411, %v1005, %v1539
      %v1668 = vsel %vm1412, %v1010, %v1540
      %v1669 = vsel %vm1413, %v1013, %v1541
      %v1670 = vsel %vm1414, %v1018, %v1542
      %v1671 = vsel %vm1415, %v1021, %v1543
      %v1672 = vsel %vm1416, %v1026, %v1544
      %v1673 = vsel %vm1417, %v1029, %v1545
      %v1674 = vsel %vm1418, %v1034, %v1546
      %v1675 = vsel %vm1419, %v1037, %v1547
      %v1676 = vsel %vm1420, %v1042, %v1548
      %v1677 = vsel %vm1421, %v1045, %v1549
      %v1678 = vsel %vm1422, %v1050, %v1550
      %v1679 = vsel %vm1423, %v1053, %v1551
      %v1680 = vsel %vm1424, %v1058, %v1552
      %v1681 = vsel %vm1425, %v1061, %v1553
      %v1682 = vsel %vm1426, %v1066, %v1554
      %v1683 = vsel %vm1427, %v1069, %v1555
      %v1684 = vsel %vm1428, %v1074, %v1556
      %v1685 = vsel %vm1429, %v1077, %v1557
      %v1686 = vsel %vm1430, %v1082, %v1558
      %v1687 = vsel %vm1431, %v1085, %v1559
      %v1688 = vsel %vm1432, %v1090, %v1560
      %v1689 = vsel %vm1433, %v1093, %v1561
      %v1690 = vsel %vm1434, %v1098, %v1562
      %v1691 = vsel %vm1435, %v1101, %v1563
      %v1692 = vsel %vm1436, %v1106, %v1564
      %v1693 = vsel %vm1437, %v1109, %v1565
      %v1694 = vsel %vm1438, %v1114, %v1566
      %v1695 = vsel %vm1439, %v1117, %v1567
      %v1696 = vsel %vm1440, %v1122, %v1568
      %v1697 = vsel %vm1441, %v1125, %v1569
      %v1698 = vsel %vm1442, %v1130, %v1570
      %v1699 = vsel %vm1443, %v1133, %v1571
      %v1700 = vsel %vm1444, %v1138, %v1572
      %v1701 = vsel %vm1445, %v1141, %v1573
      %v1702 = vsel %vm1446, %v1146, %v1574
      %v1703 = vsel %vm1447, %v1149, %v1575
      %v1704 = vsel %vm1448, %v1154, %v1576
      %v1705 = vsel %vm1449, %v1157, %v1577
      %v1706 = vsel %vm1450, %v1162, %v1578
      %v1707 = vsel %vm1451, %v1165, %v1579
      %v1708 = vsel %vm1452, %v1170, %v1580
      %v1709 = vsel %vm1453, %v1173, %v1581
      %v1710 = vsel %vm1454, %v1178, %v1582
      %v1711 = vsel %vm1455, %v1181, %v1583
      %v1712 = vsel %vm1456, %v1186, %v1584
      %v1713 = vsel %vm1457, %v1189, %v1585
      %v1714 = vsel %vm1458, %v1194, %v1586
      %v1715 = vsel %vm1459, %v1197, %v1587
      %v1716 = vsel %vm1460, %v1202, %v1588
      %v1717 = vsel %vm1461, %v1205, %v1589
      %v1718 = vsel %vm1462, %v1210, %v1590
      %v1719 = vsel %vm1463, %v1213, %v1591
      %v1720 = vsel %vm1464, %v1218, %v1592
      %v1721 = vsel %vm1465, %v1221, %v1593
      %v1722 = vsel %vm1466, %v1226, %v1594
      %v1723 = vsel %vm1467, %v1229, %v1595
      %v1724 = vsel %vm1468, %v1234, %v1596
      %v1725 = vsel %vm1469, %v1237, %v1597
      %v1726 = vsel %vm1470, %v1242, %v1598
      %v1727 = vsel %vm1471, %v1245, %v1599
      %v1728 = vsel %vm1472, %v1250, %v1600
      %v1729 = vsel %vm1473, %v1253, %v1601
      %v1730 = vsel %vm1474, %v1258, %v1602
      %v1731 = vsel %vm1475, %v1261, %v1603
      %v1732 = vsel %vm1476, %v1266, %v1604
      %v1733 = vsel %vm1477, %v1269, %v1605
      %v1734 = vsel %vm1478, %v1274, %v1606
      %v1735 = vsel %vm1479, %v1277, %v1607
      %v1736 = vsel %vm1480, %v1282, %v1608
      %v1737 = vsel %vm1481, %v1285, %v1609
      %v1738 = vsel %vm1482, %v1290, %v1610
      %v1739 = vsel %vm1483, %v1293, %v1611
      %v1740 = vsel %vm1484, %v1298, %v1612
      %v1741 = vsel %vm1485, %v1301, %v1613
      %v1742 = vsel %vm1486, %v1306, %v1614
      %v1743 = vsel %vm1487, %v1309, %v1615
      %v1744 = vsel %vm1488, %v1314, %v1616
      %v1745 = vsel %vm1489, %v1317, %v1617
      %v1746 = vsel %vm1490, %v1322, %v1618
      %v1747 = vsel %vm1491, %v1325, %v1619
      %v1748 = vsel %vm1492, %v1330, %v1620
      %v1749 = vsel %vm1493, %v1333, %v1621
      %v1750 = vsel %vm1494, %v1338, %v1622
      %v1751 = vsel %vm1495, %v1341, %v1623
      %v1752 = vsel %vm1496, %v1346, %v1624
      %v1753 = vsel %vm1497, %v1349, %v1625
      %v1754 = vsel %vm1498, %v1354, %v1626
      %v1755 = vsel %vm1499, %v1357, %v1627
      %v1756 = vsel %vm1500, %v1362, %v1628
      %v1757 = vsel %vm1501, %v1365, %v1629
      %v1758 = vsel %vm1502, %v1370, %v1630
      %v1759 = vsel %vm1503, %v1373, %v1631
      %v1760 = vpack.c.bf16 %v1633, %v1632
      %v1761 = vpack.c.bf16 %v1635, %v1634
      %v1762 = vpack.c.bf16 %v1637, %v1636
      %v1763 = vpack.c.bf16 %v1639, %v1638
      %v1764 = vpack.c.bf16 %v1641, %v1640
      %v1765 = vpack.c.bf16 %v1643, %v1642
      %v1766 = vpack.c.bf16 %v1645, %v1644
      %v1767 = vpack.c.bf16 %v1647, %v1646
      %v1768 = vpack.c.bf16 %v1649, %v1648
      %v1769 = vpack.c.bf16 %v1651, %v1650
      %v1770 = vpack.c.bf16 %v1653, %v1652
      %v1771 = vpack.c.bf16 %v1655, %v1654
      %v1772 = vpack.c.bf16 %v1657, %v1656
      %v1773 = vpack.c.bf16 %v1659, %v1658
      %v1774 = vpack.c.bf16 %v1661, %v1660
      %v1775 = vpack.c.bf16 %v1663, %v1662
      %v1776 = vpack.c.bf16 %v1665, %v1664
      %v1777 = vpack.c.bf16 %v1667, %v1666
      %v1778 = vpack.c.bf16 %v1669, %v1668
      %v1779 = vpack.c.bf16 %v1671, %v1670
      %v1780 = vpack.c.bf16 %v1673, %v1672
      %v1781 = vpack.c.bf16 %v1675, %v1674
      %v1782 = vpack.c.bf16 %v1677, %v1676
      %v1783 = vpack.c.bf16 %v1679, %v1678
      %v1784 = vpack.c.bf16 %v1681, %v1680
      %v1785 = vpack.c.bf16 %v1683, %v1682
      %v1786 = vpack.c.bf16 %v1685, %v1684
      %v1787 = vpack.c.bf16 %v1687, %v1686
      %v1788 = vpack.c.bf16 %v1689, %v1688
      %v1789 = vpack.c.bf16 %v1691, %v1690
      %v1790 = vpack.c.bf16 %v1693, %v1692
      %v1791 = vpack.c.bf16 %v1695, %v1694
      %v1792 = vpack.c.bf16 %v1697, %v1696
      %v1793 = vpack.c.bf16 %v1699, %v1698
      %v1794 = vpack.c.bf16 %v1701, %v1700
      %v1795 = vpack.c.bf16 %v1703, %v1702
      %v1796 = vpack.c.bf16 %v1705, %v1704
      %v1797 = vpack.c.bf16 %v1707, %v1706
      %v1798 = vpack.c.bf16 %v1709, %v1708
      %v1799 = vpack.c.bf16 %v1711, %v1710
      %v1800 = vpack.c.bf16 %v1713, %v1712
      %v1801 = vpack.c.bf16 %v1715, %v1714
      %v1802 = vpack.c.bf16 %v1717, %v1716
      %v1803 = vpack.c.bf16 %v1719, %v1718
      %v1804 = vpack.c.bf16 %v1721, %v1720
      %v1805 = vpack.c.bf16 %v1723, %v1722
      %v1806 = vpack.c.bf16 %v1725, %v1724
      %v1807 = vpack.c.bf16 %v1727, %v1726
      %v1808 = vpack.c.bf16 %v1729, %v1728
      %v1809 = vpack.c.bf16 %v1731, %v1730
      %v1810 = vpack.c.bf16 %v1733, %v1732
      %v1811 = vpack.c.bf16 %v1735, %v1734
      %v1812 = vpack.c.bf16 %v1737, %v1736
      %v1813 = vpack.c.bf16 %v1739, %v1738
      %v1814 = vpack.c.bf16 %v1741, %v1740
      %v1815 = vpack.c.bf16 %v1743, %v1742
      %v1816 = vpack.c.bf16 %v1745, %v1744
      %v1817 = vpack.c.bf16 %v1747, %v1746
      %v1818 = vpack.c.bf16 %v1749, %v1748
      %v1819 = vpack.c.bf16 %v1751, %v1750
      %v1820 = vpack.c.bf16 %v1753, %v1752
      %v1821 = vpack.c.bf16 %v1755, %v1754
      %v1822 = vpack.c.bf16 %v1757, %v1756
      %v1823 = vpack.c.bf16 %v1759, %v1758
      %v1888 = vunpack.c.l.b16 %v1760
      %v1889 = vunpack.c.h.b16 %v1760
      %v1890 = vunpack.c.l.b16 %v1761
      %v1891 = vunpack.c.h.b16 %v1761
      %v1892 = vunpack.c.l.b16 %v1762
      %v1893 = vunpack.c.h.b16 %v1762
      %v1894 = vunpack.c.l.b16 %v1763
      %v1895 = vunpack.c.h.b16 %v1763
      %v1896 = vunpack.c.l.b16 %v1764
      %v1897 = vunpack.c.h.b16 %v1764
      %v1898 = vunpack.c.l.b16 %v1765
      %v1899 = vunpack.c.h.b16 %v1765
      %v1900 = vunpack.c.l.b16 %v1766
      %v1901 = vunpack.c.h.b16 %v1766
      %v1902 = vunpack.c.l.b16 %v1767
      %v1903 = vunpack.c.h.b16 %v1767
      %v1904 = vunpack.c.l.b16 %v1768
      %v1905 = vunpack.c.h.b16 %v1768
      %v1906 = vunpack.c.l.b16 %v1769
      %v1907 = vunpack.c.h.b16 %v1769
      %v1908 = vunpack.c.l.b16 %v1770
      %v1909 = vunpack.c.h.b16 %v1770
      %v1910 = vunpack.c.l.b16 %v1771
      %v1911 = vunpack.c.h.b16 %v1771
      %v1912 = vunpack.c.l.b16 %v1772
      %v1913 = vunpack.c.h.b16 %v1772
      %v1914 = vunpack.c.l.b16 %v1773
      %v1915 = vunpack.c.h.b16 %v1773
      %v1916 = vunpack.c.l.b16 %v1774
      %v1917 = vunpack.c.h.b16 %v1774
      %v1918 = vunpack.c.l.b16 %v1775
      %v1919 = vunpack.c.h.b16 %v1775
      %v1920 = vunpack.c.l.b16 %v1776
      %v1921 = vunpack.c.h.b16 %v1776
      %v1922 = vunpack.c.l.b16 %v1777
      %v1923 = vunpack.c.h.b16 %v1777
      %v1924 = vunpack.c.l.b16 %v1778
      %v1925 = vunpack.c.h.b16 %v1778
      %v1926 = vunpack.c.l.b16 %v1779
      %v1927 = vunpack.c.h.b16 %v1779
      %v1928 = vunpack.c.l.b16 %v1780
      %v1929 = vunpack.c.h.b16 %v1780
      %v1930 = vunpack.c.l.b16 %v1781
      %v1931 = vunpack.c.h.b16 %v1781
      %v1932 = vunpack.c.l.b16 %v1782
      %v1933 = vunpack.c.h.b16 %v1782
      %v1934 = vunpack.c.l.b16 %v1783
      %v1935 = vunpack.c.h.b16 %v1783
      %v1936 = vunpack.c.l.b16 %v1784
      %v1937 = vunpack.c.h.b16 %v1784
      %v1938 = vunpack.c.l.b16 %v1785
      %v1939 = vunpack.c.h.b16 %v1785
      %v1940 = vunpack.c.l.b16 %v1786
      %v1941 = vunpack.c.h.b16 %v1786
      %v1942 = vunpack.c.l.b16 %v1787
      %v1943 = vunpack.c.h.b16 %v1787
      %v1944 = vunpack.c.l.b16 %v1788
      %v1945 = vunpack.c.h.b16 %v1788
      %v1946 = vunpack.c.l.b16 %v1789
      %v1947 = vunpack.c.h.b16 %v1789
      %v1948 = vunpack.c.l.b16 %v1790
      %v1949 = vunpack.c.h.b16 %v1790
      %v1950 = vunpack.c.l.b16 %v1791
      %v1951 = vunpack.c.h.b16 %v1791
      %v1952 = vunpack.c.l.b16 %v1792
      %v1953 = vunpack.c.h.b16 %v1792
      %v1954 = vunpack.c.l.b16 %v1793
      %v1955 = vunpack.c.h.b16 %v1793
      %v1956 = vunpack.c.l.b16 %v1794
      %v1957 = vunpack.c.h.b16 %v1794
      %v1958 = vunpack.c.l.b16 %v1795
      %v1959 = vunpack.c.h.b16 %v1795
      %v1960 = vunpack.c.l.b16 %v1796
      %v1961 = vunpack.c.h.b16 %v1796
      %v1962 = vunpack.c.l.b16 %v1797
      %v1963 = vunpack.c.h.b16 %v1797
      %v1964 = vunpack.c.l.b16 %v1798
      %v1965 = vunpack.c.h.b16 %v1798
      %v1966 = vunpack.c.l.b16 %v1799
      %v1967 = vunpack.c.h.b16 %v1799
      %v1968 = vunpack.c.l.b16 %v1800
      %v1969 = vunpack.c.h.b16 %v1800
      %v1970 = vunpack.c.l.b16 %v1801
      %v1971 = vunpack.c.h.b16 %v1801
      %v1972 = vunpack.c.l.b16 %v1802
      %v1973 = vunpack.c.h.b16 %v1802
      %v1974 = vunpack.c.l.b16 %v1803
      %v1975 = vunpack.c.h.b16 %v1803
      %v1976 = vunpack.c.l.b16 %v1804
      %v1977 = vunpack.c.h.b16 %v1804
      %v1978 = vunpack.c.l.b16 %v1805
      %v1979 = vunpack.c.h.b16 %v1805
      %v1980 = vunpack.c.l.b16 %v1806
      %v1981 = vunpack.c.h.b16 %v1806
      %v1982 = vunpack.c.l.b16 %v1807
      %v1983 = vunpack.c.h.b16 %v1807
      %v1984 = vunpack.c.l.b16 %v1808
      %v1985 = vunpack.c.h.b16 %v1808
      %v1986 = vunpack.c.l.b16 %v1809
      %v1987 = vunpack.c.h.b16 %v1809
      %v1988 = vunpack.c.l.b16 %v1810
      %v1989 = vunpack.c.h.b16 %v1810
      %v1990 = vunpack.c.l.b16 %v1811
      %v1991 = vunpack.c.h.b16 %v1811
      %v1992 = vunpack.c.l.b16 %v1812
      %v1993 = vunpack.c.h.b16 %v1812
      %v1994 = vunpack.c.l.b16 %v1813
      %v1995 = vunpack.c.h.b16 %v1813
      %v1996 = vunpack.c.l.b16 %v1814
      %v1997 = vunpack.c.h.b16 %v1814
      %v1998 = vunpack.c.l.b16 %v1815
      %v1999 = vunpack.c.h.b16 %v1815
      %v2000 = vunpack.c.l.b16 %v1816
      %v2001 = vunpack.c.h.b16 %v1816
      %v2002 = vunpack.c.l.b16 %v1817
      %v2003 = vunpack.c.h.b16 %v1817
      %v2004 = vunpack.c.l.b16 %v1818
      %v2005 = vunpack.c.h.b16 %v1818
      %v2006 = vunpack.c.l.b16 %v1819
      %v2007 = vunpack.c.h.b16 %v1819
      %v2008 = vunpack.c.l.b16 %v1820
      %v2009 = vunpack.c.h.b16 %v1820
      %v2010 = vunpack.c.l.b16 %v1821
      %v2011 = vunpack.c.h.b16 %v1821
      %v2012 = vunpack.c.l.b16 %v1822
      %v2013 = vunpack.c.h.b16 %v1822
      %v2014 = vunpack.c.l.b16 %v1823
      %v2015 = vunpack.c.h.b16 %v1823
      %v2016 = vpack.c.b16 %v1888, %v1888
      %v2017 = vpack.c.b16 %v1889, %v1889
      %v2018 = vpack.c.b16 %v1890, %v1890
      %v2019 = vpack.c.b16 %v1891, %v1891
      %v2020 = vpack.c.b16 %v1892, %v1892
      %v2021 = vpack.c.b16 %v1893, %v1893
      %v2022 = vpack.c.b16 %v1894, %v1894
      %v2023 = vpack.c.b16 %v1895, %v1895
      %v2024 = vpack.c.b16 %v1896, %v1896
      %v2025 = vpack.c.b16 %v1897, %v1897
      %v2026 = vpack.c.b16 %v1898, %v1898
      %v2027 = vpack.c.b16 %v1899, %v1899
      %v2028 = vpack.c.b16 %v1900, %v1900
      %v2029 = vpack.c.b16 %v1901, %v1901
      %v2030 = vpack.c.b16 %v1902, %v1902
      %v2031 = vpack.c.b16 %v1903, %v1903
      %v2032 = vpack.c.b16 %v1904, %v1904
      %v2033 = vpack.c.b16 %v1905, %v1905
      %v2034 = vpack.c.b16 %v1906, %v1906
      %v2035 = vpack.c.b16 %v1907, %v1907
      %v2036 = vpack.c.b16 %v1908, %v1908
      %v2037 = vpack.c.b16 %v1909, %v1909
      %v2038 = vpack.c.b16 %v1910, %v1910
      %v2039 = vpack.c.b16 %v1911, %v1911
      %v2040 = vpack.c.b16 %v1912, %v1912
      %v2041 = vpack.c.b16 %v1913, %v1913
      %v2042 = vpack.c.b16 %v1914, %v1914
      %v2043 = vpack.c.b16 %v1915, %v1915
      %v2044 = vpack.c.b16 %v1916, %v1916
      %v2045 = vpack.c.b16 %v1917, %v1917
      %v2046 = vpack.c.b16 %v1918, %v1918
      %v2047 = vpack.c.b16 %v1919, %v1919
      %v2048 = vpack.c.b16 %v1920, %v1920
      %v2049 = vpack.c.b16 %v1921, %v1921
      %v2050 = vpack.c.b16 %v1922, %v1922
      %v2051 = vpack.c.b16 %v1923, %v1923
      %v2052 = vpack.c.b16 %v1924, %v1924
      %v2053 = vpack.c.b16 %v1925, %v1925
      %v2054 = vpack.c.b16 %v1926, %v1926
      %v2055 = vpack.c.b16 %v1927, %v1927
      %v2056 = vpack.c.b16 %v1928, %v1928
      %v2057 = vpack.c.b16 %v1929, %v1929
      %v2058 = vpack.c.b16 %v1930, %v1930
      %v2059 = vpack.c.b16 %v1931, %v1931
      %v2060 = vpack.c.b16 %v1932, %v1932
      %v2061 = vpack.c.b16 %v1933, %v1933
      %v2062 = vpack.c.b16 %v1934, %v1934
      %v2063 = vpack.c.b16 %v1935, %v1935
      %v2064 = vpack.c.b16 %v1936, %v1936
      %v2065 = vpack.c.b16 %v1937, %v1937
      %v2066 = vpack.c.b16 %v1938, %v1938
      %v2067 = vpack.c.b16 %v1939, %v1939
      %v2068 = vpack.c.b16 %v1940, %v1940
      %v2069 = vpack.c.b16 %v1941, %v1941
      %v2070 = vpack.c.b16 %v1942, %v1942
      %v2071 = vpack.c.b16 %v1943, %v1943
      %v2072 = vpack.c.b16 %v1944, %v1944
      %v2073 = vpack.c.b16 %v1945, %v1945
      %v2074 = vpack.c.b16 %v1946, %v1946
      %v2075 = vpack.c.b16 %v1947, %v1947
      %v2076 = vpack.c.b16 %v1948, %v1948
      %v2077 = vpack.c.b16 %v1949, %v1949
      %v2078 = vpack.c.b16 %v1950, %v1950
      %v2079 = vpack.c.b16 %v1951, %v1951
      %v2080 = vpack.c.b16 %v1952, %v1952
      %v2081 = vpack.c.b16 %v1953, %v1953
      %v2082 = vpack.c.b16 %v1954, %v1954
      %v2083 = vpack.c.b16 %v1955, %v1955
      %v2084 = vpack.c.b16 %v1956, %v1956
      %v2085 = vpack.c.b16 %v1957, %v1957
      %v2086 = vpack.c.b16 %v1958, %v1958
      %v2087 = vpack.c.b16 %v1959, %v1959
      %v2088 = vpack.c.b16 %v1960, %v1960
      %v2089 = vpack.c.b16 %v1961, %v1961
      %v2090 = vpack.c.b16 %v1962, %v1962
      %v2091 = vpack.c.b16 %v1963, %v1963
      %v2092 = vpack.c.b16 %v1964, %v1964
      %v2093 = vpack.c.b16 %v1965, %v1965
      %v2094 = vpack.c.b16 %v1966, %v1966
      %v2095 = vpack.c.b16 %v1967, %v1967
      %v2096 = vpack.c.b16 %v1968, %v1968
      %v2097 = vpack.c.b16 %v1969, %v1969
      %v2098 = vpack.c.b16 %v1970, %v1970
      %v2099 = vpack.c.b16 %v1971, %v1971
      %v2100 = vpack.c.b16 %v1972, %v1972
      %v2101 = vpack.c.b16 %v1973, %v1973
      %v2102 = vpack.c.b16 %v1974, %v1974
      %v2103 = vpack.c.b16 %v1975, %v1975
      %v2104 = vpack.c.b16 %v1976, %v1976
      %v2105 = vpack.c.b16 %v1977, %v1977
      %v2106 = vpack.c.b16 %v1978, %v1978
      %v2107 = vpack.c.b16 %v1979, %v1979
      %v2108 = vpack.c.b16 %v1980, %v1980
      %v2109 = vpack.c.b16 %v1981, %v1981
      %v2110 = vpack.c.b16 %v1982, %v1982
      %v2111 = vpack.c.b16 %v1983, %v1983
      %v2112 = vpack.c.b16 %v1984, %v1984
      %v2113 = vpack.c.b16 %v1985, %v1985
      %v2114 = vpack.c.b16 %v1986, %v1986
      %v2115 = vpack.c.b16 %v1987, %v1987
      %v2116 = vpack.c.b16 %v1988, %v1988
      %v2117 = vpack.c.b16 %v1989, %v1989
      %v2118 = vpack.c.b16 %v1990, %v1990
      %v2119 = vpack.c.b16 %v1991, %v1991
      %v2120 = vpack.c.b16 %v1992, %v1992
      %v2121 = vpack.c.b16 %v1993, %v1993
      %v2122 = vpack.c.b16 %v1994, %v1994
      %v2123 = vpack.c.b16 %v1995, %v1995
      %v2124 = vpack.c.b16 %v1996, %v1996
      %v2125 = vpack.c.b16 %v1997, %v1997
      %v2126 = vpack.c.b16 %v1998, %v1998
      %v2127 = vpack.c.b16 %v1999, %v1999
      %v2128 = vpack.c.b16 %v2000, %v2000
      %v2129 = vpack.c.b16 %v2001, %v2001
      %v2130 = vpack.c.b16 %v2002, %v2002
      %v2131 = vpack.c.b16 %v2003, %v2003
      %v2132 = vpack.c.b16 %v2004, %v2004
      %v2133 = vpack.c.b16 %v2005, %v2005
      %v2134 = vpack.c.b16 %v2006, %v2006
      %v2135 = vpack.c.b16 %v2007, %v2007
      %v2136 = vpack.c.b16 %v2008, %v2008
      %v2137 = vpack.c.b16 %v2009, %v2009
      %v2138 = vpack.c.b16 %v2010, %v2010
      %v2139 = vpack.c.b16 %v2011, %v2011
      %v2140 = vpack.c.b16 %v2012, %v2012
      %v2141 = vpack.c.b16 %v2013, %v2013
      %v2142 = vpack.c.b16 %v2014, %v2014
      %v2143 = vpack.c.b16 %v2015, %v2015
      %vm2272 = vcmask 27648
      %2273 = vst.msk [vmem:[%s172] sm:$0xf] %vm2272, %v2016
      %2274 = vst.msk [vmem:[%s172 + $0x4] sm:$0xf] %vm2272, %v2017
      %2275 = vst.msk [vmem:[%s172 + $0x8] sm:$0xf] %vm2272, %v2018
      %2276 = vst.msk [vmem:[%s172 + $0xc] sm:$0xf] %vm2272, %v2019
      %2277 = vst.msk [vmem:[%s172 + $0x10] sm:$0xf] %vm2272, %v2020
      %2278 = vst.msk [vmem:[%s172 + $0x14] sm:$0xf] %vm2272, %v2021
      %2279 = vst.msk [vmem:[%s172 + $0x18] sm:$0xf] %vm2272, %v2022
      %2280 = vst.msk [vmem:[%s172 + $0x1c] sm:$0xf] %vm2272, %v2023
      %2281 = vst.msk [vmem:[%s172 + $0x20] sm:$0xf] %vm2272, %v2024
      %2282 = vst.msk [vmem:[%s172 + $0x24] sm:$0xf] %vm2272, %v2025
      %2283 = vst.msk [vmem:[%s172 + $0x28] sm:$0xf] %vm2272, %v2026
      %2284 = vst.msk [vmem:[%s172 + $0x2c] sm:$0xf] %vm2272, %v2027
      %2285 = vst.msk [vmem:[%s172 + $0x30] sm:$0xf] %vm2272, %v2028
      %2286 = vst.msk [vmem:[%s172 + $0x34] sm:$0xf] %vm2272, %v2029
      %2287 = vst.msk [vmem:[%s172 + $0x38] sm:$0xf] %vm2272, %v2030
      %2288 = vst.msk [vmem:[%s172 + $0x3c] sm:$0xf] %vm2272, %v2031
      %2289 = vst.msk [vmem:[%s172 + $0x40] sm:$0xf] %vm2272, %v2032
      %2290 = vst.msk [vmem:[%s172 + $0x44] sm:$0xf] %vm2272, %v2033
      %2291 = vst.msk [vmem:[%s172 + $0x48] sm:$0xf] %vm2272, %v2034
      %2292 = vst.msk [vmem:[%s172 + $0x4c] sm:$0xf] %vm2272, %v2035
      %2293 = vst.msk [vmem:[%s172 + $0x50] sm:$0xf] %vm2272, %v2036
      %2294 = vst.msk [vmem:[%s172 + $0x54] sm:$0xf] %vm2272, %v2037
      %2295 = vst.msk [vmem:[%s172 + $0x58] sm:$0xf] %vm2272, %v2038
      %2296 = vst.msk [vmem:[%s172 + $0x5c] sm:$0xf] %vm2272, %v2039
      %2297 = vst.msk [vmem:[%s172 + $0x60] sm:$0xf] %vm2272, %v2040
      %2298 = vst.msk [vmem:[%s172 + $0x64] sm:$0xf] %vm2272, %v2041
      %2299 = vst.msk [vmem:[%s172 + $0x68] sm:$0xf] %vm2272, %v2042
      %2300 = vst.msk [vmem:[%s172 + $0x6c] sm:$0xf] %vm2272, %v2043
      %2301 = vst.msk [vmem:[%s172 + $0x70] sm:$0xf] %vm2272, %v2044
      %2302 = vst.msk [vmem:[%s172 + $0x74] sm:$0xf] %vm2272, %v2045
      %2303 = vst.msk [vmem:[%s172 + $0x78] sm:$0xf] %vm2272, %v2046
      %2304 = vst.msk [vmem:[%s172 + $0x7c] sm:$0xf] %vm2272, %v2047
      %2305 = vst.msk [vmem:[%s172 + $0x80] sm:$0xf] %vm2272, %v2048
      %2306 = vst.msk [vmem:[%s172 + $0x84] sm:$0xf] %vm2272, %v2049
      %2307 = vst.msk [vmem:[%s172 + $0x88] sm:$0xf] %vm2272, %v2050
      %2308 = vst.msk [vmem:[%s172 + $0x8c] sm:$0xf] %vm2272, %v2051
      %2309 = vst.msk [vmem:[%s172 + $0x90] sm:$0xf] %vm2272, %v2052
      %2310 = vst.msk [vmem:[%s172 + $0x94] sm:$0xf] %vm2272, %v2053
      %2311 = vst.msk [vmem:[%s172 + $0x98] sm:$0xf] %vm2272, %v2054
      %2312 = vst.msk [vmem:[%s172 + $0x9c] sm:$0xf] %vm2272, %v2055
      %2313 = vst.msk [vmem:[%s172 + $0xa0] sm:$0xf] %vm2272, %v2056
      %2314 = vst.msk [vmem:[%s172 + $0xa4] sm:$0xf] %vm2272, %v2057
      %2315 = vst.msk [vmem:[%s172 + $0xa8] sm:$0xf] %vm2272, %v2058
      %2316 = vst.msk [vmem:[%s172 + $0xac] sm:$0xf] %vm2272, %v2059
      %2317 = vst.msk [vmem:[%s172 + $0xb0] sm:$0xf] %vm2272, %v2060
      %2318 = vst.msk [vmem:[%s172 + $0xb4] sm:$0xf] %vm2272, %v2061
      %2319 = vst.msk [vmem:[%s172 + $0xb8] sm:$0xf] %vm2272, %v2062
      %2320 = vst.msk [vmem:[%s172 + $0xbc] sm:$0xf] %vm2272, %v2063
      %2321 = vst.msk [vmem:[%s172 + $0xc0] sm:$0xf] %vm2272, %v2064
      %2322 = vst.msk [vmem:[%s172 + $0xc4] sm:$0xf] %vm2272, %v2065
      %2323 = vst.msk [vmem:[%s172 + $0xc8] sm:$0xf] %vm2272, %v2066
      %2324 = vst.msk [vmem:[%s172 + $0xcc] sm:$0xf] %vm2272, %v2067
      %2325 = vst.msk [vmem:[%s172 + $0xd0] sm:$0xf] %vm2272, %v2068
      %2326 = vst.msk [vmem:[%s172 + $0xd4] sm:$0xf] %vm2272, %v2069
      %2327 = vst.msk [vmem:[%s172 + $0xd8] sm:$0xf] %vm2272, %v2070
      %2328 = vst.msk [vmem:[%s172 + $0xdc] sm:$0xf] %vm2272, %v2071
      %2329 = vst.msk [vmem:[%s172 + $0xe0] sm:$0xf] %vm2272, %v2072
      %2330 = vst.msk [vmem:[%s172 + $0xe4] sm:$0xf] %vm2272, %v2073
      %2331 = vst.msk [vmem:[%s172 + $0xe8] sm:$0xf] %vm2272, %v2074
      %2332 = vst.msk [vmem:[%s172 + $0xec] sm:$0xf] %vm2272, %v2075
      %2333 = vst.msk [vmem:[%s172 + $0xf0] sm:$0xf] %vm2272, %v2076
      %2334 = vst.msk [vmem:[%s172 + $0xf4] sm:$0xf] %vm2272, %v2077
      %2335 = vst.msk [vmem:[%s172 + $0xf8] sm:$0xf] %vm2272, %v2078
      %2336 = vst.msk [vmem:[%s172 + $0xfc] sm:$0xf] %vm2272, %v2079
      %2337 = vst.msk [vmem:[%s172 + $0x100] sm:$0xf] %vm2272, %v2080
      %2338 = vst.msk [vmem:[%s172 + $0x104] sm:$0xf] %vm2272, %v2081
      %2339 = vst.msk [vmem:[%s172 + $0x108] sm:$0xf] %vm2272, %v2082
      %2340 = vst.msk [vmem:[%s172 + $0x10c] sm:$0xf] %vm2272, %v2083
      %2341 = vst.msk [vmem:[%s172 + $0x110] sm:$0xf] %vm2272, %v2084
      %2342 = vst.msk [vmem:[%s172 + $0x114] sm:$0xf] %vm2272, %v2085
      %2343 = vst.msk [vmem:[%s172 + $0x118] sm:$0xf] %vm2272, %v2086
      %2344 = vst.msk [vmem:[%s172 + $0x11c] sm:$0xf] %vm2272, %v2087
      %2345 = vst.msk [vmem:[%s172 + $0x120] sm:$0xf] %vm2272, %v2088
      %2346 = vst.msk [vmem:[%s172 + $0x124] sm:$0xf] %vm2272, %v2089
      %2347 = vst.msk [vmem:[%s172 + $0x128] sm:$0xf] %vm2272, %v2090
      %2348 = vst.msk [vmem:[%s172 + $0x12c] sm:$0xf] %vm2272, %v2091
      %2349 = vst.msk [vmem:[%s172 + $0x130] sm:$0xf] %vm2272, %v2092
      %2350 = vst.msk [vmem:[%s172 + $0x134] sm:$0xf] %vm2272, %v2093
      %2351 = vst.msk [vmem:[%s172 + $0x138] sm:$0xf] %vm2272, %v2094
      %2352 = vst.msk [vmem:[%s172 + $0x13c] sm:$0xf] %vm2272, %v2095
      %2353 = vst.msk [vmem:[%s172 + $0x140] sm:$0xf] %vm2272, %v2096
      %2354 = vst.msk [vmem:[%s172 + $0x144] sm:$0xf] %vm2272, %v2097
      %2355 = vst.msk [vmem:[%s172 + $0x148] sm:$0xf] %vm2272, %v2098
      %2356 = vst.msk [vmem:[%s172 + $0x14c] sm:$0xf] %vm2272, %v2099
      %2357 = vst.msk [vmem:[%s172 + $0x150] sm:$0xf] %vm2272, %v2100
      %2358 = vst.msk [vmem:[%s172 + $0x154] sm:$0xf] %vm2272, %v2101
      %2359 = vst.msk [vmem:[%s172 + $0x158] sm:$0xf] %vm2272, %v2102
      %2360 = vst.msk [vmem:[%s172 + $0x15c] sm:$0xf] %vm2272, %v2103
      %2361 = vst.msk [vmem:[%s172 + $0x160] sm:$0xf] %vm2272, %v2104
      %2362 = vst.msk [vmem:[%s172 + $0x164] sm:$0xf] %vm2272, %v2105
      %2363 = vst.msk [vmem:[%s172 + $0x168] sm:$0xf] %vm2272, %v2106
      %2364 = vst.msk [vmem:[%s172 + $0x16c] sm:$0xf] %vm2272, %v2107
      %2365 = vst.msk [vmem:[%s172 + $0x170] sm:$0xf] %vm2272, %v2108
      %2366 = vst.msk [vmem:[%s172 + $0x174] sm:$0xf] %vm2272, %v2109
      %2367 = vst.msk [vmem:[%s172 + $0x178] sm:$0xf] %vm2272, %v2110
      %2368 = vst.msk [vmem:[%s172 + $0x17c] sm:$0xf] %vm2272, %v2111
      %2369 = vst.msk [vmem:[%s172 + $0x180] sm:$0xf] %vm2272, %v2112
      %2370 = vst.msk [vmem:[%s172 + $0x184] sm:$0xf] %vm2272, %v2113
      %2371 = vst.msk [vmem:[%s172 + $0x188] sm:$0xf] %vm2272, %v2114
      %2372 = vst.msk [vmem:[%s172 + $0x18c] sm:$0xf] %vm2272, %v2115
      %2373 = vst.msk [vmem:[%s172 + $0x190] sm:$0xf] %vm2272, %v2116
      %2374 = vst.msk [vmem:[%s172 + $0x194] sm:$0xf] %vm2272, %v2117
      %2375 = vst.msk [vmem:[%s172 + $0x198] sm:$0xf] %vm2272, %v2118
      %2376 = vst.msk [vmem:[%s172 + $0x19c] sm:$0xf] %vm2272, %v2119
      %2377 = vst.msk [vmem:[%s172 + $0x1a0] sm:$0xf] %vm2272, %v2120
      %2378 = vst.msk [vmem:[%s172 + $0x1a4] sm:$0xf] %vm2272, %v2121
      %2379 = vst.msk [vmem:[%s172 + $0x1a8] sm:$0xf] %vm2272, %v2122
      %2380 = vst.msk [vmem:[%s172 + $0x1ac] sm:$0xf] %vm2272, %v2123
      %2381 = vst.msk [vmem:[%s172 + $0x1b0] sm:$0xf] %vm2272, %v2124
      %2382 = vst.msk [vmem:[%s172 + $0x1b4] sm:$0xf] %vm2272, %v2125
      %2383 = vst.msk [vmem:[%s172 + $0x1b8] sm:$0xf] %vm2272, %v2126
      %2384 = vst.msk [vmem:[%s172 + $0x1bc] sm:$0xf] %vm2272, %v2127
      %2385 = vst.msk [vmem:[%s172 + $0x1c0] sm:$0xf] %vm2272, %v2128
      %2386 = vst.msk [vmem:[%s172 + $0x1c4] sm:$0xf] %vm2272, %v2129
      %2387 = vst.msk [vmem:[%s172 + $0x1c8] sm:$0xf] %vm2272, %v2130
      %2388 = vst.msk [vmem:[%s172 + $0x1cc] sm:$0xf] %vm2272, %v2131
      %2389 = vst.msk [vmem:[%s172 + $0x1d0] sm:$0xf] %vm2272, %v2132
      %2390 = vst.msk [vmem:[%s172 + $0x1d4] sm:$0xf] %vm2272, %v2133
      %2391 = vst.msk [vmem:[%s172 + $0x1d8] sm:$0xf] %vm2272, %v2134
      %2392 = vst.msk [vmem:[%s172 + $0x1dc] sm:$0xf] %vm2272, %v2135
      %2393 = vst.msk [vmem:[%s172 + $0x1e0] sm:$0xf] %vm2272, %v2136
      %2394 = vst.msk [vmem:[%s172 + $0x1e4] sm:$0xf] %vm2272, %v2137
      %2395 = vst.msk [vmem:[%s172 + $0x1e8] sm:$0xf] %vm2272, %v2138
      %2396 = vst.msk [vmem:[%s172 + $0x1ec] sm:$0xf] %vm2272, %v2139
      %2397 = vst.msk [vmem:[%s172 + $0x1f0] sm:$0xf] %vm2272, %v2140
      %2398 = vst.msk [vmem:[%s172 + $0x1f4] sm:$0xf] %vm2272, %v2141
      %2399 = vst.msk [vmem:[%s172 + $0x1f8] sm:$0xf] %vm2272, %v2142
      %2400 = vst.msk [vmem:[%s172 + $0x1fc] sm:$0xf] %vm2272, %v2143
      %s2401 = smul.u32 128, %s14
      %p2402 = scmp.lt.s32.totalorder %s2401, 6143
      %s2403 = scalar_select %p2402, %s2401, 6143
      %s2404 = smul.addr %s2403, 4
      %s2405 = scalar_lea.vmem %s3, %s2404
      // Predicated region
      $region33: #{stargan_discriminator.7} parent=31 // pred_check
        %p2406 = pneg %p100
      $region34: #{stargan_discriminator.7} parent=31 // pred_check_branch
        %2408 = sbr.rel (%p2406) target = $region36
      $region35: #{stargan_discriminator.7} parent=31 // pred_region
        %s2409 = smul.u32 128, %s14
      $region36: #{stargan_discriminator.7} parent=31 // pred_fallthru
        _
    $region32: #{stargan_discriminator.7} parent=5 // pred_fallthru
      _
    %p2410 = scmp.le.s32.totalorder 2, %s9
    // Predicated region
    $region37: #{stargan_discriminator.7} parent=5 // pred_check
      %p2411 = pneg %p2410
    $region38: #{stargan_discriminator.7} parent=5 // pred_check_branch
      %2413 = sbr.rel (%p2411) target = $region40
    $region39: #{stargan_discriminator.7} parent=5 // pred_region
      %s2414 = ssub.s32 %s9, 2
      // Predicated region
      $region41: #{stargan_discriminator.7} parent=39 // pred_check
        %p2415 = pneg %p106
      $region42: #{stargan_discriminator.7} parent=39 // pred_check_branch
        %2417 = sbr.rel (%p2415) target = $region44
      $region43: #{stargan_discriminator.7} parent=39 // pred_region
        %s2418 = smul.u32 128, %s15
        %p2419 = scmp.lt.s32.totalorder %s2418, 6143
        %s2420 = scalar_select %p2419, %s2418, 6143
        %s2421 = smul.addr %s2420, 4
        %s2422 = scalar_lea.vmem %s3, %s2421
      $region44: #{stargan_discriminator.7} parent=39 // pred_fallthru
        _
    $region40: #{stargan_discriminator.7} parent=5 // pred_fallthru
      _
  $region6: #{stargan_discriminator.7} parent=0 // loop_footer
    %s13 = sadd.s32 1, %s9
  $region7: #{stargan_discriminator.7} parent=0 // loop_footer_branch
    %8 = sbr.rel target = $region3
  $region8: #{stargan_discriminator.7} parent=0 // loop_exit
    _

// kernel: stargan_discriminator.8
$region0: #{stargan_discriminator.8}
  #allocation0 [shape = 'u32[]', space=smem, size = 0x4, offset = 0x4, fixed_abs, tag = 'smem constant byte address 0x4 - core index']
  #allocation1 [shape = 'u32[144,128]{1,0:T(1,128)}', space=vmem, size = 0x12000, scoped, tag = 'internal scratch']
  %s0 = inlined_call_operand.vmem [shape: bf16[12288,64], index: 0, kind: input, shape index: {}]
  %s1 = inlined_call_operand.vmem [shape: bf16[64,8], index: 1, kind: input, shape index: {}]
  %s2 = inlined_call_operand.vmem [shape: f32[1,8], index: 2, kind: input, shape index: {}]
  %s3 = inlined_call_operand.vmem [shape: bf16[12288,8], index: 3, kind: output, shape index: {}]
  %s4 = sld [smem:[#allocation0]]
  $region45: #{stargan_discriminator.8} parent=0
    _
  %s6 = ssub.s32 1, %s4
  %s7 = scalar_select 0, %s6, %s4
  loop: start=0, step=1, limit=14
  $region2: #{stargan_discriminator.8} parent=0 // loop_pre_header
    _
  $region3: #{stargan_discriminator.8} parent=0 // loop_header
    %s9 = sphi 0, %s13
    %p10 = scmp.ge.s32.totalorder %s9, 14
    %s19 = sphi 0, %s21
    %s22 = sphi 0, %s19
    %s23 = sphi 0, %s22
    %s39 = sphi 0, %s23
    %s43 = sphi 0, %s43
    %s45 = sphi 0, %s43
    %s46 = sphi 0, %s45
    %s60 = sphi 0, %s46
    %s64 = sphi 0, %s64
    %s66 = sphi 0, %s64
    %s67 = sphi 0, %s66
    %s81 = sphi 0, %s67
    %s87 = sphi 0, %s89
    %s90 = sphi 0, %s87
    %s91 = sphi 0, %s90
    %s107 = sphi 0, %s91
  $region4: #{stargan_discriminator.8} parent=0 // loop_header_branch
    %12 = sbr.rel (%p10) target = $region8
  $region5: #{stargan_discriminator.8} parent=0 // loop_body
    %s14 = ssub.s32 %s9, 1
    %s15 = ssub.s32 %s9, 2
    %s16 = sadd.s32 %s9, 1
    %s17 = ssub.s32 %s9, %s16
    %p18 = scmp.eq.s32.totalorder %s17, 0
    %s20 = sadd.s32 %s19, 1
    %s21 = scalar_select %p18, %s19, %s20
    %p24 = pneg %p18
    %p25 = scmp.eq.s32.totalorder %s9, 11
    %p26 = por %p24, %p25
    %p27 = scmp.ne.s32.totalorder %s19, %s22
    %p28 = scmp.eq.s32.totalorder %s9, 0
    %p29 = por %p27, %p28
    %p30 = scmp.ne.s32.totalorder %s19, %s22
    %p31 = scmp.eq.s32.totalorder %s14, 11
    %p32 = por %p30, %p31
    %p33 = scmp.ne.s32.totalorder %s22, %s23
    %p34 = scmp.eq.s32.totalorder %s14, 0
    %p35 = por %p33, %p34
    %p36 = scmp.ne.s32.totalorder %s22, %s23
    %p37 = scmp.eq.s32.totalorder %s15, 11
    %p38 = por %p36, %p37
    %p40 = scmp.ne.s32.totalorder %s23, %s39
    %p41 = scmp.eq.s32.totalorder %s15, 0
    %p42 = por %p40, %p41
    %s44 = sadd.s32 %s43, 1
    %p47 = scmp.eq.s32.totalorder %s9, 11
    %p48 = scmp.ne.s32.totalorder %s43, %s45
    %p49 = scmp.eq.s32.totalorder %s9, 0
    %p50 = por %p48, %p49
    %p51 = scmp.ne.s32.totalorder %s43, %s45
    %p52 = scmp.eq.s32.totalorder %s14, 11
    %p53 = por %p51, %p52
    %p54 = scmp.ne.s32.totalorder %s45, %s46
    %p55 = scmp.eq.s32.totalorder %s14, 0
    %p56 = por %p54, %p55
    %p57 = scmp.ne.s32.totalorder %s45, %s46
    %p58 = scmp.eq.s32.totalorder %s15, 11
    %p59 = por %p57, %p58
    %p61 = scmp.ne.s32.totalorder %s46, %s60
    %p62 = scmp.eq.s32.totalorder %s15, 0
    %p63 = por %p61, %p62
    %s65 = sadd.s32 %s64, 1
    %p68 = scmp.eq.s32.totalorder %s9, 11
    %p69 = scmp.ne.s32.totalorder %s64, %s66
    %p70 = scmp.eq.s32.totalorder %s9, 0
    %p71 = por %p69, %p70
    %p72 = scmp.ne.s32.totalorder %s64, %s66
    %p73 = scmp.eq.s32.totalorder %s14, 11
    %p74 = por %p72, %p73
    %p75 = scmp.ne.s32.totalorder %s66, %s67
    %p76 = scmp.eq.s32.totalorder %s14, 0
    %p77 = por %p75, %p76
    %p78 = scmp.ne.s32.totalorder %s66, %s67
    %p79 = scmp.eq.s32.totalorder %s15, 11
    %p80 = por %p78, %p79
    %p82 = scmp.ne.s32.totalorder %s67, %s81
    %p83 = scmp.eq.s32.totalorder %s15, 0
    %p84 = por %p82, %p83
    %s85 = ssub.s32 %s9, %s16
    %p86 = scmp.eq.s32.totalorder %s85, 0
    %s88 = sadd.s32 %s87, 1
    %s89 = scalar_select %p86, %s87, %s88
    %p92 = pneg %p86
    %p93 = scmp.eq.s32.totalorder %s9, 11
    %p94 = por %p92, %p93
    %p95 = scmp.ne.s32.totalorder %s87, %s90
    %p96 = scmp.eq.s32.totalorder %s9, 0
    %p97 = por %p95, %p96
    %p98 = scmp.ne.s32.totalorder %s87, %s90
    %p99 = scmp.eq.s32.totalorder %s14, 11
    %p100 = por %p98, %p99
    %p101 = scmp.ne.s32.totalorder %s90, %s91
    %p102 = scmp.eq.s32.totalorder %s14, 0
    %p103 = por %p101, %p102
    %p104 = scmp.ne.s32.totalorder %s90, %s91
    %p105 = scmp.eq.s32.totalorder %s15, 11
    %p106 = por %p104, %p105
    %p108 = scmp.ne.s32.totalorder %s91, %s107
    %p109 = scmp.eq.s32.totalorder %s15, 0
    %p110 = por %p108, %p109
    %p111 = scmp.le.s32.totalorder 1, %s9
    %p112 = scmp.lt.s32.totalorder %s9, 13
    %p113 = pnand %p111, %p112
    %p114 = pneg %p113
    // Predicated region
    $region9: #{stargan_discriminator.8} parent=5 // pred_check
      _
    $region10: #{stargan_discriminator.8} parent=5 // pred_check_branch
      %116 = sbr.rel (%p113) target = $region12
    $region11: #{stargan_discriminator.8} parent=5 // pred_region
      %s117 = ssub.s32 %s9, 1
      // Predicated region
      $region13: #{stargan_discriminator.8} parent=11 // pred_check
        %p118 = pneg %p56
      $region14: #{stargan_discriminator.8} parent=11 // pred_check_branch
        %120 = sbr.rel (%p118) target = $region16
      $region15: #{stargan_discriminator.8} parent=11 // pred_region
        _
      $region16: #{stargan_discriminator.8} parent=11 // pred_fallthru
        _
      // Predicated region
      $region17: #{stargan_discriminator.8} parent=11 // pred_check
        %p121 = pneg %p77
      $region18: #{stargan_discriminator.8} parent=11 // pred_check_branch
        %123 = sbr.rel (%p121) target = $region20
      $region19: #{stargan_discriminator.8} parent=11 // pred_region
        _
      $region20: #{stargan_discriminator.8} parent=11 // pred_fallthru
        _
    $region12: #{stargan_discriminator.8} parent=5 // pred_fallthru
      _
    %p124 = scmp.lt.s32.totalorder %s9, 12
    // Predicated region
    $region21: #{stargan_discriminator.8} parent=5 // pred_check
      %p125 = pneg %p124
    $region22: #{stargan_discriminator.8} parent=5 // pred_check_branch
      %127 = sbr.rel (%p125) target = $region24
    $region23: #{stargan_discriminator.8} parent=5 // pred_region
      // Predicated region
      $region25: #{stargan_discriminator.8} parent=23 // pred_check
        %p128 = pneg %p29
      $region26: #{stargan_discriminator.8} parent=23 // pred_check_branch
        %130 = sbr.rel (%p128) target = $region28
      $region27: #{stargan_discriminator.8} parent=23 // pred_region
        %s131 = smul.u32 128, %s9
        %p132 = scmp.lt.s32.totalorder %s131, 1535
        %s133 = scalar_select %p132, %s131, 1535
        %s134 = smul.addr %s133, 4
        %s135 = scalar_lea.vmem %s0, %s134
        %s136 = smul.u32 128, %s9
      $region28: #{stargan_discriminator.8} parent=23 // pred_fallthru
        _
    $region24: #{stargan_discriminator.8} parent=5 // pred_fallthru
      _
    %p137 = scmp.le.s32.totalorder 1, %s9
    %p138 = scmp.lt.s32.totalorder %s9, 13
    %p139 = pnand %p137, %p138
    %p140 = pneg %p139
    // Predicated region
    $region29: #{stargan_discriminator.8} parent=5 // pred_check
      _
    $region30: #{stargan_discriminator.8} parent=5 // pred_check_branch
      %142 = sbr.rel (%p139) target = $region32
    $region31: #{stargan_discriminator.8} parent=5 // pred_region
      %s143 = ssub.s32 %s9, 1
      %s144 = smul.u32 128, %s14
      %p145 = scmp.lt.s32.totalorder %s144, 1535
      %s146 = scalar_select %p145, %s144, 1535
      %s147 = smul.addr %s146, 4
      %s148 = scalar_lea.vmem %s0, %s147
      %p149 = pneg %p35
      %p150 = pneg %p32
      %p151 = pneg %p56
      %p152 = pneg %p53
      %p153 = pneg %p77
      %p154 = pneg %p74
      %p155 = pneg %p103
      %p156 = pneg %p100
      %s157 = smul.u32 128, %s14
      %p158 = scmp.lt.s32.totalorder %s157, 1535
      %s159 = scalar_select %p158, %s157, 1535
      %s160 = smul.addr %s159, 4
      %s161 = scalar_lea.vmem %s3, %s160
      %s162 = smul.u32 128, %s14
      %p163 = scmp.lt.s32.totalorder %s162, 1535
      %s164 = scalar_select %p163, %s162, 1535
      %s165 = smul.addr %s164, 4
      %s166 = scalar_lea.vmem %s0, %s165
      %s167 = smul.u32 128, %s14
      %s168 = smul.u32 128, %s14
      %p169 = scmp.lt.s32.totalorder %s168, 1535
      %s170 = scalar_select %p169, %s168, 1535
      %s171 = smul.addr %s170, 4
      %s172 = scalar_lea.vmem %s3, %s171
      %s173 = smul.u32 128, %s14
      %v175 = vld [vmem:[%s166] sm:$0xf]
      %v176 = vld [vmem:[%s166 + $0x4] sm:$0xf]
      %v177 = vld [vmem:[%s166 + $0x8] sm:$0xf]
      %v178 = vld [vmem:[%s166 + $0xc] sm:$0xf]
      %v179 = vld [vmem:[%s166 + $0x10] sm:$0xf]
      %v180 = vld [vmem:[%s166 + $0x14] sm:$0xf]
      %v181 = vld [vmem:[%s166 + $0x18] sm:$0xf]
      %v182 = vld [vmem:[%s166 + $0x1c] sm:$0xf]
      %v183 = vld [vmem:[%s166 + $0x20] sm:$0xf]
      %v184 = vld [vmem:[%s166 + $0x24] sm:$0xf]
      %v185 = vld [vmem:[%s166 + $0x28] sm:$0xf]
      %v186 = vld [vmem:[%s166 + $0x2c] sm:$0xf]
      %v187 = vld [vmem:[%s166 + $0x30] sm:$0xf]
      %v188 = vld [vmem:[%s166 + $0x34] sm:$0xf]
      %v189 = vld [vmem:[%s166 + $0x38] sm:$0xf]
      %v190 = vld [vmem:[%s166 + $0x3c] sm:$0xf]
      %v191 = vld [vmem:[%s166 + $0x40] sm:$0xf]
      %v192 = vld [vmem:[%s166 + $0x44] sm:$0xf]
      %v193 = vld [vmem:[%s166 + $0x48] sm:$0xf]
      %v194 = vld [vmem:[%s166 + $0x4c] sm:$0xf]
      %v195 = vld [vmem:[%s166 + $0x50] sm:$0xf]
      %v196 = vld [vmem:[%s166 + $0x54] sm:$0xf]
      %v197 = vld [vmem:[%s166 + $0x58] sm:$0xf]
      %v198 = vld [vmem:[%s166 + $0x5c] sm:$0xf]
      %v199 = vld [vmem:[%s166 + $0x60] sm:$0xf]
      %v200 = vld [vmem:[%s166 + $0x64] sm:$0xf]
      %v201 = vld [vmem:[%s166 + $0x68] sm:$0xf]
      %v202 = vld [vmem:[%s166 + $0x6c] sm:$0xf]
      %v203 = vld [vmem:[%s166 + $0x70] sm:$0xf]
      %v204 = vld [vmem:[%s166 + $0x74] sm:$0xf]
      %v205 = vld [vmem:[%s166 + $0x78] sm:$0xf]
      %v206 = vld [vmem:[%s166 + $0x7c] sm:$0xf]
      %v207 = vld [vmem:[%s166 + $0x80] sm:$0xf]
      %v208 = vld [vmem:[%s166 + $0x84] sm:$0xf]
      %v209 = vld [vmem:[%s166 + $0x88] sm:$0xf]
      %v210 = vld [vmem:[%s166 + $0x8c] sm:$0xf]
      %v211 = vld [vmem:[%s166 + $0x90] sm:$0xf]
      %v212 = vld [vmem:[%s166 + $0x94] sm:$0xf]
      %v213 = vld [vmem:[%s166 + $0x98] sm:$0xf]
      %v214 = vld [vmem:[%s166 + $0x9c] sm:$0xf]
      %v215 = vld [vmem:[%s166 + $0xa0] sm:$0xf]
      %v216 = vld [vmem:[%s166 + $0xa4] sm:$0xf]
      %v217 = vld [vmem:[%s166 + $0xa8] sm:$0xf]
      %v218 = vld [vmem:[%s166 + $0xac] sm:$0xf]
      %v219 = vld [vmem:[%s166 + $0xb0] sm:$0xf]
      %v220 = vld [vmem:[%s166 + $0xb4] sm:$0xf]
      %v221 = vld [vmem:[%s166 + $0xb8] sm:$0xf]
      %v222 = vld [vmem:[%s166 + $0xbc] sm:$0xf]
      %v223 = vld [vmem:[%s166 + $0xc0] sm:$0xf]
      %v224 = vld [vmem:[%s166 + $0xc4] sm:$0xf]
      %v225 = vld [vmem:[%s166 + $0xc8] sm:$0xf]
      %v226 = vld [vmem:[%s166 + $0xcc] sm:$0xf]
      %v227 = vld [vmem:[%s166 + $0xd0] sm:$0xf]
      %v228 = vld [vmem:[%s166 + $0xd4] sm:$0xf]
      %v229 = vld [vmem:[%s166 + $0xd8] sm:$0xf]
      %v230 = vld [vmem:[%s166 + $0xdc] sm:$0xf]
      %v231 = vld [vmem:[%s166 + $0xe0] sm:$0xf]
      %v232 = vld [vmem:[%s166 + $0xe4] sm:$0xf]
      %v233 = vld [vmem:[%s166 + $0xe8] sm:$0xf]
      %v234 = vld [vmem:[%s166 + $0xec] sm:$0xf]
      %v235 = vld [vmem:[%s166 + $0xf0] sm:$0xf]
      %v236 = vld [vmem:[%s166 + $0xf4] sm:$0xf]
      %v237 = vld [vmem:[%s166 + $0xf8] sm:$0xf]
      %v238 = vld [vmem:[%s166 + $0xfc] sm:$0xf]
      %v239 = vld [vmem:[%s166 + $0x100] sm:$0xf]
      %v240 = vld [vmem:[%s166 + $0x104] sm:$0xf]
      %v241 = vld [vmem:[%s166 + $0x108] sm:$0xf]
      %v242 = vld [vmem:[%s166 + $0x10c] sm:$0xf]
      %v243 = vld [vmem:[%s166 + $0x110] sm:$0xf]
      %v244 = vld [vmem:[%s166 + $0x114] sm:$0xf]
      %v245 = vld [vmem:[%s166 + $0x118] sm:$0xf]
      %v246 = vld [vmem:[%s166 + $0x11c] sm:$0xf]
      %v247 = vld [vmem:[%s166 + $0x120] sm:$0xf]
      %v248 = vld [vmem:[%s166 + $0x124] sm:$0xf]
      %v249 = vld [vmem:[%s166 + $0x128] sm:$0xf]
      %v250 = vld [vmem:[%s166 + $0x12c] sm:$0xf]
      %v251 = vld [vmem:[%s166 + $0x130] sm:$0xf]
      %v252 = vld [vmem:[%s166 + $0x134] sm:$0xf]
      %v253 = vld [vmem:[%s166 + $0x138] sm:$0xf]
      %v254 = vld [vmem:[%s166 + $0x13c] sm:$0xf]
      %v255 = vld [vmem:[%s166 + $0x140] sm:$0xf]
      %v256 = vld [vmem:[%s166 + $0x144] sm:$0xf]
      %v257 = vld [vmem:[%s166 + $0x148] sm:$0xf]
      %v258 = vld [vmem:[%s166 + $0x14c] sm:$0xf]
      %v259 = vld [vmem:[%s166 + $0x150] sm:$0xf]
      %v260 = vld [vmem:[%s166 + $0x154] sm:$0xf]
      %v261 = vld [vmem:[%s166 + $0x158] sm:$0xf]
      %v262 = vld [vmem:[%s166 + $0x15c] sm:$0xf]
      %v263 = vld [vmem:[%s166 + $0x160] sm:$0xf]
      %v264 = vld [vmem:[%s166 + $0x164] sm:$0xf]
      %v265 = vld [vmem:[%s166 + $0x168] sm:$0xf]
      %v266 = vld [vmem:[%s166 + $0x16c] sm:$0xf]
      %v267 = vld [vmem:[%s166 + $0x170] sm:$0xf]
      %v268 = vld [vmem:[%s166 + $0x174] sm:$0xf]
      %v269 = vld [vmem:[%s166 + $0x178] sm:$0xf]
      %v270 = vld [vmem:[%s166 + $0x17c] sm:$0xf]
      %v271 = vld [vmem:[%s166 + $0x180] sm:$0xf]
      %v272 = vld [vmem:[%s166 + $0x184] sm:$0xf]
      %v273 = vld [vmem:[%s166 + $0x188] sm:$0xf]
      %v274 = vld [vmem:[%s166 + $0x18c] sm:$0xf]
      %v275 = vld [vmem:[%s166 + $0x190] sm:$0xf]
      %v276 = vld [vmem:[%s166 + $0x194] sm:$0xf]
      %v277 = vld [vmem:[%s166 + $0x198] sm:$0xf]
      %v278 = vld [vmem:[%s166 + $0x19c] sm:$0xf]
      %v279 = vld [vmem:[%s166 + $0x1a0] sm:$0xf]
      %v280 = vld [vmem:[%s166 + $0x1a4] sm:$0xf]
      %v281 = vld [vmem:[%s166 + $0x1a8] sm:$0xf]
      %v282 = vld [vmem:[%s166 + $0x1ac] sm:$0xf]
      %v283 = vld [vmem:[%s166 + $0x1b0] sm:$0xf]
      %v284 = vld [vmem:[%s166 + $0x1b4] sm:$0xf]
      %v285 = vld [vmem:[%s166 + $0x1b8] sm:$0xf]
      %v286 = vld [vmem:[%s166 + $0x1bc] sm:$0xf]
      %v287 = vld [vmem:[%s166 + $0x1c0] sm:$0xf]
      %v288 = vld [vmem:[%s166 + $0x1c4] sm:$0xf]
      %v289 = vld [vmem:[%s166 + $0x1c8] sm:$0xf]
      %v290 = vld [vmem:[%s166 + $0x1cc] sm:$0xf]
      %v291 = vld [vmem:[%s166 + $0x1d0] sm:$0xf]
      %v292 = vld [vmem:[%s166 + $0x1d4] sm:$0xf]
      %v293 = vld [vmem:[%s166 + $0x1d8] sm:$0xf]
      %v294 = vld [vmem:[%s166 + $0x1dc] sm:$0xf]
      %v295 = vld [vmem:[%s166 + $0x1e0] sm:$0xf]
      %v296 = vld [vmem:[%s166 + $0x1e4] sm:$0xf]
      %v297 = vld [vmem:[%s166 + $0x1e8] sm:$0xf]
      %v298 = vld [vmem:[%s166 + $0x1ec] sm:$0xf]
      %v299 = vld [vmem:[%s166 + $0x1f0] sm:$0xf]
      %v300 = vld [vmem:[%s166 + $0x1f4] sm:$0xf]
      %v301 = vld [vmem:[%s166 + $0x1f8] sm:$0xf]
      %v302 = vld [vmem:[%s166 + $0x1fc] sm:$0xf]
      %v303 = vld [vmem:[%s1] sm:$0xf]
      %v304 = vld [vmem:[%s1 + $0x4] sm:$0xf]
      %v305 = vld [vmem:[%s1 + $0x8] sm:$0xf]
      %v306 = vld [vmem:[%s1 + $0xc] sm:$0xf]
      %v307 = vld [vmem:[%s1 + $0x10] sm:$0xf]
      %v308 = vld [vmem:[%s1 + $0x14] sm:$0xf]
      %v309 = vld [vmem:[%s1 + $0x18] sm:$0xf]
      %v310 = vld [vmem:[%s1 + $0x1c] sm:$0xf]
      %v311 = vld [vmem:[%s2] sm:$0x1]
      %v313 = vlaneseq
      %v314 = vshrl.u32 %v313, 7
      %v315 = vsub.s32 0, %v314
      %v316 = vrot.slane %v311, %v315
      %v446 = vunpack.c.l.b16 %v175
      %v447 = vunpack.c.l.b16 %v176
      %v448 = vunpack.c.l.b16 %v177
      %v449 = vunpack.c.l.b16 %v178
      %v450 = vunpack.c.l.b16 %v179
      %v451 = vunpack.c.l.b16 %v180
      %v452 = vunpack.c.l.b16 %v181
      %v453 = vunpack.c.l.b16 %v182
      %v454 = vunpack.c.l.b16 %v183
      %v455 = vunpack.c.l.b16 %v184
      %v456 = vunpack.c.l.b16 %v185
      %v457 = vunpack.c.l.b16 %v186
      %v458 = vunpack.c.l.b16 %v187
      %v459 = vunpack.c.l.b16 %v188
      %v460 = vunpack.c.l.b16 %v189
      %v461 = vunpack.c.l.b16 %v190
      %v462 = vunpack.c.l.b16 %v191
      %v463 = vunpack.c.l.b16 %v192
      %v464 = vunpack.c.l.b16 %v193
      %v465 = vunpack.c.l.b16 %v194
      %v466 = vunpack.c.l.b16 %v195
      %v467 = vunpack.c.l.b16 %v196
      %v468 = vunpack.c.l.b16 %v197
      %v469 = vunpack.c.l.b16 %v198
      %v470 = vunpack.c.l.b16 %v199
      %v471 = vunpack.c.l.b16 %v200
      %v472 = vunpack.c.l.b16 %v201
      %v473 = vunpack.c.l.b16 %v202
      %v474 = vunpack.c.l.b16 %v203
      %v475 = vunpack.c.l.b16 %v204
      %v476 = vunpack.c.l.b16 %v205
      %v477 = vunpack.c.l.b16 %v206
      %v478 = vunpack.c.l.b16 %v207
      %v479 = vunpack.c.l.b16 %v208
      %v480 = vunpack.c.l.b16 %v209
      %v481 = vunpack.c.l.b16 %v210
      %v482 = vunpack.c.l.b16 %v211
      %v483 = vunpack.c.l.b16 %v212
      %v484 = vunpack.c.l.b16 %v213
      %v485 = vunpack.c.l.b16 %v214
      %v486 = vunpack.c.l.b16 %v215
      %v487 = vunpack.c.l.b16 %v216
      %v488 = vunpack.c.l.b16 %v217
      %v489 = vunpack.c.l.b16 %v218
      %v490 = vunpack.c.l.b16 %v219
      %v491 = vunpack.c.l.b16 %v220
      %v492 = vunpack.c.l.b16 %v221
      %v493 = vunpack.c.l.b16 %v222
      %v494 = vunpack.c.l.b16 %v223
      %v495 = vunpack.c.l.b16 %v224
      %v496 = vunpack.c.l.b16 %v225
      %v497 = vunpack.c.l.b16 %v226
      %v498 = vunpack.c.l.b16 %v227
      %v499 = vunpack.c.l.b16 %v228
      %v500 = vunpack.c.l.b16 %v229
      %v501 = vunpack.c.l.b16 %v230
      %v502 = vunpack.c.l.b16 %v231
      %v503 = vunpack.c.l.b16 %v232
      %v504 = vunpack.c.l.b16 %v233
      %v505 = vunpack.c.l.b16 %v234
      %v506 = vunpack.c.l.b16 %v235
      %v507 = vunpack.c.l.b16 %v236
      %v508 = vunpack.c.l.b16 %v237
      %v509 = vunpack.c.l.b16 %v238
      %v510 = vunpack.c.l.b16 %v239
      %v511 = vunpack.c.l.b16 %v240
      %v512 = vunpack.c.l.b16 %v241
      %v513 = vunpack.c.l.b16 %v242
      %v514 = vunpack.c.l.b16 %v243
      %v515 = vunpack.c.l.b16 %v244
      %v516 = vunpack.c.l.b16 %v245
      %v517 = vunpack.c.l.b16 %v246
      %v518 = vunpack.c.l.b16 %v247
      %v519 = vunpack.c.l.b16 %v248
      %v520 = vunpack.c.l.b16 %v249
      %v521 = vunpack.c.l.b16 %v250
      %v522 = vunpack.c.l.b16 %v251
      %v523 = vunpack.c.l.b16 %v252
      %v524 = vunpack.c.l.b16 %v253
      %v525 = vunpack.c.l.b16 %v254
      %v526 = vunpack.c.l.b16 %v255
      %v527 = vunpack.c.l.b16 %v256
      %v528 = vunpack.c.l.b16 %v257
      %v529 = vunpack.c.l.b16 %v258
      %v530 = vunpack.c.l.b16 %v259
      %v531 = vunpack.c.l.b16 %v260
      %v532 = vunpack.c.l.b16 %v261
      %v533 = vunpack.c.l.b16 %v262
      %v534 = vunpack.c.l.b16 %v263
      %v535 = vunpack.c.l.b16 %v264
      %v536 = vunpack.c.l.b16 %v265
      %v537 = vunpack.c.l.b16 %v266
      %v538 = vunpack.c.l.b16 %v267
      %v539 = vunpack.c.l.b16 %v268
      %v540 = vunpack.c.l.b16 %v269
      %v541 = vunpack.c.l.b16 %v270
      %v542 = vunpack.c.l.b16 %v271
      %v543 = vunpack.c.l.b16 %v272
      %v544 = vunpack.c.l.b16 %v273
      %v545 = vunpack.c.l.b16 %v274
      %v546 = vunpack.c.l.b16 %v275
      %v547 = vunpack.c.l.b16 %v276
      %v548 = vunpack.c.l.b16 %v277
      %v549 = vunpack.c.l.b16 %v278
      %v550 = vunpack.c.l.b16 %v279
      %v551 = vunpack.c.l.b16 %v280
      %v552 = vunpack.c.l.b16 %v281
      %v553 = vunpack.c.l.b16 %v282
      %v554 = vunpack.c.l.b16 %v283
      %v555 = vunpack.c.l.b16 %v284
      %v556 = vunpack.c.l.b16 %v285
      %v557 = vunpack.c.l.b16 %v286
      %v558 = vunpack.c.l.b16 %v287
      %v559 = vunpack.c.l.b16 %v288
      %v560 = vunpack.c.l.b16 %v289
      %v561 = vunpack.c.l.b16 %v290
      %v562 = vunpack.c.l.b16 %v291
      %v563 = vunpack.c.l.b16 %v292
      %v564 = vunpack.c.l.b16 %v293
      %v565 = vunpack.c.l.b16 %v294
      %v566 = vunpack.c.l.b16 %v295
      %v567 = vunpack.c.l.b16 %v296
      %v568 = vunpack.c.l.b16 %v297
      %v569 = vunpack.c.l.b16 %v298
      %v570 = vunpack.c.l.b16 %v299
      %v571 = vunpack.c.l.b16 %v300
      %v572 = vunpack.c.l.b16 %v301
      %v573 = vunpack.c.l.b16 %v302
      %v574 = vpack.c.b16 %v447, %v446
      %v575 = vpack.c.b16 %v449, %v448
      %v576 = vpack.c.b16 %v451, %v450
      %v577 = vpack.c.b16 %v453, %v452
      %v578 = vpack.c.b16 %v455, %v454
      %v579 = vpack.c.b16 %v457, %v456
      %v580 = vpack.c.b16 %v459, %v458
      %v581 = vpack.c.b16 %v461, %v460
      %v582 = vpack.c.b16 %v463, %v462
      %v583 = vpack.c.b16 %v465, %v464
      %v584 = vpack.c.b16 %v467, %v466
      %v585 = vpack.c.b16 %v469, %v468
      %v586 = vpack.c.b16 %v471, %v470
      %v587 = vpack.c.b16 %v473, %v472
      %v588 = vpack.c.b16 %v475, %v474
      %v589 = vpack.c.b16 %v477, %v476
      %v590 = vpack.c.b16 %v479, %v478
      %v591 = vpack.c.b16 %v481, %v480
      %v592 = vpack.c.b16 %v483, %v482
      %v593 = vpack.c.b16 %v485, %v484
      %v594 = vpack.c.b16 %v487, %v486
      %v595 = vpack.c.b16 %v489, %v488
      %v596 = vpack.c.b16 %v491, %v490
      %v597 = vpack.c.b16 %v493, %v492
      %v598 = vpack.c.b16 %v495, %v494
      %v599 = vpack.c.b16 %v497, %v496
      %v600 = vpack.c.b16 %v499, %v498
      %v601 = vpack.c.b16 %v501, %v500
      %v602 = vpack.c.b16 %v503, %v502
      %v603 = vpack.c.b16 %v505, %v504
      %v604 = vpack.c.b16 %v507, %v506
      %v605 = vpack.c.b16 %v509, %v508
      %v606 = vpack.c.b16 %v511, %v510
      %v607 = vpack.c.b16 %v513, %v512
      %v608 = vpack.c.b16 %v515, %v514
      %v609 = vpack.c.b16 %v517, %v516
      %v610 = vpack.c.b16 %v519, %v518
      %v611 = vpack.c.b16 %v521, %v520
      %v612 = vpack.c.b16 %v523, %v522
      %v613 = vpack.c.b16 %v525, %v524
      %v614 = vpack.c.b16 %v527, %v526
      %v615 = vpack.c.b16 %v529, %v528
      %v616 = vpack.c.b16 %v531, %v530
      %v617 = vpack.c.b16 %v533, %v532
      %v618 = vpack.c.b16 %v535, %v534
      %v619 = vpack.c.b16 %v537, %v536
      %v620 = vpack.c.b16 %v539, %v538
      %v621 = vpack.c.b16 %v541, %v540
      %v622 = vpack.c.b16 %v543, %v542
      %v623 = vpack.c.b16 %v545, %v544
      %v624 = vpack.c.b16 %v547, %v546
      %v625 = vpack.c.b16 %v549, %v548
      %v626 = vpack.c.b16 %v551, %v550
      %v627 = vpack.c.b16 %v553, %v552
      %v628 = vpack.c.b16 %v555, %v554
      %v629 = vpack.c.b16 %v557, %v556
      %v630 = vpack.c.b16 %v559, %v558
      %v631 = vpack.c.b16 %v561, %v560
      %v632 = vpack.c.b16 %v563, %v562
      %v633 = vpack.c.b16 %v565, %v564
      %v634 = vpack.c.b16 %v567, %v566
      %v635 = vpack.c.b16 %v569, %v568
      %v636 = vpack.c.b16 %v571, %v570
      %v637 = vpack.c.b16 %v573, %v572
      %v646 = vunpack.c.l.b16 %v303
      %v647 = vunpack.c.l.b16 %v304
      %v648 = vunpack.c.l.b16 %v305
      %v649 = vunpack.c.l.b16 %v306
      %v650 = vunpack.c.l.b16 %v307
      %v651 = vunpack.c.l.b16 %v308
      %v652 = vunpack.c.l.b16 %v309
      %v653 = vunpack.c.l.b16 %v310
      %v654 = vpack.c.b16 %v647, %v646
      %v655 = vpack.c.b16 %v649, %v648
      %v656 = vpack.c.b16 %v651, %v650
      %v657 = vpack.c.b16 %v653, %v652
      %vm662 = vcmask 523264
      %v664 = vsel %vm662, %v574, 0
      %v667 = vsel %vm662, %v575, 0
      %v670 = vsel %vm662, %v576, 0
      %v673 = vsel %vm662, %v577, 0
      %v676 = vsel %vm662, %v578, 0
      %v679 = vsel %vm662, %v579, 0
      %v682 = vsel %vm662, %v580, 0
      %v685 = vsel %vm662, %v581, 0
      %v688 = vsel %vm662, %v582, 0
      %v691 = vsel %vm662, %v583, 0
      %v694 = vsel %vm662, %v584, 0
      %v697 = vsel %vm662, %v585, 0
      %v700 = vsel %vm662, %v586, 0
      %v703 = vsel %vm662, %v587, 0
      %v706 = vsel %vm662, %v588, 0
      %v709 = vsel %vm662, %v589, 0
      %v712 = vsel %vm662, %v590, 0
      %v715 = vsel %vm662, %v591, 0
      %v718 = vsel %vm662, %v592, 0
      %v721 = vsel %vm662, %v593, 0
      %v724 = vsel %vm662, %v594, 0
      %v727 = vsel %vm662, %v595, 0
      %v730 = vsel %vm662, %v596, 0
      %v733 = vsel %vm662, %v597, 0
      %v736 = vsel %vm662, %v598, 0
      %v739 = vsel %vm662, %v599, 0
      %v742 = vsel %vm662, %v600, 0
      %v745 = vsel %vm662, %v601, 0
      %v748 = vsel %vm662, %v602, 0
      %v751 = vsel %vm662, %v603, 0
      %v754 = vsel %vm662, %v604, 0
      %v757 = vsel %vm662, %v605, 0
      %v760 = vsel %vm662, %v606, 0
      %v763 = vsel %vm662, %v607, 0
      %v766 = vsel %vm662, %v608, 0
      %v769 = vsel %vm662, %v609, 0
      %v772 = vsel %vm662, %v610, 0
      %v775 = vsel %vm662, %v611, 0
      %v778 = vsel %vm662, %v612, 0
      %v781 = vsel %vm662, %v613, 0
      %v784 = vsel %vm662, %v614, 0
      %v787 = vsel %vm662, %v615, 0
      %v790 = vsel %vm662, %v616, 0
      %v793 = vsel %vm662, %v617, 0
      %v796 = vsel %vm662, %v618, 0
      %v799 = vsel %vm662, %v619, 0
      %v802 = vsel %vm662, %v620, 0
      %v805 = vsel %vm662, %v621, 0
      %v808 = vsel %vm662, %v622, 0
      %v811 = vsel %vm662, %v623, 0
      %v814 = vsel %vm662, %v624, 0
      %v817 = vsel %vm662, %v625, 0
      %v820 = vsel %vm662, %v626, 0
      %v823 = vsel %vm662, %v627, 0
      %v826 = vsel %vm662, %v628, 0
      %v829 = vsel %vm662, %v629, 0
      %v832 = vsel %vm662, %v630, 0
      %v835 = vsel %vm662, %v631, 0
      %v838 = vsel %vm662, %v632, 0
      %v841 = vsel %vm662, %v633, 0
      %v844 = vsel %vm662, %v634, 0
      %v847 = vsel %vm662, %v635, 0
      %v850 = vsel %vm662, %v636, 0
      %v853 = vsel %vm662, %v637, 0
      %855 = vmatprep.subr.bf16.mxu0 0
      %856 = vmatpush1.bf16.msra.mxu0 %v654
      %857 = vmatprep.subr.bf16.mxu0 0
      %858 = vmatpush1.bf16.msra.mxu0 %v655
      %859 = vmatprep.subr.bf16.mxu0 0
      %860 = vmatpush1.bf16.msra.mxu0 %v656
      %861 = vmatprep.subr.bf16.mxu0 0
      %862 = vmatpush1.bf16.msra.mxu0 %v657
      %863 = vmatprep.subr.bf16.mxu0 0
      %864 = vmatpush1.bf16.msra.mxu0 0
      %865 = vmatprep.subr.bf16.mxu0 0
      %866 = vmatpush1.bf16.msra.mxu0 0
      %867 = vmatprep.subr.bf16.mxu0 0
      %868 = vmatpush1.bf16.msra.mxu0 0
      %869 = vmatprep.subr.bf16.mxu0 0
      %870 = vmatpush1.bf16.msra.mxu0 0
      %871 = vmatprep.subr.bf16.mxu0 0
      %872 = vmatpush1.bf16.msra.mxu0 0
      %873 = vmatprep.subr.bf16.mxu0 0
      %874 = vmatpush1.bf16.msra.mxu0 0
      %875 = vmatprep.subr.bf16.mxu0 0
      %876 = vmatpush1.bf16.msra.mxu0 0
      %877 = vmatprep.subr.bf16.mxu0 0
      %878 = vmatpush1.bf16.msra.mxu0 0
      %879 = vmatprep.subr.bf16.mxu0 0
      %880 = vmatpush1.bf16.msra.mxu0 0
      %881 = vmatprep.subr.bf16.mxu0 0
      %882 = vmatpush1.bf16.msra.mxu0 0
      %883 = vmatprep.subr.bf16.mxu0 0
      %884 = vmatpush1.bf16.msra.mxu0 0
      %885 = vmatprep.subr.bf16.mxu0 0
      %886 = vmatpush1.bf16.msra.mxu0 0
      %887 = vmatprep.mubr.bf16.mxu0 0
      %888 = vmatmul.mubr.bf16.gmra.mrb[0].mxu0 %v664
      %v889 = vpop.f32.mrb[0].mxu0
      %v890 = vadd.f32 %v316, %v889
      %v891 = vpop.f32.mrb[0].mxu0
      %v892 = vpop.f32.mrb[0].mxu0
      %v893 = vadd.f32 %v316, %v892
      %v894 = vpop.f32.mrb[0].mxu0
      %895 = vmatprep.mubr.bf16.mxu0 0
      %896 = vmatmul.mubr.bf16.gmra.mrb[0].mxu0 %v667
      %v897 = vpop.f32.mrb[0].mxu0
      %v898 = vadd.f32 %v316, %v897
      %v899 = vpop.f32.mrb[0].mxu0
      %v900 = vpop.f32.mrb[0].mxu0
      %v901 = vadd.f32 %v316, %v900
      %v902 = vpop.f32.mrb[0].mxu0
      %903 = vmatprep.mubr.bf16.mxu0 0
      %904 = vmatmul.mubr.bf16.gmra.mrb[0].mxu0 %v670
      %v905 = vpop.f32.mrb[0].mxu0
      %v906 = vadd.f32 %v316, %v905
      %v907 = vpop.f32.mrb[0].mxu0
      %v908 = vpop.f32.mrb[0].mxu0
      %v909 = vadd.f32 %v316, %v908
      %v910 = vpop.f32.mrb[0].mxu0
      %911 = vmatprep.mubr.bf16.mxu0 0
      %912 = vmatmul.mubr.bf16.gmra.mrb[0].mxu0 %v673
      %v913 = vpop.f32.mrb[0].mxu0
      %v914 = vadd.f32 %v316, %v913
      %v915 = vpop.f32.mrb[0].mxu0
      %v916 = vpop.f32.mrb[0].mxu0
      %v917 = vadd.f32 %v316, %v916
      %v918 = vpop.f32.mrb[0].mxu0
      %919 = vmatprep.mubr.bf16.mxu0 0
      %920 = vmatmul.mubr.bf16.gmra.mrb[0].mxu0 %v676
      %v921 = vpop.f32.mrb[0].mxu0
      %v922 = vadd.f32 %v316, %v921
      %v923 = vpop.f32.mrb[0].mxu0
      %v924 = vpop.f32.mrb[0].mxu0
      %v925 = vadd.f32 %v316, %v924
      %v926 = vpop.f32.mrb[0].mxu0
      %927 = vmatprep.mubr.bf16.mxu0 0
      %928 = vmatmul.mubr.bf16.gmra.mrb[0].mxu0 %v679
      %v929 = vpop.f32.mrb[0].mxu0
      %v930 = vadd.f32 %v316, %v929
      %v931 = vpop.f32.mrb[0].mxu0
      %v932 = vpop.f32.mrb[0].mxu0
      %v933 = vadd.f32 %v316, %v932
      %v934 = vpop.f32.mrb[0].mxu0
      %935 = vmatprep.mubr.bf16.mxu0 0
      %936 = vmatmul.mubr.bf16.gmra.mrb[0].mxu0 %v682
      %v937 = vpop.f32.mrb[0].mxu0
      %v938 = vadd.f32 %v316, %v937
      %v939 = vpop.f32.mrb[0].mxu0
      %v940 = vpop.f32.mrb[0].mxu0
      %v941 = vadd.f32 %v316, %v940
      %v942 = vpop.f32.mrb[0].mxu0
      %943 = vmatprep.mubr.bf16.mxu0 0
      %944 = vmatmul.mubr.bf16.gmra.mrb[0].mxu0 %v685
      %v945 = vpop.f32.mrb[0].mxu0
      %v946 = vadd.f32 %v316, %v945
      %v947 = vpop.f32.mrb[0].mxu0
      %v948 = vpop.f32.mrb[0].mxu0
      %v949 = vadd.f32 %v316, %v948
      %v950 = vpop.f32.mrb[0].mxu0
      %951 = vmatprep.mubr.bf16.mxu0 0
      %952 = vmatmul.mubr.bf16.gmra.mrb[0].mxu0 %v688
      %v953 = vpop.f32.mrb[0].mxu0
      %v954 = vadd.f32 %v316, %v953
      %v955 = vpop.f32.mrb[0].mxu0
      %v956 = vpop.f32.mrb[0].mxu0
      %v957 = vadd.f32 %v316, %v956
      %v958 = vpop.f32.mrb[0].mxu0
      %959 = vmatprep.mubr.bf16.mxu0 0
      %960 = vmatmul.mubr.bf16.gmra.mrb[0].mxu0 %v691
      %v961 = vpop.f32.mrb[0].mxu0
      %v962 = vadd.f32 %v316, %v961
      %v963 = vpop.f32.mrb[0].mxu0
      %v964 = vpop.f32.mrb[0].mxu0
      %v965 = vadd.f32 %v316, %v964
      %v966 = vpop.f32.mrb[0].mxu0
      %967 = vmatprep.mubr.bf16.mxu0 0
      %968 = vmatmul.mubr.bf16.gmra.mrb[0].mxu0 %v694
      %v969 = vpop.f32.mrb[0].mxu0
      %v970 = vadd.f32 %v316, %v969
      %v971 = vpop.f32.mrb[0].mxu0
      %v972 = vpop.f32.mrb[0].mxu0
      %v973 = vadd.f32 %v316, %v972
      %v974 = vpop.f32.mrb[0].mxu0
      %975 = vmatprep.mubr.bf16.mxu0 0
      %976 = vmatmul.mubr.bf16.gmra.mrb[0].mxu0 %v697
      %v977 = vpop.f32.mrb[0].mxu0
      %v978 = vadd.f32 %v316, %v977
      %v979 = vpop.f32.mrb[0].mxu0
      %v980 = vpop.f32.mrb[0].mxu0
      %v981 = vadd.f32 %v316, %v980
      %v982 = vpop.f32.mrb[0].mxu0
      %983 = vmatprep.mubr.bf16.mxu0 0
      %984 = vmatmul.mubr.bf16.gmra.mrb[0].mxu0 %v700
      %v985 = vpop.f32.mrb[0].mxu0
      %v986 = vadd.f32 %v316, %v985
      %v987 = vpop.f32.mrb[0].mxu0
      %v988 = vpop.f32.mrb[0].mxu0
      %v989 = vadd.f32 %v316, %v988
      %v990 = vpop.f32.mrb[0].mxu0
      %991 = vmatprep.mubr.bf16.mxu0 0
      %992 = vmatmul.mubr.bf16.gmra.mrb[0].mxu0 %v703
      %v993 = vpop.f32.mrb[0].mxu0
      %v994 = vadd.f32 %v316, %v993
      %v995 = vpop.f32.mrb[0].mxu0
      %v996 = vpop.f32.mrb[0].mxu0
      %v997 = vadd.f32 %v316, %v996
      %v998 = vpop.f32.mrb[0].mxu0
      %999 = vmatprep.mubr.bf16.mxu0 0
      %1000 = vmatmul.mubr.bf16.gmra.mrb[0].mxu0 %v706
      %v1001 = vpop.f32.mrb[0].mxu0
      %v1002 = vadd.f32 %v316, %v1001
      %v1003 = vpop.f32.mrb[0].mxu0
      %v1004 = vpop.f32.mrb[0].mxu0
      %v1005 = vadd.f32 %v316, %v1004
      %v1006 = vpop.f32.mrb[0].mxu0
      %1007 = vmatprep.mubr.bf16.mxu0 0
      %1008 = vmatmul.mubr.bf16.gmra.mrb[0].mxu0 %v709
      %v1009 = vpop.f32.mrb[0].mxu0
      %v1010 = vadd.f32 %v316, %v1009
      %v1011 = vpop.f32.mrb[0].mxu0
      %v1012 = vpop.f32.mrb[0].mxu0
      %v1013 = vadd.f32 %v316, %v1012
      %v1014 = vpop.f32.mrb[0].mxu0
      %1015 = vmatprep.mubr.bf16.mxu0 0
      %1016 = vmatmul.mubr.bf16.gmra.mrb[0].mxu0 %v712
      %v1017 = vpop.f32.mrb[0].mxu0
      %v1018 = vadd.f32 %v316, %v1017
      %v1019 = vpop.f32.mrb[0].mxu0
      %v1020 = vpop.f32.mrb[0].mxu0
      %v1021 = vadd.f32 %v316, %v1020
      %v1022 = vpop.f32.mrb[0].mxu0
      %1023 = vmatprep.mubr.bf16.mxu0 0
      %1024 = vmatmul.mubr.bf16.gmra.mrb[0].mxu0 %v715
      %v1025 = vpop.f32.mrb[0].mxu0
      %v1026 = vadd.f32 %v316, %v1025
      %v1027 = vpop.f32.mrb[0].mxu0
      %v1028 = vpop.f32.mrb[0].mxu0
      %v1029 = vadd.f32 %v316, %v1028
      %v1030 = vpop.f32.mrb[0].mxu0
      %1031 = vmatprep.mubr.bf16.mxu0 0
      %1032 = vmatmul.mubr.bf16.gmra.mrb[0].mxu0 %v718
      %v1033 = vpop.f32.mrb[0].mxu0
      %v1034 = vadd.f32 %v316, %v1033
      %v1035 = vpop.f32.mrb[0].mxu0
      %v1036 = vpop.f32.mrb[0].mxu0
      %v1037 = vadd.f32 %v316, %v1036
      %v1038 = vpop.f32.mrb[0].mxu0
      %1039 = vmatprep.mubr.bf16.mxu0 0
      %1040 = vmatmul.mubr.bf16.gmra.mrb[0].mxu0 %v721
      %v1041 = vpop.f32.mrb[0].mxu0
      %v1042 = vadd.f32 %v316, %v1041
      %v1043 = vpop.f32.mrb[0].mxu0
      %v1044 = vpop.f32.mrb[0].mxu0
      %v1045 = vadd.f32 %v316, %v1044
      %v1046 = vpop.f32.mrb[0].mxu0
      %1047 = vmatprep.mubr.bf16.mxu0 0
      %1048 = vmatmul.mubr.bf16.gmra.mrb[0].mxu0 %v724
      %v1049 = vpop.f32.mrb[0].mxu0
      %v1050 = vadd.f32 %v316, %v1049
      %v1051 = vpop.f32.mrb[0].mxu0
      %v1052 = vpop.f32.mrb[0].mxu0
      %v1053 = vadd.f32 %v316, %v1052
      %v1054 = vpop.f32.mrb[0].mxu0
      %1055 = vmatprep.mubr.bf16.mxu0 0
      %1056 = vmatmul.mubr.bf16.gmra.mrb[0].mxu0 %v727
      %v1057 = vpop.f32.mrb[0].mxu0
      %v1058 = vadd.f32 %v316, %v1057
      %v1059 = vpop.f32.mrb[0].mxu0
      %v1060 = vpop.f32.mrb[0].mxu0
      %v1061 = vadd.f32 %v316, %v1060
      %v1062 = vpop.f32.mrb[0].mxu0
      %1063 = vmatprep.mubr.bf16.mxu0 0
      %1064 = vmatmul.mubr.bf16.gmra.mrb[0].mxu0 %v730
      %v1065 = vpop.f32.mrb[0].mxu0
      %v1066 = vadd.f32 %v316, %v1065
      %v1067 = vpop.f32.mrb[0].mxu0
      %v1068 = vpop.f32.mrb[0].mxu0
      %v1069 = vadd.f32 %v316, %v1068
      %v1070 = vpop.f32.mrb[0].mxu0
      %1071 = vmatprep.mubr.bf16.mxu0 0
      %1072 = vmatmul.mubr.bf16.gmra.mrb[0].mxu0 %v733
      %v1073 = vpop.f32.mrb[0].mxu0
      %v1074 = vadd.f32 %v316, %v1073
      %v1075 = vpop.f32.mrb[0].mxu0
      %v1076 = vpop.f32.mrb[0].mxu0
      %v1077 = vadd.f32 %v316, %v1076
      %v1078 = vpop.f32.mrb[0].mxu0
      %1079 = vmatprep.mubr.bf16.mxu0 0
      %1080 = vmatmul.mubr.bf16.gmra.mrb[0].mxu0 %v736
      %v1081 = vpop.f32.mrb[0].mxu0
      %v1082 = vadd.f32 %v316, %v1081
      %v1083 = vpop.f32.mrb[0].mxu0
      %v1084 = vpop.f32.mrb[0].mxu0
      %v1085 = vadd.f32 %v316, %v1084
      %v1086 = vpop.f32.mrb[0].mxu0
      %1087 = vmatprep.mubr.bf16.mxu0 0
      %1088 = vmatmul.mubr.bf16.gmra.mrb[0].mxu0 %v739
      %v1089 = vpop.f32.mrb[0].mxu0
      %v1090 = vadd.f32 %v316, %v1089
      %v1091 = vpop.f32.mrb[0].mxu0
      %v1092 = vpop.f32.mrb[0].mxu0
      %v1093 = vadd.f32 %v316, %v1092
      %v1094 = vpop.f32.mrb[0].mxu0
      %1095 = vmatprep.mubr.bf16.mxu0 0
      %1096 = vmatmul.mubr.bf16.gmra.mrb[0].mxu0 %v742
      %v1097 = vpop.f32.mrb[0].mxu0
      %v1098 = vadd.f32 %v316, %v1097
      %v1099 = vpop.f32.mrb[0].mxu0
      %v1100 = vpop.f32.mrb[0].mxu0
      %v1101 = vadd.f32 %v316, %v1100
      %v1102 = vpop.f32.mrb[0].mxu0
      %1103 = vmatprep.mubr.bf16.mxu0 0
      %1104 = vmatmul.mubr.bf16.gmra.mrb[0].mxu0 %v745
      %v1105 = vpop.f32.mrb[0].mxu0
      %v1106 = vadd.f32 %v316, %v1105
      %v1107 = vpop.f32.mrb[0].mxu0
      %v1108 = vpop.f32.mrb[0].mxu0
      %v1109 = vadd.f32 %v316, %v1108
      %v1110 = vpop.f32.mrb[0].mxu0
      %1111 = vmatprep.mubr.bf16.mxu0 0
      %1112 = vmatmul.mubr.bf16.gmra.mrb[0].mxu0 %v748
      %v1113 = vpop.f32.mrb[0].mxu0
      %v1114 = vadd.f32 %v316, %v1113
      %v1115 = vpop.f32.mrb[0].mxu0
      %v1116 = vpop.f32.mrb[0].mxu0
      %v1117 = vadd.f32 %v316, %v1116
      %v1118 = vpop.f32.mrb[0].mxu0
      %1119 = vmatprep.mubr.bf16.mxu0 0
      %1120 = vmatmul.mubr.bf16.gmra.mrb[0].mxu0 %v751
      %v1121 = vpop.f32.mrb[0].mxu0
      %v1122 = vadd.f32 %v316, %v1121
      %v1123 = vpop.f32.mrb[0].mxu0
      %v1124 = vpop.f32.mrb[0].mxu0
      %v1125 = vadd.f32 %v316, %v1124
      %v1126 = vpop.f32.mrb[0].mxu0
      %1127 = vmatprep.mubr.bf16.mxu0 0
      %1128 = vmatmul.mubr.bf16.gmra.mrb[0].mxu0 %v754
      %v1129 = vpop.f32.mrb[0].mxu0
      %v1130 = vadd.f32 %v316, %v1129
      %v1131 = vpop.f32.mrb[0].mxu0
      %v1132 = vpop.f32.mrb[0].mxu0
      %v1133 = vadd.f32 %v316, %v1132
      %v1134 = vpop.f32.mrb[0].mxu0
      %1135 = vmatprep.mubr.bf16.mxu0 0
      %1136 = vmatmul.mubr.bf16.gmra.mrb[0].mxu0 %v757
      %v1137 = vpop.f32.mrb[0].mxu0
      %v1138 = vadd.f32 %v316, %v1137
      %v1139 = vpop.f32.mrb[0].mxu0
      %v1140 = vpop.f32.mrb[0].mxu0
      %v1141 = vadd.f32 %v316, %v1140
      %v1142 = vpop.f32.mrb[0].mxu0
      %1143 = vmatprep.mubr.bf16.mxu0 0
      %1144 = vmatmul.mubr.bf16.gmra.mrb[0].mxu0 %v760
      %v1145 = vpop.f32.mrb[0].mxu0
      %v1146 = vadd.f32 %v316, %v1145
      %v1147 = vpop.f32.mrb[0].mxu0
      %v1148 = vpop.f32.mrb[0].mxu0
      %v1149 = vadd.f32 %v316, %v1148
      %v1150 = vpop.f32.mrb[0].mxu0
      %1151 = vmatprep.mubr.bf16.mxu0 0
      %1152 = vmatmul.mubr.bf16.gmra.mrb[0].mxu0 %v763
      %v1153 = vpop.f32.mrb[0].mxu0
      %v1154 = vadd.f32 %v316, %v1153
      %v1155 = vpop.f32.mrb[0].mxu0
      %v1156 = vpop.f32.mrb[0].mxu0
      %v1157 = vadd.f32 %v316, %v1156
      %v1158 = vpop.f32.mrb[0].mxu0
      %1159 = vmatprep.mubr.bf16.mxu0 0
      %1160 = vmatmul.mubr.bf16.gmra.mrb[0].mxu0 %v766
      %v1161 = vpop.f32.mrb[0].mxu0
      %v1162 = vadd.f32 %v316, %v1161
      %v1163 = vpop.f32.mrb[0].mxu0
      %v1164 = vpop.f32.mrb[0].mxu0
      %v1165 = vadd.f32 %v316, %v1164
      %v1166 = vpop.f32.mrb[0].mxu0
      %1167 = vmatprep.mubr.bf16.mxu0 0
      %1168 = vmatmul.mubr.bf16.gmra.mrb[0].mxu0 %v769
      %v1169 = vpop.f32.mrb[0].mxu0
      %v1170 = vadd.f32 %v316, %v1169
      %v1171 = vpop.f32.mrb[0].mxu0
      %v1172 = vpop.f32.mrb[0].mxu0
      %v1173 = vadd.f32 %v316, %v1172
      %v1174 = vpop.f32.mrb[0].mxu0
      %1175 = vmatprep.mubr.bf16.mxu0 0
      %1176 = vmatmul.mubr.bf16.gmra.mrb[0].mxu0 %v772
      %v1177 = vpop.f32.mrb[0].mxu0
      %v1178 = vadd.f32 %v316, %v1177
      %v1179 = vpop.f32.mrb[0].mxu0
      %v1180 = vpop.f32.mrb[0].mxu0
      %v1181 = vadd.f32 %v316, %v1180
      %v1182 = vpop.f32.mrb[0].mxu0
      %1183 = vmatprep.mubr.bf16.mxu0 0
      %1184 = vmatmul.mubr.bf16.gmra.mrb[0].mxu0 %v775
      %v1185 = vpop.f32.mrb[0].mxu0
      %v1186 = vadd.f32 %v316, %v1185
      %v1187 = vpop.f32.mrb[0].mxu0
      %v1188 = vpop.f32.mrb[0].mxu0
      %v1189 = vadd.f32 %v316, %v1188
      %v1190 = vpop.f32.mrb[0].mxu0
      %1191 = vmatprep.mubr.bf16.mxu0 0
      %1192 = vmatmul.mubr.bf16.gmra.mrb[0].mxu0 %v778
      %v1193 = vpop.f32.mrb[0].mxu0
      %v1194 = vadd.f32 %v316, %v1193
      %v1195 = vpop.f32.mrb[0].mxu0
      %v1196 = vpop.f32.mrb[0].mxu0
      %v1197 = vadd.f32 %v316, %v1196
      %v1198 = vpop.f32.mrb[0].mxu0
      %1199 = vmatprep.mubr.bf16.mxu0 0
      %1200 = vmatmul.mubr.bf16.gmra.mrb[0].mxu0 %v781
      %v1201 = vpop.f32.mrb[0].mxu0
      %v1202 = vadd.f32 %v316, %v1201
      %v1203 = vpop.f32.mrb[0].mxu0
      %v1204 = vpop.f32.mrb[0].mxu0
      %v1205 = vadd.f32 %v316, %v1204
      %v1206 = vpop.f32.mrb[0].mxu0
      %1207 = vmatprep.mubr.bf16.mxu0 0
      %1208 = vmatmul.mubr.bf16.gmra.mrb[0].mxu0 %v784
      %v1209 = vpop.f32.mrb[0].mxu0
      %v1210 = vadd.f32 %v316, %v1209
      %v1211 = vpop.f32.mrb[0].mxu0
      %v1212 = vpop.f32.mrb[0].mxu0
      %v1213 = vadd.f32 %v316, %v1212
      %v1214 = vpop.f32.mrb[0].mxu0
      %1215 = vmatprep.mubr.bf16.mxu0 0
      %1216 = vmatmul.mubr.bf16.gmra.mrb[0].mxu0 %v787
      %v1217 = vpop.f32.mrb[0].mxu0
      %v1218 = vadd.f32 %v316, %v1217
      %v1219 = vpop.f32.mrb[0].mxu0
      %v1220 = vpop.f32.mrb[0].mxu0
      %v1221 = vadd.f32 %v316, %v1220
      %v1222 = vpop.f32.mrb[0].mxu0
      %1223 = vmatprep.mubr.bf16.mxu0 0
      %1224 = vmatmul.mubr.bf16.gmra.mrb[0].mxu0 %v790
      %v1225 = vpop.f32.mrb[0].mxu0
      %v1226 = vadd.f32 %v316, %v1225
      %v1227 = vpop.f32.mrb[0].mxu0
      %v1228 = vpop.f32.mrb[0].mxu0
      %v1229 = vadd.f32 %v316, %v1228
      %v1230 = vpop.f32.mrb[0].mxu0
      %1231 = vmatprep.mubr.bf16.mxu0 0
      %1232 = vmatmul.mubr.bf16.gmra.mrb[0].mxu0 %v793
      %v1233 = vpop.f32.mrb[0].mxu0
      %v1234 = vadd.f32 %v316, %v1233
      %v1235 = vpop.f32.mrb[0].mxu0
      %v1236 = vpop.f32.mrb[0].mxu0
      %v1237 = vadd.f32 %v316, %v1236
      %v1238 = vpop.f32.mrb[0].mxu0
      %1239 = vmatprep.mubr.bf16.mxu0 0
      %1240 = vmatmul.mubr.bf16.gmra.mrb[0].mxu0 %v796
      %v1241 = vpop.f32.mrb[0].mxu0
      %v1242 = vadd.f32 %v316, %v1241
      %v1243 = vpop.f32.mrb[0].mxu0
      %v1244 = vpop.f32.mrb[0].mxu0
      %v1245 = vadd.f32 %v316, %v1244
      %v1246 = vpop.f32.mrb[0].mxu0
      %1247 = vmatprep.mubr.bf16.mxu0 0
      %1248 = vmatmul.mubr.bf16.gmra.mrb[0].mxu0 %v799
      %v1249 = vpop.f32.mrb[0].mxu0
      %v1250 = vadd.f32 %v316, %v1249
      %v1251 = vpop.f32.mrb[0].mxu0
      %v1252 = vpop.f32.mrb[0].mxu0
      %v1253 = vadd.f32 %v316, %v1252
      %v1254 = vpop.f32.mrb[0].mxu0
      %1255 = vmatprep.mubr.bf16.mxu0 0
      %1256 = vmatmul.mubr.bf16.gmra.mrb[0].mxu0 %v802
      %v1257 = vpop.f32.mrb[0].mxu0
      %v1258 = vadd.f32 %v316, %v1257
      %v1259 = vpop.f32.mrb[0].mxu0
      %v1260 = vpop.f32.mrb[0].mxu0
      %v1261 = vadd.f32 %v316, %v1260
      %v1262 = vpop.f32.mrb[0].mxu0
      %1263 = vmatprep.mubr.bf16.mxu0 0
      %1264 = vmatmul.mubr.bf16.gmra.mrb[0].mxu0 %v805
      %v1265 = vpop.f32.mrb[0].mxu0
      %v1266 = vadd.f32 %v316, %v1265
      %v1267 = vpop.f32.mrb[0].mxu0
      %v1268 = vpop.f32.mrb[0].mxu0
      %v1269 = vadd.f32 %v316, %v1268
      %v1270 = vpop.f32.mrb[0].mxu0
      %1271 = vmatprep.mubr.bf16.mxu0 0
      %1272 = vmatmul.mubr.bf16.gmra.mrb[0].mxu0 %v808
      %v1273 = vpop.f32.mrb[0].mxu0
      %v1274 = vadd.f32 %v316, %v1273
      %v1275 = vpop.f32.mrb[0].mxu0
      %v1276 = vpop.f32.mrb[0].mxu0
      %v1277 = vadd.f32 %v316, %v1276
      %v1278 = vpop.f32.mrb[0].mxu0
      %1279 = vmatprep.mubr.bf16.mxu0 0
      %1280 = vmatmul.mubr.bf16.gmra.mrb[0].mxu0 %v811
      %v1281 = vpop.f32.mrb[0].mxu0
      %v1282 = vadd.f32 %v316, %v1281
      %v1283 = vpop.f32.mrb[0].mxu0
      %v1284 = vpop.f32.mrb[0].mxu0
      %v1285 = vadd.f32 %v316, %v1284
      %v1286 = vpop.f32.mrb[0].mxu0
      %1287 = vmatprep.mubr.bf16.mxu0 0
      %1288 = vmatmul.mubr.bf16.gmra.mrb[0].mxu0 %v814
      %v1289 = vpop.f32.mrb[0].mxu0
      %v1290 = vadd.f32 %v316, %v1289
      %v1291 = vpop.f32.mrb[0].mxu0
      %v1292 = vpop.f32.mrb[0].mxu0
      %v1293 = vadd.f32 %v316, %v1292
      %v1294 = vpop.f32.mrb[0].mxu0
      %1295 = vmatprep.mubr.bf16.mxu0 0
      %1296 = vmatmul.mubr.bf16.gmra.mrb[0].mxu0 %v817
      %v1297 = vpop.f32.mrb[0].mxu0
      %v1298 = vadd.f32 %v316, %v1297
      %v1299 = vpop.f32.mrb[0].mxu0
      %v1300 = vpop.f32.mrb[0].mxu0
      %v1301 = vadd.f32 %v316, %v1300
      %v1302 = vpop.f32.mrb[0].mxu0
      %1303 = vmatprep.mubr.bf16.mxu0 0
      %1304 = vmatmul.mubr.bf16.gmra.mrb[0].mxu0 %v820
      %v1305 = vpop.f32.mrb[0].mxu0
      %v1306 = vadd.f32 %v316, %v1305
      %v1307 = vpop.f32.mrb[0].mxu0
      %v1308 = vpop.f32.mrb[0].mxu0
      %v1309 = vadd.f32 %v316, %v1308
      %v1310 = vpop.f32.mrb[0].mxu0
      %1311 = vmatprep.mubr.bf16.mxu0 0
      %1312 = vmatmul.mubr.bf16.gmra.mrb[0].mxu0 %v823
      %v1313 = vpop.f32.mrb[0].mxu0
      %v1314 = vadd.f32 %v316, %v1313
      %v1315 = vpop.f32.mrb[0].mxu0
      %v1316 = vpop.f32.mrb[0].mxu0
      %v1317 = vadd.f32 %v316, %v1316
      %v1318 = vpop.f32.mrb[0].mxu0
      %1319 = vmatprep.mubr.bf16.mxu0 0
      %1320 = vmatmul.mubr.bf16.gmra.mrb[0].mxu0 %v826
      %v1321 = vpop.f32.mrb[0].mxu0
      %v1322 = vadd.f32 %v316, %v1321
      %v1323 = vpop.f32.mrb[0].mxu0
      %v1324 = vpop.f32.mrb[0].mxu0
      %v1325 = vadd.f32 %v316, %v1324
      %v1326 = vpop.f32.mrb[0].mxu0
      %1327 = vmatprep.mubr.bf16.mxu0 0
      %1328 = vmatmul.mubr.bf16.gmra.mrb[0].mxu0 %v829
      %v1329 = vpop.f32.mrb[0].mxu0
      %v1330 = vadd.f32 %v316, %v1329
      %v1331 = vpop.f32.mrb[0].mxu0
      %v1332 = vpop.f32.mrb[0].mxu0
      %v1333 = vadd.f32 %v316, %v1332
      %v1334 = vpop.f32.mrb[0].mxu0
      %1335 = vmatprep.mubr.bf16.mxu0 0
      %1336 = vmatmul.mubr.bf16.gmra.mrb[0].mxu0 %v832
      %v1337 = vpop.f32.mrb[0].mxu0
      %v1338 = vadd.f32 %v316, %v1337
      %v1339 = vpop.f32.mrb[0].mxu0
      %v1340 = vpop.f32.mrb[0].mxu0
      %v1341 = vadd.f32 %v316, %v1340
      %v1342 = vpop.f32.mrb[0].mxu0
      %1343 = vmatprep.mubr.bf16.mxu0 0
      %1344 = vmatmul.mubr.bf16.gmra.mrb[0].mxu0 %v835
      %v1345 = vpop.f32.mrb[0].mxu0
      %v1346 = vadd.f32 %v316, %v1345
      %v1347 = vpop.f32.mrb[0].mxu0
      %v1348 = vpop.f32.mrb[0].mxu0
      %v1349 = vadd.f32 %v316, %v1348
      %v1350 = vpop.f32.mrb[0].mxu0
      %1351 = vmatprep.mubr.bf16.mxu0 0
      %1352 = vmatmul.mubr.bf16.gmra.mrb[0].mxu0 %v838
      %v1353 = vpop.f32.mrb[0].mxu0
      %v1354 = vadd.f32 %v316, %v1353
      %v1355 = vpop.f32.mrb[0].mxu0
      %v1356 = vpop.f32.mrb[0].mxu0
      %v1357 = vadd.f32 %v316, %v1356
      %v1358 = vpop.f32.mrb[0].mxu0
      %1359 = vmatprep.mubr.bf16.mxu0 0
      %1360 = vmatmul.mubr.bf16.gmra.mrb[0].mxu0 %v841
      %v1361 = vpop.f32.mrb[0].mxu0
      %v1362 = vadd.f32 %v316, %v1361
      %v1363 = vpop.f32.mrb[0].mxu0
      %v1364 = vpop.f32.mrb[0].mxu0
      %v1365 = vadd.f32 %v316, %v1364
      %v1366 = vpop.f32.mrb[0].mxu0
      %1367 = vmatprep.mubr.bf16.mxu0 0
      %1368 = vmatmul.mubr.bf16.gmra.mrb[0].mxu0 %v844
      %v1369 = vpop.f32.mrb[0].mxu0
      %v1370 = vadd.f32 %v316, %v1369
      %v1371 = vpop.f32.mrb[0].mxu0
      %v1372 = vpop.f32.mrb[0].mxu0
      %v1373 = vadd.f32 %v316, %v1372
      %v1374 = vpop.f32.mrb[0].mxu0
      %1375 = vmatprep.mubr.bf16.mxu0 0
      %1376 = vmatmul.mubr.bf16.gmra.mrb[0].mxu0 %v847
      %v1377 = vpop.f32.mrb[0].mxu0
      %v1378 = vadd.f32 %v316, %v1377
      %v1379 = vpop.f32.mrb[0].mxu0
      %v1380 = vpop.f32.mrb[0].mxu0
      %v1381 = vadd.f32 %v316, %v1380
      %v1382 = vpop.f32.mrb[0].mxu0
      %1383 = vmatprep.mubr.bf16.mxu0 0
      %1384 = vmatmul.mubr.bf16.gmra.mrb[0].mxu0 %v850
      %v1385 = vpop.f32.mrb[0].mxu0
      %v1386 = vadd.f32 %v316, %v1385
      %v1387 = vpop.f32.mrb[0].mxu0
      %v1388 = vpop.f32.mrb[0].mxu0
      %v1389 = vadd.f32 %v316, %v1388
      %v1390 = vpop.f32.mrb[0].mxu0
      %1391 = vmatprep.mubr.bf16.mxu0 0
      %1392 = vmatmul.mubr.bf16.gmra.mrb[0].mxu0 %v853
      %v1393 = vpop.f32.mrb[0].mxu0
      %v1394 = vadd.f32 %v316, %v1393
      %v1395 = vpop.f32.mrb[0].mxu0
      %v1396 = vpop.f32.mrb[0].mxu0
      %v1397 = vadd.f32 %v316, %v1396
      %v1398 = vpop.f32.mrb[0].mxu0
      %1399 = vdwg.mxu0
      %vm1400 = vcmp.ge.f32.partialorder %v890, 0.0
      %vm1401 = vcmp.ge.f32.partialorder %v893, 0.0
      %vm1402 = vcmp.ge.f32.partialorder %v898, 0.0
      %vm1403 = vcmp.ge.f32.partialorder %v901, 0.0
      %vm1404 = vcmp.ge.f32.partialorder %v906, 0.0
      %vm1405 = vcmp.ge.f32.partialorder %v909, 0.0
      %vm1406 = vcmp.ge.f32.partialorder %v914, 0.0
      %vm1407 = vcmp.ge.f32.partialorder %v917, 0.0
      %vm1408 = vcmp.ge.f32.partialorder %v922, 0.0
      %vm1409 = vcmp.ge.f32.partialorder %v925, 0.0
      %vm1410 = vcmp.ge.f32.partialorder %v930, 0.0
      %vm1411 = vcmp.ge.f32.partialorder %v933, 0.0
      %vm1412 = vcmp.ge.f32.partialorder %v938, 0.0
      %vm1413 = vcmp.ge.f32.partialorder %v941, 0.0
      %vm1414 = vcmp.ge.f32.partialorder %v946, 0.0
      %vm1415 = vcmp.ge.f32.partialorder %v949, 0.0
      %vm1416 = vcmp.ge.f32.partialorder %v954, 0.0
      %vm1417 = vcmp.ge.f32.partialorder %v957, 0.0
      %vm1418 = vcmp.ge.f32.partialorder %v962, 0.0
      %vm1419 = vcmp.ge.f32.partialorder %v965, 0.0
      %vm1420 = vcmp.ge.f32.partialorder %v970, 0.0
      %vm1421 = vcmp.ge.f32.partialorder %v973, 0.0
      %vm1422 = vcmp.ge.f32.partialorder %v978, 0.0
      %vm1423 = vcmp.ge.f32.partialorder %v981, 0.0
      %vm1424 = vcmp.ge.f32.partialorder %v986, 0.0
      %vm1425 = vcmp.ge.f32.partialorder %v989, 0.0
      %vm1426 = vcmp.ge.f32.partialorder %v994, 0.0
      %vm1427 = vcmp.ge.f32.partialorder %v997, 0.0
      %vm1428 = vcmp.ge.f32.partialorder %v1002, 0.0
      %vm1429 = vcmp.ge.f32.partialorder %v1005, 0.0
      %vm1430 = vcmp.ge.f32.partialorder %v1010, 0.0
      %vm1431 = vcmp.ge.f32.partialorder %v1013, 0.0
      %vm1432 = vcmp.ge.f32.partialorder %v1018, 0.0
      %vm1433 = vcmp.ge.f32.partialorder %v1021, 0.0
      %vm1434 = vcmp.ge.f32.partialorder %v1026, 0.0
      %vm1435 = vcmp.ge.f32.partialorder %v1029, 0.0
      %vm1436 = vcmp.ge.f32.partialorder %v1034, 0.0
      %vm1437 = vcmp.ge.f32.partialorder %v1037, 0.0
      %vm1438 = vcmp.ge.f32.partialorder %v1042, 0.0
      %vm1439 = vcmp.ge.f32.partialorder %v1045, 0.0
      %vm1440 = vcmp.ge.f32.partialorder %v1050, 0.0
      %vm1441 = vcmp.ge.f32.partialorder %v1053, 0.0
      %vm1442 = vcmp.ge.f32.partialorder %v1058, 0.0
      %vm1443 = vcmp.ge.f32.partialorder %v1061, 0.0
      %vm1444 = vcmp.ge.f32.partialorder %v1066, 0.0
      %vm1445 = vcmp.ge.f32.partialorder %v1069, 0.0
      %vm1446 = vcmp.ge.f32.partialorder %v1074, 0.0
      %vm1447 = vcmp.ge.f32.partialorder %v1077, 0.0
      %vm1448 = vcmp.ge.f32.partialorder %v1082, 0.0
      %vm1449 = vcmp.ge.f32.partialorder %v1085, 0.0
      %vm1450 = vcmp.ge.f32.partialorder %v1090, 0.0
      %vm1451 = vcmp.ge.f32.partialorder %v1093, 0.0
      %vm1452 = vcmp.ge.f32.partialorder %v1098, 0.0
      %vm1453 = vcmp.ge.f32.partialorder %v1101, 0.0
      %vm1454 = vcmp.ge.f32.partialorder %v1106, 0.0
      %vm1455 = vcmp.ge.f32.partialorder %v1109, 0.0
      %vm1456 = vcmp.ge.f32.partialorder %v1114, 0.0
      %vm1457 = vcmp.ge.f32.partialorder %v1117, 0.0
      %vm1458 = vcmp.ge.f32.partialorder %v1122, 0.0
      %vm1459 = vcmp.ge.f32.partialorder %v1125, 0.0
      %vm1460 = vcmp.ge.f32.partialorder %v1130, 0.0
      %vm1461 = vcmp.ge.f32.partialorder %v1133, 0.0
      %vm1462 = vcmp.ge.f32.partialorder %v1138, 0.0
      %vm1463 = vcmp.ge.f32.partialorder %v1141, 0.0
      %vm1464 = vcmp.ge.f32.partialorder %v1146, 0.0
      %vm1465 = vcmp.ge.f32.partialorder %v1149, 0.0
      %vm1466 = vcmp.ge.f32.partialorder %v1154, 0.0
      %vm1467 = vcmp.ge.f32.partialorder %v1157, 0.0
      %vm1468 = vcmp.ge.f32.partialorder %v1162, 0.0
      %vm1469 = vcmp.ge.f32.partialorder %v1165, 0.0
      %vm1470 = vcmp.ge.f32.partialorder %v1170, 0.0
      %vm1471 = vcmp.ge.f32.partialorder %v1173, 0.0
      %vm1472 = vcmp.ge.f32.partialorder %v1178, 0.0
      %vm1473 = vcmp.ge.f32.partialorder %v1181, 0.0
      %vm1474 = vcmp.ge.f32.partialorder %v1186, 0.0
      %vm1475 = vcmp.ge.f32.partialorder %v1189, 0.0
      %vm1476 = vcmp.ge.f32.partialorder %v1194, 0.0
      %vm1477 = vcmp.ge.f32.partialorder %v1197, 0.0
      %vm1478 = vcmp.ge.f32.partialorder %v1202, 0.0
      %vm1479 = vcmp.ge.f32.partialorder %v1205, 0.0
      %vm1480 = vcmp.ge.f32.partialorder %v1210, 0.0
      %vm1481 = vcmp.ge.f32.partialorder %v1213, 0.0
      %vm1482 = vcmp.ge.f32.partialorder %v1218, 0.0
      %vm1483 = vcmp.ge.f32.partialorder %v1221, 0.0
      %vm1484 = vcmp.ge.f32.partialorder %v1226, 0.0
      %vm1485 = vcmp.ge.f32.partialorder %v1229, 0.0
      %vm1486 = vcmp.ge.f32.partialorder %v1234, 0.0
      %vm1487 = vcmp.ge.f32.partialorder %v1237, 0.0
      %vm1488 = vcmp.ge.f32.partialorder %v1242, 0.0
      %vm1489 = vcmp.ge.f32.partialorder %v1245, 0.0
      %vm1490 = vcmp.ge.f32.partialorder %v1250, 0.0
      %vm1491 = vcmp.ge.f32.partialorder %v1253, 0.0
      %vm1492 = vcmp.ge.f32.partialorder %v1258, 0.0
      %vm1493 = vcmp.ge.f32.partialorder %v1261, 0.0
      %vm1494 = vcmp.ge.f32.partialorder %v1266, 0.0
      %vm1495 = vcmp.ge.f32.partialorder %v1269, 0.0
      %vm1496 = vcmp.ge.f32.partialorder %v1274, 0.0
      %vm1497 = vcmp.ge.f32.partialorder %v1277, 0.0
      %vm1498 = vcmp.ge.f32.partialorder %v1282, 0.0
      %vm1499 = vcmp.ge.f32.partialorder %v1285, 0.0
      %vm1500 = vcmp.ge.f32.partialorder %v1290, 0.0
      %vm1501 = vcmp.ge.f32.partialorder %v1293, 0.0
      %vm1502 = vcmp.ge.f32.partialorder %v1298, 0.0
      %vm1503 = vcmp.ge.f32.partialorder %v1301, 0.0
      %vm1504 = vcmp.ge.f32.partialorder %v1306, 0.0
      %vm1505 = vcmp.ge.f32.partialorder %v1309, 0.0
      %vm1506 = vcmp.ge.f32.partialorder %v1314, 0.0
      %vm1507 = vcmp.ge.f32.partialorder %v1317, 0.0
      %vm1508 = vcmp.ge.f32.partialorder %v1322, 0.0
      %vm1509 = vcmp.ge.f32.partialorder %v1325, 0.0
      %vm1510 = vcmp.ge.f32.partialorder %v1330, 0.0
      %vm1511 = vcmp.ge.f32.partialorder %v1333, 0.0
      %vm1512 = vcmp.ge.f32.partialorder %v1338, 0.0
      %vm1513 = vcmp.ge.f32.partialorder %v1341, 0.0
      %vm1514 = vcmp.ge.f32.partialorder %v1346, 0.0
      %vm1515 = vcmp.ge.f32.partialorder %v1349, 0.0
      %vm1516 = vcmp.ge.f32.partialorder %v1354, 0.0
      %vm1517 = vcmp.ge.f32.partialorder %v1357, 0.0
      %vm1518 = vcmp.ge.f32.partialorder %v1362, 0.0
      %vm1519 = vcmp.ge.f32.partialorder %v1365, 0.0
      %vm1520 = vcmp.ge.f32.partialorder %v1370, 0.0
      %vm1521 = vcmp.ge.f32.partialorder %v1373, 0.0
      %vm1522 = vcmp.ge.f32.partialorder %v1378, 0.0
      %vm1523 = vcmp.ge.f32.partialorder %v1381, 0.0
      %vm1524 = vcmp.ge.f32.partialorder %v1386, 0.0
      %vm1525 = vcmp.ge.f32.partialorder %v1389, 0.0
      %vm1526 = vcmp.ge.f32.partialorder %v1394, 0.0
      %vm1527 = vcmp.ge.f32.partialorder %v1397, 0.0
      %v1528 = vmul.f32 %v890, 0.01
      %v1529 = vmul.f32 %v893, 0.01
      %v1530 = vmul.f32 %v898, 0.01
      %v1531 = vmul.f32 %v901, 0.01
      %v1532 = vmul.f32 %v906, 0.01
      %v1533 = vmul.f32 %v909, 0.01
      %v1534 = vmul.f32 %v914, 0.01
      %v1535 = vmul.f32 %v917, 0.01
      %v1536 = vmul.f32 %v922, 0.01
      %v1537 = vmul.f32 %v925, 0.01
      %v1538 = vmul.f32 %v930, 0.01
      %v1539 = vmul.f32 %v933, 0.01
      %v1540 = vmul.f32 %v938, 0.01
      %v1541 = vmul.f32 %v941, 0.01
      %v1542 = vmul.f32 %v946, 0.01
      %v1543 = vmul.f32 %v949, 0.01
      %v1544 = vmul.f32 %v954, 0.01
      %v1545 = vmul.f32 %v957, 0.01
      %v1546 = vmul.f32 %v962, 0.01
      %v1547 = vmul.f32 %v965, 0.01
      %v1548 = vmul.f32 %v970, 0.01
      %v1549 = vmul.f32 %v973, 0.01
      %v1550 = vmul.f32 %v978, 0.01
      %v1551 = vmul.f32 %v981, 0.01
      %v1552 = vmul.f32 %v986, 0.01
      %v1553 = vmul.f32 %v989, 0.01
      %v1554 = vmul.f32 %v994, 0.01
      %v1555 = vmul.f32 %v997, 0.01
      %v1556 = vmul.f32 %v1002, 0.01
      %v1557 = vmul.f32 %v1005, 0.01
      %v1558 = vmul.f32 %v1010, 0.01
      %v1559 = vmul.f32 %v1013, 0.01
      %v1560 = vmul.f32 %v1018, 0.01
      %v1561 = vmul.f32 %v1021, 0.01
      %v1562 = vmul.f32 %v1026, 0.01
      %v1563 = vmul.f32 %v1029, 0.01
      %v1564 = vmul.f32 %v1034, 0.01
      %v1565 = vmul.f32 %v1037, 0.01
      %v1566 = vmul.f32 %v1042, 0.01
      %v1567 = vmul.f32 %v1045, 0.01
      %v1568 = vmul.f32 %v1050, 0.01
      %v1569 = vmul.f32 %v1053, 0.01
      %v1570 = vmul.f32 %v1058, 0.01
      %v1571 = vmul.f32 %v1061, 0.01
      %v1572 = vmul.f32 %v1066, 0.01
      %v1573 = vmul.f32 %v1069, 0.01
      %v1574 = vmul.f32 %v1074, 0.01
      %v1575 = vmul.f32 %v1077, 0.01
      %v1576 = vmul.f32 %v1082, 0.01
      %v1577 = vmul.f32 %v1085, 0.01
      %v1578 = vmul.f32 %v1090, 0.01
      %v1579 = vmul.f32 %v1093, 0.01
      %v1580 = vmul.f32 %v1098, 0.01
      %v1581 = vmul.f32 %v1101, 0.01
      %v1582 = vmul.f32 %v1106, 0.01
      %v1583 = vmul.f32 %v1109, 0.01
      %v1584 = vmul.f32 %v1114, 0.01
      %v1585 = vmul.f32 %v1117, 0.01
      %v1586 = vmul.f32 %v1122, 0.01
      %v1587 = vmul.f32 %v1125, 0.01
      %v1588 = vmul.f32 %v1130, 0.01
      %v1589 = vmul.f32 %v1133, 0.01
      %v1590 = vmul.f32 %v1138, 0.01
      %v1591 = vmul.f32 %v1141, 0.01
      %v1592 = vmul.f32 %v1146, 0.01
      %v1593 = vmul.f32 %v1149, 0.01
      %v1594 = vmul.f32 %v1154, 0.01
      %v1595 = vmul.f32 %v1157, 0.01
      %v1596 = vmul.f32 %v1162, 0.01
      %v1597 = vmul.f32 %v1165, 0.01
      %v1598 = vmul.f32 %v1170, 0.01
      %v1599 = vmul.f32 %v1173, 0.01
      %v1600 = vmul.f32 %v1178, 0.01
      %v1601 = vmul.f32 %v1181, 0.01
      %v1602 = vmul.f32 %v1186, 0.01
      %v1603 = vmul.f32 %v1189, 0.01
      %v1604 = vmul.f32 %v1194, 0.01
      %v1605 = vmul.f32 %v1197, 0.01
      %v1606 = vmul.f32 %v1202, 0.01
      %v1607 = vmul.f32 %v1205, 0.01
      %v1608 = vmul.f32 %v1210, 0.01
      %v1609 = vmul.f32 %v1213, 0.01
      %v1610 = vmul.f32 %v1218, 0.01
      %v1611 = vmul.f32 %v1221, 0.01
      %v1612 = vmul.f32 %v1226, 0.01
      %v1613 = vmul.f32 %v1229, 0.01
      %v1614 = vmul.f32 %v1234, 0.01
      %v1615 = vmul.f32 %v1237, 0.01
      %v1616 = vmul.f32 %v1242, 0.01
      %v1617 = vmul.f32 %v1245, 0.01
      %v1618 = vmul.f32 %v1250, 0.01
      %v1619 = vmul.f32 %v1253, 0.01
      %v1620 = vmul.f32 %v1258, 0.01
      %v1621 = vmul.f32 %v1261, 0.01
      %v1622 = vmul.f32 %v1266, 0.01
      %v1623 = vmul.f32 %v1269, 0.01
      %v1624 = vmul.f32 %v1274, 0.01
      %v1625 = vmul.f32 %v1277, 0.01
      %v1626 = vmul.f32 %v1282, 0.01
      %v1627 = vmul.f32 %v1285, 0.01
      %v1628 = vmul.f32 %v1290, 0.01
      %v1629 = vmul.f32 %v1293, 0.01
      %v1630 = vmul.f32 %v1298, 0.01
      %v1631 = vmul.f32 %v1301, 0.01
      %v1632 = vmul.f32 %v1306, 0.01
      %v1633 = vmul.f32 %v1309, 0.01
      %v1634 = vmul.f32 %v1314, 0.01
      %v1635 = vmul.f32 %v1317, 0.01
      %v1636 = vmul.f32 %v1322, 0.01
      %v1637 = vmul.f32 %v1325, 0.01
      %v1638 = vmul.f32 %v1330, 0.01
      %v1639 = vmul.f32 %v1333, 0.01
      %v1640 = vmul.f32 %v1338, 0.01
      %v1641 = vmul.f32 %v1341, 0.01
      %v1642 = vmul.f32 %v1346, 0.01
      %v1643 = vmul.f32 %v1349, 0.01
      %v1644 = vmul.f32 %v1354, 0.01
      %v1645 = vmul.f32 %v1357, 0.01
      %v1646 = vmul.f32 %v1362, 0.01
      %v1647 = vmul.f32 %v1365, 0.01
      %v1648 = vmul.f32 %v1370, 0.01
      %v1649 = vmul.f32 %v1373, 0.01
      %v1650 = vmul.f32 %v1378, 0.01
      %v1651 = vmul.f32 %v1381, 0.01
      %v1652 = vmul.f32 %v1386, 0.01
      %v1653 = vmul.f32 %v1389, 0.01
      %v1654 = vmul.f32 %v1394, 0.01
      %v1655 = vmul.f32 %v1397, 0.01
      %v1656 = vsel %vm1400, %v890, %v1528
      %v1657 = vsel %vm1401, %v893, %v1529
      %v1658 = vsel %vm1402, %v898, %v1530
      %v1659 = vsel %vm1403, %v901, %v1531
      %v1660 = vsel %vm1404, %v906, %v1532
      %v1661 = vsel %vm1405, %v909, %v1533
      %v1662 = vsel %vm1406, %v914, %v1534
      %v1663 = vsel %vm1407, %v917, %v1535
      %v1664 = vsel %vm1408, %v922, %v1536
      %v1665 = vsel %vm1409, %v925, %v1537
      %v1666 = vsel %vm1410, %v930, %v1538
      %v1667 = vsel %vm1411, %v933, %v1539
      %v1668 = vsel %vm1412, %v938, %v1540
      %v1669 = vsel %vm1413, %v941, %v1541
      %v1670 = vsel %vm1414, %v946, %v1542
      %v1671 = vsel %vm1415, %v949, %v1543
      %v1672 = vsel %vm1416, %v954, %v1544
      %v1673 = vsel %vm1417, %v957, %v1545
      %v1674 = vsel %vm1418, %v962, %v1546
      %v1675 = vsel %vm1419, %v965, %v1547
      %v1676 = vsel %vm1420, %v970, %v1548
      %v1677 = vsel %vm1421, %v973, %v1549
      %v1678 = vsel %vm1422, %v978, %v1550
      %v1679 = vsel %vm1423, %v981, %v1551
      %v1680 = vsel %vm1424, %v986, %v1552
      %v1681 = vsel %vm1425, %v989, %v1553
      %v1682 = vsel %vm1426, %v994, %v1554
      %v1683 = vsel %vm1427, %v997, %v1555
      %v1684 = vsel %vm1428, %v1002, %v1556
      %v1685 = vsel %vm1429, %v1005, %v1557
      %v1686 = vsel %vm1430, %v1010, %v1558
      %v1687 = vsel %vm1431, %v1013, %v1559
      %v1688 = vsel %vm1432, %v1018, %v1560
      %v1689 = vsel %vm1433, %v1021, %v1561
      %v1690 = vsel %vm1434, %v1026, %v1562
      %v1691 = vsel %vm1435, %v1029, %v1563
      %v1692 = vsel %vm1436, %v1034, %v1564
      %v1693 = vsel %vm1437, %v1037, %v1565
      %v1694 = vsel %vm1438, %v1042, %v1566
      %v1695 = vsel %vm1439, %v1045, %v1567
      %v1696 = vsel %vm1440, %v1050, %v1568
      %v1697 = vsel %vm1441, %v1053, %v1569
      %v1698 = vsel %vm1442, %v1058, %v1570
      %v1699 = vsel %vm1443, %v1061, %v1571
      %v1700 = vsel %vm1444, %v1066, %v1572
      %v1701 = vsel %vm1445, %v1069, %v1573
      %v1702 = vsel %vm1446, %v1074, %v1574
      %v1703 = vsel %vm1447, %v1077, %v1575
      %v1704 = vsel %vm1448, %v1082, %v1576
      %v1705 = vsel %vm1449, %v1085, %v1577
      %v1706 = vsel %vm1450, %v1090, %v1578
      %v1707 = vsel %vm1451, %v1093, %v1579
      %v1708 = vsel %vm1452, %v1098, %v1580
      %v1709 = vsel %vm1453, %v1101, %v1581
      %v1710 = vsel %vm1454, %v1106, %v1582
      %v1711 = vsel %vm1455, %v1109, %v1583
      %v1712 = vsel %vm1456, %v1114, %v1584
      %v1713 = vsel %vm1457, %v1117, %v1585
      %v1714 = vsel %vm1458, %v1122, %v1586
      %v1715 = vsel %vm1459, %v1125, %v1587
      %v1716 = vsel %vm1460, %v1130, %v1588
      %v1717 = vsel %vm1461, %v1133, %v1589
      %v1718 = vsel %vm1462, %v1138, %v1590
      %v1719 = vsel %vm1463, %v1141, %v1591
      %v1720 = vsel %vm1464, %v1146, %v1592
      %v1721 = vsel %vm1465, %v1149, %v1593
      %v1722 = vsel %vm1466, %v1154, %v1594
      %v1723 = vsel %vm1467, %v1157, %v1595
      %v1724 = vsel %vm1468, %v1162, %v1596
      %v1725 = vsel %vm1469, %v1165, %v1597
      %v1726 = vsel %vm1470, %v1170, %v1598
      %v1727 = vsel %vm1471, %v1173, %v1599
      %v1728 = vsel %vm1472, %v1178, %v1600
      %v1729 = vsel %vm1473, %v1181, %v1601
      %v1730 = vsel %vm1474, %v1186, %v1602
      %v1731 = vsel %vm1475, %v1189, %v1603
      %v1732 = vsel %vm1476, %v1194, %v1604
      %v1733 = vsel %vm1477, %v1197, %v1605
      %v1734 = vsel %vm1478, %v1202, %v1606
      %v1735 = vsel %vm1479, %v1205, %v1607
      %v1736 = vsel %vm1480, %v1210, %v1608
      %v1737 = vsel %vm1481, %v1213, %v1609
      %v1738 = vsel %vm1482, %v1218, %v1610
      %v1739 = vsel %vm1483, %v1221, %v1611
      %v1740 = vsel %vm1484, %v1226, %v1612
      %v1741 = vsel %vm1485, %v1229, %v1613
      %v1742 = vsel %vm1486, %v1234, %v1614
      %v1743 = vsel %vm1487, %v1237, %v1615
      %v1744 = vsel %vm1488, %v1242, %v1616
      %v1745 = vsel %vm1489, %v1245, %v1617
      %v1746 = vsel %vm1490, %v1250, %v1618
      %v1747 = vsel %vm1491, %v1253, %v1619
      %v1748 = vsel %vm1492, %v1258, %v1620
      %v1749 = vsel %vm1493, %v1261, %v1621
      %v1750 = vsel %vm1494, %v1266, %v1622
      %v1751 = vsel %vm1495, %v1269, %v1623
      %v1752 = vsel %vm1496, %v1274, %v1624
      %v1753 = vsel %vm1497, %v1277, %v1625
      %v1754 = vsel %vm1498, %v1282, %v1626
      %v1755 = vsel %vm1499, %v1285, %v1627
      %v1756 = vsel %vm1500, %v1290, %v1628
      %v1757 = vsel %vm1501, %v1293, %v1629
      %v1758 = vsel %vm1502, %v1298, %v1630
      %v1759 = vsel %vm1503, %v1301, %v1631
      %v1760 = vsel %vm1504, %v1306, %v1632
      %v1761 = vsel %vm1505, %v1309, %v1633
      %v1762 = vsel %vm1506, %v1314, %v1634
      %v1763 = vsel %vm1507, %v1317, %v1635
      %v1764 = vsel %vm1508, %v1322, %v1636
      %v1765 = vsel %vm1509, %v1325, %v1637
      %v1766 = vsel %vm1510, %v1330, %v1638
      %v1767 = vsel %vm1511, %v1333, %v1639
      %v1768 = vsel %vm1512, %v1338, %v1640
      %v1769 = vsel %vm1513, %v1341, %v1641
      %v1770 = vsel %vm1514, %v1346, %v1642
      %v1771 = vsel %vm1515, %v1349, %v1643
      %v1772 = vsel %vm1516, %v1354, %v1644
      %v1773 = vsel %vm1517, %v1357, %v1645
      %v1774 = vsel %vm1518, %v1362, %v1646
      %v1775 = vsel %vm1519, %v1365, %v1647
      %v1776 = vsel %vm1520, %v1370, %v1648
      %v1777 = vsel %vm1521, %v1373, %v1649
      %v1778 = vsel %vm1522, %v1378, %v1650
      %v1779 = vsel %vm1523, %v1381, %v1651
      %v1780 = vsel %vm1524, %v1386, %v1652
      %v1781 = vsel %vm1525, %v1389, %v1653
      %v1782 = vsel %vm1526, %v1394, %v1654
      %v1783 = vsel %vm1527, %v1397, %v1655
      %v1784 = vpack.c.bf16 %v1657, %v1656
      %v1785 = vpack.c.bf16 %v1659, %v1658
      %v1786 = vpack.c.bf16 %v1661, %v1660
      %v1787 = vpack.c.bf16 %v1663, %v1662
      %v1788 = vpack.c.bf16 %v1665, %v1664
      %v1789 = vpack.c.bf16 %v1667, %v1666
      %v1790 = vpack.c.bf16 %v1669, %v1668
      %v1791 = vpack.c.bf16 %v1671, %v1670
      %v1792 = vpack.c.bf16 %v1673, %v1672
      %v1793 = vpack.c.bf16 %v1675, %v1674
      %v1794 = vpack.c.bf16 %v1677, %v1676
      %v1795 = vpack.c.bf16 %v1679, %v1678
      %v1796 = vpack.c.bf16 %v1681, %v1680
      %v1797 = vpack.c.bf16 %v1683, %v1682
      %v1798 = vpack.c.bf16 %v1685, %v1684
      %v1799 = vpack.c.bf16 %v1687, %v1686
      %v1800 = vpack.c.bf16 %v1689, %v1688
      %v1801 = vpack.c.bf16 %v1691, %v1690
      %v1802 = vpack.c.bf16 %v1693, %v1692
      %v1803 = vpack.c.bf16 %v1695, %v1694
      %v1804 = vpack.c.bf16 %v1697, %v1696
      %v1805 = vpack.c.bf16 %v1699, %v1698
      %v1806 = vpack.c.bf16 %v1701, %v1700
      %v1807 = vpack.c.bf16 %v1703, %v1702
      %v1808 = vpack.c.bf16 %v1705, %v1704
      %v1809 = vpack.c.bf16 %v1707, %v1706
      %v1810 = vpack.c.bf16 %v1709, %v1708
      %v1811 = vpack.c.bf16 %v1711, %v1710
      %v1812 = vpack.c.bf16 %v1713, %v1712
      %v1813 = vpack.c.bf16 %v1715, %v1714
      %v1814 = vpack.c.bf16 %v1717, %v1716
      %v1815 = vpack.c.bf16 %v1719, %v1718
      %v1816 = vpack.c.bf16 %v1721, %v1720
      %v1817 = vpack.c.bf16 %v1723, %v1722
      %v1818 = vpack.c.bf16 %v1725, %v1724
      %v1819 = vpack.c.bf16 %v1727, %v1726
      %v1820 = vpack.c.bf16 %v1729, %v1728
      %v1821 = vpack.c.bf16 %v1731, %v1730
      %v1822 = vpack.c.bf16 %v1733, %v1732
      %v1823 = vpack.c.bf16 %v1735, %v1734
      %v1824 = vpack.c.bf16 %v1737, %v1736
      %v1825 = vpack.c.bf16 %v1739, %v1738
      %v1826 = vpack.c.bf16 %v1741, %v1740
      %v1827 = vpack.c.bf16 %v1743, %v1742
      %v1828 = vpack.c.bf16 %v1745, %v1744
      %v1829 = vpack.c.bf16 %v1747, %v1746
      %v1830 = vpack.c.bf16 %v1749, %v1748
      %v1831 = vpack.c.bf16 %v1751, %v1750
      %v1832 = vpack.c.bf16 %v1753, %v1752
      %v1833 = vpack.c.bf16 %v1755, %v1754
      %v1834 = vpack.c.bf16 %v1757, %v1756
      %v1835 = vpack.c.bf16 %v1759, %v1758
      %v1836 = vpack.c.bf16 %v1761, %v1760
      %v1837 = vpack.c.bf16 %v1763, %v1762
      %v1838 = vpack.c.bf16 %v1765, %v1764
      %v1839 = vpack.c.bf16 %v1767, %v1766
      %v1840 = vpack.c.bf16 %v1769, %v1768
      %v1841 = vpack.c.bf16 %v1771, %v1770
      %v1842 = vpack.c.bf16 %v1773, %v1772
      %v1843 = vpack.c.bf16 %v1775, %v1774
      %v1844 = vpack.c.bf16 %v1777, %v1776
      %v1845 = vpack.c.bf16 %v1779, %v1778
      %v1846 = vpack.c.bf16 %v1781, %v1780
      %v1847 = vpack.c.bf16 %v1783, %v1782
      %v1912 = vunpack.c.l.b16 %v1784
      %v1913 = vunpack.c.h.b16 %v1784
      %v1914 = vunpack.c.l.b16 %v1785
      %v1915 = vunpack.c.h.b16 %v1785
      %v1916 = vunpack.c.l.b16 %v1786
      %v1917 = vunpack.c.h.b16 %v1786
      %v1918 = vunpack.c.l.b16 %v1787
      %v1919 = vunpack.c.h.b16 %v1787
      %v1920 = vunpack.c.l.b16 %v1788
      %v1921 = vunpack.c.h.b16 %v1788
      %v1922 = vunpack.c.l.b16 %v1789
      %v1923 = vunpack.c.h.b16 %v1789
      %v1924 = vunpack.c.l.b16 %v1790
      %v1925 = vunpack.c.h.b16 %v1790
      %v1926 = vunpack.c.l.b16 %v1791
      %v1927 = vunpack.c.h.b16 %v1791
      %v1928 = vunpack.c.l.b16 %v1792
      %v1929 = vunpack.c.h.b16 %v1792
      %v1930 = vunpack.c.l.b16 %v1793
      %v1931 = vunpack.c.h.b16 %v1793
      %v1932 = vunpack.c.l.b16 %v1794
      %v1933 = vunpack.c.h.b16 %v1794
      %v1934 = vunpack.c.l.b16 %v1795
      %v1935 = vunpack.c.h.b16 %v1795
      %v1936 = vunpack.c.l.b16 %v1796
      %v1937 = vunpack.c.h.b16 %v1796
      %v1938 = vunpack.c.l.b16 %v1797
      %v1939 = vunpack.c.h.b16 %v1797
      %v1940 = vunpack.c.l.b16 %v1798
      %v1941 = vunpack.c.h.b16 %v1798
      %v1942 = vunpack.c.l.b16 %v1799
      %v1943 = vunpack.c.h.b16 %v1799
      %v1944 = vunpack.c.l.b16 %v1800
      %v1945 = vunpack.c.h.b16 %v1800
      %v1946 = vunpack.c.l.b16 %v1801
      %v1947 = vunpack.c.h.b16 %v1801
      %v1948 = vunpack.c.l.b16 %v1802
      %v1949 = vunpack.c.h.b16 %v1802
      %v1950 = vunpack.c.l.b16 %v1803
      %v1951 = vunpack.c.h.b16 %v1803
      %v1952 = vunpack.c.l.b16 %v1804
      %v1953 = vunpack.c.h.b16 %v1804
      %v1954 = vunpack.c.l.b16 %v1805
      %v1955 = vunpack.c.h.b16 %v1805
      %v1956 = vunpack.c.l.b16 %v1806
      %v1957 = vunpack.c.h.b16 %v1806
      %v1958 = vunpack.c.l.b16 %v1807
      %v1959 = vunpack.c.h.b16 %v1807
      %v1960 = vunpack.c.l.b16 %v1808
      %v1961 = vunpack.c.h.b16 %v1808
      %v1962 = vunpack.c.l.b16 %v1809
      %v1963 = vunpack.c.h.b16 %v1809
      %v1964 = vunpack.c.l.b16 %v1810
      %v1965 = vunpack.c.h.b16 %v1810
      %v1966 = vunpack.c.l.b16 %v1811
      %v1967 = vunpack.c.h.b16 %v1811
      %v1968 = vunpack.c.l.b16 %v1812
      %v1969 = vunpack.c.h.b16 %v1812
      %v1970 = vunpack.c.l.b16 %v1813
      %v1971 = vunpack.c.h.b16 %v1813
      %v1972 = vunpack.c.l.b16 %v1814
      %v1973 = vunpack.c.h.b16 %v1814
      %v1974 = vunpack.c.l.b16 %v1815
      %v1975 = vunpack.c.h.b16 %v1815
      %v1976 = vunpack.c.l.b16 %v1816
      %v1977 = vunpack.c.h.b16 %v1816
      %v1978 = vunpack.c.l.b16 %v1817
      %v1979 = vunpack.c.h.b16 %v1817
      %v1980 = vunpack.c.l.b16 %v1818
      %v1981 = vunpack.c.h.b16 %v1818
      %v1982 = vunpack.c.l.b16 %v1819
      %v1983 = vunpack.c.h.b16 %v1819
      %v1984 = vunpack.c.l.b16 %v1820
      %v1985 = vunpack.c.h.b16 %v1820
      %v1986 = vunpack.c.l.b16 %v1821
      %v1987 = vunpack.c.h.b16 %v1821
      %v1988 = vunpack.c.l.b16 %v1822
      %v1989 = vunpack.c.h.b16 %v1822
      %v1990 = vunpack.c.l.b16 %v1823
      %v1991 = vunpack.c.h.b16 %v1823
      %v1992 = vunpack.c.l.b16 %v1824
      %v1993 = vunpack.c.h.b16 %v1824
      %v1994 = vunpack.c.l.b16 %v1825
      %v1995 = vunpack.c.h.b16 %v1825
      %v1996 = vunpack.c.l.b16 %v1826
      %v1997 = vunpack.c.h.b16 %v1826
      %v1998 = vunpack.c.l.b16 %v1827
      %v1999 = vunpack.c.h.b16 %v1827
      %v2000 = vunpack.c.l.b16 %v1828
      %v2001 = vunpack.c.h.b16 %v1828
      %v2002 = vunpack.c.l.b16 %v1829
      %v2003 = vunpack.c.h.b16 %v1829
      %v2004 = vunpack.c.l.b16 %v1830
      %v2005 = vunpack.c.h.b16 %v1830
      %v2006 = vunpack.c.l.b16 %v1831
      %v2007 = vunpack.c.h.b16 %v1831
      %v2008 = vunpack.c.l.b16 %v1832
      %v2009 = vunpack.c.h.b16 %v1832
      %v2010 = vunpack.c.l.b16 %v1833
      %v2011 = vunpack.c.h.b16 %v1833
      %v2012 = vunpack.c.l.b16 %v1834
      %v2013 = vunpack.c.h.b16 %v1834
      %v2014 = vunpack.c.l.b16 %v1835
      %v2015 = vunpack.c.h.b16 %v1835
      %v2016 = vunpack.c.l.b16 %v1836
      %v2017 = vunpack.c.h.b16 %v1836
      %v2018 = vunpack.c.l.b16 %v1837
      %v2019 = vunpack.c.h.b16 %v1837
      %v2020 = vunpack.c.l.b16 %v1838
      %v2021 = vunpack.c.h.b16 %v1838
      %v2022 = vunpack.c.l.b16 %v1839
      %v2023 = vunpack.c.h.b16 %v1839
      %v2024 = vunpack.c.l.b16 %v1840
      %v2025 = vunpack.c.h.b16 %v1840
      %v2026 = vunpack.c.l.b16 %v1841
      %v2027 = vunpack.c.h.b16 %v1841
      %v2028 = vunpack.c.l.b16 %v1842
      %v2029 = vunpack.c.h.b16 %v1842
      %v2030 = vunpack.c.l.b16 %v1843
      %v2031 = vunpack.c.h.b16 %v1843
      %v2032 = vunpack.c.l.b16 %v1844
      %v2033 = vunpack.c.h.b16 %v1844
      %v2034 = vunpack.c.l.b16 %v1845
      %v2035 = vunpack.c.h.b16 %v1845
      %v2036 = vunpack.c.l.b16 %v1846
      %v2037 = vunpack.c.h.b16 %v1846
      %v2038 = vunpack.c.l.b16 %v1847
      %v2039 = vunpack.c.h.b16 %v1847
      %v2040 = vpack.c.b16 %v1912, %v1912
      %v2041 = vpack.c.b16 %v1913, %v1913
      %v2042 = vpack.c.b16 %v1914, %v1914
      %v2043 = vpack.c.b16 %v1915, %v1915
      %v2044 = vpack.c.b16 %v1916, %v1916
      %v2045 = vpack.c.b16 %v1917, %v1917
      %v2046 = vpack.c.b16 %v1918, %v1918
      %v2047 = vpack.c.b16 %v1919, %v1919
      %v2048 = vpack.c.b16 %v1920, %v1920
      %v2049 = vpack.c.b16 %v1921, %v1921
      %v2050 = vpack.c.b16 %v1922, %v1922
      %v2051 = vpack.c.b16 %v1923, %v1923
      %v2052 = vpack.c.b16 %v1924, %v1924
      %v2053 = vpack.c.b16 %v1925, %v1925
      %v2054 = vpack.c.b16 %v1926, %v1926
      %v2055 = vpack.c.b16 %v1927, %v1927
      %v2056 = vpack.c.b16 %v1928, %v1928
      %v2057 = vpack.c.b16 %v1929, %v1929
      %v2058 = vpack.c.b16 %v1930, %v1930
      %v2059 = vpack.c.b16 %v1931, %v1931
      %v2060 = vpack.c.b16 %v1932, %v1932
      %v2061 = vpack.c.b16 %v1933, %v1933
      %v2062 = vpack.c.b16 %v1934, %v1934
      %v2063 = vpack.c.b16 %v1935, %v1935
      %v2064 = vpack.c.b16 %v1936, %v1936
      %v2065 = vpack.c.b16 %v1937, %v1937
      %v2066 = vpack.c.b16 %v1938, %v1938
      %v2067 = vpack.c.b16 %v1939, %v1939
      %v2068 = vpack.c.b16 %v1940, %v1940
      %v2069 = vpack.c.b16 %v1941, %v1941
      %v2070 = vpack.c.b16 %v1942, %v1942
      %v2071 = vpack.c.b16 %v1943, %v1943
      %v2072 = vpack.c.b16 %v1944, %v1944
      %v2073 = vpack.c.b16 %v1945, %v1945
      %v2074 = vpack.c.b16 %v1946, %v1946
      %v2075 = vpack.c.b16 %v1947, %v1947
      %v2076 = vpack.c.b16 %v1948, %v1948
      %v2077 = vpack.c.b16 %v1949, %v1949
      %v2078 = vpack.c.b16 %v1950, %v1950
      %v2079 = vpack.c.b16 %v1951, %v1951
      %v2080 = vpack.c.b16 %v1952, %v1952
      %v2081 = vpack.c.b16 %v1953, %v1953
      %v2082 = vpack.c.b16 %v1954, %v1954
      %v2083 = vpack.c.b16 %v1955, %v1955
      %v2084 = vpack.c.b16 %v1956, %v1956
      %v2085 = vpack.c.b16 %v1957, %v1957
      %v2086 = vpack.c.b16 %v1958, %v1958
      %v2087 = vpack.c.b16 %v1959, %v1959
      %v2088 = vpack.c.b16 %v1960, %v1960
      %v2089 = vpack.c.b16 %v1961, %v1961
      %v2090 = vpack.c.b16 %v1962, %v1962
      %v2091 = vpack.c.b16 %v1963, %v1963
      %v2092 = vpack.c.b16 %v1964, %v1964
      %v2093 = vpack.c.b16 %v1965, %v1965
      %v2094 = vpack.c.b16 %v1966, %v1966
      %v2095 = vpack.c.b16 %v1967, %v1967
      %v2096 = vpack.c.b16 %v1968, %v1968
      %v2097 = vpack.c.b16 %v1969, %v1969
      %v2098 = vpack.c.b16 %v1970, %v1970
      %v2099 = vpack.c.b16 %v1971, %v1971
      %v2100 = vpack.c.b16 %v1972, %v1972
      %v2101 = vpack.c.b16 %v1973, %v1973
      %v2102 = vpack.c.b16 %v1974, %v1974
      %v2103 = vpack.c.b16 %v1975, %v1975
      %v2104 = vpack.c.b16 %v1976, %v1976
      %v2105 = vpack.c.b16 %v1977, %v1977
      %v2106 = vpack.c.b16 %v1978, %v1978
      %v2107 = vpack.c.b16 %v1979, %v1979
      %v2108 = vpack.c.b16 %v1980, %v1980
      %v2109 = vpack.c.b16 %v1981, %v1981
      %v2110 = vpack.c.b16 %v1982, %v1982
      %v2111 = vpack.c.b16 %v1983, %v1983
      %v2112 = vpack.c.b16 %v1984, %v1984
      %v2113 = vpack.c.b16 %v1985, %v1985
      %v2114 = vpack.c.b16 %v1986, %v1986
      %v2115 = vpack.c.b16 %v1987, %v1987
      %v2116 = vpack.c.b16 %v1988, %v1988
      %v2117 = vpack.c.b16 %v1989, %v1989
      %v2118 = vpack.c.b16 %v1990, %v1990
      %v2119 = vpack.c.b16 %v1991, %v1991
      %v2120 = vpack.c.b16 %v1992, %v1992
      %v2121 = vpack.c.b16 %v1993, %v1993
      %v2122 = vpack.c.b16 %v1994, %v1994
      %v2123 = vpack.c.b16 %v1995, %v1995
      %v2124 = vpack.c.b16 %v1996, %v1996
      %v2125 = vpack.c.b16 %v1997, %v1997
      %v2126 = vpack.c.b16 %v1998, %v1998
      %v2127 = vpack.c.b16 %v1999, %v1999
      %v2128 = vpack.c.b16 %v2000, %v2000
      %v2129 = vpack.c.b16 %v2001, %v2001
      %v2130 = vpack.c.b16 %v2002, %v2002
      %v2131 = vpack.c.b16 %v2003, %v2003
      %v2132 = vpack.c.b16 %v2004, %v2004
      %v2133 = vpack.c.b16 %v2005, %v2005
      %v2134 = vpack.c.b16 %v2006, %v2006
      %v2135 = vpack.c.b16 %v2007, %v2007
      %v2136 = vpack.c.b16 %v2008, %v2008
      %v2137 = vpack.c.b16 %v2009, %v2009
      %v2138 = vpack.c.b16 %v2010, %v2010
      %v2139 = vpack.c.b16 %v2011, %v2011
      %v2140 = vpack.c.b16 %v2012, %v2012
      %v2141 = vpack.c.b16 %v2013, %v2013
      %v2142 = vpack.c.b16 %v2014, %v2014
      %v2143 = vpack.c.b16 %v2015, %v2015
      %v2144 = vpack.c.b16 %v2016, %v2016
      %v2145 = vpack.c.b16 %v2017, %v2017
      %v2146 = vpack.c.b16 %v2018, %v2018
      %v2147 = vpack.c.b16 %v2019, %v2019
      %v2148 = vpack.c.b16 %v2020, %v2020
      %v2149 = vpack.c.b16 %v2021, %v2021
      %v2150 = vpack.c.b16 %v2022, %v2022
      %v2151 = vpack.c.b16 %v2023, %v2023
      %v2152 = vpack.c.b16 %v2024, %v2024
      %v2153 = vpack.c.b16 %v2025, %v2025
      %v2154 = vpack.c.b16 %v2026, %v2026
      %v2155 = vpack.c.b16 %v2027, %v2027
      %v2156 = vpack.c.b16 %v2028, %v2028
      %v2157 = vpack.c.b16 %v2029, %v2029
      %v2158 = vpack.c.b16 %v2030, %v2030
      %v2159 = vpack.c.b16 %v2031, %v2031
      %v2160 = vpack.c.b16 %v2032, %v2032
      %v2161 = vpack.c.b16 %v2033, %v2033
      %v2162 = vpack.c.b16 %v2034, %v2034
      %v2163 = vpack.c.b16 %v2035, %v2035
      %v2164 = vpack.c.b16 %v2036, %v2036
      %v2165 = vpack.c.b16 %v2037, %v2037
      %v2166 = vpack.c.b16 %v2038, %v2038
      %v2167 = vpack.c.b16 %v2039, %v2039
      %vm2296 = vcmask 60416
      %2297 = vst.msk [vmem:[%s172] sm:$0xf] %vm2296, %v2040
      %2298 = vst.msk [vmem:[%s172 + $0x4] sm:$0xf] %vm2296, %v2041
      %2299 = vst.msk [vmem:[%s172 + $0x8] sm:$0xf] %vm2296, %v2042
      %2300 = vst.msk [vmem:[%s172 + $0xc] sm:$0xf] %vm2296, %v2043
      %2301 = vst.msk [vmem:[%s172 + $0x10] sm:$0xf] %vm2296, %v2044
      %2302 = vst.msk [vmem:[%s172 + $0x14] sm:$0xf] %vm2296, %v2045
      %2303 = vst.msk [vmem:[%s172 + $0x18] sm:$0xf] %vm2296, %v2046
      %2304 = vst.msk [vmem:[%s172 + $0x1c] sm:$0xf] %vm2296, %v2047
      %2305 = vst.msk [vmem:[%s172 + $0x20] sm:$0xf] %vm2296, %v2048
      %2306 = vst.msk [vmem:[%s172 + $0x24] sm:$0xf] %vm2296, %v2049
      %2307 = vst.msk [vmem:[%s172 + $0x28] sm:$0xf] %vm2296, %v2050
      %2308 = vst.msk [vmem:[%s172 + $0x2c] sm:$0xf] %vm2296, %v2051
      %2309 = vst.msk [vmem:[%s172 + $0x30] sm:$0xf] %vm2296, %v2052
      %2310 = vst.msk [vmem:[%s172 + $0x34] sm:$0xf] %vm2296, %v2053
      %2311 = vst.msk [vmem:[%s172 + $0x38] sm:$0xf] %vm2296, %v2054
      %2312 = vst.msk [vmem:[%s172 + $0x3c] sm:$0xf] %vm2296, %v2055
      %2313 = vst.msk [vmem:[%s172 + $0x40] sm:$0xf] %vm2296, %v2056
      %2314 = vst.msk [vmem:[%s172 + $0x44] sm:$0xf] %vm2296, %v2057
      %2315 = vst.msk [vmem:[%s172 + $0x48] sm:$0xf] %vm2296, %v2058
      %2316 = vst.msk [vmem:[%s172 + $0x4c] sm:$0xf] %vm2296, %v2059
      %2317 = vst.msk [vmem:[%s172 + $0x50] sm:$0xf] %vm2296, %v2060
      %2318 = vst.msk [vmem:[%s172 + $0x54] sm:$0xf] %vm2296, %v2061
      %2319 = vst.msk [vmem:[%s172 + $0x58] sm:$0xf] %vm2296, %v2062
      %2320 = vst.msk [vmem:[%s172 + $0x5c] sm:$0xf] %vm2296, %v2063
      %2321 = vst.msk [vmem:[%s172 + $0x60] sm:$0xf] %vm2296, %v2064
      %2322 = vst.msk [vmem:[%s172 + $0x64] sm:$0xf] %vm2296, %v2065
      %2323 = vst.msk [vmem:[%s172 + $0x68] sm:$0xf] %vm2296, %v2066
      %2324 = vst.msk [vmem:[%s172 + $0x6c] sm:$0xf] %vm2296, %v2067
      %2325 = vst.msk [vmem:[%s172 + $0x70] sm:$0xf] %vm2296, %v2068
      %2326 = vst.msk [vmem:[%s172 + $0x74] sm:$0xf] %vm2296, %v2069
      %2327 = vst.msk [vmem:[%s172 + $0x78] sm:$0xf] %vm2296, %v2070
      %2328 = vst.msk [vmem:[%s172 + $0x7c] sm:$0xf] %vm2296, %v2071
      %2329 = vst.msk [vmem:[%s172 + $0x80] sm:$0xf] %vm2296, %v2072
      %2330 = vst.msk [vmem:[%s172 + $0x84] sm:$0xf] %vm2296, %v2073
      %2331 = vst.msk [vmem:[%s172 + $0x88] sm:$0xf] %vm2296, %v2074
      %2332 = vst.msk [vmem:[%s172 + $0x8c] sm:$0xf] %vm2296, %v2075
      %2333 = vst.msk [vmem:[%s172 + $0x90] sm:$0xf] %vm2296, %v2076
      %2334 = vst.msk [vmem:[%s172 + $0x94] sm:$0xf] %vm2296, %v2077
      %2335 = vst.msk [vmem:[%s172 + $0x98] sm:$0xf] %vm2296, %v2078
      %2336 = vst.msk [vmem:[%s172 + $0x9c] sm:$0xf] %vm2296, %v2079
      %2337 = vst.msk [vmem:[%s172 + $0xa0] sm:$0xf] %vm2296, %v2080
      %2338 = vst.msk [vmem:[%s172 + $0xa4] sm:$0xf] %vm2296, %v2081
      %2339 = vst.msk [vmem:[%s172 + $0xa8] sm:$0xf] %vm2296, %v2082
      %2340 = vst.msk [vmem:[%s172 + $0xac] sm:$0xf] %vm2296, %v2083
      %2341 = vst.msk [vmem:[%s172 + $0xb0] sm:$0xf] %vm2296, %v2084
      %2342 = vst.msk [vmem:[%s172 + $0xb4] sm:$0xf] %vm2296, %v2085
      %2343 = vst.msk [vmem:[%s172 + $0xb8] sm:$0xf] %vm2296, %v2086
      %2344 = vst.msk [vmem:[%s172 + $0xbc] sm:$0xf] %vm2296, %v2087
      %2345 = vst.msk [vmem:[%s172 + $0xc0] sm:$0xf] %vm2296, %v2088
      %2346 = vst.msk [vmem:[%s172 + $0xc4] sm:$0xf] %vm2296, %v2089
      %2347 = vst.msk [vmem:[%s172 + $0xc8] sm:$0xf] %vm2296, %v2090
      %2348 = vst.msk [vmem:[%s172 + $0xcc] sm:$0xf] %vm2296, %v2091
      %2349 = vst.msk [vmem:[%s172 + $0xd0] sm:$0xf] %vm2296, %v2092
      %2350 = vst.msk [vmem:[%s172 + $0xd4] sm:$0xf] %vm2296, %v2093
      %2351 = vst.msk [vmem:[%s172 + $0xd8] sm:$0xf] %vm2296, %v2094
      %2352 = vst.msk [vmem:[%s172 + $0xdc] sm:$0xf] %vm2296, %v2095
      %2353 = vst.msk [vmem:[%s172 + $0xe0] sm:$0xf] %vm2296, %v2096
      %2354 = vst.msk [vmem:[%s172 + $0xe4] sm:$0xf] %vm2296, %v2097
      %2355 = vst.msk [vmem:[%s172 + $0xe8] sm:$0xf] %vm2296, %v2098
      %2356 = vst.msk [vmem:[%s172 + $0xec] sm:$0xf] %vm2296, %v2099
      %2357 = vst.msk [vmem:[%s172 + $0xf0] sm:$0xf] %vm2296, %v2100
      %2358 = vst.msk [vmem:[%s172 + $0xf4] sm:$0xf] %vm2296, %v2101
      %2359 = vst.msk [vmem:[%s172 + $0xf8] sm:$0xf] %vm2296, %v2102
      %2360 = vst.msk [vmem:[%s172 + $0xfc] sm:$0xf] %vm2296, %v2103
      %2361 = vst.msk [vmem:[%s172 + $0x100] sm:$0xf] %vm2296, %v2104
      %2362 = vst.msk [vmem:[%s172 + $0x104] sm:$0xf] %vm2296, %v2105
      %2363 = vst.msk [vmem:[%s172 + $0x108] sm:$0xf] %vm2296, %v2106
      %2364 = vst.msk [vmem:[%s172 + $0x10c] sm:$0xf] %vm2296, %v2107
      %2365 = vst.msk [vmem:[%s172 + $0x110] sm:$0xf] %vm2296, %v2108
      %2366 = vst.msk [vmem:[%s172 + $0x114] sm:$0xf] %vm2296, %v2109
      %2367 = vst.msk [vmem:[%s172 + $0x118] sm:$0xf] %vm2296, %v2110
      %2368 = vst.msk [vmem:[%s172 + $0x11c] sm:$0xf] %vm2296, %v2111
      %2369 = vst.msk [vmem:[%s172 + $0x120] sm:$0xf] %vm2296, %v2112
      %2370 = vst.msk [vmem:[%s172 + $0x124] sm:$0xf] %vm2296, %v2113
      %2371 = vst.msk [vmem:[%s172 + $0x128] sm:$0xf] %vm2296, %v2114
      %2372 = vst.msk [vmem:[%s172 + $0x12c] sm:$0xf] %vm2296, %v2115
      %2373 = vst.msk [vmem:[%s172 + $0x130] sm:$0xf] %vm2296, %v2116
      %2374 = vst.msk [vmem:[%s172 + $0x134] sm:$0xf] %vm2296, %v2117
      %2375 = vst.msk [vmem:[%s172 + $0x138] sm:$0xf] %vm2296, %v2118
      %2376 = vst.msk [vmem:[%s172 + $0x13c] sm:$0xf] %vm2296, %v2119
      %2377 = vst.msk [vmem:[%s172 + $0x140] sm:$0xf] %vm2296, %v2120
      %2378 = vst.msk [vmem:[%s172 + $0x144] sm:$0xf] %vm2296, %v2121
      %2379 = vst.msk [vmem:[%s172 + $0x148] sm:$0xf] %vm2296, %v2122
      %2380 = vst.msk [vmem:[%s172 + $0x14c] sm:$0xf] %vm2296, %v2123
      %2381 = vst.msk [vmem:[%s172 + $0x150] sm:$0xf] %vm2296, %v2124
      %2382 = vst.msk [vmem:[%s172 + $0x154] sm:$0xf] %vm2296, %v2125
      %2383 = vst.msk [vmem:[%s172 + $0x158] sm:$0xf] %vm2296, %v2126
      %2384 = vst.msk [vmem:[%s172 + $0x15c] sm:$0xf] %vm2296, %v2127
      %2385 = vst.msk [vmem:[%s172 + $0x160] sm:$0xf] %vm2296, %v2128
      %2386 = vst.msk [vmem:[%s172 + $0x164] sm:$0xf] %vm2296, %v2129
      %2387 = vst.msk [vmem:[%s172 + $0x168] sm:$0xf] %vm2296, %v2130
      %2388 = vst.msk [vmem:[%s172 + $0x16c] sm:$0xf] %vm2296, %v2131
      %2389 = vst.msk [vmem:[%s172 + $0x170] sm:$0xf] %vm2296, %v2132
      %2390 = vst.msk [vmem:[%s172 + $0x174] sm:$0xf] %vm2296, %v2133
      %2391 = vst.msk [vmem:[%s172 + $0x178] sm:$0xf] %vm2296, %v2134
      %2392 = vst.msk [vmem:[%s172 + $0x17c] sm:$0xf] %vm2296, %v2135
      %2393 = vst.msk [vmem:[%s172 + $0x180] sm:$0xf] %vm2296, %v2136
      %2394 = vst.msk [vmem:[%s172 + $0x184] sm:$0xf] %vm2296, %v2137
      %2395 = vst.msk [vmem:[%s172 + $0x188] sm:$0xf] %vm2296, %v2138
      %2396 = vst.msk [vmem:[%s172 + $0x18c] sm:$0xf] %vm2296, %v2139
      %2397 = vst.msk [vmem:[%s172 + $0x190] sm:$0xf] %vm2296, %v2140
      %2398 = vst.msk [vmem:[%s172 + $0x194] sm:$0xf] %vm2296, %v2141
      %2399 = vst.msk [vmem:[%s172 + $0x198] sm:$0xf] %vm2296, %v2142
      %2400 = vst.msk [vmem:[%s172 + $0x19c] sm:$0xf] %vm2296, %v2143
      %2401 = vst.msk [vmem:[%s172 + $0x1a0] sm:$0xf] %vm2296, %v2144
      %2402 = vst.msk [vmem:[%s172 + $0x1a4] sm:$0xf] %vm2296, %v2145
      %2403 = vst.msk [vmem:[%s172 + $0x1a8] sm:$0xf] %vm2296, %v2146
      %2404 = vst.msk [vmem:[%s172 + $0x1ac] sm:$0xf] %vm2296, %v2147
      %2405 = vst.msk [vmem:[%s172 + $0x1b0] sm:$0xf] %vm2296, %v2148
      %2406 = vst.msk [vmem:[%s172 + $0x1b4] sm:$0xf] %vm2296, %v2149
      %2407 = vst.msk [vmem:[%s172 + $0x1b8] sm:$0xf] %vm2296, %v2150
      %2408 = vst.msk [vmem:[%s172 + $0x1bc] sm:$0xf] %vm2296, %v2151
      %2409 = vst.msk [vmem:[%s172 + $0x1c0] sm:$0xf] %vm2296, %v2152
      %2410 = vst.msk [vmem:[%s172 + $0x1c4] sm:$0xf] %vm2296, %v2153
      %2411 = vst.msk [vmem:[%s172 + $0x1c8] sm:$0xf] %vm2296, %v2154
      %2412 = vst.msk [vmem:[%s172 + $0x1cc] sm:$0xf] %vm2296, %v2155
      %2413 = vst.msk [vmem:[%s172 + $0x1d0] sm:$0xf] %vm2296, %v2156
      %2414 = vst.msk [vmem:[%s172 + $0x1d4] sm:$0xf] %vm2296, %v2157
      %2415 = vst.msk [vmem:[%s172 + $0x1d8] sm:$0xf] %vm2296, %v2158
      %2416 = vst.msk [vmem:[%s172 + $0x1dc] sm:$0xf] %vm2296, %v2159
      %2417 = vst.msk [vmem:[%s172 + $0x1e0] sm:$0xf] %vm2296, %v2160
      %2418 = vst.msk [vmem:[%s172 + $0x1e4] sm:$0xf] %vm2296, %v2161
      %2419 = vst.msk [vmem:[%s172 + $0x1e8] sm:$0xf] %vm2296, %v2162
      %2420 = vst.msk [vmem:[%s172 + $0x1ec] sm:$0xf] %vm2296, %v2163
      %2421 = vst.msk [vmem:[%s172 + $0x1f0] sm:$0xf] %vm2296, %v2164
      %2422 = vst.msk [vmem:[%s172 + $0x1f4] sm:$0xf] %vm2296, %v2165
      %2423 = vst.msk [vmem:[%s172 + $0x1f8] sm:$0xf] %vm2296, %v2166
      %2424 = vst.msk [vmem:[%s172 + $0x1fc] sm:$0xf] %vm2296, %v2167
      %s2425 = smul.u32 128, %s14
      %p2426 = scmp.lt.s32.totalorder %s2425, 1535
      %s2427 = scalar_select %p2426, %s2425, 1535
      %s2428 = smul.addr %s2427, 4
      %s2429 = scalar_lea.vmem %s3, %s2428
      // Predicated region
      $region33: #{stargan_discriminator.8} parent=31 // pred_check
        %p2430 = pneg %p100
      $region34: #{stargan_discriminator.8} parent=31 // pred_check_branch
        %2432 = sbr.rel (%p2430) target = $region36
      $region35: #{stargan_discriminator.8} parent=31 // pred_region
        %s2433 = smul.u32 128, %s14
      $region36: #{stargan_discriminator.8} parent=31 // pred_fallthru
        _
    $region32: #{stargan_discriminator.8} parent=5 // pred_fallthru
      _
    %p2434 = scmp.le.s32.totalorder 2, %s9
    // Predicated region
    $region37: #{stargan_discriminator.8} parent=5 // pred_check
      %p2435 = pneg %p2434
    $region38: #{stargan_discriminator.8} parent=5 // pred_check_branch
      %2437 = sbr.rel (%p2435) target = $region40
    $region39: #{stargan_discriminator.8} parent=5 // pred_region
      %s2438 = ssub.s32 %s9, 2
      // Predicated region
      $region41: #{stargan_discriminator.8} parent=39 // pred_check
        %p2439 = pneg %p106
      $region42: #{stargan_discriminator.8} parent=39 // pred_check_branch
        %2441 = sbr.rel (%p2439) target = $region44
      $region43: #{stargan_discriminator.8} parent=39 // pred_region
        %s2442 = smul.u32 128, %s15
        %p2443 = scmp.lt.s32.totalorder %s2442, 1535
        %s2444 = scalar_select %p2443, %s2442, 1535
        %s2445 = smul.addr %s2444, 4
        %s2446 = scalar_lea.vmem %s3, %s2445
      $region44: #{stargan_discriminator.8} parent=39 // pred_fallthru
        _
    $region40: #{stargan_discriminator.8} parent=5 // pred_fallthru
      _
  $region6: #{stargan_discriminator.8} parent=0 // loop_footer
    %s13 = sadd.s32 1, %s9
  $region7: #{stargan_discriminator.8} parent=0 // loop_footer_branch
    %8 = sbr.rel target = $region3
  $region8: #{stargan_discriminator.8} parent=0 // loop_exit
    _

// kernel: stargan_discriminator.9
$region0: #{stargan_discriminator.9}
  #allocation0 [shape = 'u32[]', space=smem, size = 0x4, offset = 0x4, fixed_abs, tag = 'smem constant byte address 0x4 - core index']
  #allocation1 [shape = 'u32[144,128]{1,0:T(1,128)}', space=vmem, size = 0x12000, scoped, tag = 'internal scratch']
  %s0 = inlined_call_operand.vmem [shape: bf16[3072,128], index: 0, kind: input, shape index: {}]
  %s1 = inlined_call_operand.vmem [shape: bf16[128,16], index: 1, kind: input, shape index: {}]
  %s2 = inlined_call_operand.vmem [shape: f32[1,16], index: 2, kind: input, shape index: {}]
  %s3 = inlined_call_operand.vmem [shape: bf16[3072,16], index: 3, kind: output, shape index: {}]
  %s4 = sld [smem:[#allocation0]]
  $region45: #{stargan_discriminator.9} parent=0
    _
  %s6 = ssub.s32 1, %s4
  %s7 = scalar_select 0, %s6, %s4
  loop: start=0, step=1, limit=5
  $region2: #{stargan_discriminator.9} parent=0 // loop_pre_header
    _
  $region3: #{stargan_discriminator.9} parent=0 // loop_header
    %s9 = sphi 0, %s13
    %p10 = scmp.ge.s32.totalorder %s9, 5
    %s19 = sphi 0, %s21
    %s22 = sphi 0, %s19
    %s23 = sphi 0, %s22
    %s39 = sphi 0, %s23
    %s43 = sphi 0, %s43
    %s45 = sphi 0, %s43
    %s46 = sphi 0, %s45
    %s60 = sphi 0, %s46
    %s64 = sphi 0, %s64
    %s66 = sphi 0, %s64
    %s67 = sphi 0, %s66
    %s81 = sphi 0, %s67
    %s87 = sphi 0, %s89
    %s90 = sphi 0, %s87
    %s91 = sphi 0, %s90
    %s107 = sphi 0, %s91
  $region4: #{stargan_discriminator.9} parent=0 // loop_header_branch
    %12 = sbr.rel (%p10) target = $region8
  $region5: #{stargan_discriminator.9} parent=0 // loop_body
    %s14 = ssub.s32 %s9, 1
    %s15 = ssub.s32 %s9, 2
    %s16 = sadd.s32 %s9, 1
    %s17 = ssub.s32 %s9, %s16
    %p18 = scmp.eq.s32.totalorder %s17, 0
    %s20 = sadd.s32 %s19, 1
    %s21 = scalar_select %p18, %s19, %s20
    %p24 = pneg %p18
    %p25 = scmp.eq.s32.totalorder %s9, 2
    %p26 = por %p24, %p25
    %p27 = scmp.ne.s32.totalorder %s19, %s22
    %p28 = scmp.eq.s32.totalorder %s9, 0
    %p29 = por %p27, %p28
    %p30 = scmp.ne.s32.totalorder %s19, %s22
    %p31 = scmp.eq.s32.totalorder %s14, 2
    %p32 = por %p30, %p31
    %p33 = scmp.ne.s32.totalorder %s22, %s23
    %p34 = scmp.eq.s32.totalorder %s14, 0
    %p35 = por %p33, %p34
    %p36 = scmp.ne.s32.totalorder %s22, %s23
    %p37 = scmp.eq.s32.totalorder %s15, 2
    %p38 = por %p36, %p37
    %p40 = scmp.ne.s32.totalorder %s23, %s39
    %p41 = scmp.eq.s32.totalorder %s15, 0
    %p42 = por %p40, %p41
    %s44 = sadd.s32 %s43, 1
    %p47 = scmp.eq.s32.totalorder %s9, 2
    %p48 = scmp.ne.s32.totalorder %s43, %s45
    %p49 = scmp.eq.s32.totalorder %s9, 0
    %p50 = por %p48, %p49
    %p51 = scmp.ne.s32.totalorder %s43, %s45
    %p52 = scmp.eq.s32.totalorder %s14, 2
    %p53 = por %p51, %p52
    %p54 = scmp.ne.s32.totalorder %s45, %s46
    %p55 = scmp.eq.s32.totalorder %s14, 0
    %p56 = por %p54, %p55
    %p57 = scmp.ne.s32.totalorder %s45, %s46
    %p58 = scmp.eq.s32.totalorder %s15, 2
    %p59 = por %p57, %p58
    %p61 = scmp.ne.s32.totalorder %s46, %s60
    %p62 = scmp.eq.s32.totalorder %s15, 0
    %p63 = por %p61, %p62
    %s65 = sadd.s32 %s64, 1
    %p68 = scmp.eq.s32.totalorder %s9, 2
    %p69 = scmp.ne.s32.totalorder %s64, %s66
    %p70 = scmp.eq.s32.totalorder %s9, 0
    %p71 = por %p69, %p70
    %p72 = scmp.ne.s32.totalorder %s64, %s66
    %p73 = scmp.eq.s32.totalorder %s14, 2
    %p74 = por %p72, %p73
    %p75 = scmp.ne.s32.totalorder %s66, %s67
    %p76 = scmp.eq.s32.totalorder %s14, 0
    %p77 = por %p75, %p76
    %p78 = scmp.ne.s32.totalorder %s66, %s67
    %p79 = scmp.eq.s32.totalorder %s15, 2
    %p80 = por %p78, %p79
    %p82 = scmp.ne.s32.totalorder %s67, %s81
    %p83 = scmp.eq.s32.totalorder %s15, 0
    %p84 = por %p82, %p83
    %s85 = ssub.s32 %s9, %s16
    %p86 = scmp.eq.s32.totalorder %s85, 0
    %s88 = sadd.s32 %s87, 1
    %s89 = scalar_select %p86, %s87, %s88
    %p92 = pneg %p86
    %p93 = scmp.eq.s32.totalorder %s9, 2
    %p94 = por %p92, %p93
    %p95 = scmp.ne.s32.totalorder %s87, %s90
    %p96 = scmp.eq.s32.totalorder %s9, 0
    %p97 = por %p95, %p96
    %p98 = scmp.ne.s32.totalorder %s87, %s90
    %p99 = scmp.eq.s32.totalorder %s14, 2
    %p100 = por %p98, %p99
    %p101 = scmp.ne.s32.totalorder %s90, %s91
    %p102 = scmp.eq.s32.totalorder %s14, 0
    %p103 = por %p101, %p102
    %p104 = scmp.ne.s32.totalorder %s90, %s91
    %p105 = scmp.eq.s32.totalorder %s15, 2
    %p106 = por %p104, %p105
    %p108 = scmp.ne.s32.totalorder %s91, %s107
    %p109 = scmp.eq.s32.totalorder %s15, 0
    %p110 = por %p108, %p109
    %p111 = scmp.le.s32.totalorder 1, %s9
    %p112 = scmp.lt.s32.totalorder %s9, 4
    %p113 = pnand %p111, %p112
    %p114 = pneg %p113
    // Predicated region
    $region9: #{stargan_discriminator.9} parent=5 // pred_check
      _
    $region10: #{stargan_discriminator.9} parent=5 // pred_check_branch
      %116 = sbr.rel (%p113) target = $region12
    $region11: #{stargan_discriminator.9} parent=5 // pred_region
      %s117 = ssub.s32 %s9, 1
      // Predicated region
      $region13: #{stargan_discriminator.9} parent=11 // pred_check
        %p118 = pneg %p56
      $region14: #{stargan_discriminator.9} parent=11 // pred_check_branch
        %120 = sbr.rel (%p118) target = $region16
      $region15: #{stargan_discriminator.9} parent=11 // pred_region
        _
      $region16: #{stargan_discriminator.9} parent=11 // pred_fallthru
        _
      // Predicated region
      $region17: #{stargan_discriminator.9} parent=11 // pred_check
        %p121 = pneg %p77
      $region18: #{stargan_discriminator.9} parent=11 // pred_check_branch
        %123 = sbr.rel (%p121) target = $region20
      $region19: #{stargan_discriminator.9} parent=11 // pred_region
        _
      $region20: #{stargan_discriminator.9} parent=11 // pred_fallthru
        _
    $region12: #{stargan_discriminator.9} parent=5 // pred_fallthru
      _
    %p124 = scmp.lt.s32.totalorder %s9, 3
    // Predicated region
    $region21: #{stargan_discriminator.9} parent=5 // pred_check
      %p125 = pneg %p124
    $region22: #{stargan_discriminator.9} parent=5 // pred_check_branch
      %127 = sbr.rel (%p125) target = $region24
    $region23: #{stargan_discriminator.9} parent=5 // pred_region
      // Predicated region
      $region25: #{stargan_discriminator.9} parent=23 // pred_check
        %p128 = pneg %p29
      $region26: #{stargan_discriminator.9} parent=23 // pred_check_branch
        %130 = sbr.rel (%p128) target = $region28
      $region27: #{stargan_discriminator.9} parent=23 // pred_region
        %s131 = smul.u32 128, %s9
        %p132 = scmp.lt.s32.totalorder %s131, 383
        %s133 = scalar_select %p132, %s131, 383
        %s134 = smul.addr %s133, 4
        %s135 = scalar_lea.vmem %s0, %s134
        %s136 = smul.u32 128, %s9
      $region28: #{stargan_discriminator.9} parent=23 // pred_fallthru
        _
    $region24: #{stargan_discriminator.9} parent=5 // pred_fallthru
      _
    %p137 = scmp.le.s32.totalorder 1, %s9
    %p138 = scmp.lt.s32.totalorder %s9, 4
    %p139 = pnand %p137, %p138
    %p140 = pneg %p139
    // Predicated region
    $region29: #{stargan_discriminator.9} parent=5 // pred_check
      _
    $region30: #{stargan_discriminator.9} parent=5 // pred_check_branch
      %142 = sbr.rel (%p139) target = $region32
    $region31: #{stargan_discriminator.9} parent=5 // pred_region
      %s143 = ssub.s32 %s9, 1
      %s144 = smul.u32 128, %s14
      %p145 = scmp.lt.s32.totalorder %s144, 383
      %s146 = scalar_select %p145, %s144, 383
      %s147 = smul.addr %s146, 4
      %s148 = scalar_lea.vmem %s0, %s147
      %p149 = pneg %p35
      %p150 = pneg %p32
      %p151 = pneg %p56
      %p152 = pneg %p53
      %p153 = pneg %p77
      %p154 = pneg %p74
      %p155 = pneg %p103
      %p156 = pneg %p100
      %s157 = smul.u32 128, %s14
      %p158 = scmp.lt.s32.totalorder %s157, 383
      %s159 = scalar_select %p158, %s157, 383
      %s160 = smul.addr %s159, 4
      %s161 = scalar_lea.vmem %s3, %s160
      %s162 = smul.u32 128, %s14
      %p163 = scmp.lt.s32.totalorder %s162, 383
      %s164 = scalar_select %p163, %s162, 383
      %s165 = smul.addr %s164, 4
      %s166 = scalar_lea.vmem %s0, %s165
      %s167 = smul.u32 128, %s14
      %s168 = smul.u32 128, %s14
      %p169 = scmp.lt.s32.totalorder %s168, 383
      %s170 = scalar_select %p169, %s168, 383
      %s171 = smul.addr %s170, 4
      %s172 = scalar_lea.vmem %s3, %s171
      %s173 = smul.u32 128, %s14
      %v175 = vld [vmem:[%s166] sm:$0xf]
      %v176 = vld [vmem:[%s166 + $0x4] sm:$0xf]
      %v177 = vld [vmem:[%s166 + $0x8] sm:$0xf]
      %v178 = vld [vmem:[%s166 + $0xc] sm:$0xf]
      %v179 = vld [vmem:[%s166 + $0x10] sm:$0xf]
      %v180 = vld [vmem:[%s166 + $0x14] sm:$0xf]
      %v181 = vld [vmem:[%s166 + $0x18] sm:$0xf]
      %v182 = vld [vmem:[%s166 + $0x1c] sm:$0xf]
      %v183 = vld [vmem:[%s166 + $0x20] sm:$0xf]
      %v184 = vld [vmem:[%s166 + $0x24] sm:$0xf]
      %v185 = vld [vmem:[%s166 + $0x28] sm:$0xf]
      %v186 = vld [vmem:[%s166 + $0x2c] sm:$0xf]
      %v187 = vld [vmem:[%s166 + $0x30] sm:$0xf]
      %v188 = vld [vmem:[%s166 + $0x34] sm:$0xf]
      %v189 = vld [vmem:[%s166 + $0x38] sm:$0xf]
      %v190 = vld [vmem:[%s166 + $0x3c] sm:$0xf]
      %v191 = vld [vmem:[%s166 + $0x40] sm:$0xf]
      %v192 = vld [vmem:[%s166 + $0x44] sm:$0xf]
      %v193 = vld [vmem:[%s166 + $0x48] sm:$0xf]
      %v194 = vld [vmem:[%s166 + $0x4c] sm:$0xf]
      %v195 = vld [vmem:[%s166 + $0x50] sm:$0xf]
      %v196 = vld [vmem:[%s166 + $0x54] sm:$0xf]
      %v197 = vld [vmem:[%s166 + $0x58] sm:$0xf]
      %v198 = vld [vmem:[%s166 + $0x5c] sm:$0xf]
      %v199 = vld [vmem:[%s166 + $0x60] sm:$0xf]
      %v200 = vld [vmem:[%s166 + $0x64] sm:$0xf]
      %v201 = vld [vmem:[%s166 + $0x68] sm:$0xf]
      %v202 = vld [vmem:[%s166 + $0x6c] sm:$0xf]
      %v203 = vld [vmem:[%s166 + $0x70] sm:$0xf]
      %v204 = vld [vmem:[%s166 + $0x74] sm:$0xf]
      %v205 = vld [vmem:[%s166 + $0x78] sm:$0xf]
      %v206 = vld [vmem:[%s166 + $0x7c] sm:$0xf]
      %v207 = vld [vmem:[%s166 + $0x80] sm:$0xf]
      %v208 = vld [vmem:[%s166 + $0x84] sm:$0xf]
      %v209 = vld [vmem:[%s166 + $0x88] sm:$0xf]
      %v210 = vld [vmem:[%s166 + $0x8c] sm:$0xf]
      %v211 = vld [vmem:[%s166 + $0x90] sm:$0xf]
      %v212 = vld [vmem:[%s166 + $0x94] sm:$0xf]
      %v213 = vld [vmem:[%s166 + $0x98] sm:$0xf]
      %v214 = vld [vmem:[%s166 + $0x9c] sm:$0xf]
      %v215 = vld [vmem:[%s166 + $0xa0] sm:$0xf]
      %v216 = vld [vmem:[%s166 + $0xa4] sm:$0xf]
      %v217 = vld [vmem:[%s166 + $0xa8] sm:$0xf]
      %v218 = vld [vmem:[%s166 + $0xac] sm:$0xf]
      %v219 = vld [vmem:[%s166 + $0xb0] sm:$0xf]
      %v220 = vld [vmem:[%s166 + $0xb4] sm:$0xf]
      %v221 = vld [vmem:[%s166 + $0xb8] sm:$0xf]
      %v222 = vld [vmem:[%s166 + $0xbc] sm:$0xf]
      %v223 = vld [vmem:[%s166 + $0xc0] sm:$0xf]
      %v224 = vld [vmem:[%s166 + $0xc4] sm:$0xf]
      %v225 = vld [vmem:[%s166 + $0xc8] sm:$0xf]
      %v226 = vld [vmem:[%s166 + $0xcc] sm:$0xf]
      %v227 = vld [vmem:[%s166 + $0xd0] sm:$0xf]
      %v228 = vld [vmem:[%s166 + $0xd4] sm:$0xf]
      %v229 = vld [vmem:[%s166 + $0xd8] sm:$0xf]
      %v230 = vld [vmem:[%s166 + $0xdc] sm:$0xf]
      %v231 = vld [vmem:[%s166 + $0xe0] sm:$0xf]
      %v232 = vld [vmem:[%s166 + $0xe4] sm:$0xf]
      %v233 = vld [vmem:[%s166 + $0xe8] sm:$0xf]
      %v234 = vld [vmem:[%s166 + $0xec] sm:$0xf]
      %v235 = vld [vmem:[%s166 + $0xf0] sm:$0xf]
      %v236 = vld [vmem:[%s166 + $0xf4] sm:$0xf]
      %v237 = vld [vmem:[%s166 + $0xf8] sm:$0xf]
      %v238 = vld [vmem:[%s166 + $0xfc] sm:$0xf]
      %v239 = vld [vmem:[%s166 + $0x100] sm:$0xf]
      %v240 = vld [vmem:[%s166 + $0x104] sm:$0xf]
      %v241 = vld [vmem:[%s166 + $0x108] sm:$0xf]
      %v242 = vld [vmem:[%s166 + $0x10c] sm:$0xf]
      %v243 = vld [vmem:[%s166 + $0x110] sm:$0xf]
      %v244 = vld [vmem:[%s166 + $0x114] sm:$0xf]
      %v245 = vld [vmem:[%s166 + $0x118] sm:$0xf]
      %v246 = vld [vmem:[%s166 + $0x11c] sm:$0xf]
      %v247 = vld [vmem:[%s166 + $0x120] sm:$0xf]
      %v248 = vld [vmem:[%s166 + $0x124] sm:$0xf]
      %v249 = vld [vmem:[%s166 + $0x128] sm:$0xf]
      %v250 = vld [vmem:[%s166 + $0x12c] sm:$0xf]
      %v251 = vld [vmem:[%s166 + $0x130] sm:$0xf]
      %v252 = vld [vmem:[%s166 + $0x134] sm:$0xf]
      %v253 = vld [vmem:[%s166 + $0x138] sm:$0xf]
      %v254 = vld [vmem:[%s166 + $0x13c] sm:$0xf]
      %v255 = vld [vmem:[%s166 + $0x140] sm:$0xf]
      %v256 = vld [vmem:[%s166 + $0x144] sm:$0xf]
      %v257 = vld [vmem:[%s166 + $0x148] sm:$0xf]
      %v258 = vld [vmem:[%s166 + $0x14c] sm:$0xf]
      %v259 = vld [vmem:[%s166 + $0x150] sm:$0xf]
      %v260 = vld [vmem:[%s166 + $0x154] sm:$0xf]
      %v261 = vld [vmem:[%s166 + $0x158] sm:$0xf]
      %v262 = vld [vmem:[%s166 + $0x15c] sm:$0xf]
      %v263 = vld [vmem:[%s166 + $0x160] sm:$0xf]
      %v264 = vld [vmem:[%s166 + $0x164] sm:$0xf]
      %v265 = vld [vmem:[%s166 + $0x168] sm:$0xf]
      %v266 = vld [vmem:[%s166 + $0x16c] sm:$0xf]
      %v267 = vld [vmem:[%s166 + $0x170] sm:$0xf]
      %v268 = vld [vmem:[%s166 + $0x174] sm:$0xf]
      %v269 = vld [vmem:[%s166 + $0x178] sm:$0xf]
      %v270 = vld [vmem:[%s166 + $0x17c] sm:$0xf]
      %v271 = vld [vmem:[%s166 + $0x180] sm:$0xf]
      %v272 = vld [vmem:[%s166 + $0x184] sm:$0xf]
      %v273 = vld [vmem:[%s166 + $0x188] sm:$0xf]
      %v274 = vld [vmem:[%s166 + $0x18c] sm:$0xf]
      %v275 = vld [vmem:[%s166 + $0x190] sm:$0xf]
      %v276 = vld [vmem:[%s166 + $0x194] sm:$0xf]
      %v277 = vld [vmem:[%s166 + $0x198] sm:$0xf]
      %v278 = vld [vmem:[%s166 + $0x19c] sm:$0xf]
      %v279 = vld [vmem:[%s166 + $0x1a0] sm:$0xf]
      %v280 = vld [vmem:[%s166 + $0x1a4] sm:$0xf]
      %v281 = vld [vmem:[%s166 + $0x1a8] sm:$0xf]
      %v282 = vld [vmem:[%s166 + $0x1ac] sm:$0xf]
      %v283 = vld [vmem:[%s166 + $0x1b0] sm:$0xf]
      %v284 = vld [vmem:[%s166 + $0x1b4] sm:$0xf]
      %v285 = vld [vmem:[%s166 + $0x1b8] sm:$0xf]
      %v286 = vld [vmem:[%s166 + $0x1bc] sm:$0xf]
      %v287 = vld [vmem:[%s166 + $0x1c0] sm:$0xf]
      %v288 = vld [vmem:[%s166 + $0x1c4] sm:$0xf]
      %v289 = vld [vmem:[%s166 + $0x1c8] sm:$0xf]
      %v290 = vld [vmem:[%s166 + $0x1cc] sm:$0xf]
      %v291 = vld [vmem:[%s166 + $0x1d0] sm:$0xf]
      %v292 = vld [vmem:[%s166 + $0x1d4] sm:$0xf]
      %v293 = vld [vmem:[%s166 + $0x1d8] sm:$0xf]
      %v294 = vld [vmem:[%s166 + $0x1dc] sm:$0xf]
      %v295 = vld [vmem:[%s166 + $0x1e0] sm:$0xf]
      %v296 = vld [vmem:[%s166 + $0x1e4] sm:$0xf]
      %v297 = vld [vmem:[%s166 + $0x1e8] sm:$0xf]
      %v298 = vld [vmem:[%s166 + $0x1ec] sm:$0xf]
      %v299 = vld [vmem:[%s166 + $0x1f0] sm:$0xf]
      %v300 = vld [vmem:[%s166 + $0x1f4] sm:$0xf]
      %v301 = vld [vmem:[%s166 + $0x1f8] sm:$0xf]
      %v302 = vld [vmem:[%s166 + $0x1fc] sm:$0xf]
      %v303 = vld [vmem:[%s1] sm:$0xf]
      %v304 = vld [vmem:[%s1 + $0x4] sm:$0xf]
      %v305 = vld [vmem:[%s1 + $0x8] sm:$0xf]
      %v306 = vld [vmem:[%s1 + $0xc] sm:$0xf]
      %v307 = vld [vmem:[%s1 + $0x10] sm:$0xf]
      %v308 = vld [vmem:[%s1 + $0x14] sm:$0xf]
      %v309 = vld [vmem:[%s1 + $0x18] sm:$0xf]
      %v310 = vld [vmem:[%s1 + $0x1c] sm:$0xf]
      %v311 = vld [vmem:[%s1 + $0x20] sm:$0xf]
      %v312 = vld [vmem:[%s1 + $0x24] sm:$0xf]
      %v313 = vld [vmem:[%s1 + $0x28] sm:$0xf]
      %v314 = vld [vmem:[%s1 + $0x2c] sm:$0xf]
      %v315 = vld [vmem:[%s1 + $0x30] sm:$0xf]
      %v316 = vld [vmem:[%s1 + $0x34] sm:$0xf]
      %v317 = vld [vmem:[%s1 + $0x38] sm:$0xf]
      %v318 = vld [vmem:[%s1 + $0x3c] sm:$0xf]
      %v319 = vld [vmem:[%s2] sm:$0x1]
      %v321 = vlaneseq
      %v322 = vshrl.u32 %v321, 7
      %v323 = vsub.s32 0, %v322
      %v324 = vrot.slane %v319, %v323
      %v454 = vunpack.c.l.b16 %v175
      %v455 = vunpack.c.l.b16 %v176
      %v456 = vunpack.c.l.b16 %v177
      %v457 = vunpack.c.l.b16 %v178
      %v458 = vunpack.c.l.b16 %v179
      %v459 = vunpack.c.l.b16 %v180
      %v460 = vunpack.c.l.b16 %v181
      %v461 = vunpack.c.l.b16 %v182
      %v462 = vunpack.c.l.b16 %v183
      %v463 = vunpack.c.l.b16 %v184
      %v464 = vunpack.c.l.b16 %v185
      %v465 = vunpack.c.l.b16 %v186
      %v466 = vunpack.c.l.b16 %v187
      %v467 = vunpack.c.l.b16 %v188
      %v468 = vunpack.c.l.b16 %v189
      %v469 = vunpack.c.l.b16 %v190
      %v470 = vunpack.c.l.b16 %v191
      %v471 = vunpack.c.l.b16 %v192
      %v472 = vunpack.c.l.b16 %v193
      %v473 = vunpack.c.l.b16 %v194
      %v474 = vunpack.c.l.b16 %v195
      %v475 = vunpack.c.l.b16 %v196
      %v476 = vunpack.c.l.b16 %v197
      %v477 = vunpack.c.l.b16 %v198
      %v478 = vunpack.c.l.b16 %v199
      %v479 = vunpack.c.l.b16 %v200
      %v480 = vunpack.c.l.b16 %v201
      %v481 = vunpack.c.l.b16 %v202
      %v482 = vunpack.c.l.b16 %v203
      %v483 = vunpack.c.l.b16 %v204
      %v484 = vunpack.c.l.b16 %v205
      %v485 = vunpack.c.l.b16 %v206
      %v486 = vunpack.c.l.b16 %v207
      %v487 = vunpack.c.l.b16 %v208
      %v488 = vunpack.c.l.b16 %v209
      %v489 = vunpack.c.l.b16 %v210
      %v490 = vunpack.c.l.b16 %v211
      %v491 = vunpack.c.l.b16 %v212
      %v492 = vunpack.c.l.b16 %v213
      %v493 = vunpack.c.l.b16 %v214
      %v494 = vunpack.c.l.b16 %v215
      %v495 = vunpack.c.l.b16 %v216
      %v496 = vunpack.c.l.b16 %v217
      %v497 = vunpack.c.l.b16 %v218
      %v498 = vunpack.c.l.b16 %v219
      %v499 = vunpack.c.l.b16 %v220
      %v500 = vunpack.c.l.b16 %v221
      %v501 = vunpack.c.l.b16 %v222
      %v502 = vunpack.c.l.b16 %v223
      %v503 = vunpack.c.l.b16 %v224
      %v504 = vunpack.c.l.b16 %v225
      %v505 = vunpack.c.l.b16 %v226
      %v506 = vunpack.c.l.b16 %v227
      %v507 = vunpack.c.l.b16 %v228
      %v508 = vunpack.c.l.b16 %v229
      %v509 = vunpack.c.l.b16 %v230
      %v510 = vunpack.c.l.b16 %v231
      %v511 = vunpack.c.l.b16 %v232
      %v512 = vunpack.c.l.b16 %v233
      %v513 = vunpack.c.l.b16 %v234
      %v514 = vunpack.c.l.b16 %v235
      %v515 = vunpack.c.l.b16 %v236
      %v516 = vunpack.c.l.b16 %v237
      %v517 = vunpack.c.l.b16 %v238
      %v518 = vunpack.c.l.b16 %v239
      %v519 = vunpack.c.l.b16 %v240
      %v520 = vunpack.c.l.b16 %v241
      %v521 = vunpack.c.l.b16 %v242
      %v522 = vunpack.c.l.b16 %v243
      %v523 = vunpack.c.l.b16 %v244
      %v524 = vunpack.c.l.b16 %v245
      %v525 = vunpack.c.l.b16 %v246
      %v526 = vunpack.c.l.b16 %v247
      %v527 = vunpack.c.l.b16 %v248
      %v528 = vunpack.c.l.b16 %v249
      %v529 = vunpack.c.l.b16 %v250
      %v530 = vunpack.c.l.b16 %v251
      %v531 = vunpack.c.l.b16 %v252
      %v532 = vunpack.c.l.b16 %v253
      %v533 = vunpack.c.l.b16 %v254
      %v534 = vunpack.c.l.b16 %v255
      %v535 = vunpack.c.l.b16 %v256
      %v536 = vunpack.c.l.b16 %v257
      %v537 = vunpack.c.l.b16 %v258
      %v538 = vunpack.c.l.b16 %v259
      %v539 = vunpack.c.l.b16 %v260
      %v540 = vunpack.c.l.b16 %v261
      %v541 = vunpack.c.l.b16 %v262
      %v542 = vunpack.c.l.b16 %v263
      %v543 = vunpack.c.l.b16 %v264
      %v544 = vunpack.c.l.b16 %v265
      %v545 = vunpack.c.l.b16 %v266
      %v546 = vunpack.c.l.b16 %v267
      %v547 = vunpack.c.l.b16 %v268
      %v548 = vunpack.c.l.b16 %v269
      %v549 = vunpack.c.l.b16 %v270
      %v550 = vunpack.c.l.b16 %v271
      %v551 = vunpack.c.l.b16 %v272
      %v552 = vunpack.c.l.b16 %v273
      %v553 = vunpack.c.l.b16 %v274
      %v554 = vunpack.c.l.b16 %v275
      %v555 = vunpack.c.l.b16 %v276
      %v556 = vunpack.c.l.b16 %v277
      %v557 = vunpack.c.l.b16 %v278
      %v558 = vunpack.c.l.b16 %v279
      %v559 = vunpack.c.l.b16 %v280
      %v560 = vunpack.c.l.b16 %v281
      %v561 = vunpack.c.l.b16 %v282
      %v562 = vunpack.c.l.b16 %v283
      %v563 = vunpack.c.l.b16 %v284
      %v564 = vunpack.c.l.b16 %v285
      %v565 = vunpack.c.l.b16 %v286
      %v566 = vunpack.c.l.b16 %v287
      %v567 = vunpack.c.l.b16 %v288
      %v568 = vunpack.c.l.b16 %v289
      %v569 = vunpack.c.l.b16 %v290
      %v570 = vunpack.c.l.b16 %v291
      %v571 = vunpack.c.l.b16 %v292
      %v572 = vunpack.c.l.b16 %v293
      %v573 = vunpack.c.l.b16 %v294
      %v574 = vunpack.c.l.b16 %v295
      %v575 = vunpack.c.l.b16 %v296
      %v576 = vunpack.c.l.b16 %v297
      %v577 = vunpack.c.l.b16 %v298
      %v578 = vunpack.c.l.b16 %v299
      %v579 = vunpack.c.l.b16 %v300
      %v580 = vunpack.c.l.b16 %v301
      %v581 = vunpack.c.l.b16 %v302
      %v582 = vpack.c.b16 %v455, %v454
      %v583 = vpack.c.b16 %v457, %v456
      %v584 = vpack.c.b16 %v459, %v458
      %v585 = vpack.c.b16 %v461, %v460
      %v586 = vpack.c.b16 %v463, %v462
      %v587 = vpack.c.b16 %v465, %v464
      %v588 = vpack.c.b16 %v467, %v466
      %v589 = vpack.c.b16 %v469, %v468
      %v590 = vpack.c.b16 %v471, %v470
      %v591 = vpack.c.b16 %v473, %v472
      %v592 = vpack.c.b16 %v475, %v474
      %v593 = vpack.c.b16 %v477, %v476
      %v594 = vpack.c.b16 %v479, %v478
      %v595 = vpack.c.b16 %v481, %v480
      %v596 = vpack.c.b16 %v483, %v482
      %v597 = vpack.c.b16 %v485, %v484
      %v598 = vpack.c.b16 %v487, %v486
      %v599 = vpack.c.b16 %v489, %v488
      %v600 = vpack.c.b16 %v491, %v490
      %v601 = vpack.c.b16 %v493, %v492
      %v602 = vpack.c.b16 %v495, %v494
      %v603 = vpack.c.b16 %v497, %v496
      %v604 = vpack.c.b16 %v499, %v498
      %v605 = vpack.c.b16 %v501, %v500
      %v606 = vpack.c.b16 %v503, %v502
      %v607 = vpack.c.b16 %v505, %v504
      %v608 = vpack.c.b16 %v507, %v506
      %v609 = vpack.c.b16 %v509, %v508
      %v610 = vpack.c.b16 %v511, %v510
      %v611 = vpack.c.b16 %v513, %v512
      %v612 = vpack.c.b16 %v515, %v514
      %v613 = vpack.c.b16 %v517, %v516
      %v614 = vpack.c.b16 %v519, %v518
      %v615 = vpack.c.b16 %v521, %v520
      %v616 = vpack.c.b16 %v523, %v522
      %v617 = vpack.c.b16 %v525, %v524
      %v618 = vpack.c.b16 %v527, %v526
      %v619 = vpack.c.b16 %v529, %v528
      %v620 = vpack.c.b16 %v531, %v530
      %v621 = vpack.c.b16 %v533, %v532
      %v622 = vpack.c.b16 %v535, %v534
      %v623 = vpack.c.b16 %v537, %v536
      %v624 = vpack.c.b16 %v539, %v538
      %v625 = vpack.c.b16 %v541, %v540
      %v626 = vpack.c.b16 %v543, %v542
      %v627 = vpack.c.b16 %v545, %v544
      %v628 = vpack.c.b16 %v547, %v546
      %v629 = vpack.c.b16 %v549, %v548
      %v630 = vpack.c.b16 %v551, %v550
      %v631 = vpack.c.b16 %v553, %v552
      %v632 = vpack.c.b16 %v555, %v554
      %v633 = vpack.c.b16 %v557, %v556
      %v634 = vpack.c.b16 %v559, %v558
      %v635 = vpack.c.b16 %v561, %v560
      %v636 = vpack.c.b16 %v563, %v562
      %v637 = vpack.c.b16 %v565, %v564
      %v638 = vpack.c.b16 %v567, %v566
      %v639 = vpack.c.b16 %v569, %v568
      %v640 = vpack.c.b16 %v571, %v570
      %v641 = vpack.c.b16 %v573, %v572
      %v642 = vpack.c.b16 %v575, %v574
      %v643 = vpack.c.b16 %v577, %v576
      %v644 = vpack.c.b16 %v579, %v578
      %v645 = vpack.c.b16 %v581, %v580
      %v726 = vunpack.c.l.b16 %v303
      %v727 = vunpack.c.l.b16 %v304
      %v728 = vunpack.c.l.b16 %v305
      %v729 = vunpack.c.l.b16 %v306
      %v730 = vunpack.c.l.b16 %v307
      %v731 = vunpack.c.l.b16 %v308
      %v732 = vunpack.c.l.b16 %v309
      %v733 = vunpack.c.l.b16 %v310
      %v734 = vunpack.c.l.b16 %v311
      %v735 = vunpack.c.l.b16 %v312
      %v736 = vunpack.c.l.b16 %v313
      %v737 = vunpack.c.l.b16 %v314
      %v738 = vunpack.c.l.b16 %v315
      %v739 = vunpack.c.l.b16 %v316
      %v740 = vunpack.c.l.b16 %v317
      %v741 = vunpack.c.l.b16 %v318
      %v742 = vpack.c.b16 %v727, %v726
      %v743 = vpack.c.b16 %v729, %v728
      %v744 = vpack.c.b16 %v731, %v730
      %v745 = vpack.c.b16 %v733, %v732
      %v746 = vpack.c.b16 %v735, %v734
      %v747 = vpack.c.b16 %v737, %v736
      %v748 = vpack.c.b16 %v739, %v738
      %v749 = vpack.c.b16 %v741, %v740
      %758 = vmatprep.subr.bf16.mxu0 0
      %759 = vmatpush1.bf16.msra.mxu0 %v742
      %760 = vmatprep.subr.bf16.mxu0 0
      %761 = vmatpush1.bf16.msra.mxu0 %v743
      %762 = vmatprep.subr.bf16.mxu0 0
      %763 = vmatpush1.bf16.msra.mxu0 %v744
      %764 = vmatprep.subr.bf16.mxu0 0
      %765 = vmatpush1.bf16.msra.mxu0 %v745
      %766 = vmatprep.subr.bf16.mxu0 0
      %767 = vmatpush1.bf16.msra.mxu0 %v746
      %768 = vmatprep.subr.bf16.mxu0 0
      %769 = vmatpush1.bf16.msra.mxu0 %v747
      %770 = vmatprep.subr.bf16.mxu0 0
      %771 = vmatpush1.bf16.msra.mxu0 %v748
      %772 = vmatprep.subr.bf16.mxu0 0
      %773 = vmatpush1.bf16.msra.mxu0 %v749
      %774 = vmatprep.subr.bf16.mxu0 0
      %775 = vmatpush1.bf16.msra.mxu0 0
      %776 = vmatprep.subr.bf16.mxu0 0
      %777 = vmatpush1.bf16.msra.mxu0 0
      %778 = vmatprep.subr.bf16.mxu0 0
      %779 = vmatpush1.bf16.msra.mxu0 0
      %780 = vmatprep.subr.bf16.mxu0 0
      %781 = vmatpush1.bf16.msra.mxu0 0
      %782 = vmatprep.subr.bf16.mxu0 0
      %783 = vmatpush1.bf16.msra.mxu0 0
      %784 = vmatprep.subr.bf16.mxu0 0
      %785 = vmatpush1.bf16.msra.mxu0 0
      %786 = vmatprep.subr.bf16.mxu0 0
      %787 = vmatpush1.bf16.msra.mxu0 0
      %788 = vmatprep.subr.bf16.mxu0 0
      %789 = vmatpush1.bf16.msra.mxu0 0
      %790 = vmatprep.mubr.bf16.mxu0 0
      %791 = vmatmul.mubr.bf16.gmra.mrb[0].mxu0 %v582
      %v792 = vpop.f32.mrb[0].mxu0
      %v793 = vadd.f32 %v324, %v792
      %v794 = vpop.f32.mrb[0].mxu0
      %v795 = vpop.f32.mrb[0].mxu0
      %v796 = vadd.f32 %v324, %v795
      %v797 = vpop.f32.mrb[0].mxu0
      %798 = vmatprep.mubr.bf16.mxu0 0
      %799 = vmatmul.mubr.bf16.gmra.mrb[0].mxu0 %v583
      %v800 = vpop.f32.mrb[0].mxu0
      %v801 = vadd.f32 %v324, %v800
      %v802 = vpop.f32.mrb[0].mxu0
      %v803 = vpop.f32.mrb[0].mxu0
      %v804 = vadd.f32 %v324, %v803
      %v805 = vpop.f32.mrb[0].mxu0
      %806 = vmatprep.mubr.bf16.mxu0 0
      %807 = vmatmul.mubr.bf16.gmra.mrb[0].mxu0 %v584
      %v808 = vpop.f32.mrb[0].mxu0
      %v809 = vadd.f32 %v324, %v808
      %v810 = vpop.f32.mrb[0].mxu0
      %v811 = vpop.f32.mrb[0].mxu0
      %v812 = vadd.f32 %v324, %v811
      %v813 = vpop.f32.mrb[0].mxu0
      %814 = vmatprep.mubr.bf16.mxu0 0
      %815 = vmatmul.mubr.bf16.gmra.mrb[0].mxu0 %v585
      %v816 = vpop.f32.mrb[0].mxu0
      %v817 = vadd.f32 %v324, %v816
      %v818 = vpop.f32.mrb[0].mxu0
      %v819 = vpop.f32.mrb[0].mxu0
      %v820 = vadd.f32 %v324, %v819
      %v821 = vpop.f32.mrb[0].mxu0
      %822 = vmatprep.mubr.bf16.mxu0 0
      %823 = vmatmul.mubr.bf16.gmra.mrb[0].mxu0 %v586
      %v824 = vpop.f32.mrb[0].mxu0
      %v825 = vadd.f32 %v324, %v824
      %v826 = vpop.f32.mrb[0].mxu0
      %v827 = vpop.f32.mrb[0].mxu0
      %v828 = vadd.f32 %v324, %v827
      %v829 = vpop.f32.mrb[0].mxu0
      %830 = vmatprep.mubr.bf16.mxu0 0
      %831 = vmatmul.mubr.bf16.gmra.mrb[0].mxu0 %v587
      %v832 = vpop.f32.mrb[0].mxu0
      %v833 = vadd.f32 %v324, %v832
      %v834 = vpop.f32.mrb[0].mxu0
      %v835 = vpop.f32.mrb[0].mxu0
      %v836 = vadd.f32 %v324, %v835
      %v837 = vpop.f32.mrb[0].mxu0
      %838 = vmatprep.mubr.bf16.mxu0 0
      %839 = vmatmul.mubr.bf16.gmra.mrb[0].mxu0 %v588
      %v840 = vpop.f32.mrb[0].mxu0
      %v841 = vadd.f32 %v324, %v840
      %v842 = vpop.f32.mrb[0].mxu0
      %v843 = vpop.f32.mrb[0].mxu0
      %v844 = vadd.f32 %v324, %v843
      %v845 = vpop.f32.mrb[0].mxu0
      %846 = vmatprep.mubr.bf16.mxu0 0
      %847 = vmatmul.mubr.bf16.gmra.mrb[0].mxu0 %v589
      %v848 = vpop.f32.mrb[0].mxu0
      %v849 = vadd.f32 %v324, %v848
      %v850 = vpop.f32.mrb[0].mxu0
      %v851 = vpop.f32.mrb[0].mxu0
      %v852 = vadd.f32 %v324, %v851
      %v853 = vpop.f32.mrb[0].mxu0
      %854 = vmatprep.mubr.bf16.mxu0 0
      %855 = vmatmul.mubr.bf16.gmra.mrb[0].mxu0 %v590
      %v856 = vpop.f32.mrb[0].mxu0
      %v857 = vadd.f32 %v324, %v856
      %v858 = vpop.f32.mrb[0].mxu0
      %v859 = vpop.f32.mrb[0].mxu0
      %v860 = vadd.f32 %v324, %v859
      %v861 = vpop.f32.mrb[0].mxu0
      %862 = vmatprep.mubr.bf16.mxu0 0
      %863 = vmatmul.mubr.bf16.gmra.mrb[0].mxu0 %v591
      %v864 = vpop.f32.mrb[0].mxu0
      %v865 = vadd.f32 %v324, %v864
      %v866 = vpop.f32.mrb[0].mxu0
      %v867 = vpop.f32.mrb[0].mxu0
      %v868 = vadd.f32 %v324, %v867
      %v869 = vpop.f32.mrb[0].mxu0
      %870 = vmatprep.mubr.bf16.mxu0 0
      %871 = vmatmul.mubr.bf16.gmra.mrb[0].mxu0 %v592
      %v872 = vpop.f32.mrb[0].mxu0
      %v873 = vadd.f32 %v324, %v872
      %v874 = vpop.f32.mrb[0].mxu0
      %v875 = vpop.f32.mrb[0].mxu0
      %v876 = vadd.f32 %v324, %v875
      %v877 = vpop.f32.mrb[0].mxu0
      %878 = vmatprep.mubr.bf16.mxu0 0
      %879 = vmatmul.mubr.bf16.gmra.mrb[0].mxu0 %v593
      %v880 = vpop.f32.mrb[0].mxu0
      %v881 = vadd.f32 %v324, %v880
      %v882 = vpop.f32.mrb[0].mxu0
      %v883 = vpop.f32.mrb[0].mxu0
      %v884 = vadd.f32 %v324, %v883
      %v885 = vpop.f32.mrb[0].mxu0
      %886 = vmatprep.mubr.bf16.mxu0 0
      %887 = vmatmul.mubr.bf16.gmra.mrb[0].mxu0 %v594
      %v888 = vpop.f32.mrb[0].mxu0
      %v889 = vadd.f32 %v324, %v888
      %v890 = vpop.f32.mrb[0].mxu0
      %v891 = vpop.f32.mrb[0].mxu0
      %v892 = vadd.f32 %v324, %v891
      %v893 = vpop.f32.mrb[0].mxu0
      %894 = vmatprep.mubr.bf16.mxu0 0
      %895 = vmatmul.mubr.bf16.gmra.mrb[0].mxu0 %v595
      %v896 = vpop.f32.mrb[0].mxu0
      %v897 = vadd.f32 %v324, %v896
      %v898 = vpop.f32.mrb[0].mxu0
      %v899 = vpop.f32.mrb[0].mxu0
      %v900 = vadd.f32 %v324, %v899
      %v901 = vpop.f32.mrb[0].mxu0
      %902 = vmatprep.mubr.bf16.mxu0 0
      %903 = vmatmul.mubr.bf16.gmra.mrb[0].mxu0 %v596
      %v904 = vpop.f32.mrb[0].mxu0
      %v905 = vadd.f32 %v324, %v904
      %v906 = vpop.f32.mrb[0].mxu0
      %v907 = vpop.f32.mrb[0].mxu0
      %v908 = vadd.f32 %v324, %v907
      %v909 = vpop.f32.mrb[0].mxu0
      %910 = vmatprep.mubr.bf16.mxu0 0
      %911 = vmatmul.mubr.bf16.gmra.mrb[0].mxu0 %v597
      %v912 = vpop.f32.mrb[0].mxu0
      %v913 = vadd.f32 %v324, %v912
      %v914 = vpop.f32.mrb[0].mxu0
      %v915 = vpop.f32.mrb[0].mxu0
      %v916 = vadd.f32 %v324, %v915
      %v917 = vpop.f32.mrb[0].mxu0
      %918 = vmatprep.mubr.bf16.mxu0 0
      %919 = vmatmul.mubr.bf16.gmra.mrb[0].mxu0 %v598
      %v920 = vpop.f32.mrb[0].mxu0
      %v921 = vadd.f32 %v324, %v920
      %v922 = vpop.f32.mrb[0].mxu0
      %v923 = vpop.f32.mrb[0].mxu0
      %v924 = vadd.f32 %v324, %v923
      %v925 = vpop.f32.mrb[0].mxu0
      %926 = vmatprep.mubr.bf16.mxu0 0
      %927 = vmatmul.mubr.bf16.gmra.mrb[0].mxu0 %v599
      %v928 = vpop.f32.mrb[0].mxu0
      %v929 = vadd.f32 %v324, %v928
      %v930 = vpop.f32.mrb[0].mxu0
      %v931 = vpop.f32.mrb[0].mxu0
      %v932 = vadd.f32 %v324, %v931
      %v933 = vpop.f32.mrb[0].mxu0
      %934 = vmatprep.mubr.bf16.mxu0 0
      %935 = vmatmul.mubr.bf16.gmra.mrb[0].mxu0 %v600
      %v936 = vpop.f32.mrb[0].mxu0
      %v937 = vadd.f32 %v324, %v936
      %v938 = vpop.f32.mrb[0].mxu0
      %v939 = vpop.f32.mrb[0].mxu0
      %v940 = vadd.f32 %v324, %v939
      %v941 = vpop.f32.mrb[0].mxu0
      %942 = vmatprep.mubr.bf16.mxu0 0
      %943 = vmatmul.mubr.bf16.gmra.mrb[0].mxu0 %v601
      %v944 = vpop.f32.mrb[0].mxu0
      %v945 = vadd.f32 %v324, %v944
      %v946 = vpop.f32.mrb[0].mxu0
      %v947 = vpop.f32.mrb[0].mxu0
      %v948 = vadd.f32 %v324, %v947
      %v949 = vpop.f32.mrb[0].mxu0
      %950 = vmatprep.mubr.bf16.mxu0 0
      %951 = vmatmul.mubr.bf16.gmra.mrb[0].mxu0 %v602
      %v952 = vpop.f32.mrb[0].mxu0
      %v953 = vadd.f32 %v324, %v952
      %v954 = vpop.f32.mrb[0].mxu0
      %v955 = vpop.f32.mrb[0].mxu0
      %v956 = vadd.f32 %v324, %v955
      %v957 = vpop.f32.mrb[0].mxu0
      %958 = vmatprep.mubr.bf16.mxu0 0
      %959 = vmatmul.mubr.bf16.gmra.mrb[0].mxu0 %v603
      %v960 = vpop.f32.mrb[0].mxu0
      %v961 = vadd.f32 %v324, %v960
      %v962 = vpop.f32.mrb[0].mxu0
      %v963 = vpop.f32.mrb[0].mxu0
      %v964 = vadd.f32 %v324, %v963
      %v965 = vpop.f32.mrb[0].mxu0
      %966 = vmatprep.mubr.bf16.mxu0 0
      %967 = vmatmul.mubr.bf16.gmra.mrb[0].mxu0 %v604
      %v968 = vpop.f32.mrb[0].mxu0
      %v969 = vadd.f32 %v324, %v968
      %v970 = vpop.f32.mrb[0].mxu0
      %v971 = vpop.f32.mrb[0].mxu0
      %v972 = vadd.f32 %v324, %v971
      %v973 = vpop.f32.mrb[0].mxu0
      %974 = vmatprep.mubr.bf16.mxu0 0
      %975 = vmatmul.mubr.bf16.gmra.mrb[0].mxu0 %v605
      %v976 = vpop.f32.mrb[0].mxu0
      %v977 = vadd.f32 %v324, %v976
      %v978 = vpop.f32.mrb[0].mxu0
      %v979 = vpop.f32.mrb[0].mxu0
      %v980 = vadd.f32 %v324, %v979
      %v981 = vpop.f32.mrb[0].mxu0
      %982 = vmatprep.mubr.bf16.mxu0 0
      %983 = vmatmul.mubr.bf16.gmra.mrb[0].mxu0 %v606
      %v984 = vpop.f32.mrb[0].mxu0
      %v985 = vadd.f32 %v324, %v984
      %v986 = vpop.f32.mrb[0].mxu0
      %v987 = vpop.f32.mrb[0].mxu0
      %v988 = vadd.f32 %v324, %v987
      %v989 = vpop.f32.mrb[0].mxu0
      %990 = vmatprep.mubr.bf16.mxu0 0
      %991 = vmatmul.mubr.bf16.gmra.mrb[0].mxu0 %v607
      %v992 = vpop.f32.mrb[0].mxu0
      %v993 = vadd.f32 %v324, %v992
      %v994 = vpop.f32.mrb[0].mxu0
      %v995 = vpop.f32.mrb[0].mxu0
      %v996 = vadd.f32 %v324, %v995
      %v997 = vpop.f32.mrb[0].mxu0
      %998 = vmatprep.mubr.bf16.mxu0 0
      %999 = vmatmul.mubr.bf16.gmra.mrb[0].mxu0 %v608
      %v1000 = vpop.f32.mrb[0].mxu0
      %v1001 = vadd.f32 %v324, %v1000
      %v1002 = vpop.f32.mrb[0].mxu0
      %v1003 = vpop.f32.mrb[0].mxu0
      %v1004 = vadd.f32 %v324, %v1003
      %v1005 = vpop.f32.mrb[0].mxu0
      %1006 = vmatprep.mubr.bf16.mxu0 0
      %1007 = vmatmul.mubr.bf16.gmra.mrb[0].mxu0 %v609
      %v1008 = vpop.f32.mrb[0].mxu0
      %v1009 = vadd.f32 %v324, %v1008
      %v1010 = vpop.f32.mrb[0].mxu0
      %v1011 = vpop.f32.mrb[0].mxu0
      %v1012 = vadd.f32 %v324, %v1011
      %v1013 = vpop.f32.mrb[0].mxu0
      %1014 = vmatprep.mubr.bf16.mxu0 0
      %1015 = vmatmul.mubr.bf16.gmra.mrb[0].mxu0 %v610
      %v1016 = vpop.f32.mrb[0].mxu0
      %v1017 = vadd.f32 %v324, %v1016
      %v1018 = vpop.f32.mrb[0].mxu0
      %v1019 = vpop.f32.mrb[0].mxu0
      %v1020 = vadd.f32 %v324, %v1019
      %v1021 = vpop.f32.mrb[0].mxu0
      %1022 = vmatprep.mubr.bf16.mxu0 0
      %1023 = vmatmul.mubr.bf16.gmra.mrb[0].mxu0 %v611
      %v1024 = vpop.f32.mrb[0].mxu0
      %v1025 = vadd.f32 %v324, %v1024
      %v1026 = vpop.f32.mrb[0].mxu0
      %v1027 = vpop.f32.mrb[0].mxu0
      %v1028 = vadd.f32 %v324, %v1027
      %v1029 = vpop.f32.mrb[0].mxu0
      %1030 = vmatprep.mubr.bf16.mxu0 0
      %1031 = vmatmul.mubr.bf16.gmra.mrb[0].mxu0 %v612
      %v1032 = vpop.f32.mrb[0].mxu0
      %v1033 = vadd.f32 %v324, %v1032
      %v1034 = vpop.f32.mrb[0].mxu0
      %v1035 = vpop.f32.mrb[0].mxu0
      %v1036 = vadd.f32 %v324, %v1035
      %v1037 = vpop.f32.mrb[0].mxu0
      %1038 = vmatprep.mubr.bf16.mxu0 0
      %1039 = vmatmul.mubr.bf16.gmra.mrb[0].mxu0 %v613
      %v1040 = vpop.f32.mrb[0].mxu0
      %v1041 = vadd.f32 %v324, %v1040
      %v1042 = vpop.f32.mrb[0].mxu0
      %v1043 = vpop.f32.mrb[0].mxu0
      %v1044 = vadd.f32 %v324, %v1043
      %v1045 = vpop.f32.mrb[0].mxu0
      %1046 = vmatprep.mubr.bf16.mxu0 0
      %1047 = vmatmul.mubr.bf16.gmra.mrb[0].mxu0 %v614
      %v1048 = vpop.f32.mrb[0].mxu0
      %v1049 = vadd.f32 %v324, %v1048
      %v1050 = vpop.f32.mrb[0].mxu0
      %v1051 = vpop.f32.mrb[0].mxu0
      %v1052 = vadd.f32 %v324, %v1051
      %v1053 = vpop.f32.mrb[0].mxu0
      %1054 = vmatprep.mubr.bf16.mxu0 0
      %1055 = vmatmul.mubr.bf16.gmra.mrb[0].mxu0 %v615
      %v1056 = vpop.f32.mrb[0].mxu0
      %v1057 = vadd.f32 %v324, %v1056
      %v1058 = vpop.f32.mrb[0].mxu0
      %v1059 = vpop.f32.mrb[0].mxu0
      %v1060 = vadd.f32 %v324, %v1059
      %v1061 = vpop.f32.mrb[0].mxu0
      %1062 = vmatprep.mubr.bf16.mxu0 0
      %1063 = vmatmul.mubr.bf16.gmra.mrb[0].mxu0 %v616
      %v1064 = vpop.f32.mrb[0].mxu0
      %v1065 = vadd.f32 %v324, %v1064
      %v1066 = vpop.f32.mrb[0].mxu0
      %v1067 = vpop.f32.mrb[0].mxu0
      %v1068 = vadd.f32 %v324, %v1067
      %v1069 = vpop.f32.mrb[0].mxu0
      %1070 = vmatprep.mubr.bf16.mxu0 0
      %1071 = vmatmul.mubr.bf16.gmra.mrb[0].mxu0 %v617
      %v1072 = vpop.f32.mrb[0].mxu0
      %v1073 = vadd.f32 %v324, %v1072
      %v1074 = vpop.f32.mrb[0].mxu0
      %v1075 = vpop.f32.mrb[0].mxu0
      %v1076 = vadd.f32 %v324, %v1075
      %v1077 = vpop.f32.mrb[0].mxu0
      %1078 = vmatprep.mubr.bf16.mxu0 0
      %1079 = vmatmul.mubr.bf16.gmra.mrb[0].mxu0 %v618
      %v1080 = vpop.f32.mrb[0].mxu0
      %v1081 = vadd.f32 %v324, %v1080
      %v1082 = vpop.f32.mrb[0].mxu0
      %v1083 = vpop.f32.mrb[0].mxu0
      %v1084 = vadd.f32 %v324, %v1083
      %v1085 = vpop.f32.mrb[0].mxu0
      %1086 = vmatprep.mubr.bf16.mxu0 0
      %1087 = vmatmul.mubr.bf16.gmra.mrb[0].mxu0 %v619
      %v1088 = vpop.f32.mrb[0].mxu0
      %v1089 = vadd.f32 %v324, %v1088
      %v1090 = vpop.f32.mrb[0].mxu0
      %v1091 = vpop.f32.mrb[0].mxu0
      %v1092 = vadd.f32 %v324, %v1091
      %v1093 = vpop.f32.mrb[0].mxu0
      %1094 = vmatprep.mubr.bf16.mxu0 0
      %1095 = vmatmul.mubr.bf16.gmra.mrb[0].mxu0 %v620
      %v1096 = vpop.f32.mrb[0].mxu0
      %v1097 = vadd.f32 %v324, %v1096
      %v1098 = vpop.f32.mrb[0].mxu0
      %v1099 = vpop.f32.mrb[0].mxu0
      %v1100 = vadd.f32 %v324, %v1099
      %v1101 = vpop.f32.mrb[0].mxu0
      %1102 = vmatprep.mubr.bf16.mxu0 0
      %1103 = vmatmul.mubr.bf16.gmra.mrb[0].mxu0 %v621
      %v1104 = vpop.f32.mrb[0].mxu0
      %v1105 = vadd.f32 %v324, %v1104
      %v1106 = vpop.f32.mrb[0].mxu0
      %v1107 = vpop.f32.mrb[0].mxu0
      %v1108 = vadd.f32 %v324, %v1107
      %v1109 = vpop.f32.mrb[0].mxu0
      %1110 = vmatprep.mubr.bf16.mxu0 0
      %1111 = vmatmul.mubr.bf16.gmra.mrb[0].mxu0 %v622
      %v1112 = vpop.f32.mrb[0].mxu0
      %v1113 = vadd.f32 %v324, %v1112
      %v1114 = vpop.f32.mrb[0].mxu0
      %v1115 = vpop.f32.mrb[0].mxu0
      %v1116 = vadd.f32 %v324, %v1115
      %v1117 = vpop.f32.mrb[0].mxu0
      %1118 = vmatprep.mubr.bf16.mxu0 0
      %1119 = vmatmul.mubr.bf16.gmra.mrb[0].mxu0 %v623
      %v1120 = vpop.f32.mrb[0].mxu0
      %v1121 = vadd.f32 %v324, %v1120
      %v1122 = vpop.f32.mrb[0].mxu0
      %v1123 = vpop.f32.mrb[0].mxu0
      %v1124 = vadd.f32 %v324, %v1123
      %v1125 = vpop.f32.mrb[0].mxu0
      %1126 = vmatprep.mubr.bf16.mxu0 0
      %1127 = vmatmul.mubr.bf16.gmra.mrb[0].mxu0 %v624
      %v1128 = vpop.f32.mrb[0].mxu0
      %v1129 = vadd.f32 %v324, %v1128
      %v1130 = vpop.f32.mrb[0].mxu0
      %v1131 = vpop.f32.mrb[0].mxu0
      %v1132 = vadd.f32 %v324, %v1131
      %v1133 = vpop.f32.mrb[0].mxu0
      %1134 = vmatprep.mubr.bf16.mxu0 0
      %1135 = vmatmul.mubr.bf16.gmra.mrb[0].mxu0 %v625
      %v1136 = vpop.f32.mrb[0].mxu0
      %v1137 = vadd.f32 %v324, %v1136
      %v1138 = vpop.f32.mrb[0].mxu0
      %v1139 = vpop.f32.mrb[0].mxu0
      %v1140 = vadd.f32 %v324, %v1139
      %v1141 = vpop.f32.mrb[0].mxu0
      %1142 = vmatprep.mubr.bf16.mxu0 0
      %1143 = vmatmul.mubr.bf16.gmra.mrb[0].mxu0 %v626
      %v1144 = vpop.f32.mrb[0].mxu0
      %v1145 = vadd.f32 %v324, %v1144
      %v1146 = vpop.f32.mrb[0].mxu0
      %v1147 = vpop.f32.mrb[0].mxu0
      %v1148 = vadd.f32 %v324, %v1147
      %v1149 = vpop.f32.mrb[0].mxu0
      %1150 = vmatprep.mubr.bf16.mxu0 0
      %1151 = vmatmul.mubr.bf16.gmra.mrb[0].mxu0 %v627
      %v1152 = vpop.f32.mrb[0].mxu0
      %v1153 = vadd.f32 %v324, %v1152
      %v1154 = vpop.f32.mrb[0].mxu0
      %v1155 = vpop.f32.mrb[0].mxu0
      %v1156 = vadd.f32 %v324, %v1155
      %v1157 = vpop.f32.mrb[0].mxu0
      %1158 = vmatprep.mubr.bf16.mxu0 0
      %1159 = vmatmul.mubr.bf16.gmra.mrb[0].mxu0 %v628
      %v1160 = vpop.f32.mrb[0].mxu0
      %v1161 = vadd.f32 %v324, %v1160
      %v1162 = vpop.f32.mrb[0].mxu0
      %v1163 = vpop.f32.mrb[0].mxu0
      %v1164 = vadd.f32 %v324, %v1163
      %v1165 = vpop.f32.mrb[0].mxu0
      %1166 = vmatprep.mubr.bf16.mxu0 0
      %1167 = vmatmul.mubr.bf16.gmra.mrb[0].mxu0 %v629
      %v1168 = vpop.f32.mrb[0].mxu0
      %v1169 = vadd.f32 %v324, %v1168
      %v1170 = vpop.f32.mrb[0].mxu0
      %v1171 = vpop.f32.mrb[0].mxu0
      %v1172 = vadd.f32 %v324, %v1171
      %v1173 = vpop.f32.mrb[0].mxu0
      %1174 = vmatprep.mubr.bf16.mxu0 0
      %1175 = vmatmul.mubr.bf16.gmra.mrb[0].mxu0 %v630
      %v1176 = vpop.f32.mrb[0].mxu0
      %v1177 = vadd.f32 %v324, %v1176
      %v1178 = vpop.f32.mrb[0].mxu0
      %v1179 = vpop.f32.mrb[0].mxu0
      %v1180 = vadd.f32 %v324, %v1179
      %v1181 = vpop.f32.mrb[0].mxu0
      %1182 = vmatprep.mubr.bf16.mxu0 0
      %1183 = vmatmul.mubr.bf16.gmra.mrb[0].mxu0 %v631
      %v1184 = vpop.f32.mrb[0].mxu0
      %v1185 = vadd.f32 %v324, %v1184
      %v1186 = vpop.f32.mrb[0].mxu0
      %v1187 = vpop.f32.mrb[0].mxu0
      %v1188 = vadd.f32 %v324, %v1187
      %v1189 = vpop.f32.mrb[0].mxu0
      %1190 = vmatprep.mubr.bf16.mxu0 0
      %1191 = vmatmul.mubr.bf16.gmra.mrb[0].mxu0 %v632
      %v1192 = vpop.f32.mrb[0].mxu0
      %v1193 = vadd.f32 %v324, %v1192
      %v1194 = vpop.f32.mrb[0].mxu0
      %v1195 = vpop.f32.mrb[0].mxu0
      %v1196 = vadd.f32 %v324, %v1195
      %v1197 = vpop.f32.mrb[0].mxu0
      %1198 = vmatprep.mubr.bf16.mxu0 0
      %1199 = vmatmul.mubr.bf16.gmra.mrb[0].mxu0 %v633
      %v1200 = vpop.f32.mrb[0].mxu0
      %v1201 = vadd.f32 %v324, %v1200
      %v1202 = vpop.f32.mrb[0].mxu0
      %v1203 = vpop.f32.mrb[0].mxu0
      %v1204 = vadd.f32 %v324, %v1203
      %v1205 = vpop.f32.mrb[0].mxu0
      %1206 = vmatprep.mubr.bf16.mxu0 0
      %1207 = vmatmul.mubr.bf16.gmra.mrb[0].mxu0 %v634
      %v1208 = vpop.f32.mrb[0].mxu0
      %v1209 = vadd.f32 %v324, %v1208
      %v1210 = vpop.f32.mrb[0].mxu0
      %v1211 = vpop.f32.mrb[0].mxu0
      %v1212 = vadd.f32 %v324, %v1211
      %v1213 = vpop.f32.mrb[0].mxu0
      %1214 = vmatprep.mubr.bf16.mxu0 0
      %1215 = vmatmul.mubr.bf16.gmra.mrb[0].mxu0 %v635
      %v1216 = vpop.f32.mrb[0].mxu0
      %v1217 = vadd.f32 %v324, %v1216
      %v1218 = vpop.f32.mrb[0].mxu0
      %v1219 = vpop.f32.mrb[0].mxu0
      %v1220 = vadd.f32 %v324, %v1219
      %v1221 = vpop.f32.mrb[0].mxu0
      %1222 = vmatprep.mubr.bf16.mxu0 0
      %1223 = vmatmul.mubr.bf16.gmra.mrb[0].mxu0 %v636
      %v1224 = vpop.f32.mrb[0].mxu0
      %v1225 = vadd.f32 %v324, %v1224
      %v1226 = vpop.f32.mrb[0].mxu0
      %v1227 = vpop.f32.mrb[0].mxu0
      %v1228 = vadd.f32 %v324, %v1227
      %v1229 = vpop.f32.mrb[0].mxu0
      %1230 = vmatprep.mubr.bf16.mxu0 0
      %1231 = vmatmul.mubr.bf16.gmra.mrb[0].mxu0 %v637
      %v1232 = vpop.f32.mrb[0].mxu0
      %v1233 = vadd.f32 %v324, %v1232
      %v1234 = vpop.f32.mrb[0].mxu0
      %v1235 = vpop.f32.mrb[0].mxu0
      %v1236 = vadd.f32 %v324, %v1235
      %v1237 = vpop.f32.mrb[0].mxu0
      %1238 = vmatprep.mubr.bf16.mxu0 0
      %1239 = vmatmul.mubr.bf16.gmra.mrb[0].mxu0 %v638
      %v1240 = vpop.f32.mrb[0].mxu0
      %v1241 = vadd.f32 %v324, %v1240
      %v1242 = vpop.f32.mrb[0].mxu0
      %v1243 = vpop.f32.mrb[0].mxu0
      %v1244 = vadd.f32 %v324, %v1243
      %v1245 = vpop.f32.mrb[0].mxu0
      %1246 = vmatprep.mubr.bf16.mxu0 0
      %1247 = vmatmul.mubr.bf16.gmra.mrb[0].mxu0 %v639
      %v1248 = vpop.f32.mrb[0].mxu0
      %v1249 = vadd.f32 %v324, %v1248
      %v1250 = vpop.f32.mrb[0].mxu0
      %v1251 = vpop.f32.mrb[0].mxu0
      %v1252 = vadd.f32 %v324, %v1251
      %v1253 = vpop.f32.mrb[0].mxu0
      %1254 = vmatprep.mubr.bf16.mxu0 0
      %1255 = vmatmul.mubr.bf16.gmra.mrb[0].mxu0 %v640
      %v1256 = vpop.f32.mrb[0].mxu0
      %v1257 = vadd.f32 %v324, %v1256
      %v1258 = vpop.f32.mrb[0].mxu0
      %v1259 = vpop.f32.mrb[0].mxu0
      %v1260 = vadd.f32 %v324, %v1259
      %v1261 = vpop.f32.mrb[0].mxu0
      %1262 = vmatprep.mubr.bf16.mxu0 0
      %1263 = vmatmul.mubr.bf16.gmra.mrb[0].mxu0 %v641
      %v1264 = vpop.f32.mrb[0].mxu0
      %v1265 = vadd.f32 %v324, %v1264
      %v1266 = vpop.f32.mrb[0].mxu0
      %v1267 = vpop.f32.mrb[0].mxu0
      %v1268 = vadd.f32 %v324, %v1267
      %v1269 = vpop.f32.mrb[0].mxu0
      %1270 = vmatprep.mubr.bf16.mxu0 0
      %1271 = vmatmul.mubr.bf16.gmra.mrb[0].mxu0 %v642
      %v1272 = vpop.f32.mrb[0].mxu0
      %v1273 = vadd.f32 %v324, %v1272
      %v1274 = vpop.f32.mrb[0].mxu0
      %v1275 = vpop.f32.mrb[0].mxu0
      %v1276 = vadd.f32 %v324, %v1275
      %v1277 = vpop.f32.mrb[0].mxu0
      %1278 = vmatprep.mubr.bf16.mxu0 0
      %1279 = vmatmul.mubr.bf16.gmra.mrb[0].mxu0 %v643
      %v1280 = vpop.f32.mrb[0].mxu0
      %v1281 = vadd.f32 %v324, %v1280
      %v1282 = vpop.f32.mrb[0].mxu0
      %v1283 = vpop.f32.mrb[0].mxu0
      %v1284 = vadd.f32 %v324, %v1283
      %v1285 = vpop.f32.mrb[0].mxu0
      %1286 = vmatprep.mubr.bf16.mxu0 0
      %1287 = vmatmul.mubr.bf16.gmra.mrb[0].mxu0 %v644
      %v1288 = vpop.f32.mrb[0].mxu0
      %v1289 = vadd.f32 %v324, %v1288
      %v1290 = vpop.f32.mrb[0].mxu0
      %v1291 = vpop.f32.mrb[0].mxu0
      %v1292 = vadd.f32 %v324, %v1291
      %v1293 = vpop.f32.mrb[0].mxu0
      %1294 = vmatprep.mubr.bf16.mxu0 0
      %1295 = vmatmul.mubr.bf16.gmra.mrb[0].mxu0 %v645
      %v1296 = vpop.f32.mrb[0].mxu0
      %v1297 = vadd.f32 %v324, %v1296
      %v1298 = vpop.f32.mrb[0].mxu0
      %v1299 = vpop.f32.mrb[0].mxu0
      %v1300 = vadd.f32 %v324, %v1299
      %v1301 = vpop.f32.mrb[0].mxu0
      %1302 = vdwg.mxu0
      %vm1303 = vcmp.ge.f32.partialorder %v793, 0.0
      %vm1304 = vcmp.ge.f32.partialorder %v796, 0.0
      %vm1305 = vcmp.ge.f32.partialorder %v801, 0.0
      %vm1306 = vcmp.ge.f32.partialorder %v804, 0.0
      %vm1307 = vcmp.ge.f32.partialorder %v809, 0.0
      %vm1308 = vcmp.ge.f32.partialorder %v812, 0.0
      %vm1309 = vcmp.ge.f32.partialorder %v817, 0.0
      %vm1310 = vcmp.ge.f32.partialorder %v820, 0.0
      %vm1311 = vcmp.ge.f32.partialorder %v825, 0.0
      %vm1312 = vcmp.ge.f32.partialorder %v828, 0.0
      %vm1313 = vcmp.ge.f32.partialorder %v833, 0.0
      %vm1314 = vcmp.ge.f32.partialorder %v836, 0.0
      %vm1315 = vcmp.ge.f32.partialorder %v841, 0.0
      %vm1316 = vcmp.ge.f32.partialorder %v844, 0.0
      %vm1317 = vcmp.ge.f32.partialorder %v849, 0.0
      %vm1318 = vcmp.ge.f32.partialorder %v852, 0.0
      %vm1319 = vcmp.ge.f32.partialorder %v857, 0.0
      %vm1320 = vcmp.ge.f32.partialorder %v860, 0.0
      %vm1321 = vcmp.ge.f32.partialorder %v865, 0.0
      %vm1322 = vcmp.ge.f32.partialorder %v868, 0.0
      %vm1323 = vcmp.ge.f32.partialorder %v873, 0.0
      %vm1324 = vcmp.ge.f32.partialorder %v876, 0.0
      %vm1325 = vcmp.ge.f32.partialorder %v881, 0.0
      %vm1326 = vcmp.ge.f32.partialorder %v884, 0.0
      %vm1327 = vcmp.ge.f32.partialorder %v889, 0.0
      %vm1328 = vcmp.ge.f32.partialorder %v892, 0.0
      %vm1329 = vcmp.ge.f32.partialorder %v897, 0.0
      %vm1330 = vcmp.ge.f32.partialorder %v900, 0.0
      %vm1331 = vcmp.ge.f32.partialorder %v905, 0.0
      %vm1332 = vcmp.ge.f32.partialorder %v908, 0.0
      %vm1333 = vcmp.ge.f32.partialorder %v913, 0.0
      %vm1334 = vcmp.ge.f32.partialorder %v916, 0.0
      %vm1335 = vcmp.ge.f32.partialorder %v921, 0.0
      %vm1336 = vcmp.ge.f32.partialorder %v924, 0.0
      %vm1337 = vcmp.ge.f32.partialorder %v929, 0.0
      %vm1338 = vcmp.ge.f32.partialorder %v932, 0.0
      %vm1339 = vcmp.ge.f32.partialorder %v937, 0.0
      %vm1340 = vcmp.ge.f32.partialorder %v940, 0.0
      %vm1341 = vcmp.ge.f32.partialorder %v945, 0.0
      %vm1342 = vcmp.ge.f32.partialorder %v948, 0.0
      %vm1343 = vcmp.ge.f32.partialorder %v953, 0.0
      %vm1344 = vcmp.ge.f32.partialorder %v956, 0.0
      %vm1345 = vcmp.ge.f32.partialorder %v961, 0.0
      %vm1346 = vcmp.ge.f32.partialorder %v964, 0.0
      %vm1347 = vcmp.ge.f32.partialorder %v969, 0.0
      %vm1348 = vcmp.ge.f32.partialorder %v972, 0.0
      %vm1349 = vcmp.ge.f32.partialorder %v977, 0.0
      %vm1350 = vcmp.ge.f32.partialorder %v980, 0.0
      %vm1351 = vcmp.ge.f32.partialorder %v985, 0.0
      %vm1352 = vcmp.ge.f32.partialorder %v988, 0.0
      %vm1353 = vcmp.ge.f32.partialorder %v993, 0.0
      %vm1354 = vcmp.ge.f32.partialorder %v996, 0.0
      %vm1355 = vcmp.ge.f32.partialorder %v1001, 0.0
      %vm1356 = vcmp.ge.f32.partialorder %v1004, 0.0
      %vm1357 = vcmp.ge.f32.partialorder %v1009, 0.0
      %vm1358 = vcmp.ge.f32.partialorder %v1012, 0.0
      %vm1359 = vcmp.ge.f32.partialorder %v1017, 0.0
      %vm1360 = vcmp.ge.f32.partialorder %v1020, 0.0
      %vm1361 = vcmp.ge.f32.partialorder %v1025, 0.0
      %vm1362 = vcmp.ge.f32.partialorder %v1028, 0.0
      %vm1363 = vcmp.ge.f32.partialorder %v1033, 0.0
      %vm1364 = vcmp.ge.f32.partialorder %v1036, 0.0
      %vm1365 = vcmp.ge.f32.partialorder %v1041, 0.0
      %vm1366 = vcmp.ge.f32.partialorder %v1044, 0.0
      %vm1367 = vcmp.ge.f32.partialorder %v1049, 0.0
      %vm1368 = vcmp.ge.f32.partialorder %v1052, 0.0
      %vm1369 = vcmp.ge.f32.partialorder %v1057, 0.0
      %vm1370 = vcmp.ge.f32.partialorder %v1060, 0.0
      %vm1371 = vcmp.ge.f32.partialorder %v1065, 0.0
      %vm1372 = vcmp.ge.f32.partialorder %v1068, 0.0
      %vm1373 = vcmp.ge.f32.partialorder %v1073, 0.0
      %vm1374 = vcmp.ge.f32.partialorder %v1076, 0.0
      %vm1375 = vcmp.ge.f32.partialorder %v1081, 0.0
      %vm1376 = vcmp.ge.f32.partialorder %v1084, 0.0
      %vm1377 = vcmp.ge.f32.partialorder %v1089, 0.0
      %vm1378 = vcmp.ge.f32.partialorder %v1092, 0.0
      %vm1379 = vcmp.ge.f32.partialorder %v1097, 0.0
      %vm1380 = vcmp.ge.f32.partialorder %v1100, 0.0
      %vm1381 = vcmp.ge.f32.partialorder %v1105, 0.0
      %vm1382 = vcmp.ge.f32.partialorder %v1108, 0.0
      %vm1383 = vcmp.ge.f32.partialorder %v1113, 0.0
      %vm1384 = vcmp.ge.f32.partialorder %v1116, 0.0
      %vm1385 = vcmp.ge.f32.partialorder %v1121, 0.0
      %vm1386 = vcmp.ge.f32.partialorder %v1124, 0.0
      %vm1387 = vcmp.ge.f32.partialorder %v1129, 0.0
      %vm1388 = vcmp.ge.f32.partialorder %v1132, 0.0
      %vm1389 = vcmp.ge.f32.partialorder %v1137, 0.0
      %vm1390 = vcmp.ge.f32.partialorder %v1140, 0.0
      %vm1391 = vcmp.ge.f32.partialorder %v1145, 0.0
      %vm1392 = vcmp.ge.f32.partialorder %v1148, 0.0
      %vm1393 = vcmp.ge.f32.partialorder %v1153, 0.0
      %vm1394 = vcmp.ge.f32.partialorder %v1156, 0.0
      %vm1395 = vcmp.ge.f32.partialorder %v1161, 0.0
      %vm1396 = vcmp.ge.f32.partialorder %v1164, 0.0
      %vm1397 = vcmp.ge.f32.partialorder %v1169, 0.0
      %vm1398 = vcmp.ge.f32.partialorder %v1172, 0.0
      %vm1399 = vcmp.ge.f32.partialorder %v1177, 0.0
      %vm1400 = vcmp.ge.f32.partialorder %v1180, 0.0
      %vm1401 = vcmp.ge.f32.partialorder %v1185, 0.0
      %vm1402 = vcmp.ge.f32.partialorder %v1188, 0.0
      %vm1403 = vcmp.ge.f32.partialorder %v1193, 0.0
      %vm1404 = vcmp.ge.f32.partialorder %v1196, 0.0
      %vm1405 = vcmp.ge.f32.partialorder %v1201, 0.0
      %vm1406 = vcmp.ge.f32.partialorder %v1204, 0.0
      %vm1407 = vcmp.ge.f32.partialorder %v1209, 0.0
      %vm1408 = vcmp.ge.f32.partialorder %v1212, 0.0
      %vm1409 = vcmp.ge.f32.partialorder %v1217, 0.0
      %vm1410 = vcmp.ge.f32.partialorder %v1220, 0.0
      %vm1411 = vcmp.ge.f32.partialorder %v1225, 0.0
      %vm1412 = vcmp.ge.f32.partialorder %v1228, 0.0
      %vm1413 = vcmp.ge.f32.partialorder %v1233, 0.0
      %vm1414 = vcmp.ge.f32.partialorder %v1236, 0.0
      %vm1415 = vcmp.ge.f32.partialorder %v1241, 0.0
      %vm1416 = vcmp.ge.f32.partialorder %v1244, 0.0
      %vm1417 = vcmp.ge.f32.partialorder %v1249, 0.0
      %vm1418 = vcmp.ge.f32.partialorder %v1252, 0.0
      %vm1419 = vcmp.ge.f32.partialorder %v1257, 0.0
      %vm1420 = vcmp.ge.f32.partialorder %v1260, 0.0
      %vm1421 = vcmp.ge.f32.partialorder %v1265, 0.0
      %vm1422 = vcmp.ge.f32.partialorder %v1268, 0.0
      %vm1423 = vcmp.ge.f32.partialorder %v1273, 0.0
      %vm1424 = vcmp.ge.f32.partialorder %v1276, 0.0
      %vm1425 = vcmp.ge.f32.partialorder %v1281, 0.0
      %vm1426 = vcmp.ge.f32.partialorder %v1284, 0.0
      %vm1427 = vcmp.ge.f32.partialorder %v1289, 0.0
      %vm1428 = vcmp.ge.f32.partialorder %v1292, 0.0
      %vm1429 = vcmp.ge.f32.partialorder %v1297, 0.0
      %vm1430 = vcmp.ge.f32.partialorder %v1300, 0.0
      %v1431 = vmul.f32 %v793, 0.01
      %v1432 = vmul.f32 %v796, 0.01
      %v1433 = vmul.f32 %v801, 0.01
      %v1434 = vmul.f32 %v804, 0.01
      %v1435 = vmul.f32 %v809, 0.01
      %v1436 = vmul.f32 %v812, 0.01
      %v1437 = vmul.f32 %v817, 0.01
      %v1438 = vmul.f32 %v820, 0.01
      %v1439 = vmul.f32 %v825, 0.01
      %v1440 = vmul.f32 %v828, 0.01
      %v1441 = vmul.f32 %v833, 0.01
      %v1442 = vmul.f32 %v836, 0.01
      %v1443 = vmul.f32 %v841, 0.01
      %v1444 = vmul.f32 %v844, 0.01
      %v1445 = vmul.f32 %v849, 0.01
      %v1446 = vmul.f32 %v852, 0.01
      %v1447 = vmul.f32 %v857, 0.01
      %v1448 = vmul.f32 %v860, 0.01
      %v1449 = vmul.f32 %v865, 0.01
      %v1450 = vmul.f32 %v868, 0.01
      %v1451 = vmul.f32 %v873, 0.01
      %v1452 = vmul.f32 %v876, 0.01
      %v1453 = vmul.f32 %v881, 0.01
      %v1454 = vmul.f32 %v884, 0.01
      %v1455 = vmul.f32 %v889, 0.01
      %v1456 = vmul.f32 %v892, 0.01
      %v1457 = vmul.f32 %v897, 0.01
      %v1458 = vmul.f32 %v900, 0.01
      %v1459 = vmul.f32 %v905, 0.01
      %v1460 = vmul.f32 %v908, 0.01
      %v1461 = vmul.f32 %v913, 0.01
      %v1462 = vmul.f32 %v916, 0.01
      %v1463 = vmul.f32 %v921, 0.01
      %v1464 = vmul.f32 %v924, 0.01
      %v1465 = vmul.f32 %v929, 0.01
      %v1466 = vmul.f32 %v932, 0.01
      %v1467 = vmul.f32 %v937, 0.01
      %v1468 = vmul.f32 %v940, 0.01
      %v1469 = vmul.f32 %v945, 0.01
      %v1470 = vmul.f32 %v948, 0.01
      %v1471 = vmul.f32 %v953, 0.01
      %v1472 = vmul.f32 %v956, 0.01
      %v1473 = vmul.f32 %v961, 0.01
      %v1474 = vmul.f32 %v964, 0.01
      %v1475 = vmul.f32 %v969, 0.01
      %v1476 = vmul.f32 %v972, 0.01
      %v1477 = vmul.f32 %v977, 0.01
      %v1478 = vmul.f32 %v980, 0.01
      %v1479 = vmul.f32 %v985, 0.01
      %v1480 = vmul.f32 %v988, 0.01
      %v1481 = vmul.f32 %v993, 0.01
      %v1482 = vmul.f32 %v996, 0.01
      %v1483 = vmul.f32 %v1001, 0.01
      %v1484 = vmul.f32 %v1004, 0.01
      %v1485 = vmul.f32 %v1009, 0.01
      %v1486 = vmul.f32 %v1012, 0.01
      %v1487 = vmul.f32 %v1017, 0.01
      %v1488 = vmul.f32 %v1020, 0.01
      %v1489 = vmul.f32 %v1025, 0.01
      %v1490 = vmul.f32 %v1028, 0.01
      %v1491 = vmul.f32 %v1033, 0.01
      %v1492 = vmul.f32 %v1036, 0.01
      %v1493 = vmul.f32 %v1041, 0.01
      %v1494 = vmul.f32 %v1044, 0.01
      %v1495 = vmul.f32 %v1049, 0.01
      %v1496 = vmul.f32 %v1052, 0.01
      %v1497 = vmul.f32 %v1057, 0.01
      %v1498 = vmul.f32 %v1060, 0.01
      %v1499 = vmul.f32 %v1065, 0.01
      %v1500 = vmul.f32 %v1068, 0.01
      %v1501 = vmul.f32 %v1073, 0.01
      %v1502 = vmul.f32 %v1076, 0.01
      %v1503 = vmul.f32 %v1081, 0.01
      %v1504 = vmul.f32 %v1084, 0.01
      %v1505 = vmul.f32 %v1089, 0.01
      %v1506 = vmul.f32 %v1092, 0.01
      %v1507 = vmul.f32 %v1097, 0.01
      %v1508 = vmul.f32 %v1100, 0.01
      %v1509 = vmul.f32 %v1105, 0.01
      %v1510 = vmul.f32 %v1108, 0.01
      %v1511 = vmul.f32 %v1113, 0.01
      %v1512 = vmul.f32 %v1116, 0.01
      %v1513 = vmul.f32 %v1121, 0.01
      %v1514 = vmul.f32 %v1124, 0.01
      %v1515 = vmul.f32 %v1129, 0.01
      %v1516 = vmul.f32 %v1132, 0.01
      %v1517 = vmul.f32 %v1137, 0.01
      %v1518 = vmul.f32 %v1140, 0.01
      %v1519 = vmul.f32 %v1145, 0.01
      %v1520 = vmul.f32 %v1148, 0.01
      %v1521 = vmul.f32 %v1153, 0.01
      %v1522 = vmul.f32 %v1156, 0.01
      %v1523 = vmul.f32 %v1161, 0.01
      %v1524 = vmul.f32 %v1164, 0.01
      %v1525 = vmul.f32 %v1169, 0.01
      %v1526 = vmul.f32 %v1172, 0.01
      %v1527 = vmul.f32 %v1177, 0.01
      %v1528 = vmul.f32 %v1180, 0.01
      %v1529 = vmul.f32 %v1185, 0.01
      %v1530 = vmul.f32 %v1188, 0.01
      %v1531 = vmul.f32 %v1193, 0.01
      %v1532 = vmul.f32 %v1196, 0.01
      %v1533 = vmul.f32 %v1201, 0.01
      %v1534 = vmul.f32 %v1204, 0.01
      %v1535 = vmul.f32 %v1209, 0.01
      %v1536 = vmul.f32 %v1212, 0.01
      %v1537 = vmul.f32 %v1217, 0.01
      %v1538 = vmul.f32 %v1220, 0.01
      %v1539 = vmul.f32 %v1225, 0.01
      %v1540 = vmul.f32 %v1228, 0.01
      %v1541 = vmul.f32 %v1233, 0.01
      %v1542 = vmul.f32 %v1236, 0.01
      %v1543 = vmul.f32 %v1241, 0.01
      %v1544 = vmul.f32 %v1244, 0.01
      %v1545 = vmul.f32 %v1249, 0.01
      %v1546 = vmul.f32 %v1252, 0.01
      %v1547 = vmul.f32 %v1257, 0.01
      %v1548 = vmul.f32 %v1260, 0.01
      %v1549 = vmul.f32 %v1265, 0.01
      %v1550 = vmul.f32 %v1268, 0.01
      %v1551 = vmul.f32 %v1273, 0.01
      %v1552 = vmul.f32 %v1276, 0.01
      %v1553 = vmul.f32 %v1281, 0.01
      %v1554 = vmul.f32 %v1284, 0.01
      %v1555 = vmul.f32 %v1289, 0.01
      %v1556 = vmul.f32 %v1292, 0.01
      %v1557 = vmul.f32 %v1297, 0.01
      %v1558 = vmul.f32 %v1300, 0.01
      %v1559 = vsel %vm1303, %v793, %v1431
      %v1560 = vsel %vm1304, %v796, %v1432
      %v1561 = vsel %vm1305, %v801, %v1433
      %v1562 = vsel %vm1306, %v804, %v1434
      %v1563 = vsel %vm1307, %v809, %v1435
      %v1564 = vsel %vm1308, %v812, %v1436
      %v1565 = vsel %vm1309, %v817, %v1437
      %v1566 = vsel %vm1310, %v820, %v1438
      %v1567 = vsel %vm1311, %v825, %v1439
      %v1568 = vsel %vm1312, %v828, %v1440
      %v1569 = vsel %vm1313, %v833, %v1441
      %v1570 = vsel %vm1314, %v836, %v1442
      %v1571 = vsel %vm1315, %v841, %v1443
      %v1572 = vsel %vm1316, %v844, %v1444
      %v1573 = vsel %vm1317, %v849, %v1445
      %v1574 = vsel %vm1318, %v852, %v1446
      %v1575 = vsel %vm1319, %v857, %v1447
      %v1576 = vsel %vm1320, %v860, %v1448
      %v1577 = vsel %vm1321, %v865, %v1449
      %v1578 = vsel %vm1322, %v868, %v1450
      %v1579 = vsel %vm1323, %v873, %v1451
      %v1580 = vsel %vm1324, %v876, %v1452
      %v1581 = vsel %vm1325, %v881, %v1453
      %v1582 = vsel %vm1326, %v884, %v1454
      %v1583 = vsel %vm1327, %v889, %v1455
      %v1584 = vsel %vm1328, %v892, %v1456
      %v1585 = vsel %vm1329, %v897, %v1457
      %v1586 = vsel %vm1330, %v900, %v1458
      %v1587 = vsel %vm1331, %v905, %v1459
      %v1588 = vsel %vm1332, %v908, %v1460
      %v1589 = vsel %vm1333, %v913, %v1461
      %v1590 = vsel %vm1334, %v916, %v1462
      %v1591 = vsel %vm1335, %v921, %v1463
      %v1592 = vsel %vm1336, %v924, %v1464
      %v1593 = vsel %vm1337, %v929, %v1465
      %v1594 = vsel %vm1338, %v932, %v1466
      %v1595 = vsel %vm1339, %v937, %v1467
      %v1596 = vsel %vm1340, %v940, %v1468
      %v1597 = vsel %vm1341, %v945, %v1469
      %v1598 = vsel %vm1342, %v948, %v1470
      %v1599 = vsel %vm1343, %v953, %v1471
      %v1600 = vsel %vm1344, %v956, %v1472
      %v1601 = vsel %vm1345, %v961, %v1473
      %v1602 = vsel %vm1346, %v964, %v1474
      %v1603 = vsel %vm1347, %v969, %v1475
      %v1604 = vsel %vm1348, %v972, %v1476
      %v1605 = vsel %vm1349, %v977, %v1477
      %v1606 = vsel %vm1350, %v980, %v1478
      %v1607 = vsel %vm1351, %v985, %v1479
      %v1608 = vsel %vm1352, %v988, %v1480
      %v1609 = vsel %vm1353, %v993, %v1481
      %v1610 = vsel %vm1354, %v996, %v1482
      %v1611 = vsel %vm1355, %v1001, %v1483
      %v1612 = vsel %vm1356, %v1004, %v1484
      %v1613 = vsel %vm1357, %v1009, %v1485
      %v1614 = vsel %vm1358, %v1012, %v1486
      %v1615 = vsel %vm1359, %v1017, %v1487
      %v1616 = vsel %vm1360, %v1020, %v1488
      %v1617 = vsel %vm1361, %v1025, %v1489
      %v1618 = vsel %vm1362, %v1028, %v1490
      %v1619 = vsel %vm1363, %v1033, %v1491
      %v1620 = vsel %vm1364, %v1036, %v1492
      %v1621 = vsel %vm1365, %v1041, %v1493
      %v1622 = vsel %vm1366, %v1044, %v1494
      %v1623 = vsel %vm1367, %v1049, %v1495
      %v1624 = vsel %vm1368, %v1052, %v1496
      %v1625 = vsel %vm1369, %v1057, %v1497
      %v1626 = vsel %vm1370, %v1060, %v1498
      %v1627 = vsel %vm1371, %v1065, %v1499
      %v1628 = vsel %vm1372, %v1068, %v1500
      %v1629 = vsel %vm1373, %v1073, %v1501
      %v1630 = vsel %vm1374, %v1076, %v1502
      %v1631 = vsel %vm1375, %v1081, %v1503
      %v1632 = vsel %vm1376, %v1084, %v1504
      %v1633 = vsel %vm1377, %v1089, %v1505
      %v1634 = vsel %vm1378, %v1092, %v1506
      %v1635 = vsel %vm1379, %v1097, %v1507
      %v1636 = vsel %vm1380, %v1100, %v1508
      %v1637 = vsel %vm1381, %v1105, %v1509
      %v1638 = vsel %vm1382, %v1108, %v1510
      %v1639 = vsel %vm1383, %v1113, %v1511
      %v1640 = vsel %vm1384, %v1116, %v1512
      %v1641 = vsel %vm1385, %v1121, %v1513
      %v1642 = vsel %vm1386, %v1124, %v1514
      %v1643 = vsel %vm1387, %v1129, %v1515
      %v1644 = vsel %vm1388, %v1132, %v1516
      %v1645 = vsel %vm1389, %v1137, %v1517
      %v1646 = vsel %vm1390, %v1140, %v1518
      %v1647 = vsel %vm1391, %v1145, %v1519
      %v1648 = vsel %vm1392, %v1148, %v1520
      %v1649 = vsel %vm1393, %v1153, %v1521
      %v1650 = vsel %vm1394, %v1156, %v1522
      %v1651 = vsel %vm1395, %v1161, %v1523
      %v1652 = vsel %vm1396, %v1164, %v1524
      %v1653 = vsel %vm1397, %v1169, %v1525
      %v1654 = vsel %vm1398, %v1172, %v1526
      %v1655 = vsel %vm1399, %v1177, %v1527
      %v1656 = vsel %vm1400, %v1180, %v1528
      %v1657 = vsel %vm1401, %v1185, %v1529
      %v1658 = vsel %vm1402, %v1188, %v1530
      %v1659 = vsel %vm1403, %v1193, %v1531
      %v1660 = vsel %vm1404, %v1196, %v1532
      %v1661 = vsel %vm1405, %v1201, %v1533
      %v1662 = vsel %vm1406, %v1204, %v1534
      %v1663 = vsel %vm1407, %v1209, %v1535
      %v1664 = vsel %vm1408, %v1212, %v1536
      %v1665 = vsel %vm1409, %v1217, %v1537
      %v1666 = vsel %vm1410, %v1220, %v1538
      %v1667 = vsel %vm1411, %v1225, %v1539
      %v1668 = vsel %vm1412, %v1228, %v1540
      %v1669 = vsel %vm1413, %v1233, %v1541
      %v1670 = vsel %vm1414, %v1236, %v1542
      %v1671 = vsel %vm1415, %v1241, %v1543
      %v1672 = vsel %vm1416, %v1244, %v1544
      %v1673 = vsel %vm1417, %v1249, %v1545
      %v1674 = vsel %vm1418, %v1252, %v1546
      %v1675 = vsel %vm1419, %v1257, %v1547
      %v1676 = vsel %vm1420, %v1260, %v1548
      %v1677 = vsel %vm1421, %v1265, %v1549
      %v1678 = vsel %vm1422, %v1268, %v1550
      %v1679 = vsel %vm1423, %v1273, %v1551
      %v1680 = vsel %vm1424, %v1276, %v1552
      %v1681 = vsel %vm1425, %v1281, %v1553
      %v1682 = vsel %vm1426, %v1284, %v1554
      %v1683 = vsel %vm1427, %v1289, %v1555
      %v1684 = vsel %vm1428, %v1292, %v1556
      %v1685 = vsel %vm1429, %v1297, %v1557
      %v1686 = vsel %vm1430, %v1300, %v1558
      %v1687 = vpack.c.bf16 %v1560, %v1559
      %v1688 = vpack.c.bf16 %v1562, %v1561
      %v1689 = vpack.c.bf16 %v1564, %v1563
      %v1690 = vpack.c.bf16 %v1566, %v1565
      %v1691 = vpack.c.bf16 %v1568, %v1567
      %v1692 = vpack.c.bf16 %v1570, %v1569
      %v1693 = vpack.c.bf16 %v1572, %v1571
      %v1694 = vpack.c.bf16 %v1574, %v1573
      %v1695 = vpack.c.bf16 %v1576, %v1575
      %v1696 = vpack.c.bf16 %v1578, %v1577
      %v1697 = vpack.c.bf16 %v1580, %v1579
      %v1698 = vpack.c.bf16 %v1582, %v1581
      %v1699 = vpack.c.bf16 %v1584, %v1583
      %v1700 = vpack.c.bf16 %v1586, %v1585
      %v1701 = vpack.c.bf16 %v1588, %v1587
      %v1702 = vpack.c.bf16 %v1590, %v1589
      %v1703 = vpack.c.bf16 %v1592, %v1591
      %v1704 = vpack.c.bf16 %v1594, %v1593
      %v1705 = vpack.c.bf16 %v1596, %v1595
      %v1706 = vpack.c.bf16 %v1598, %v1597
      %v1707 = vpack.c.bf16 %v1600, %v1599
      %v1708 = vpack.c.bf16 %v1602, %v1601
      %v1709 = vpack.c.bf16 %v1604, %v1603
      %v1710 = vpack.c.bf16 %v1606, %v1605
      %v1711 = vpack.c.bf16 %v1608, %v1607
      %v1712 = vpack.c.bf16 %v1610, %v1609
      %v1713 = vpack.c.bf16 %v1612, %v1611
      %v1714 = vpack.c.bf16 %v1614, %v1613
      %v1715 = vpack.c.bf16 %v1616, %v1615
      %v1716 = vpack.c.bf16 %v1618, %v1617
      %v1717 = vpack.c.bf16 %v1620, %v1619
      %v1718 = vpack.c.bf16 %v1622, %v1621
      %v1719 = vpack.c.bf16 %v1624, %v1623
      %v1720 = vpack.c.bf16 %v1626, %v1625
      %v1721 = vpack.c.bf16 %v1628, %v1627
      %v1722 = vpack.c.bf16 %v1630, %v1629
      %v1723 = vpack.c.bf16 %v1632, %v1631
      %v1724 = vpack.c.bf16 %v1634, %v1633
      %v1725 = vpack.c.bf16 %v1636, %v1635
      %v1726 = vpack.c.bf16 %v1638, %v1637
      %v1727 = vpack.c.bf16 %v1640, %v1639
      %v1728 = vpack.c.bf16 %v1642, %v1641
      %v1729 = vpack.c.bf16 %v1644, %v1643
      %v1730 = vpack.c.bf16 %v1646, %v1645
      %v1731 = vpack.c.bf16 %v1648, %v1647
      %v1732 = vpack.c.bf16 %v1650, %v1649
      %v1733 = vpack.c.bf16 %v1652, %v1651
      %v1734 = vpack.c.bf16 %v1654, %v1653
      %v1735 = vpack.c.bf16 %v1656, %v1655
      %v1736 = vpack.c.bf16 %v1658, %v1657
      %v1737 = vpack.c.bf16 %v1660, %v1659
      %v1738 = vpack.c.bf16 %v1662, %v1661
      %v1739 = vpack.c.bf16 %v1664, %v1663
      %v1740 = vpack.c.bf16 %v1666, %v1665
      %v1741 = vpack.c.bf16 %v1668, %v1667
      %v1742 = vpack.c.bf16 %v1670, %v1669
      %v1743 = vpack.c.bf16 %v1672, %v1671
      %v1744 = vpack.c.bf16 %v1674, %v1673
      %v1745 = vpack.c.bf16 %v1676, %v1675
      %v1746 = vpack.c.bf16 %v1678, %v1677
      %v1747 = vpack.c.bf16 %v1680, %v1679
      %v1748 = vpack.c.bf16 %v1682, %v1681
      %v1749 = vpack.c.bf16 %v1684, %v1683
      %v1750 = vpack.c.bf16 %v1686, %v1685
      %v1815 = vunpack.c.l.b16 %v1687
      %v1816 = vunpack.c.h.b16 %v1687
      %v1817 = vunpack.c.l.b16 %v1688
      %v1818 = vunpack.c.h.b16 %v1688
      %v1819 = vunpack.c.l.b16 %v1689
      %v1820 = vunpack.c.h.b16 %v1689
      %v1821 = vunpack.c.l.b16 %v1690
      %v1822 = vunpack.c.h.b16 %v1690
      %v1823 = vunpack.c.l.b16 %v1691
      %v1824 = vunpack.c.h.b16 %v1691
      %v1825 = vunpack.c.l.b16 %v1692
      %v1826 = vunpack.c.h.b16 %v1692
      %v1827 = vunpack.c.l.b16 %v1693
      %v1828 = vunpack.c.h.b16 %v1693
      %v1829 = vunpack.c.l.b16 %v1694
      %v1830 = vunpack.c.h.b16 %v1694
      %v1831 = vunpack.c.l.b16 %v1695
      %v1832 = vunpack.c.h.b16 %v1695
      %v1833 = vunpack.c.l.b16 %v1696
      %v1834 = vunpack.c.h.b16 %v1696
      %v1835 = vunpack.c.l.b16 %v1697
      %v1836 = vunpack.c.h.b16 %v1697
      %v1837 = vunpack.c.l.b16 %v1698
      %v1838 = vunpack.c.h.b16 %v1698
      %v1839 = vunpack.c.l.b16 %v1699
      %v1840 = vunpack.c.h.b16 %v1699
      %v1841 = vunpack.c.l.b16 %v1700
      %v1842 = vunpack.c.h.b16 %v1700
      %v1843 = vunpack.c.l.b16 %v1701
      %v1844 = vunpack.c.h.b16 %v1701
      %v1845 = vunpack.c.l.b16 %v1702
      %v1846 = vunpack.c.h.b16 %v1702
      %v1847 = vunpack.c.l.b16 %v1703
      %v1848 = vunpack.c.h.b16 %v1703
      %v1849 = vunpack.c.l.b16 %v1704
      %v1850 = vunpack.c.h.b16 %v1704
      %v1851 = vunpack.c.l.b16 %v1705
      %v1852 = vunpack.c.h.b16 %v1705
      %v1853 = vunpack.c.l.b16 %v1706
      %v1854 = vunpack.c.h.b16 %v1706
      %v1855 = vunpack.c.l.b16 %v1707
      %v1856 = vunpack.c.h.b16 %v1707
      %v1857 = vunpack.c.l.b16 %v1708
      %v1858 = vunpack.c.h.b16 %v1708
      %v1859 = vunpack.c.l.b16 %v1709
      %v1860 = vunpack.c.h.b16 %v1709
      %v1861 = vunpack.c.l.b16 %v1710
      %v1862 = vunpack.c.h.b16 %v1710
      %v1863 = vunpack.c.l.b16 %v1711
      %v1864 = vunpack.c.h.b16 %v1711
      %v1865 = vunpack.c.l.b16 %v1712
      %v1866 = vunpack.c.h.b16 %v1712
      %v1867 = vunpack.c.l.b16 %v1713
      %v1868 = vunpack.c.h.b16 %v1713
      %v1869 = vunpack.c.l.b16 %v1714
      %v1870 = vunpack.c.h.b16 %v1714
      %v1871 = vunpack.c.l.b16 %v1715
      %v1872 = vunpack.c.h.b16 %v1715
      %v1873 = vunpack.c.l.b16 %v1716
      %v1874 = vunpack.c.h.b16 %v1716
      %v1875 = vunpack.c.l.b16 %v1717
      %v1876 = vunpack.c.h.b16 %v1717
      %v1877 = vunpack.c.l.b16 %v1718
      %v1878 = vunpack.c.h.b16 %v1718
      %v1879 = vunpack.c.l.b16 %v1719
      %v1880 = vunpack.c.h.b16 %v1719
      %v1881 = vunpack.c.l.b16 %v1720
      %v1882 = vunpack.c.h.b16 %v1720
      %v1883 = vunpack.c.l.b16 %v1721
      %v1884 = vunpack.c.h.b16 %v1721
      %v1885 = vunpack.c.l.b16 %v1722
      %v1886 = vunpack.c.h.b16 %v1722
      %v1887 = vunpack.c.l.b16 %v1723
      %v1888 = vunpack.c.h.b16 %v1723
      %v1889 = vunpack.c.l.b16 %v1724
      %v1890 = vunpack.c.h.b16 %v1724
      %v1891 = vunpack.c.l.b16 %v1725
      %v1892 = vunpack.c.h.b16 %v1725
      %v1893 = vunpack.c.l.b16 %v1726
      %v1894 = vunpack.c.h.b16 %v1726
      %v1895 = vunpack.c.l.b16 %v1727
      %v1896 = vunpack.c.h.b16 %v1727
      %v1897 = vunpack.c.l.b16 %v1728
      %v1898 = vunpack.c.h.b16 %v1728
      %v1899 = vunpack.c.l.b16 %v1729
      %v1900 = vunpack.c.h.b16 %v1729
      %v1901 = vunpack.c.l.b16 %v1730
      %v1902 = vunpack.c.h.b16 %v1730
      %v1903 = vunpack.c.l.b16 %v1731
      %v1904 = vunpack.c.h.b16 %v1731
      %v1905 = vunpack.c.l.b16 %v1732
      %v1906 = vunpack.c.h.b16 %v1732
      %v1907 = vunpack.c.l.b16 %v1733
      %v1908 = vunpack.c.h.b16 %v1733
      %v1909 = vunpack.c.l.b16 %v1734
      %v1910 = vunpack.c.h.b16 %v1734
      %v1911 = vunpack.c.l.b16 %v1735
      %v1912 = vunpack.c.h.b16 %v1735
      %v1913 = vunpack.c.l.b16 %v1736
      %v1914 = vunpack.c.h.b16 %v1736
      %v1915 = vunpack.c.l.b16 %v1737
      %v1916 = vunpack.c.h.b16 %v1737
      %v1917 = vunpack.c.l.b16 %v1738
      %v1918 = vunpack.c.h.b16 %v1738
      %v1919 = vunpack.c.l.b16 %v1739
      %v1920 = vunpack.c.h.b16 %v1739
      %v1921 = vunpack.c.l.b16 %v1740
      %v1922 = vunpack.c.h.b16 %v1740
      %v1923 = vunpack.c.l.b16 %v1741
      %v1924 = vunpack.c.h.b16 %v1741
      %v1925 = vunpack.c.l.b16 %v1742
      %v1926 = vunpack.c.h.b16 %v1742
      %v1927 = vunpack.c.l.b16 %v1743
      %v1928 = vunpack.c.h.b16 %v1743
      %v1929 = vunpack.c.l.b16 %v1744
      %v1930 = vunpack.c.h.b16 %v1744
      %v1931 = vunpack.c.l.b16 %v1745
      %v1932 = vunpack.c.h.b16 %v1745
      %v1933 = vunpack.c.l.b16 %v1746
      %v1934 = vunpack.c.h.b16 %v1746
      %v1935 = vunpack.c.l.b16 %v1747
      %v1936 = vunpack.c.h.b16 %v1747
      %v1937 = vunpack.c.l.b16 %v1748
      %v1938 = vunpack.c.h.b16 %v1748
      %v1939 = vunpack.c.l.b16 %v1749
      %v1940 = vunpack.c.h.b16 %v1749
      %v1941 = vunpack.c.l.b16 %v1750
      %v1942 = vunpack.c.h.b16 %v1750
      %v1943 = vpack.c.b16 %v1815, %v1815
      %v1944 = vpack.c.b16 %v1816, %v1816
      %v1945 = vpack.c.b16 %v1817, %v1817
      %v1946 = vpack.c.b16 %v1818, %v1818
      %v1947 = vpack.c.b16 %v1819, %v1819
      %v1948 = vpack.c.b16 %v1820, %v1820
      %v1949 = vpack.c.b16 %v1821, %v1821
      %v1950 = vpack.c.b16 %v1822, %v1822
      %v1951 = vpack.c.b16 %v1823, %v1823
      %v1952 = vpack.c.b16 %v1824, %v1824
      %v1953 = vpack.c.b16 %v1825, %v1825
      %v1954 = vpack.c.b16 %v1826, %v1826
      %v1955 = vpack.c.b16 %v1827, %v1827
      %v1956 = vpack.c.b16 %v1828, %v1828
      %v1957 = vpack.c.b16 %v1829, %v1829
      %v1958 = vpack.c.b16 %v1830, %v1830
      %v1959 = vpack.c.b16 %v1831, %v1831
      %v1960 = vpack.c.b16 %v1832, %v1832
      %v1961 = vpack.c.b16 %v1833, %v1833
      %v1962 = vpack.c.b16 %v1834, %v1834
      %v1963 = vpack.c.b16 %v1835, %v1835
      %v1964 = vpack.c.b16 %v1836, %v1836
      %v1965 = vpack.c.b16 %v1837, %v1837
      %v1966 = vpack.c.b16 %v1838, %v1838
      %v1967 = vpack.c.b16 %v1839, %v1839
      %v1968 = vpack.c.b16 %v1840, %v1840
      %v1969 = vpack.c.b16 %v1841, %v1841
      %v1970 = vpack.c.b16 %v1842, %v1842
      %v1971 = vpack.c.b16 %v1843, %v1843
      %v1972 = vpack.c.b16 %v1844, %v1844
      %v1973 = vpack.c.b16 %v1845, %v1845
      %v1974 = vpack.c.b16 %v1846, %v1846
      %v1975 = vpack.c.b16 %v1847, %v1847
      %v1976 = vpack.c.b16 %v1848, %v1848
      %v1977 = vpack.c.b16 %v1849, %v1849
      %v1978 = vpack.c.b16 %v1850, %v1850
      %v1979 = vpack.c.b16 %v1851, %v1851
      %v1980 = vpack.c.b16 %v1852, %v1852
      %v1981 = vpack.c.b16 %v1853, %v1853
      %v1982 = vpack.c.b16 %v1854, %v1854
      %v1983 = vpack.c.b16 %v1855, %v1855
      %v1984 = vpack.c.b16 %v1856, %v1856
      %v1985 = vpack.c.b16 %v1857, %v1857
      %v1986 = vpack.c.b16 %v1858, %v1858
      %v1987 = vpack.c.b16 %v1859, %v1859
      %v1988 = vpack.c.b16 %v1860, %v1860
      %v1989 = vpack.c.b16 %v1861, %v1861
      %v1990 = vpack.c.b16 %v1862, %v1862
      %v1991 = vpack.c.b16 %v1863, %v1863
      %v1992 = vpack.c.b16 %v1864, %v1864
      %v1993 = vpack.c.b16 %v1865, %v1865
      %v1994 = vpack.c.b16 %v1866, %v1866
      %v1995 = vpack.c.b16 %v1867, %v1867
      %v1996 = vpack.c.b16 %v1868, %v1868
      %v1997 = vpack.c.b16 %v1869, %v1869
      %v1998 = vpack.c.b16 %v1870, %v1870
      %v1999 = vpack.c.b16 %v1871, %v1871
      %v2000 = vpack.c.b16 %v1872, %v1872
      %v2001 = vpack.c.b16 %v1873, %v1873
      %v2002 = vpack.c.b16 %v1874, %v1874
      %v2003 = vpack.c.b16 %v1875, %v1875
      %v2004 = vpack.c.b16 %v1876, %v1876
      %v2005 = vpack.c.b16 %v1877, %v1877
      %v2006 = vpack.c.b16 %v1878, %v1878
      %v2007 = vpack.c.b16 %v1879, %v1879
      %v2008 = vpack.c.b16 %v1880, %v1880
      %v2009 = vpack.c.b16 %v1881, %v1881
      %v2010 = vpack.c.b16 %v1882, %v1882
      %v2011 = vpack.c.b16 %v1883, %v1883
      %v2012 = vpack.c.b16 %v1884, %v1884
      %v2013 = vpack.c.b16 %v1885, %v1885
      %v2014 = vpack.c.b16 %v1886, %v1886
      %v2015 = vpack.c.b16 %v1887, %v1887
      %v2016 = vpack.c.b16 %v1888, %v1888
      %v2017 = vpack.c.b16 %v1889, %v1889
      %v2018 = vpack.c.b16 %v1890, %v1890
      %v2019 = vpack.c.b16 %v1891, %v1891
      %v2020 = vpack.c.b16 %v1892, %v1892
      %v2021 = vpack.c.b16 %v1893, %v1893
      %v2022 = vpack.c.b16 %v1894, %v1894
      %v2023 = vpack.c.b16 %v1895, %v1895
      %v2024 = vpack.c.b16 %v1896, %v1896
      %v2025 = vpack.c.b16 %v1897, %v1897
      %v2026 = vpack.c.b16 %v1898, %v1898
      %v2027 = vpack.c.b16 %v1899, %v1899
      %v2028 = vpack.c.b16 %v1900, %v1900
      %v2029 = vpack.c.b16 %v1901, %v1901
      %v2030 = vpack.c.b16 %v1902, %v1902
      %v2031 = vpack.c.b16 %v1903, %v1903
      %v2032 = vpack.c.b16 %v1904, %v1904
      %v2033 = vpack.c.b16 %v1905, %v1905
      %v2034 = vpack.c.b16 %v1906, %v1906
      %v2035 = vpack.c.b16 %v1907, %v1907
      %v2036 = vpack.c.b16 %v1908, %v1908
      %v2037 = vpack.c.b16 %v1909, %v1909
      %v2038 = vpack.c.b16 %v1910, %v1910
      %v2039 = vpack.c.b16 %v1911, %v1911
      %v2040 = vpack.c.b16 %v1912, %v1912
      %v2041 = vpack.c.b16 %v1913, %v1913
      %v2042 = vpack.c.b16 %v1914, %v1914
      %v2043 = vpack.c.b16 %v1915, %v1915
      %v2044 = vpack.c.b16 %v1916, %v1916
      %v2045 = vpack.c.b16 %v1917, %v1917
      %v2046 = vpack.c.b16 %v1918, %v1918
      %v2047 = vpack.c.b16 %v1919, %v1919
      %v2048 = vpack.c.b16 %v1920, %v1920
      %v2049 = vpack.c.b16 %v1921, %v1921
      %v2050 = vpack.c.b16 %v1922, %v1922
      %v2051 = vpack.c.b16 %v1923, %v1923
      %v2052 = vpack.c.b16 %v1924, %v1924
      %v2053 = vpack.c.b16 %v1925, %v1925
      %v2054 = vpack.c.b16 %v1926, %v1926
      %v2055 = vpack.c.b16 %v1927, %v1927
      %v2056 = vpack.c.b16 %v1928, %v1928
      %v2057 = vpack.c.b16 %v1929, %v1929
      %v2058 = vpack.c.b16 %v1930, %v1930
      %v2059 = vpack.c.b16 %v1931, %v1931
      %v2060 = vpack.c.b16 %v1932, %v1932
      %v2061 = vpack.c.b16 %v1933, %v1933
      %v2062 = vpack.c.b16 %v1934, %v1934
      %v2063 = vpack.c.b16 %v1935, %v1935
      %v2064 = vpack.c.b16 %v1936, %v1936
      %v2065 = vpack.c.b16 %v1937, %v1937
      %v2066 = vpack.c.b16 %v1938, %v1938
      %v2067 = vpack.c.b16 %v1939, %v1939
      %v2068 = vpack.c.b16 %v1940, %v1940
      %v2069 = vpack.c.b16 %v1941, %v1941
      %v2070 = vpack.c.b16 %v1942, %v1942
      %vm2199 = vcmask 125952
      %2200 = vst.msk [vmem:[%s172] sm:$0xf] %vm2199, %v1943
      %2201 = vst.msk [vmem:[%s172 + $0x4] sm:$0xf] %vm2199, %v1944
      %2202 = vst.msk [vmem:[%s172 + $0x8] sm:$0xf] %vm2199, %v1945
      %2203 = vst.msk [vmem:[%s172 + $0xc] sm:$0xf] %vm2199, %v1946
      %2204 = vst.msk [vmem:[%s172 + $0x10] sm:$0xf] %vm2199, %v1947
      %2205 = vst.msk [vmem:[%s172 + $0x14] sm:$0xf] %vm2199, %v1948
      %2206 = vst.msk [vmem:[%s172 + $0x18] sm:$0xf] %vm2199, %v1949
      %2207 = vst.msk [vmem:[%s172 + $0x1c] sm:$0xf] %vm2199, %v1950
      %2208 = vst.msk [vmem:[%s172 + $0x20] sm:$0xf] %vm2199, %v1951
      %2209 = vst.msk [vmem:[%s172 + $0x24] sm:$0xf] %vm2199, %v1952
      %2210 = vst.msk [vmem:[%s172 + $0x28] sm:$0xf] %vm2199, %v1953
      %2211 = vst.msk [vmem:[%s172 + $0x2c] sm:$0xf] %vm2199, %v1954
      %2212 = vst.msk [vmem:[%s172 + $0x30] sm:$0xf] %vm2199, %v1955
      %2213 = vst.msk [vmem:[%s172 + $0x34] sm:$0xf] %vm2199, %v1956
      %2214 = vst.msk [vmem:[%s172 + $0x38] sm:$0xf] %vm2199, %v1957
      %2215 = vst.msk [vmem:[%s172 + $0x3c] sm:$0xf] %vm2199, %v1958
      %2216 = vst.msk [vmem:[%s172 + $0x40] sm:$0xf] %vm2199, %v1959
      %2217 = vst.msk [vmem:[%s172 + $0x44] sm:$0xf] %vm2199, %v1960
      %2218 = vst.msk [vmem:[%s172 + $0x48] sm:$0xf] %vm2199, %v1961
      %2219 = vst.msk [vmem:[%s172 + $0x4c] sm:$0xf] %vm2199, %v1962
      %2220 = vst.msk [vmem:[%s172 + $0x50] sm:$0xf] %vm2199, %v1963
      %2221 = vst.msk [vmem:[%s172 + $0x54] sm:$0xf] %vm2199, %v1964
      %2222 = vst.msk [vmem:[%s172 + $0x58] sm:$0xf] %vm2199, %v1965
      %2223 = vst.msk [vmem:[%s172 + $0x5c] sm:$0xf] %vm2199, %v1966
      %2224 = vst.msk [vmem:[%s172 + $0x60] sm:$0xf] %vm2199, %v1967
      %2225 = vst.msk [vmem:[%s172 + $0x64] sm:$0xf] %vm2199, %v1968
      %2226 = vst.msk [vmem:[%s172 + $0x68] sm:$0xf] %vm2199, %v1969
      %2227 = vst.msk [vmem:[%s172 + $0x6c] sm:$0xf] %vm2199, %v1970
      %2228 = vst.msk [vmem:[%s172 + $0x70] sm:$0xf] %vm2199, %v1971
      %2229 = vst.msk [vmem:[%s172 + $0x74] sm:$0xf] %vm2199, %v1972
      %2230 = vst.msk [vmem:[%s172 + $0x78] sm:$0xf] %vm2199, %v1973
      %2231 = vst.msk [vmem:[%s172 + $0x7c] sm:$0xf] %vm2199, %v1974
      %2232 = vst.msk [vmem:[%s172 + $0x80] sm:$0xf] %vm2199, %v1975
      %2233 = vst.msk [vmem:[%s172 + $0x84] sm:$0xf] %vm2199, %v1976
      %2234 = vst.msk [vmem:[%s172 + $0x88] sm:$0xf] %vm2199, %v1977
      %2235 = vst.msk [vmem:[%s172 + $0x8c] sm:$0xf] %vm2199, %v1978
      %2236 = vst.msk [vmem:[%s172 + $0x90] sm:$0xf] %vm2199, %v1979
      %2237 = vst.msk [vmem:[%s172 + $0x94] sm:$0xf] %vm2199, %v1980
      %2238 = vst.msk [vmem:[%s172 + $0x98] sm:$0xf] %vm2199, %v1981
      %2239 = vst.msk [vmem:[%s172 + $0x9c] sm:$0xf] %vm2199, %v1982
      %2240 = vst.msk [vmem:[%s172 + $0xa0] sm:$0xf] %vm2199, %v1983
      %2241 = vst.msk [vmem:[%s172 + $0xa4] sm:$0xf] %vm2199, %v1984
      %2242 = vst.msk [vmem:[%s172 + $0xa8] sm:$0xf] %vm2199, %v1985
      %2243 = vst.msk [vmem:[%s172 + $0xac] sm:$0xf] %vm2199, %v1986
      %2244 = vst.msk [vmem:[%s172 + $0xb0] sm:$0xf] %vm2199, %v1987
      %2245 = vst.msk [vmem:[%s172 + $0xb4] sm:$0xf] %vm2199, %v1988
      %2246 = vst.msk [vmem:[%s172 + $0xb8] sm:$0xf] %vm2199, %v1989
      %2247 = vst.msk [vmem:[%s172 + $0xbc] sm:$0xf] %vm2199, %v1990
      %2248 = vst.msk [vmem:[%s172 + $0xc0] sm:$0xf] %vm2199, %v1991
      %2249 = vst.msk [vmem:[%s172 + $0xc4] sm:$0xf] %vm2199, %v1992
      %2250 = vst.msk [vmem:[%s172 + $0xc8] sm:$0xf] %vm2199, %v1993
      %2251 = vst.msk [vmem:[%s172 + $0xcc] sm:$0xf] %vm2199, %v1994
      %2252 = vst.msk [vmem:[%s172 + $0xd0] sm:$0xf] %vm2199, %v1995
      %2253 = vst.msk [vmem:[%s172 + $0xd4] sm:$0xf] %vm2199, %v1996
      %2254 = vst.msk [vmem:[%s172 + $0xd8] sm:$0xf] %vm2199, %v1997
      %2255 = vst.msk [vmem:[%s172 + $0xdc] sm:$0xf] %vm2199, %v1998
      %2256 = vst.msk [vmem:[%s172 + $0xe0] sm:$0xf] %vm2199, %v1999
      %2257 = vst.msk [vmem:[%s172 + $0xe4] sm:$0xf] %vm2199, %v2000
      %2258 = vst.msk [vmem:[%s172 + $0xe8] sm:$0xf] %vm2199, %v2001
      %2259 = vst.msk [vmem:[%s172 + $0xec] sm:$0xf] %vm2199, %v2002
      %2260 = vst.msk [vmem:[%s172 + $0xf0] sm:$0xf] %vm2199, %v2003
      %2261 = vst.msk [vmem:[%s172 + $0xf4] sm:$0xf] %vm2199, %v2004
      %2262 = vst.msk [vmem:[%s172 + $0xf8] sm:$0xf] %vm2199, %v2005
      %2263 = vst.msk [vmem:[%s172 + $0xfc] sm:$0xf] %vm2199, %v2006
      %2264 = vst.msk [vmem:[%s172 + $0x100] sm:$0xf] %vm2199, %v2007
      %2265 = vst.msk [vmem:[%s172 + $0x104] sm:$0xf] %vm2199, %v2008
      %2266 = vst.msk [vmem:[%s172 + $0x108] sm:$0xf] %vm2199, %v2009
      %2267 = vst.msk [vmem:[%s172 + $0x10c] sm:$0xf] %vm2199, %v2010
      %2268 = vst.msk [vmem:[%s172 + $0x110] sm:$0xf] %vm2199, %v2011
      %2269 = vst.msk [vmem:[%s172 + $0x114] sm:$0xf] %vm2199, %v2012
      %2270 = vst.msk [vmem:[%s172 + $0x118] sm:$0xf] %vm2199, %v2013
      %2271 = vst.msk [vmem:[%s172 + $0x11c] sm:$0xf] %vm2199, %v2014
      %2272 = vst.msk [vmem:[%s172 + $0x120] sm:$0xf] %vm2199, %v2015
      %2273 = vst.msk [vmem:[%s172 + $0x124] sm:$0xf] %vm2199, %v2016
      %2274 = vst.msk [vmem:[%s172 + $0x128] sm:$0xf] %vm2199, %v2017
      %2275 = vst.msk [vmem:[%s172 + $0x12c] sm:$0xf] %vm2199, %v2018
      %2276 = vst.msk [vmem:[%s172 + $0x130] sm:$0xf] %vm2199, %v2019
      %2277 = vst.msk [vmem:[%s172 + $0x134] sm:$0xf] %vm2199, %v2020
      %2278 = vst.msk [vmem:[%s172 + $0x138] sm:$0xf] %vm2199, %v2021
      %2279 = vst.msk [vmem:[%s172 + $0x13c] sm:$0xf] %vm2199, %v2022
      %2280 = vst.msk [vmem:[%s172 + $0x140] sm:$0xf] %vm2199, %v2023
      %2281 = vst.msk [vmem:[%s172 + $0x144] sm:$0xf] %vm2199, %v2024
      %2282 = vst.msk [vmem:[%s172 + $0x148] sm:$0xf] %vm2199, %v2025
      %2283 = vst.msk [vmem:[%s172 + $0x14c] sm:$0xf] %vm2199, %v2026
      %2284 = vst.msk [vmem:[%s172 + $0x150] sm:$0xf] %vm2199, %v2027
      %2285 = vst.msk [vmem:[%s172 + $0x154] sm:$0xf] %vm2199, %v2028
      %2286 = vst.msk [vmem:[%s172 + $0x158] sm:$0xf] %vm2199, %v2029
      %2287 = vst.msk [vmem:[%s172 + $0x15c] sm:$0xf] %vm2199, %v2030
      %2288 = vst.msk [vmem:[%s172 + $0x160] sm:$0xf] %vm2199, %v2031
      %2289 = vst.msk [vmem:[%s172 + $0x164] sm:$0xf] %vm2199, %v2032
      %2290 = vst.msk [vmem:[%s172 + $0x168] sm:$0xf] %vm2199, %v2033
      %2291 = vst.msk [vmem:[%s172 + $0x16c] sm:$0xf] %vm2199, %v2034
      %2292 = vst.msk [vmem:[%s172 + $0x170] sm:$0xf] %vm2199, %v2035
      %2293 = vst.msk [vmem:[%s172 + $0x174] sm:$0xf] %vm2199, %v2036
      %2294 = vst.msk [vmem:[%s172 + $0x178] sm:$0xf] %vm2199, %v2037
      %2295 = vst.msk [vmem:[%s172 + $0x17c] sm:$0xf] %vm2199, %v2038
      %2296 = vst.msk [vmem:[%s172 + $0x180] sm:$0xf] %vm2199, %v2039
      %2297 = vst.msk [vmem:[%s172 + $0x184] sm:$0xf] %vm2199, %v2040
      %2298 = vst.msk [vmem:[%s172 + $0x188] sm:$0xf] %vm2199, %v2041
      %2299 = vst.msk [vmem:[%s172 + $0x18c] sm:$0xf] %vm2199, %v2042
      %2300 = vst.msk [vmem:[%s172 + $0x190] sm:$0xf] %vm2199, %v2043
      %2301 = vst.msk [vmem:[%s172 + $0x194] sm:$0xf] %vm2199, %v2044
      %2302 = vst.msk [vmem:[%s172 + $0x198] sm:$0xf] %vm2199, %v2045
      %2303 = vst.msk [vmem:[%s172 + $0x19c] sm:$0xf] %vm2199, %v2046
      %2304 = vst.msk [vmem:[%s172 + $0x1a0] sm:$0xf] %vm2199, %v2047
      %2305 = vst.msk [vmem:[%s172 + $0x1a4] sm:$0xf] %vm2199, %v2048
      %2306 = vst.msk [vmem:[%s172 + $0x1a8] sm:$0xf] %vm2199, %v2049
      %2307 = vst.msk [vmem:[%s172 + $0x1ac] sm:$0xf] %vm2199, %v2050
      %2308 = vst.msk [vmem:[%s172 + $0x1b0] sm:$0xf] %vm2199, %v2051
      %2309 = vst.msk [vmem:[%s172 + $0x1b4] sm:$0xf] %vm2199, %v2052
      %2310 = vst.msk [vmem:[%s172 + $0x1b8] sm:$0xf] %vm2199, %v2053
      %2311 = vst.msk [vmem:[%s172 + $0x1bc] sm:$0xf] %vm2199, %v2054
      %2312 = vst.msk [vmem:[%s172 + $0x1c0] sm:$0xf] %vm2199, %v2055
      %2313 = vst.msk [vmem:[%s172 + $0x1c4] sm:$0xf] %vm2199, %v2056
      %2314 = vst.msk [vmem:[%s172 + $0x1c8] sm:$0xf] %vm2199, %v2057
      %2315 = vst.msk [vmem:[%s172 + $0x1cc] sm:$0xf] %vm2199, %v2058
      %2316 = vst.msk [vmem:[%s172 + $0x1d0] sm:$0xf] %vm2199, %v2059
      %2317 = vst.msk [vmem:[%s172 + $0x1d4] sm:$0xf] %vm2199, %v2060
      %2318 = vst.msk [vmem:[%s172 + $0x1d8] sm:$0xf] %vm2199, %v2061
      %2319 = vst.msk [vmem:[%s172 + $0x1dc] sm:$0xf] %vm2199, %v2062
      %2320 = vst.msk [vmem:[%s172 + $0x1e0] sm:$0xf] %vm2199, %v2063
      %2321 = vst.msk [vmem:[%s172 + $0x1e4] sm:$0xf] %vm2199, %v2064
      %2322 = vst.msk [vmem:[%s172 + $0x1e8] sm:$0xf] %vm2199, %v2065
      %2323 = vst.msk [vmem:[%s172 + $0x1ec] sm:$0xf] %vm2199, %v2066
      %2324 = vst.msk [vmem:[%s172 + $0x1f0] sm:$0xf] %vm2199, %v2067
      %2325 = vst.msk [vmem:[%s172 + $0x1f4] sm:$0xf] %vm2199, %v2068
      %2326 = vst.msk [vmem:[%s172 + $0x1f8] sm:$0xf] %vm2199, %v2069
      %2327 = vst.msk [vmem:[%s172 + $0x1fc] sm:$0xf] %vm2199, %v2070
      %s2328 = smul.u32 128, %s14
      %p2329 = scmp.lt.s32.totalorder %s2328, 383
      %s2330 = scalar_select %p2329, %s2328, 383
      %s2331 = smul.addr %s2330, 4
      %s2332 = scalar_lea.vmem %s3, %s2331
      // Predicated region
      $region33: #{stargan_discriminator.9} parent=31 // pred_check
        %p2333 = pneg %p100
      $region34: #{stargan_discriminator.9} parent=31 // pred_check_branch
        %2335 = sbr.rel (%p2333) target = $region36
      $region35: #{stargan_discriminator.9} parent=31 // pred_region
        %s2336 = smul.u32 128, %s14
      $region36: #{stargan_discriminator.9} parent=31 // pred_fallthru
        _
    $region32: #{stargan_discriminator.9} parent=5 // pred_fallthru
      _
    %p2337 = scmp.le.s32.totalorder 2, %s9
    // Predicated region
    $region37: #{stargan_discriminator.9} parent=5 // pred_check
      %p2338 = pneg %p2337
    $region38: #{stargan_discriminator.9} parent=5 // pred_check_branch
      %2340 = sbr.rel (%p2338) target = $region40
    $region39: #{stargan_discriminator.9} parent=5 // pred_region
      %s2341 = ssub.s32 %s9, 2
      // Predicated region
      $region41: #{stargan_discriminator.9} parent=39 // pred_check
        %p2342 = pneg %p106
      $region42: #{stargan_discriminator.9} parent=39 // pred_check_branch
        %2344 = sbr.rel (%p2342) target = $region44
      $region43: #{stargan_discriminator.9} parent=39 // pred_region
        %s2345 = smul.u32 128, %s15
        %p2346 = scmp.lt.s32.totalorder %s2345, 383
        %s2347 = scalar_select %p2346, %s2345, 383
        %s2348 = smul.addr %s2347, 4
        %s2349 = scalar_lea.vmem %s3, %s2348
      $region44: #{stargan_discriminator.9} parent=39 // pred_fallthru
        _
    $region40: #{stargan_discriminator.9} parent=5 // pred_fallthru
      _
  $region6: #{stargan_discriminator.9} parent=0 // loop_footer
    %s13 = sadd.s32 1, %s9
  $region7: #{stargan_discriminator.9} parent=0 // loop_footer_branch
    %8 = sbr.rel target = $region3
  $region8: #{stargan_discriminator.9} parent=0 // loop_exit
    _

// kernel: stargan_discriminator.10
$region0: #{stargan_discriminator.10}
  #allocation0 [shape = 'u32[]', space=smem, size = 0x4, offset = 0x4, fixed_abs, tag = 'smem constant byte address 0x4 - core index']
  #allocation1 [shape = 'u32[144,128]{1,0:T(1,128)}', space=vmem, size = 0x12000, scoped, tag = 'internal scratch']
  %s0 = inlined_call_operand.vmem [shape: bf16[768,256], index: 0, kind: input, shape index: {}]
  %s1 = inlined_call_operand.vmem [shape: bf16[256,32], index: 1, kind: input, shape index: {}]
  %s2 = inlined_call_operand.vmem [shape: f32[1,32], index: 2, kind: input, shape index: {}]
  %s3 = inlined_call_operand.vmem [shape: bf16[768,32], index: 3, kind: output, shape index: {}]
  %s4 = sld [smem:[#allocation0]]
  $region45: #{stargan_discriminator.10} parent=0
    _
  %s6 = ssub.s32 1, %s4
  %s7 = scalar_select 0, %s6, %s4
  loop: start=0, step=1, limit=4
  $region2: #{stargan_discriminator.10} parent=0 // loop_pre_header
    _
  $region3: #{stargan_discriminator.10} parent=0 // loop_header
    %s9 = sphi 0, %s13
    %p10 = scmp.ge.s32.totalorder %s9, 4
    %s19 = sphi 0, %s21
    %s22 = sphi 0, %s19
    %s23 = sphi 0, %s22
    %s39 = sphi 0, %s23
    %s43 = sphi 0, %s43
    %s45 = sphi 0, %s43
    %s46 = sphi 0, %s45
    %s60 = sphi 0, %s46
    %s64 = sphi 0, %s64
    %s66 = sphi 0, %s64
    %s67 = sphi 0, %s66
    %s81 = sphi 0, %s67
    %s87 = sphi 0, %s89
    %s90 = sphi 0, %s87
    %s91 = sphi 0, %s90
    %s107 = sphi 0, %s91
  $region4: #{stargan_discriminator.10} parent=0 // loop_header_branch
    %12 = sbr.rel (%p10) target = $region8
  $region5: #{stargan_discriminator.10} parent=0 // loop_body
    %s14 = ssub.s32 %s9, 1
    %s15 = ssub.s32 %s9, 2
    %s16 = sadd.s32 %s9, 1
    %s17 = ssub.s32 %s9, %s16
    %p18 = scmp.eq.s32.totalorder %s17, 0
    %s20 = sadd.s32 %s19, 1
    %s21 = scalar_select %p18, %s19, %s20
    %p24 = pneg %p18
    %p25 = scmp.eq.s32.totalorder %s9, 1
    %p26 = por %p24, %p25
    %p27 = scmp.ne.s32.totalorder %s19, %s22
    %p28 = scmp.eq.s32.totalorder %s9, 0
    %p29 = por %p27, %p28
    %p30 = scmp.ne.s32.totalorder %s19, %s22
    %p31 = scmp.eq.s32.totalorder %s14, 1
    %p32 = por %p30, %p31
    %p33 = scmp.ne.s32.totalorder %s22, %s23
    %p34 = scmp.eq.s32.totalorder %s14, 0
    %p35 = por %p33, %p34
    %p36 = scmp.ne.s32.totalorder %s22, %s23
    %p37 = scmp.eq.s32.totalorder %s15, 1
    %p38 = por %p36, %p37
    %p40 = scmp.ne.s32.totalorder %s23, %s39
    %p41 = scmp.eq.s32.totalorder %s15, 0
    %p42 = por %p40, %p41
    %s44 = sadd.s32 %s43, 1
    %p47 = scmp.eq.s32.totalorder %s9, 1
    %p48 = scmp.ne.s32.totalorder %s43, %s45
    %p49 = scmp.eq.s32.totalorder %s9, 0
    %p50 = por %p48, %p49
    %p51 = scmp.ne.s32.totalorder %s43, %s45
    %p52 = scmp.eq.s32.totalorder %s14, 1
    %p53 = por %p51, %p52
    %p54 = scmp.ne.s32.totalorder %s45, %s46
    %p55 = scmp.eq.s32.totalorder %s14, 0
    %p56 = por %p54, %p55
    %p57 = scmp.ne.s32.totalorder %s45, %s46
    %p58 = scmp.eq.s32.totalorder %s15, 1
    %p59 = por %p57, %p58
    %p61 = scmp.ne.s32.totalorder %s46, %s60
    %p62 = scmp.eq.s32.totalorder %s15, 0
    %p63 = por %p61, %p62
    %s65 = sadd.s32 %s64, 1
    %p68 = scmp.eq.s32.totalorder %s9, 1
    %p69 = scmp.ne.s32.totalorder %s64, %s66
    %p70 = scmp.eq.s32.totalorder %s9, 0
    %p71 = por %p69, %p70
    %p72 = scmp.ne.s32.totalorder %s64, %s66
    %p73 = scmp.eq.s32.totalorder %s14, 1
    %p74 = por %p72, %p73
    %p75 = scmp.ne.s32.totalorder %s66, %s67
    %p76 = scmp.eq.s32.totalorder %s14, 0
    %p77 = por %p75, %p76
    %p78 = scmp.ne.s32.totalorder %s66, %s67
    %p79 = scmp.eq.s32.totalorder %s15, 1
    %p80 = por %p78, %p79
    %p82 = scmp.ne.s32.totalorder %s67, %s81
    %p83 = scmp.eq.s32.totalorder %s15, 0
    %p84 = por %p82, %p83
    %s85 = ssub.s32 %s9, %s16
    %p86 = scmp.eq.s32.totalorder %s85, 0
    %s88 = sadd.s32 %s87, 1
    %s89 = scalar_select %p86, %s87, %s88
    %p92 = pneg %p86
    %p93 = scmp.eq.s32.totalorder %s9, 1
    %p94 = por %p92, %p93
    %p95 = scmp.ne.s32.totalorder %s87, %s90
    %p96 = scmp.eq.s32.totalorder %s9, 0
    %p97 = por %p95, %p96
    %p98 = scmp.ne.s32.totalorder %s87, %s90
    %p99 = scmp.eq.s32.totalorder %s14, 1
    %p100 = por %p98, %p99
    %p101 = scmp.ne.s32.totalorder %s90, %s91
    %p102 = scmp.eq.s32.totalorder %s14, 0
    %p103 = por %p101, %p102
    %p104 = scmp.ne.s32.totalorder %s90, %s91
    %p105 = scmp.eq.s32.totalorder %s15, 1
    %p106 = por %p104, %p105
    %p108 = scmp.ne.s32.totalorder %s91, %s107
    %p109 = scmp.eq.s32.totalorder %s15, 0
    %p110 = por %p108, %p109
    %p111 = scmp.le.s32.totalorder 1, %s9
    %p112 = scmp.lt.s32.totalorder %s9, 3
    %p113 = pnand %p111, %p112
    %p114 = pneg %p113
    // Predicated region
    $region9: #{stargan_discriminator.10} parent=5 // pred_check
      _
    $region10: #{stargan_discriminator.10} parent=5 // pred_check_branch
      %116 = sbr.rel (%p113) target = $region12
    $region11: #{stargan_discriminator.10} parent=5 // pred_region
      %s117 = ssub.s32 %s9, 1
      // Predicated region
      $region13: #{stargan_discriminator.10} parent=11 // pred_check
        %p118 = pneg %p56
      $region14: #{stargan_discriminator.10} parent=11 // pred_check_branch
        %120 = sbr.rel (%p118) target = $region16
      $region15: #{stargan_discriminator.10} parent=11 // pred_region
        _
      $region16: #{stargan_discriminator.10} parent=11 // pred_fallthru
        _
      // Predicated region
      $region17: #{stargan_discriminator.10} parent=11 // pred_check
        %p121 = pneg %p77
      $region18: #{stargan_discriminator.10} parent=11 // pred_check_branch
        %123 = sbr.rel (%p121) target = $region20
      $region19: #{stargan_discriminator.10} parent=11 // pred_region
        _
      $region20: #{stargan_discriminator.10} parent=11 // pred_fallthru
        _
    $region12: #{stargan_discriminator.10} parent=5 // pred_fallthru
      _
    %p124 = scmp.lt.s32.totalorder %s9, 2
    // Predicated region
    $region21: #{stargan_discriminator.10} parent=5 // pred_check
      %p125 = pneg %p124
    $region22: #{stargan_discriminator.10} parent=5 // pred_check_branch
      %127 = sbr.rel (%p125) target = $region24
    $region23: #{stargan_discriminator.10} parent=5 // pred_region
      // Predicated region
      $region25: #{stargan_discriminator.10} parent=23 // pred_check
        %p128 = pneg %p29
      $region26: #{stargan_discriminator.10} parent=23 // pred_check_branch
        %130 = sbr.rel (%p128) target = $region28
      $region27: #{stargan_discriminator.10} parent=23 // pred_region
        %s131 = smul.u32 48, %s9
        %p132 = scmp.lt.s32.totalorder %s131, 95
        %s133 = scalar_select %p132, %s131, 95
        %s134 = smul.addr %s133, 2
        %s135 = smul.addr %s134, 4
        %s136 = scalar_lea.vmem %s0, %s135
        %s137 = smul.u32 48, %s9
      $region28: #{stargan_discriminator.10} parent=23 // pred_fallthru
        _
    $region24: #{stargan_discriminator.10} parent=5 // pred_fallthru
      _
    %p138 = scmp.le.s32.totalorder 1, %s9
    %p139 = scmp.lt.s32.totalorder %s9, 3
    %p140 = pnand %p138, %p139
    %p141 = pneg %p140
    // Predicated region
    $region29: #{stargan_discriminator.10} parent=5 // pred_check
      _
    $region30: #{stargan_discriminator.10} parent=5 // pred_check_branch
      %143 = sbr.rel (%p140) target = $region32
    $region31: #{stargan_discriminator.10} parent=5 // pred_region
      %s144 = ssub.s32 %s9, 1
      %s145 = smul.u32 48, %s14
      %p146 = scmp.lt.s32.totalorder %s145, 95
      %s147 = scalar_select %p146, %s145, 95
      %s148 = smul.addr %s147, 2
      %s149 = smul.addr %s148, 4
      %s150 = scalar_lea.vmem %s0, %s149
      %p151 = pneg %p35
      %p152 = pneg %p32
      %p153 = pneg %p56
      %p154 = pneg %p53
      %p155 = pneg %p77
      %p156 = pneg %p74
      %p157 = pneg %p103
      %p158 = pneg %p100
      %s159 = smul.u32 48, %s14
      %p160 = scmp.lt.s32.totalorder %s159, 95
      %s161 = scalar_select %p160, %s159, 95
      %s162 = smul.addr %s161, 4
      %s163 = scalar_lea.vmem %s3, %s162
      %s164 = smul.u32 48, %s14
      %p165 = scmp.lt.s32.totalorder %s164, 95
      %s166 = scalar_select %p165, %s164, 95
      %s167 = smul.addr %s166, 2
      %s168 = smul.addr %s167, 4
      %s169 = scalar_lea.vmem %s0, %s168
      %s170 = smul.u32 48, %s14
      %s171 = smul.u32 48, %s14
      %p172 = scmp.lt.s32.totalorder %s171, 95
      %s173 = scalar_select %p172, %s171, 95
      %s174 = smul.addr %s173, 4
      %s175 = scalar_lea.vmem %s3, %s174
      %s176 = smul.u32 48, %s14
      %v178 = vld [vmem:[%s169] sm:$0xff]
      %v179 = vld [vmem:[%s169 + $0x8] sm:$0xff]
      %v180 = vld [vmem:[%s169 + $0x10] sm:$0xff]
      %v181 = vld [vmem:[%s169 + $0x18] sm:$0xff]
      %v182 = vld [vmem:[%s169 + $0x20] sm:$0xff]
      %v183 = vld [vmem:[%s169 + $0x28] sm:$0xff]
      %v184 = vld [vmem:[%s169 + $0x30] sm:$0xff]
      %v185 = vld [vmem:[%s169 + $0x38] sm:$0xff]
      %v186 = vld [vmem:[%s169 + $0x40] sm:$0xff]
      %v187 = vld [vmem:[%s169 + $0x48] sm:$0xff]
      %v188 = vld [vmem:[%s169 + $0x50] sm:$0xff]
      %v189 = vld [vmem:[%s169 + $0x58] sm:$0xff]
      %v190 = vld [vmem:[%s169 + $0x60] sm:$0xff]
      %v191 = vld [vmem:[%s169 + $0x68] sm:$0xff]
      %v192 = vld [vmem:[%s169 + $0x70] sm:$0xff]
      %v193 = vld [vmem:[%s169 + $0x78] sm:$0xff]
      %v194 = vld [vmem:[%s169 + $0x80] sm:$0xff]
      %v195 = vld [vmem:[%s169 + $0x88] sm:$0xff]
      %v196 = vld [vmem:[%s169 + $0x90] sm:$0xff]
      %v197 = vld [vmem:[%s169 + $0x98] sm:$0xff]
      %v198 = vld [vmem:[%s169 + $0xa0] sm:$0xff]
      %v199 = vld [vmem:[%s169 + $0xa8] sm:$0xff]
      %v200 = vld [vmem:[%s169 + $0xb0] sm:$0xff]
      %v201 = vld [vmem:[%s169 + $0xb8] sm:$0xff]
      %v202 = vld [vmem:[%s169 + $0xc0] sm:$0xff]
      %v203 = vld [vmem:[%s169 + $0xc8] sm:$0xff]
      %v204 = vld [vmem:[%s169 + $0xd0] sm:$0xff]
      %v205 = vld [vmem:[%s169 + $0xd8] sm:$0xff]
      %v206 = vld [vmem:[%s169 + $0xe0] sm:$0xff]
      %v207 = vld [vmem:[%s169 + $0xe8] sm:$0xff]
      %v208 = vld [vmem:[%s169 + $0xf0] sm:$0xff]
      %v209 = vld [vmem:[%s169 + $0xf8] sm:$0xff]
      %v210 = vld [vmem:[%s169 + $0x100] sm:$0xff]
      %v211 = vld [vmem:[%s169 + $0x108] sm:$0xff]
      %v212 = vld [vmem:[%s169 + $0x110] sm:$0xff]
      %v213 = vld [vmem:[%s169 + $0x118] sm:$0xff]
      %v214 = vld [vmem:[%s169 + $0x120] sm:$0xff]
      %v215 = vld [vmem:[%s169 + $0x128] sm:$0xff]
      %v216 = vld [vmem:[%s169 + $0x130] sm:$0xff]
      %v217 = vld [vmem:[%s169 + $0x138] sm:$0xff]
      %v218 = vld [vmem:[%s169 + $0x140] sm:$0xff]
      %v219 = vld [vmem:[%s169 + $0x148] sm:$0xff]
      %v220 = vld [vmem:[%s169 + $0x150] sm:$0xff]
      %v221 = vld [vmem:[%s169 + $0x158] sm:$0xff]
      %v222 = vld [vmem:[%s169 + $0x160] sm:$0xff]
      %v223 = vld [vmem:[%s169 + $0x168] sm:$0xff]
      %v224 = vld [vmem:[%s169 + $0x170] sm:$0xff]
      %v225 = vld [vmem:[%s169 + $0x178] sm:$0xff]
      %v226 = vld [vmem:[%s1] sm:$0xf]
      %v227 = vld [vmem:[%s1 + $0x4] sm:$0xf]
      %v228 = vld [vmem:[%s1 + $0x8] sm:$0xf]
      %v229 = vld [vmem:[%s1 + $0xc] sm:$0xf]
      %v230 = vld [vmem:[%s1 + $0x10] sm:$0xf]
      %v231 = vld [vmem:[%s1 + $0x14] sm:$0xf]
      %v232 = vld [vmem:[%s1 + $0x18] sm:$0xf]
      %v233 = vld [vmem:[%s1 + $0x1c] sm:$0xf]
      %v234 = vld [vmem:[%s1 + $0x20] sm:$0xf]
      %v235 = vld [vmem:[%s1 + $0x24] sm:$0xf]
      %v236 = vld [vmem:[%s1 + $0x28] sm:$0xf]
      %v237 = vld [vmem:[%s1 + $0x2c] sm:$0xf]
      %v238 = vld [vmem:[%s1 + $0x30] sm:$0xf]
      %v239 = vld [vmem:[%s1 + $0x34] sm:$0xf]
      %v240 = vld [vmem:[%s1 + $0x38] sm:$0xf]
      %v241 = vld [vmem:[%s1 + $0x3c] sm:$0xf]
      %v242 = vld [vmem:[%s1 + $0x40] sm:$0xf]
      %v243 = vld [vmem:[%s1 + $0x44] sm:$0xf]
      %v244 = vld [vmem:[%s1 + $0x48] sm:$0xf]
      %v245 = vld [vmem:[%s1 + $0x4c] sm:$0xf]
      %v246 = vld [vmem:[%s1 + $0x50] sm:$0xf]
      %v247 = vld [vmem:[%s1 + $0x54] sm:$0xf]
      %v248 = vld [vmem:[%s1 + $0x58] sm:$0xf]
      %v249 = vld [vmem:[%s1 + $0x5c] sm:$0xf]
      %v250 = vld [vmem:[%s1 + $0x60] sm:$0xf]
      %v251 = vld [vmem:[%s1 + $0x64] sm:$0xf]
      %v252 = vld [vmem:[%s1 + $0x68] sm:$0xf]
      %v253 = vld [vmem:[%s1 + $0x6c] sm:$0xf]
      %v254 = vld [vmem:[%s1 + $0x70] sm:$0xf]
      %v255 = vld [vmem:[%s1 + $0x74] sm:$0xf]
      %v256 = vld [vmem:[%s1 + $0x78] sm:$0xf]
      %v257 = vld [vmem:[%s1 + $0x7c] sm:$0xf]
      %v258 = vld [vmem:[%s2] sm:$0x1]
      %v260 = vlaneseq
      %v261 = vshrl.u32 %v260, 7
      %v262 = vsub.s32 0, %v261
      %v263 = vrot.slane %v258, %v262
      %v313 = vunpack.c.l.b16 %v178
      %v314 = vunpack.c.h.b16 %v178
      %v315 = vunpack.c.l.b16 %v179
      %v316 = vunpack.c.h.b16 %v179
      %v317 = vunpack.c.l.b16 %v180
      %v318 = vunpack.c.h.b16 %v180
      %v319 = vunpack.c.l.b16 %v181
      %v320 = vunpack.c.h.b16 %v181
      %v321 = vunpack.c.l.b16 %v182
      %v322 = vunpack.c.h.b16 %v182
      %v323 = vunpack.c.l.b16 %v183
      %v324 = vunpack.c.h.b16 %v183
      %v325 = vunpack.c.l.b16 %v184
      %v326 = vunpack.c.h.b16 %v184
      %v327 = vunpack.c.l.b16 %v185
      %v328 = vunpack.c.h.b16 %v185
      %v329 = vunpack.c.l.b16 %v186
      %v330 = vunpack.c.h.b16 %v186
      %v331 = vunpack.c.l.b16 %v187
      %v332 = vunpack.c.h.b16 %v187
      %v333 = vunpack.c.l.b16 %v188
      %v334 = vunpack.c.h.b16 %v188
      %v335 = vunpack.c.l.b16 %v189
      %v336 = vunpack.c.h.b16 %v189
      %v337 = vunpack.c.l.b16 %v190
      %v338 = vunpack.c.h.b16 %v190
      %v339 = vunpack.c.l.b16 %v191
      %v340 = vunpack.c.h.b16 %v191
      %v341 = vunpack.c.l.b16 %v192
      %v342 = vunpack.c.h.b16 %v192
      %v343 = vunpack.c.l.b16 %v193
      %v344 = vunpack.c.h.b16 %v193
      %v345 = vunpack.c.l.b16 %v194
      %v346 = vunpack.c.h.b16 %v194
      %v347 = vunpack.c.l.b16 %v195
      %v348 = vunpack.c.h.b16 %v195
      %v349 = vunpack.c.l.b16 %v196
      %v350 = vunpack.c.h.b16 %v196
      %v351 = vunpack.c.l.b16 %v197
      %v352 = vunpack.c.h.b16 %v197
      %v353 = vunpack.c.l.b16 %v198
      %v354 = vunpack.c.h.b16 %v198
      %v355 = vunpack.c.l.b16 %v199
      %v356 = vunpack.c.h.b16 %v199
      %v357 = vunpack.c.l.b16 %v200
      %v358 = vunpack.c.h.b16 %v200
      %v359 = vunpack.c.l.b16 %v201
      %v360 = vunpack.c.h.b16 %v201
      %v361 = vunpack.c.l.b16 %v202
      %v362 = vunpack.c.h.b16 %v202
      %v363 = vunpack.c.l.b16 %v203
      %v364 = vunpack.c.h.b16 %v203
      %v365 = vunpack.c.l.b16 %v204
      %v366 = vunpack.c.h.b16 %v204
      %v367 = vunpack.c.l.b16 %v205
      %v368 = vunpack.c.h.b16 %v205
      %v369 = vunpack.c.l.b16 %v206
      %v370 = vunpack.c.h.b16 %v206
      %v371 = vunpack.c.l.b16 %v207
      %v372 = vunpack.c.h.b16 %v207
      %v373 = vunpack.c.l.b16 %v208
      %v374 = vunpack.c.h.b16 %v208
      %v375 = vunpack.c.l.b16 %v209
      %v376 = vunpack.c.h.b16 %v209
      %v377 = vunpack.c.l.b16 %v210
      %v378 = vunpack.c.h.b16 %v210
      %v379 = vunpack.c.l.b16 %v211
      %v380 = vunpack.c.h.b16 %v211
      %v381 = vunpack.c.l.b16 %v212
      %v382 = vunpack.c.h.b16 %v212
      %v383 = vunpack.c.l.b16 %v213
      %v384 = vunpack.c.h.b16 %v213
      %v385 = vunpack.c.l.b16 %v214
      %v386 = vunpack.c.h.b16 %v214
      %v387 = vunpack.c.l.b16 %v215
      %v388 = vunpack.c.h.b16 %v215
      %v389 = vunpack.c.l.b16 %v216
      %v390 = vunpack.c.h.b16 %v216
      %v391 = vunpack.c.l.b16 %v217
      %v392 = vunpack.c.h.b16 %v217
      %v393 = vunpack.c.l.b16 %v218
      %v394 = vunpack.c.h.b16 %v218
      %v395 = vunpack.c.l.b16 %v219
      %v396 = vunpack.c.h.b16 %v219
      %v397 = vunpack.c.l.b16 %v220
      %v398 = vunpack.c.h.b16 %v220
      %v399 = vunpack.c.l.b16 %v221
      %v400 = vunpack.c.h.b16 %v221
      %v401 = vunpack.c.l.b16 %v222
      %v402 = vunpack.c.h.b16 %v222
      %v403 = vunpack.c.l.b16 %v223
      %v404 = vunpack.c.h.b16 %v223
      %v405 = vunpack.c.l.b16 %v224
      %v406 = vunpack.c.h.b16 %v224
      %v407 = vunpack.c.l.b16 %v225
      %v408 = vunpack.c.h.b16 %v225
      %v409 = vpack.c.b16 %v315, %v313
      %v410 = vpack.c.b16 %v316, %v314
      %v411 = vpack.c.b16 %v319, %v317
      %v412 = vpack.c.b16 %v320, %v318
      %v413 = vpack.c.b16 %v323, %v321
      %v414 = vpack.c.b16 %v324, %v322
      %v415 = vpack.c.b16 %v327, %v325
      %v416 = vpack.c.b16 %v328, %v326
      %v417 = vpack.c.b16 %v331, %v329
      %v418 = vpack.c.b16 %v332, %v330
      %v419 = vpack.c.b16 %v335, %v333
      %v420 = vpack.c.b16 %v336, %v334
      %v421 = vpack.c.b16 %v339, %v337
      %v422 = vpack.c.b16 %v340, %v338
      %v423 = vpack.c.b16 %v343, %v341
      %v424 = vpack.c.b16 %v344, %v342
      %v425 = vpack.c.b16 %v347, %v345
      %v426 = vpack.c.b16 %v348, %v346
      %v427 = vpack.c.b16 %v351, %v349
      %v428 = vpack.c.b16 %v352, %v350
      %v429 = vpack.c.b16 %v355, %v353
      %v430 = vpack.c.b16 %v356, %v354
      %v431 = vpack.c.b16 %v359, %v357
      %v432 = vpack.c.b16 %v360, %v358
      %v433 = vpack.c.b16 %v363, %v361
      %v434 = vpack.c.b16 %v364, %v362
      %v435 = vpack.c.b16 %v367, %v365
      %v436 = vpack.c.b16 %v368, %v366
      %v437 = vpack.c.b16 %v371, %v369
      %v438 = vpack.c.b16 %v372, %v370
      %v439 = vpack.c.b16 %v375, %v373
      %v440 = vpack.c.b16 %v376, %v374
      %v441 = vpack.c.b16 %v379, %v377
      %v442 = vpack.c.b16 %v380, %v378
      %v443 = vpack.c.b16 %v383, %v381
      %v444 = vpack.c.b16 %v384, %v382
      %v445 = vpack.c.b16 %v387, %v385
      %v446 = vpack.c.b16 %v388, %v386
      %v447 = vpack.c.b16 %v391, %v389
      %v448 = vpack.c.b16 %v392, %v390
      %v449 = vpack.c.b16 %v395, %v393
      %v450 = vpack.c.b16 %v396, %v394
      %v451 = vpack.c.b16 %v399, %v397
      %v452 = vpack.c.b16 %v400, %v398
      %v453 = vpack.c.b16 %v403, %v401
      %v454 = vpack.c.b16 %v404, %v402
      %v455 = vpack.c.b16 %v407, %v405
      %v456 = vpack.c.b16 %v408, %v406
      %v537 = vunpack.c.l.b16 %v226
      %v538 = vunpack.c.l.b16 %v227
      %v539 = vunpack.c.l.b16 %v228
      %v540 = vunpack.c.l.b16 %v229
      %v541 = vunpack.c.l.b16 %v230
      %v542 = vunpack.c.l.b16 %v231
      %v543 = vunpack.c.l.b16 %v232
      %v544 = vunpack.c.l.b16 %v233
      %v545 = vunpack.c.l.b16 %v234
      %v546 = vunpack.c.l.b16 %v235
      %v547 = vunpack.c.l.b16 %v236
      %v548 = vunpack.c.l.b16 %v237
      %v549 = vunpack.c.l.b16 %v238
      %v550 = vunpack.c.l.b16 %v239
      %v551 = vunpack.c.l.b16 %v240
      %v552 = vunpack.c.l.b16 %v241
      %v553 = vunpack.c.l.b16 %v242
      %v554 = vunpack.c.l.b16 %v243
      %v555 = vunpack.c.l.b16 %v244
      %v556 = vunpack.c.l.b16 %v245
      %v557 = vunpack.c.l.b16 %v246
      %v558 = vunpack.c.l.b16 %v247
      %v559 = vunpack.c.l.b16 %v248
      %v560 = vunpack.c.l.b16 %v249
      %v561 = vunpack.c.l.b16 %v250
      %v562 = vunpack.c.l.b16 %v251
      %v563 = vunpack.c.l.b16 %v252
      %v564 = vunpack.c.l.b16 %v253
      %v565 = vunpack.c.l.b16 %v254
      %v566 = vunpack.c.l.b16 %v255
      %v567 = vunpack.c.l.b16 %v256
      %v568 = vunpack.c.l.b16 %v257
      %v569 = vpack.c.b16 %v538, %v537
      %v570 = vpack.c.b16 %v540, %v539
      %v571 = vpack.c.b16 %v542, %v541
      %v572 = vpack.c.b16 %v544, %v543
      %v573 = vpack.c.b16 %v546, %v545
      %v574 = vpack.c.b16 %v548, %v547
      %v575 = vpack.c.b16 %v550, %v549
      %v576 = vpack.c.b16 %v552, %v551
      %v577 = vpack.c.b16 %v554, %v553
      %v578 = vpack.c.b16 %v556, %v555
      %v579 = vpack.c.b16 %v558, %v557
      %v580 = vpack.c.b16 %v560, %v559
      %v581 = vpack.c.b16 %v562, %v561
      %v582 = vpack.c.b16 %v564, %v563
      %v583 = vpack.c.b16 %v566, %v565
      %v584 = vpack.c.b16 %v568, %v567
      %601 = vmatprep.subr.bf16.mxu0 0
      %602 = vmatpush1.bf16.msra.mxu0 %v569
      %603 = vmatprep.subr.bf16.mxu0 0
      %604 = vmatpush1.bf16.msra.mxu0 %v570
      %605 = vmatprep.subr.bf16.mxu0 0
      %606 = vmatpush1.bf16.msra.mxu0 %v571
      %607 = vmatprep.subr.bf16.mxu0 0
      %608 = vmatpush1.bf16.msra.mxu0 %v572
      %609 = vmatprep.subr.bf16.mxu0 0
      %610 = vmatpush1.bf16.msra.mxu0 %v573
      %611 = vmatprep.subr.bf16.mxu0 0
      %612 = vmatpush1.bf16.msra.mxu0 %v574
      %613 = vmatprep.subr.bf16.mxu0 0
      %614 = vmatpush1.bf16.msra.mxu0 %v575
      %615 = vmatprep.subr.bf16.mxu0 0
      %616 = vmatpush1.bf16.msra.mxu0 %v576
      %617 = vmatprep.subr.bf16.mxu0 0
      %618 = vmatpush1.bf16.msra.mxu0 %v577
      %619 = vmatprep.subr.bf16.mxu0 0
      %620 = vmatpush1.bf16.msra.mxu0 %v578
      %621 = vmatprep.subr.bf16.mxu0 0
      %622 = vmatpush1.bf16.msra.mxu0 %v579
      %623 = vmatprep.subr.bf16.mxu0 0
      %624 = vmatpush1.bf16.msra.mxu0 %v580
      %625 = vmatprep.subr.bf16.mxu0 0
      %626 = vmatpush1.bf16.msra.mxu0 %v581
      %627 = vmatprep.subr.bf16.mxu0 0
      %628 = vmatpush1.bf16.msra.mxu0 %v582
      %629 = vmatprep.subr.bf16.mxu0 0
      %630 = vmatpush1.bf16.msra.mxu0 %v583
      %631 = vmatprep.subr.bf16.mxu0 0
      %632 = vmatpush1.bf16.msra.mxu0 %v584
      %633 = vmatprep.mubr.bf16.mxu0 %v410
      %634 = vmatmul.mubr.bf16.gmra.mrb[0].mxu0 %v409
      %v635 = vpop.f32.mrb[0].mxu0
      %v636 = vadd.f32 %v263, %v635
      %v637 = vpop.f32.mrb[0].mxu0
      %v638 = vpop.f32.mrb[0].mxu0
      %v639 = vadd.f32 %v263, %v638
      %v640 = vpop.f32.mrb[0].mxu0
      %641 = vmatprep.mubr.bf16.mxu0 %v412
      %642 = vmatmul.mubr.bf16.gmra.mrb[0].mxu0 %v411
      %v643 = vpop.f32.mrb[0].mxu0
      %v644 = vadd.f32 %v263, %v643
      %v645 = vpop.f32.mrb[0].mxu0
      %v646 = vpop.f32.mrb[0].mxu0
      %v647 = vadd.f32 %v263, %v646
      %v648 = vpop.f32.mrb[0].mxu0
      %649 = vmatprep.mubr.bf16.mxu0 %v414
      %650 = vmatmul.mubr.bf16.gmra.mrb[0].mxu0 %v413
      %v651 = vpop.f32.mrb[0].mxu0
      %v652 = vadd.f32 %v263, %v651
      %v653 = vpop.f32.mrb[0].mxu0
      %v654 = vpop.f32.mrb[0].mxu0
      %v655 = vadd.f32 %v263, %v654
      %v656 = vpop.f32.mrb[0].mxu0
      %657 = vmatprep.mubr.bf16.mxu0 %v416
      %658 = vmatmul.mubr.bf16.gmra.mrb[0].mxu0 %v415
      %v659 = vpop.f32.mrb[0].mxu0
      %v660 = vadd.f32 %v263, %v659
      %v661 = vpop.f32.mrb[0].mxu0
      %v662 = vpop.f32.mrb[0].mxu0
      %v663 = vadd.f32 %v263, %v662
      %v664 = vpop.f32.mrb[0].mxu0
      %665 = vmatprep.mubr.bf16.mxu0 %v418
      %666 = vmatmul.mubr.bf16.gmra.mrb[0].mxu0 %v417
      %v667 = vpop.f32.mrb[0].mxu0
      %v668 = vadd.f32 %v263, %v667
      %v669 = vpop.f32.mrb[0].mxu0
      %v670 = vpop.f32.mrb[0].mxu0
      %v671 = vadd.f32 %v263, %v670
      %v672 = vpop.f32.mrb[0].mxu0
      %673 = vmatprep.mubr.bf16.mxu0 %v420
      %674 = vmatmul.mubr.bf16.gmra.mrb[0].mxu0 %v419
      %v675 = vpop.f32.mrb[0].mxu0
      %v676 = vadd.f32 %v263, %v675
      %v677 = vpop.f32.mrb[0].mxu0
      %v678 = vpop.f32.mrb[0].mxu0
      %v679 = vadd.f32 %v263, %v678
      %v680 = vpop.f32.mrb[0].mxu0
      %681 = vmatprep.mubr.bf16.mxu0 %v422
      %682 = vmatmul.mubr.bf16.gmra.mrb[0].mxu0 %v421
      %v683 = vpop.f32.mrb[0].mxu0
      %v684 = vadd.f32 %v263, %v683
      %v685 = vpop.f32.mrb[0].mxu0
      %v686 = vpop.f32.mrb[0].mxu0
      %v687 = vadd.f32 %v263, %v686
      %v688 = vpop.f32.mrb[0].mxu0
      %689 = vmatprep.mubr.bf16.mxu0 %v424
      %690 = vmatmul.mubr.bf16.gmra.mrb[0].mxu0 %v423
      %v691 = vpop.f32.mrb[0].mxu0
      %v692 = vadd.f32 %v263, %v691
      %v693 = vpop.f32.mrb[0].mxu0
      %v694 = vpop.f32.mrb[0].mxu0
      %v695 = vadd.f32 %v263, %v694
      %v696 = vpop.f32.mrb[0].mxu0
      %697 = vmatprep.mubr.bf16.mxu0 %v426
      %698 = vmatmul.mubr.bf16.gmra.mrb[0].mxu0 %v425
      %v699 = vpop.f32.mrb[0].mxu0
      %v700 = vadd.f32 %v263, %v699
      %v701 = vpop.f32.mrb[0].mxu0
      %v702 = vpop.f32.mrb[0].mxu0
      %v703 = vadd.f32 %v263, %v702
      %v704 = vpop.f32.mrb[0].mxu0
      %705 = vmatprep.mubr.bf16.mxu0 %v428
      %706 = vmatmul.mubr.bf16.gmra.mrb[0].mxu0 %v427
      %v707 = vpop.f32.mrb[0].mxu0
      %v708 = vadd.f32 %v263, %v707
      %v709 = vpop.f32.mrb[0].mxu0
      %v710 = vpop.f32.mrb[0].mxu0
      %v711 = vadd.f32 %v263, %v710
      %v712 = vpop.f32.mrb[0].mxu0
      %713 = vmatprep.mubr.bf16.mxu0 %v430
      %714 = vmatmul.mubr.bf16.gmra.mrb[0].mxu0 %v429
      %v715 = vpop.f32.mrb[0].mxu0
      %v716 = vadd.f32 %v263, %v715
      %v717 = vpop.f32.mrb[0].mxu0
      %v718 = vpop.f32.mrb[0].mxu0
      %v719 = vadd.f32 %v263, %v718
      %v720 = vpop.f32.mrb[0].mxu0
      %721 = vmatprep.mubr.bf16.mxu0 %v432
      %722 = vmatmul.mubr.bf16.gmra.mrb[0].mxu0 %v431
      %v723 = vpop.f32.mrb[0].mxu0
      %v724 = vadd.f32 %v263, %v723
      %v725 = vpop.f32.mrb[0].mxu0
      %v726 = vpop.f32.mrb[0].mxu0
      %v727 = vadd.f32 %v263, %v726
      %v728 = vpop.f32.mrb[0].mxu0
      %729 = vmatprep.mubr.bf16.mxu0 %v434
      %730 = vmatmul.mubr.bf16.gmra.mrb[0].mxu0 %v433
      %v731 = vpop.f32.mrb[0].mxu0
      %v732 = vadd.f32 %v263, %v731
      %v733 = vpop.f32.mrb[0].mxu0
      %v734 = vpop.f32.mrb[0].mxu0
      %v735 = vadd.f32 %v263, %v734
      %v736 = vpop.f32.mrb[0].mxu0
      %737 = vmatprep.mubr.bf16.mxu0 %v436
      %738 = vmatmul.mubr.bf16.gmra.mrb[0].mxu0 %v435
      %v739 = vpop.f32.mrb[0].mxu0
      %v740 = vadd.f32 %v263, %v739
      %v741 = vpop.f32.mrb[0].mxu0
      %v742 = vpop.f32.mrb[0].mxu0
      %v743 = vadd.f32 %v263, %v742
      %v744 = vpop.f32.mrb[0].mxu0
      %745 = vmatprep.mubr.bf16.mxu0 %v438
      %746 = vmatmul.mubr.bf16.gmra.mrb[0].mxu0 %v437
      %v747 = vpop.f32.mrb[0].mxu0
      %v748 = vadd.f32 %v263, %v747
      %v749 = vpop.f32.mrb[0].mxu0
      %v750 = vpop.f32.mrb[0].mxu0
      %v751 = vadd.f32 %v263, %v750
      %v752 = vpop.f32.mrb[0].mxu0
      %753 = vmatprep.mubr.bf16.mxu0 %v440
      %754 = vmatmul.mubr.bf16.gmra.mrb[0].mxu0 %v439
      %v755 = vpop.f32.mrb[0].mxu0
      %v756 = vadd.f32 %v263, %v755
      %v757 = vpop.f32.mrb[0].mxu0
      %v758 = vpop.f32.mrb[0].mxu0
      %v759 = vadd.f32 %v263, %v758
      %v760 = vpop.f32.mrb[0].mxu0
      %761 = vmatprep.mubr.bf16.mxu0 %v442
      %762 = vmatmul.mubr.bf16.gmra.mrb[0].mxu0 %v441
      %v763 = vpop.f32.mrb[0].mxu0
      %v764 = vadd.f32 %v263, %v763
      %v765 = vpop.f32.mrb[0].mxu0
      %v766 = vpop.f32.mrb[0].mxu0
      %v767 = vadd.f32 %v263, %v766
      %v768 = vpop.f32.mrb[0].mxu0
      %769 = vmatprep.mubr.bf16.mxu0 %v444
      %770 = vmatmul.mubr.bf16.gmra.mrb[0].mxu0 %v443
      %v771 = vpop.f32.mrb[0].mxu0
      %v772 = vadd.f32 %v263, %v771
      %v773 = vpop.f32.mrb[0].mxu0
      %v774 = vpop.f32.mrb[0].mxu0
      %v775 = vadd.f32 %v263, %v774
      %v776 = vpop.f32.mrb[0].mxu0
      %777 = vmatprep.mubr.bf16.mxu0 %v446
      %778 = vmatmul.mubr.bf16.gmra.mrb[0].mxu0 %v445
      %v779 = vpop.f32.mrb[0].mxu0
      %v780 = vadd.f32 %v263, %v779
      %v781 = vpop.f32.mrb[0].mxu0
      %v782 = vpop.f32.mrb[0].mxu0
      %v783 = vadd.f32 %v263, %v782
      %v784 = vpop.f32.mrb[0].mxu0
      %785 = vmatprep.mubr.bf16.mxu0 %v448
      %786 = vmatmul.mubr.bf16.gmra.mrb[0].mxu0 %v447
      %v787 = vpop.f32.mrb[0].mxu0
      %v788 = vadd.f32 %v263, %v787
      %v789 = vpop.f32.mrb[0].mxu0
      %v790 = vpop.f32.mrb[0].mxu0
      %v791 = vadd.f32 %v263, %v790
      %v792 = vpop.f32.mrb[0].mxu0
      %793 = vmatprep.mubr.bf16.mxu0 %v450
      %794 = vmatmul.mubr.bf16.gmra.mrb[0].mxu0 %v449
      %v795 = vpop.f32.mrb[0].mxu0
      %v796 = vadd.f32 %v263, %v795
      %v797 = vpop.f32.mrb[0].mxu0
      %v798 = vpop.f32.mrb[0].mxu0
      %v799 = vadd.f32 %v263, %v798
      %v800 = vpop.f32.mrb[0].mxu0
      %801 = vmatprep.mubr.bf16.mxu0 %v452
      %802 = vmatmul.mubr.bf16.gmra.mrb[0].mxu0 %v451
      %v803 = vpop.f32.mrb[0].mxu0
      %v804 = vadd.f32 %v263, %v803
      %v805 = vpop.f32.mrb[0].mxu0
      %v806 = vpop.f32.mrb[0].mxu0
      %v807 = vadd.f32 %v263, %v806
      %v808 = vpop.f32.mrb[0].mxu0
      %809 = vmatprep.mubr.bf16.mxu0 %v454
      %810 = vmatmul.mubr.bf16.gmra.mrb[0].mxu0 %v453
      %v811 = vpop.f32.mrb[0].mxu0
      %v812 = vadd.f32 %v263, %v811
      %v813 = vpop.f32.mrb[0].mxu0
      %v814 = vpop.f32.mrb[0].mxu0
      %v815 = vadd.f32 %v263, %v814
      %v816 = vpop.f32.mrb[0].mxu0
      %817 = vmatprep.mubr.bf16.mxu0 %v456
      %818 = vmatmul.mubr.bf16.gmra.mrb[0].mxu0 %v455
      %v819 = vpop.f32.mrb[0].mxu0
      %v820 = vadd.f32 %v263, %v819
      %v821 = vpop.f32.mrb[0].mxu0
      %v822 = vpop.f32.mrb[0].mxu0
      %v823 = vadd.f32 %v263, %v822
      %v824 = vpop.f32.mrb[0].mxu0
      %825 = vdwg.mxu0
      %vm826 = vcmp.ge.f32.partialorder %v636, 0.0
      %vm827 = vcmp.ge.f32.partialorder %v639, 0.0
      %vm828 = vcmp.ge.f32.partialorder %v644, 0.0
      %vm829 = vcmp.ge.f32.partialorder %v647, 0.0
      %vm830 = vcmp.ge.f32.partialorder %v652, 0.0
      %vm831 = vcmp.ge.f32.partialorder %v655, 0.0
      %vm832 = vcmp.ge.f32.partialorder %v660, 0.0
      %vm833 = vcmp.ge.f32.partialorder %v663, 0.0
      %vm834 = vcmp.ge.f32.partialorder %v668, 0.0
      %vm835 = vcmp.ge.f32.partialorder %v671, 0.0
      %vm836 = vcmp.ge.f32.partialorder %v676, 0.0
      %vm837 = vcmp.ge.f32.partialorder %v679, 0.0
      %vm838 = vcmp.ge.f32.partialorder %v684, 0.0
      %vm839 = vcmp.ge.f32.partialorder %v687, 0.0
      %vm840 = vcmp.ge.f32.partialorder %v692, 0.0
      %vm841 = vcmp.ge.f32.partialorder %v695, 0.0
      %vm842 = vcmp.ge.f32.partialorder %v700, 0.0
      %vm843 = vcmp.ge.f32.partialorder %v703, 0.0
      %vm844 = vcmp.ge.f32.partialorder %v708, 0.0
      %vm845 = vcmp.ge.f32.partialorder %v711, 0.0
      %vm846 = vcmp.ge.f32.partialorder %v716, 0.0
      %vm847 = vcmp.ge.f32.partialorder %v719, 0.0
      %vm848 = vcmp.ge.f32.partialorder %v724, 0.0
      %vm849 = vcmp.ge.f32.partialorder %v727, 0.0
      %vm850 = vcmp.ge.f32.partialorder %v732, 0.0
      %vm851 = vcmp.ge.f32.partialorder %v735, 0.0
      %vm852 = vcmp.ge.f32.partialorder %v740, 0.0
      %vm853 = vcmp.ge.f32.partialorder %v743, 0.0
      %vm854 = vcmp.ge.f32.partialorder %v748, 0.0
      %vm855 = vcmp.ge.f32.partialorder %v751, 0.0
      %vm856 = vcmp.ge.f32.partialorder %v756, 0.0
      %vm857 = vcmp.ge.f32.partialorder %v759, 0.0
      %vm858 = vcmp.ge.f32.partialorder %v764, 0.0
      %vm859 = vcmp.ge.f32.partialorder %v767, 0.0
      %vm860 = vcmp.ge.f32.partialorder %v772, 0.0
      %vm861 = vcmp.ge.f32.partialorder %v775, 0.0
      %vm862 = vcmp.ge.f32.partialorder %v780, 0.0
      %vm863 = vcmp.ge.f32.partialorder %v783, 0.0
      %vm864 = vcmp.ge.f32.partialorder %v788, 0.0
      %vm865 = vcmp.ge.f32.partialorder %v791, 0.0
      %vm866 = vcmp.ge.f32.partialorder %v796, 0.0
      %vm867 = vcmp.ge.f32.partialorder %v799, 0.0
      %vm868 = vcmp.ge.f32.partialorder %v804, 0.0
      %vm869 = vcmp.ge.f32.partialorder %v807, 0.0
      %vm870 = vcmp.ge.f32.partialorder %v812, 0.0
      %vm871 = vcmp.ge.f32.partialorder %v815, 0.0
      %vm872 = vcmp.ge.f32.partialorder %v820, 0.0
      %vm873 = vcmp.ge.f32.partialorder %v823, 0.0
      %v874 = vmul.f32 %v636, 0.01
      %v875 = vmul.f32 %v639, 0.01
      %v876 = vmul.f32 %v644, 0.01
      %v877 = vmul.f32 %v647, 0.01
      %v878 = vmul.f32 %v652, 0.01
      %v879 = vmul.f32 %v655, 0.01
      %v880 = vmul.f32 %v660, 0.01
      %v881 = vmul.f32 %v663, 0.01
      %v882 = vmul.f32 %v668, 0.01
      %v883 = vmul.f32 %v671, 0.01
      %v884 = vmul.f32 %v676, 0.01
      %v885 = vmul.f32 %v679, 0.01
      %v886 = vmul.f32 %v684, 0.01
      %v887 = vmul.f32 %v687, 0.01
      %v888 = vmul.f32 %v692, 0.01
      %v889 = vmul.f32 %v695, 0.01
      %v890 = vmul.f32 %v700, 0.01
      %v891 = vmul.f32 %v703, 0.01
      %v892 = vmul.f32 %v708, 0.01
      %v893 = vmul.f32 %v711, 0.01
      %v894 = vmul.f32 %v716, 0.01
      %v895 = vmul.f32 %v719, 0.01
      %v896 = vmul.f32 %v724, 0.01
      %v897 = vmul.f32 %v727, 0.01
      %v898 = vmul.f32 %v732, 0.01
      %v899 = vmul.f32 %v735, 0.01
      %v900 = vmul.f32 %v740, 0.01
      %v901 = vmul.f32 %v743, 0.01
      %v902 = vmul.f32 %v748, 0.01
      %v903 = vmul.f32 %v751, 0.01
      %v904 = vmul.f32 %v756, 0.01
      %v905 = vmul.f32 %v759, 0.01
      %v906 = vmul.f32 %v764, 0.01
      %v907 = vmul.f32 %v767, 0.01
      %v908 = vmul.f32 %v772, 0.01
      %v909 = vmul.f32 %v775, 0.01
      %v910 = vmul.f32 %v780, 0.01
      %v911 = vmul.f32 %v783, 0.01
      %v912 = vmul.f32 %v788, 0.01
      %v913 = vmul.f32 %v791, 0.01
      %v914 = vmul.f32 %v796, 0.01
      %v915 = vmul.f32 %v799, 0.01
      %v916 = vmul.f32 %v804, 0.01
      %v917 = vmul.f32 %v807, 0.01
      %v918 = vmul.f32 %v812, 0.01
      %v919 = vmul.f32 %v815, 0.01
      %v920 = vmul.f32 %v820, 0.01
      %v921 = vmul.f32 %v823, 0.01
      %v922 = vsel %vm826, %v636, %v874
      %v923 = vsel %vm827, %v639, %v875
      %v924 = vsel %vm828, %v644, %v876
      %v925 = vsel %vm829, %v647, %v877
      %v926 = vsel %vm830, %v652, %v878
      %v927 = vsel %vm831, %v655, %v879
      %v928 = vsel %vm832, %v660, %v880
      %v929 = vsel %vm833, %v663, %v881
      %v930 = vsel %vm834, %v668, %v882
      %v931 = vsel %vm835, %v671, %v883
      %v932 = vsel %vm836, %v676, %v884
      %v933 = vsel %vm837, %v679, %v885
      %v934 = vsel %vm838, %v684, %v886
      %v935 = vsel %vm839, %v687, %v887
      %v936 = vsel %vm840, %v692, %v888
      %v937 = vsel %vm841, %v695, %v889
      %v938 = vsel %vm842, %v700, %v890
      %v939 = vsel %vm843, %v703, %v891
      %v940 = vsel %vm844, %v708, %v892
      %v941 = vsel %vm845, %v711, %v893
      %v942 = vsel %vm846, %v716, %v894
      %v943 = vsel %vm847, %v719, %v895
      %v944 = vsel %vm848, %v724, %v896
      %v945 = vsel %vm849, %v727, %v897
      %v946 = vsel %vm850, %v732, %v898
      %v947 = vsel %vm851, %v735, %v899
      %v948 = vsel %vm852, %v740, %v900
      %v949 = vsel %vm853, %v743, %v901
      %v950 = vsel %vm854, %v748, %v902
      %v951 = vsel %vm855, %v751, %v903
      %v952 = vsel %vm856, %v756, %v904
      %v953 = vsel %vm857, %v759, %v905
      %v954 = vsel %vm858, %v764, %v906
      %v955 = vsel %vm859, %v767, %v907
      %v956 = vsel %vm860, %v772, %v908
      %v957 = vsel %vm861, %v775, %v909
      %v958 = vsel %vm862, %v780, %v910
      %v959 = vsel %vm863, %v783, %v911
      %v960 = vsel %vm864, %v788, %v912
      %v961 = vsel %vm865, %v791, %v913
      %v962 = vsel %vm866, %v796, %v914
      %v963 = vsel %vm867, %v799, %v915
      %v964 = vsel %vm868, %v804, %v916
      %v965 = vsel %vm869, %v807, %v917
      %v966 = vsel %vm870, %v812, %v918
      %v967 = vsel %vm871, %v815, %v919
      %v968 = vsel %vm872, %v820, %v920
      %v969 = vsel %vm873, %v823, %v921
      %v970 = vpack.c.bf16 %v923, %v922
      %v971 = vpack.c.bf16 %v925, %v924
      %v972 = vpack.c.bf16 %v927, %v926
      %v973 = vpack.c.bf16 %v929, %v928
      %v974 = vpack.c.bf16 %v931, %v930
      %v975 = vpack.c.bf16 %v933, %v932
      %v976 = vpack.c.bf16 %v935, %v934
      %v977 = vpack.c.bf16 %v937, %v936
      %v978 = vpack.c.bf16 %v939, %v938
      %v979 = vpack.c.bf16 %v941, %v940
      %v980 = vpack.c.bf16 %v943, %v942
      %v981 = vpack.c.bf16 %v945, %v944
      %v982 = vpack.c.bf16 %v947, %v946
      %v983 = vpack.c.bf16 %v949, %v948
      %v984 = vpack.c.bf16 %v951, %v950
      %v985 = vpack.c.bf16 %v953, %v952
      %v986 = vpack.c.bf16 %v955, %v954
      %v987 = vpack.c.bf16 %v957, %v956
      %v988 = vpack.c.bf16 %v959, %v958
      %v989 = vpack.c.bf16 %v961, %v960
      %v990 = vpack.c.bf16 %v963, %v962
      %v991 = vpack.c.bf16 %v965, %v964
      %v992 = vpack.c.bf16 %v967, %v966
      %v993 = vpack.c.bf16 %v969, %v968
      %v1018 = vunpack.c.l.b16 %v970
      %v1019 = vunpack.c.h.b16 %v970
      %v1020 = vunpack.c.l.b16 %v971
      %v1021 = vunpack.c.h.b16 %v971
      %v1022 = vunpack.c.l.b16 %v972
      %v1023 = vunpack.c.h.b16 %v972
      %v1024 = vunpack.c.l.b16 %v973
      %v1025 = vunpack.c.h.b16 %v973
      %v1026 = vunpack.c.l.b16 %v974
      %v1027 = vunpack.c.h.b16 %v974
      %v1028 = vunpack.c.l.b16 %v975
      %v1029 = vunpack.c.h.b16 %v975
      %v1030 = vunpack.c.l.b16 %v976
      %v1031 = vunpack.c.h.b16 %v976
      %v1032 = vunpack.c.l.b16 %v977
      %v1033 = vunpack.c.h.b16 %v977
      %v1034 = vunpack.c.l.b16 %v978
      %v1035 = vunpack.c.h.b16 %v978
      %v1036 = vunpack.c.l.b16 %v979
      %v1037 = vunpack.c.h.b16 %v979
      %v1038 = vunpack.c.l.b16 %v980
      %v1039 = vunpack.c.h.b16 %v980
      %v1040 = vunpack.c.l.b16 %v981
      %v1041 = vunpack.c.h.b16 %v981
      %v1042 = vunpack.c.l.b16 %v982
      %v1043 = vunpack.c.h.b16 %v982
      %v1044 = vunpack.c.l.b16 %v983
      %v1045 = vunpack.c.h.b16 %v983
      %v1046 = vunpack.c.l.b16 %v984
      %v1047 = vunpack.c.h.b16 %v984
      %v1048 = vunpack.c.l.b16 %v985
      %v1049 = vunpack.c.h.b16 %v985
      %v1050 = vunpack.c.l.b16 %v986
      %v1051 = vunpack.c.h.b16 %v986
      %v1052 = vunpack.c.l.b16 %v987
      %v1053 = vunpack.c.h.b16 %v987
      %v1054 = vunpack.c.l.b16 %v988
      %v1055 = vunpack.c.h.b16 %v988
      %v1056 = vunpack.c.l.b16 %v989
      %v1057 = vunpack.c.h.b16 %v989
      %v1058 = vunpack.c.l.b16 %v990
      %v1059 = vunpack.c.h.b16 %v990
      %v1060 = vunpack.c.l.b16 %v991
      %v1061 = vunpack.c.h.b16 %v991
      %v1062 = vunpack.c.l.b16 %v992
      %v1063 = vunpack.c.h.b16 %v992
      %v1064 = vunpack.c.l.b16 %v993
      %v1065 = vunpack.c.h.b16 %v993
      %v1066 = vpack.c.b16 %v1018, %v1018
      %v1067 = vpack.c.b16 %v1019, %v1019
      %v1068 = vpack.c.b16 %v1020, %v1020
      %v1069 = vpack.c.b16 %v1021, %v1021
      %v1070 = vpack.c.b16 %v1022, %v1022
      %v1071 = vpack.c.b16 %v1023, %v1023
      %v1072 = vpack.c.b16 %v1024, %v1024
      %v1073 = vpack.c.b16 %v1025, %v1025
      %v1074 = vpack.c.b16 %v1026, %v1026
      %v1075 = vpack.c.b16 %v1027, %v1027
      %v1076 = vpack.c.b16 %v1028, %v1028
      %v1077 = vpack.c.b16 %v1029, %v1029
      %v1078 = vpack.c.b16 %v1030, %v1030
      %v1079 = vpack.c.b16 %v1031, %v1031
      %v1080 = vpack.c.b16 %v1032, %v1032
      %v1081 = vpack.c.b16 %v1033, %v1033
      %v1082 = vpack.c.b16 %v1034, %v1034
      %v1083 = vpack.c.b16 %v1035, %v1035
      %v1084 = vpack.c.b16 %v1036, %v1036
      %v1085 = vpack.c.b16 %v1037, %v1037
      %v1086 = vpack.c.b16 %v1038, %v1038
      %v1087 = vpack.c.b16 %v1039, %v1039
      %v1088 = vpack.c.b16 %v1040, %v1040
      %v1089 = vpack.c.b16 %v1041, %v1041
      %v1090 = vpack.c.b16 %v1042, %v1042
      %v1091 = vpack.c.b16 %v1043, %v1043
      %v1092 = vpack.c.b16 %v1044, %v1044
      %v1093 = vpack.c.b16 %v1045, %v1045
      %v1094 = vpack.c.b16 %v1046, %v1046
      %v1095 = vpack.c.b16 %v1047, %v1047
      %v1096 = vpack.c.b16 %v1048, %v1048
      %v1097 = vpack.c.b16 %v1049, %v1049
      %v1098 = vpack.c.b16 %v1050, %v1050
      %v1099 = vpack.c.b16 %v1051, %v1051
      %v1100 = vpack.c.b16 %v1052, %v1052
      %v1101 = vpack.c.b16 %v1053, %v1053
      %v1102 = vpack.c.b16 %v1054, %v1054
      %v1103 = vpack.c.b16 %v1055, %v1055
      %v1104 = vpack.c.b16 %v1056, %v1056
      %v1105 = vpack.c.b16 %v1057, %v1057
      %v1106 = vpack.c.b16 %v1058, %v1058
      %v1107 = vpack.c.b16 %v1059, %v1059
      %v1108 = vpack.c.b16 %v1060, %v1060
      %v1109 = vpack.c.b16 %v1061, %v1061
      %v1110 = vpack.c.b16 %v1062, %v1062
      %v1111 = vpack.c.b16 %v1063, %v1063
      %v1112 = vpack.c.b16 %v1064, %v1064
      %v1113 = vpack.c.b16 %v1065, %v1065
      %vm1162 = vcmask 257024
      %1163 = vst.msk [vmem:[%s175] sm:$0xf] %vm1162, %v1066
      %1164 = vst.msk [vmem:[%s175 + $0x4] sm:$0xf] %vm1162, %v1067
      %1165 = vst.msk [vmem:[%s175 + $0x8] sm:$0xf] %vm1162, %v1068
      %1166 = vst.msk [vmem:[%s175 + $0xc] sm:$0xf] %vm1162, %v1069
      %1167 = vst.msk [vmem:[%s175 + $0x10] sm:$0xf] %vm1162, %v1070
      %1168 = vst.msk [vmem:[%s175 + $0x14] sm:$0xf] %vm1162, %v1071
      %1169 = vst.msk [vmem:[%s175 + $0x18] sm:$0xf] %vm1162, %v1072
      %1170 = vst.msk [vmem:[%s175 + $0x1c] sm:$0xf] %vm1162, %v1073
      %1171 = vst.msk [vmem:[%s175 + $0x20] sm:$0xf] %vm1162, %v1074
      %1172 = vst.msk [vmem:[%s175 + $0x24] sm:$0xf] %vm1162, %v1075
      %1173 = vst.msk [vmem:[%s175 + $0x28] sm:$0xf] %vm1162, %v1076
      %1174 = vst.msk [vmem:[%s175 + $0x2c] sm:$0xf] %vm1162, %v1077
      %1175 = vst.msk [vmem:[%s175 + $0x30] sm:$0xf] %vm1162, %v1078
      %1176 = vst.msk [vmem:[%s175 + $0x34] sm:$0xf] %vm1162, %v1079
      %1177 = vst.msk [vmem:[%s175 + $0x38] sm:$0xf] %vm1162, %v1080
      %1178 = vst.msk [vmem:[%s175 + $0x3c] sm:$0xf] %vm1162, %v1081
      %1179 = vst.msk [vmem:[%s175 + $0x40] sm:$0xf] %vm1162, %v1082
      %1180 = vst.msk [vmem:[%s175 + $0x44] sm:$0xf] %vm1162, %v1083
      %1181 = vst.msk [vmem:[%s175 + $0x48] sm:$0xf] %vm1162, %v1084
      %1182 = vst.msk [vmem:[%s175 + $0x4c] sm:$0xf] %vm1162, %v1085
      %1183 = vst.msk [vmem:[%s175 + $0x50] sm:$0xf] %vm1162, %v1086
      %1184 = vst.msk [vmem:[%s175 + $0x54] sm:$0xf] %vm1162, %v1087
      %1185 = vst.msk [vmem:[%s175 + $0x58] sm:$0xf] %vm1162, %v1088
      %1186 = vst.msk [vmem:[%s175 + $0x5c] sm:$0xf] %vm1162, %v1089
      %1187 = vst.msk [vmem:[%s175 + $0x60] sm:$0xf] %vm1162, %v1090
      %1188 = vst.msk [vmem:[%s175 + $0x64] sm:$0xf] %vm1162, %v1091
      %1189 = vst.msk [vmem:[%s175 + $0x68] sm:$0xf] %vm1162, %v1092
      %1190 = vst.msk [vmem:[%s175 + $0x6c] sm:$0xf] %vm1162, %v1093
      %1191 = vst.msk [vmem:[%s175 + $0x70] sm:$0xf] %vm1162, %v1094
      %1192 = vst.msk [vmem:[%s175 + $0x74] sm:$0xf] %vm1162, %v1095
      %1193 = vst.msk [vmem:[%s175 + $0x78] sm:$0xf] %vm1162, %v1096
      %1194 = vst.msk [vmem:[%s175 + $0x7c] sm:$0xf] %vm1162, %v1097
      %1195 = vst.msk [vmem:[%s175 + $0x80] sm:$0xf] %vm1162, %v1098
      %1196 = vst.msk [vmem:[%s175 + $0x84] sm:$0xf] %vm1162, %v1099
      %1197 = vst.msk [vmem:[%s175 + $0x88] sm:$0xf] %vm1162, %v1100
      %1198 = vst.msk [vmem:[%s175 + $0x8c] sm:$0xf] %vm1162, %v1101
      %1199 = vst.msk [vmem:[%s175 + $0x90] sm:$0xf] %vm1162, %v1102
      %1200 = vst.msk [vmem:[%s175 + $0x94] sm:$0xf] %vm1162, %v1103
      %1201 = vst.msk [vmem:[%s175 + $0x98] sm:$0xf] %vm1162, %v1104
      %1202 = vst.msk [vmem:[%s175 + $0x9c] sm:$0xf] %vm1162, %v1105
      %1203 = vst.msk [vmem:[%s175 + $0xa0] sm:$0xf] %vm1162, %v1106
      %1204 = vst.msk [vmem:[%s175 + $0xa4] sm:$0xf] %vm1162, %v1107
      %1205 = vst.msk [vmem:[%s175 + $0xa8] sm:$0xf] %vm1162, %v1108
      %1206 = vst.msk [vmem:[%s175 + $0xac] sm:$0xf] %vm1162, %v1109
      %1207 = vst.msk [vmem:[%s175 + $0xb0] sm:$0xf] %vm1162, %v1110
      %1208 = vst.msk [vmem:[%s175 + $0xb4] sm:$0xf] %vm1162, %v1111
      %1209 = vst.msk [vmem:[%s175 + $0xb8] sm:$0xf] %vm1162, %v1112
      %1210 = vst.msk [vmem:[%s175 + $0xbc] sm:$0xf] %vm1162, %v1113
      %s1211 = smul.u32 48, %s14
      %p1212 = scmp.lt.s32.totalorder %s1211, 95
      %s1213 = scalar_select %p1212, %s1211, 95
      %s1214 = smul.addr %s1213, 4
      %s1215 = scalar_lea.vmem %s3, %s1214
      // Predicated region
      $region33: #{stargan_discriminator.10} parent=31 // pred_check
        %p1216 = pneg %p100
      $region34: #{stargan_discriminator.10} parent=31 // pred_check_branch
        %1218 = sbr.rel (%p1216) target = $region36
      $region35: #{stargan_discriminator.10} parent=31 // pred_region
        %s1219 = smul.u32 48, %s14
      $region36: #{stargan_discriminator.10} parent=31 // pred_fallthru
        _
    $region32: #{stargan_discriminator.10} parent=5 // pred_fallthru
      _
    %p1220 = scmp.le.s32.totalorder 2, %s9
    // Predicated region
    $region37: #{stargan_discriminator.10} parent=5 // pred_check
      %p1221 = pneg %p1220
    $region38: #{stargan_discriminator.10} parent=5 // pred_check_branch
      %1223 = sbr.rel (%p1221) target = $region40
    $region39: #{stargan_discriminator.10} parent=5 // pred_region
      %s1224 = ssub.s32 %s9, 2
      // Predicated region
      $region41: #{stargan_discriminator.10} parent=39 // pred_check
        %p1225 = pneg %p106
      $region42: #{stargan_discriminator.10} parent=39 // pred_check_branch
        %1227 = sbr.rel (%p1225) target = $region44
      $region43: #{stargan_discriminator.10} parent=39 // pred_region
        %s1228 = smul.u32 48, %s15
        %p1229 = scmp.lt.s32.totalorder %s1228, 95
        %s1230 = scalar_select %p1229, %s1228, 95
        %s1231 = smul.addr %s1230, 4
        %s1232 = scalar_lea.vmem %s3, %s1231
      $region44: #{stargan_discriminator.10} parent=39 // pred_fallthru
        _
    $region40: #{stargan_discriminator.10} parent=5 // pred_fallthru
      _
  $region6: #{stargan_discriminator.10} parent=0 // loop_footer
    %s13 = sadd.s32 1, %s9
  $region7: #{stargan_discriminator.10} parent=0 // loop_footer_branch
    %8 = sbr.rel target = $region3
  $region8: #{stargan_discriminator.10} parent=0 // loop_exit
    _

// kernel: stargan_discriminator.11
$region0: #{stargan_discriminator.11}
  #allocation0 [shape = 'u32[]', space=smem, size = 0x4, offset = 0x4, fixed_abs, tag = 'smem constant byte address 0x4 - core index']
  #allocation1 [shape = 'u32[144,128]{1,0:T(1,128)}', space=vmem, size = 0x12000, scoped, tag = 'internal scratch']
  %s0 = inlined_call_operand.vmem [shape: bf16[192,512], index: 0, kind: input, shape index: {}]
  %s1 = inlined_call_operand.vmem [shape: bf16[512,64], index: 1, kind: input, shape index: {}]
  %s2 = inlined_call_operand.vmem [shape: f32[1,64], index: 2, kind: input, shape index: {}]
  %s3 = inlined_call_operand.vmem [shape: bf16[192,64], index: 3, kind: output, shape index: {}]
  %s4 = sld [smem:[#allocation0]]
  $region45: #{stargan_discriminator.11} parent=0
    _
  %s6 = ssub.s32 1, %s4
  %s7 = scalar_select 0, %s6, %s4
  loop: start=0, step=1, limit=4
  $region2: #{stargan_discriminator.11} parent=0 // loop_pre_header
    _
  $region3: #{stargan_discriminator.11} parent=0 // loop_header
    %s9 = sphi 0, %s13
    %p10 = scmp.ge.s32.totalorder %s9, 4
    %s19 = sphi 0, %s21
    %s22 = sphi 0, %s19
    %s23 = sphi 0, %s22
    %s39 = sphi 0, %s23
    %s43 = sphi 0, %s43
    %s45 = sphi 0, %s43
    %s46 = sphi 0, %s45
    %s60 = sphi 0, %s46
    %s64 = sphi 0, %s64
    %s66 = sphi 0, %s64
    %s67 = sphi 0, %s66
    %s81 = sphi 0, %s67
    %s87 = sphi 0, %s89
    %s90 = sphi 0, %s87
    %s91 = sphi 0, %s90
    %s107 = sphi 0, %s91
  $region4: #{stargan_discriminator.11} parent=0 // loop_header_branch
    %12 = sbr.rel (%p10) target = $region8
  $region5: #{stargan_discriminator.11} parent=0 // loop_body
    %s14 = ssub.s32 %s9, 1
    %s15 = ssub.s32 %s9, 2
    %s16 = sadd.s32 %s9, 1
    %s17 = ssub.s32 %s9, %s16
    %p18 = scmp.eq.s32.totalorder %s17, 0
    %s20 = sadd.s32 %s19, 1
    %s21 = scalar_select %p18, %s19, %s20
    %p24 = pneg %p18
    %p25 = scmp.eq.s32.totalorder %s9, 1
    %p26 = por %p24, %p25
    %p27 = scmp.ne.s32.totalorder %s19, %s22
    %p28 = scmp.eq.s32.totalorder %s9, 0
    %p29 = por %p27, %p28
    %p30 = scmp.ne.s32.totalorder %s19, %s22
    %p31 = scmp.eq.s32.totalorder %s14, 1
    %p32 = por %p30, %p31
    %p33 = scmp.ne.s32.totalorder %s22, %s23
    %p34 = scmp.eq.s32.totalorder %s14, 0
    %p35 = por %p33, %p34
    %p36 = scmp.ne.s32.totalorder %s22, %s23
    %p37 = scmp.eq.s32.totalorder %s15, 1
    %p38 = por %p36, %p37
    %p40 = scmp.ne.s32.totalorder %s23, %s39
    %p41 = scmp.eq.s32.totalorder %s15, 0
    %p42 = por %p40, %p41
    %s44 = sadd.s32 %s43, 1
    %p47 = scmp.eq.s32.totalorder %s9, 1
    %p48 = scmp.ne.s32.totalorder %s43, %s45
    %p49 = scmp.eq.s32.totalorder %s9, 0
    %p50 = por %p48, %p49
    %p51 = scmp.ne.s32.totalorder %s43, %s45
    %p52 = scmp.eq.s32.totalorder %s14, 1
    %p53 = por %p51, %p52
    %p54 = scmp.ne.s32.totalorder %s45, %s46
    %p55 = scmp.eq.s32.totalorder %s14, 0
    %p56 = por %p54, %p55
    %p57 = scmp.ne.s32.totalorder %s45, %s46
    %p58 = scmp.eq.s32.totalorder %s15, 1
    %p59 = por %p57, %p58
    %p61 = scmp.ne.s32.totalorder %s46, %s60
    %p62 = scmp.eq.s32.totalorder %s15, 0
    %p63 = por %p61, %p62
    %s65 = sadd.s32 %s64, 1
    %p68 = scmp.eq.s32.totalorder %s9, 1
    %p69 = scmp.ne.s32.totalorder %s64, %s66
    %p70 = scmp.eq.s32.totalorder %s9, 0
    %p71 = por %p69, %p70
    %p72 = scmp.ne.s32.totalorder %s64, %s66
    %p73 = scmp.eq.s32.totalorder %s14, 1
    %p74 = por %p72, %p73
    %p75 = scmp.ne.s32.totalorder %s66, %s67
    %p76 = scmp.eq.s32.totalorder %s14, 0
    %p77 = por %p75, %p76
    %p78 = scmp.ne.s32.totalorder %s66, %s67
    %p79 = scmp.eq.s32.totalorder %s15, 1
    %p80 = por %p78, %p79
    %p82 = scmp.ne.s32.totalorder %s67, %s81
    %p83 = scmp.eq.s32.totalorder %s15, 0
    %p84 = por %p82, %p83
    %s85 = ssub.s32 %s9, %s16
    %p86 = scmp.eq.s32.totalorder %s85, 0
    %s88 = sadd.s32 %s87, 1
    %s89 = scalar_select %p86, %s87, %s88
    %p92 = pneg %p86
    %p93 = scmp.eq.s32.totalorder %s9, 1
    %p94 = por %p92, %p93
    %p95 = scmp.ne.s32.totalorder %s87, %s90
    %p96 = scmp.eq.s32.totalorder %s9, 0
    %p97 = por %p95, %p96
    %p98 = scmp.ne.s32.totalorder %s87, %s90
    %p99 = scmp.eq.s32.totalorder %s14, 1
    %p100 = por %p98, %p99
    %p101 = scmp.ne.s32.totalorder %s90, %s91
    %p102 = scmp.eq.s32.totalorder %s14, 0
    %p103 = por %p101, %p102
    %p104 = scmp.ne.s32.totalorder %s90, %s91
    %p105 = scmp.eq.s32.totalorder %s15, 1
    %p106 = por %p104, %p105
    %p108 = scmp.ne.s32.totalorder %s91, %s107
    %p109 = scmp.eq.s32.totalorder %s15, 0
    %p110 = por %p108, %p109
    %p111 = scmp.le.s32.totalorder 1, %s9
    %p112 = scmp.lt.s32.totalorder %s9, 3
    %p113 = pnand %p111, %p112
    %p114 = pneg %p113
    // Predicated region
    $region9: #{stargan_discriminator.11} parent=5 // pred_check
      _
    $region10: #{stargan_discriminator.11} parent=5 // pred_check_branch
      %116 = sbr.rel (%p113) target = $region12
    $region11: #{stargan_discriminator.11} parent=5 // pred_region
      %s117 = ssub.s32 %s9, 1
      // Predicated region
      $region13: #{stargan_discriminator.11} parent=11 // pred_check
        %p118 = pneg %p56
      $region14: #{stargan_discriminator.11} parent=11 // pred_check_branch
        %120 = sbr.rel (%p118) target = $region16
      $region15: #{stargan_discriminator.11} parent=11 // pred_region
        _
      $region16: #{stargan_discriminator.11} parent=11 // pred_fallthru
        _
      // Predicated region
      $region17: #{stargan_discriminator.11} parent=11 // pred_check
        %p121 = pneg %p77
      $region18: #{stargan_discriminator.11} parent=11 // pred_check_branch
        %123 = sbr.rel (%p121) target = $region20
      $region19: #{stargan_discriminator.11} parent=11 // pred_region
        _
      $region20: #{stargan_discriminator.11} parent=11 // pred_fallthru
        _
    $region12: #{stargan_discriminator.11} parent=5 // pred_fallthru
      _
    %p124 = scmp.lt.s32.totalorder %s9, 2
    // Predicated region
    $region21: #{stargan_discriminator.11} parent=5 // pred_check
      %p125 = pneg %p124
    $region22: #{stargan_discriminator.11} parent=5 // pred_check_branch
      %127 = sbr.rel (%p125) target = $region24
    $region23: #{stargan_discriminator.11} parent=5 // pred_region
      // Predicated region
      $region25: #{stargan_discriminator.11} parent=23 // pred_check
        %p128 = pneg %p29
      $region26: #{stargan_discriminator.11} parent=23 // pred_check_branch
        %130 = sbr.rel (%p128) target = $region28
      $region27: #{stargan_discriminator.11} parent=23 // pred_region
        %s131 = smul.u32 12, %s9
        %p132 = scmp.lt.s32.totalorder %s131, 23
        %s133 = scalar_select %p132, %s131, 23
        %s134 = smul.addr %s133, 4
        %s135 = smul.addr %s134, 4
        %s136 = scalar_lea.vmem %s0, %s135
        %s137 = smul.u32 12, %s9
      $region28: #{stargan_discriminator.11} parent=23 // pred_fallthru
        _
    $region24: #{stargan_discriminator.11} parent=5 // pred_fallthru
      _
    %p138 = scmp.le.s32.totalorder 1, %s9
    %p139 = scmp.lt.s32.totalorder %s9, 3
    %p140 = pnand %p138, %p139
    %p141 = pneg %p140
    // Predicated region
    $region29: #{stargan_discriminator.11} parent=5 // pred_check
      _
    $region30: #{stargan_discriminator.11} parent=5 // pred_check_branch
      %143 = sbr.rel (%p140) target = $region32
    $region31: #{stargan_discriminator.11} parent=5 // pred_region
      %s144 = ssub.s32 %s9, 1
      %s145 = smul.u32 12, %s14
      %p146 = scmp.lt.s32.totalorder %s145, 23
      %s147 = scalar_select %p146, %s145, 23
      %s148 = smul.addr %s147, 4
      %s149 = smul.addr %s148, 4
      %s150 = scalar_lea.vmem %s0, %s149
      %p151 = pneg %p35
      %p152 = pneg %p32
      %p153 = pneg %p56
      %p154 = pneg %p53
      %p155 = pneg %p77
      %p156 = pneg %p74
      %p157 = pneg %p103
      %p158 = pneg %p100
      %s159 = smul.u32 12, %s14
      %p160 = scmp.lt.s32.totalorder %s159, 23
      %s161 = scalar_select %p160, %s159, 23
      %s162 = smul.addr %s161, 4
      %s163 = scalar_lea.vmem %s3, %s162
      %s164 = smul.u32 12, %s14
      %p165 = scmp.lt.s32.totalorder %s164, 23
      %s166 = scalar_select %p165, %s164, 23
      %s167 = smul.addr %s166, 4
      %s168 = smul.addr %s167, 4
      %s169 = scalar_lea.vmem %s0, %s168
      %s170 = smul.u32 12, %s14
      %s171 = smul.u32 12, %s14
      %p172 = scmp.lt.s32.totalorder %s171, 23
      %s173 = scalar_select %p172, %s171, 23
      %s174 = smul.addr %s173, 4
      %s175 = scalar_lea.vmem %s3, %s174
      %s176 = smul.u32 12, %s14
      %v178 = vld [vmem:[%s169] sm:$0xff]
      %v179 = vld [vmem:[%s169 + $0x8] sm:$0xff]
      %v180 = vld [vmem:[%s169 + $0x10] sm:$0xff]
      %v181 = vld [vmem:[%s169 + $0x18] sm:$0xff]
      %v182 = vld [vmem:[%s169 + $0x20] sm:$0xff]
      %v183 = vld [vmem:[%s169 + $0x28] sm:$0xff]
      %v184 = vld [vmem:[%s169 + $0x30] sm:$0xff]
      %v185 = vld [vmem:[%s169 + $0x38] sm:$0xff]
      %v186 = vld [vmem:[%s169 + $0x40] sm:$0xff]
      %v187 = vld [vmem:[%s169 + $0x48] sm:$0xff]
      %v188 = vld [vmem:[%s169 + $0x50] sm:$0xff]
      %v189 = vld [vmem:[%s169 + $0x58] sm:$0xff]
      %v190 = vld [vmem:[%s169 + $0x60] sm:$0xff]
      %v191 = vld [vmem:[%s169 + $0x68] sm:$0xff]
      %v192 = vld [vmem:[%s169 + $0x70] sm:$0xff]
      %v193 = vld [vmem:[%s169 + $0x78] sm:$0xff]
      %v194 = vld [vmem:[%s169 + $0x80] sm:$0xff]
      %v195 = vld [vmem:[%s169 + $0x88] sm:$0xff]
      %v196 = vld [vmem:[%s169 + $0x90] sm:$0xff]
      %v197 = vld [vmem:[%s169 + $0x98] sm:$0xff]
      %v198 = vld [vmem:[%s169 + $0xa0] sm:$0xff]
      %v199 = vld [vmem:[%s169 + $0xa8] sm:$0xff]
      %v200 = vld [vmem:[%s169 + $0xb0] sm:$0xff]
      %v201 = vld [vmem:[%s169 + $0xb8] sm:$0xff]
      %v202 = vld [vmem:[%s1] sm:$0xf]
      %v203 = vld [vmem:[%s1 + $0x4] sm:$0xf]
      %v204 = vld [vmem:[%s1 + $0x8] sm:$0xf]
      %v205 = vld [vmem:[%s1 + $0xc] sm:$0xf]
      %v206 = vld [vmem:[%s1 + $0x10] sm:$0xf]
      %v207 = vld [vmem:[%s1 + $0x14] sm:$0xf]
      %v208 = vld [vmem:[%s1 + $0x18] sm:$0xf]
      %v209 = vld [vmem:[%s1 + $0x1c] sm:$0xf]
      %v210 = vld [vmem:[%s1 + $0x20] sm:$0xf]
      %v211 = vld [vmem:[%s1 + $0x24] sm:$0xf]
      %v212 = vld [vmem:[%s1 + $0x28] sm:$0xf]
      %v213 = vld [vmem:[%s1 + $0x2c] sm:$0xf]
      %v214 = vld [vmem:[%s1 + $0x30] sm:$0xf]
      %v215 = vld [vmem:[%s1 + $0x34] sm:$0xf]
      %v216 = vld [vmem:[%s1 + $0x38] sm:$0xf]
      %v217 = vld [vmem:[%s1 + $0x3c] sm:$0xf]
      %v218 = vld [vmem:[%s1 + $0x40] sm:$0xf]
      %v219 = vld [vmem:[%s1 + $0x44] sm:$0xf]
      %v220 = vld [vmem:[%s1 + $0x48] sm:$0xf]
      %v221 = vld [vmem:[%s1 + $0x4c] sm:$0xf]
      %v222 = vld [vmem:[%s1 + $0x50] sm:$0xf]
      %v223 = vld [vmem:[%s1 + $0x54] sm:$0xf]
      %v224 = vld [vmem:[%s1 + $0x58] sm:$0xf]
      %v225 = vld [vmem:[%s1 + $0x5c] sm:$0xf]
      %v226 = vld [vmem:[%s1 + $0x60] sm:$0xf]
      %v227 = vld [vmem:[%s1 + $0x64] sm:$0xf]
      %v228 = vld [vmem:[%s1 + $0x68] sm:$0xf]
      %v229 = vld [vmem:[%s1 + $0x6c] sm:$0xf]
      %v230 = vld [vmem:[%s1 + $0x70] sm:$0xf]
      %v231 = vld [vmem:[%s1 + $0x74] sm:$0xf]
      %v232 = vld [vmem:[%s1 + $0x78] sm:$0xf]
      %v233 = vld [vmem:[%s1 + $0x7c] sm:$0xf]
      %v234 = vld [vmem:[%s1 + $0x80] sm:$0xf]
      %v235 = vld [vmem:[%s1 + $0x84] sm:$0xf]
      %v236 = vld [vmem:[%s1 + $0x88] sm:$0xf]
      %v237 = vld [vmem:[%s1 + $0x8c] sm:$0xf]
      %v238 = vld [vmem:[%s1 + $0x90] sm:$0xf]
      %v239 = vld [vmem:[%s1 + $0x94] sm:$0xf]
      %v240 = vld [vmem:[%s1 + $0x98] sm:$0xf]
      %v241 = vld [vmem:[%s1 + $0x9c] sm:$0xf]
      %v242 = vld [vmem:[%s1 + $0xa0] sm:$0xf]
      %v243 = vld [vmem:[%s1 + $0xa4] sm:$0xf]
      %v244 = vld [vmem:[%s1 + $0xa8] sm:$0xf]
      %v245 = vld [vmem:[%s1 + $0xac] sm:$0xf]
      %v246 = vld [vmem:[%s1 + $0xb0] sm:$0xf]
      %v247 = vld [vmem:[%s1 + $0xb4] sm:$0xf]
      %v248 = vld [vmem:[%s1 + $0xb8] sm:$0xf]
      %v249 = vld [vmem:[%s1 + $0xbc] sm:$0xf]
      %v250 = vld [vmem:[%s1 + $0xc0] sm:$0xf]
      %v251 = vld [vmem:[%s1 + $0xc4] sm:$0xf]
      %v252 = vld [vmem:[%s1 + $0xc8] sm:$0xf]
      %v253 = vld [vmem:[%s1 + $0xcc] sm:$0xf]
      %v254 = vld [vmem:[%s1 + $0xd0] sm:$0xf]
      %v255 = vld [vmem:[%s1 + $0xd4] sm:$0xf]
      %v256 = vld [vmem:[%s1 + $0xd8] sm:$0xf]
      %v257 = vld [vmem:[%s1 + $0xdc] sm:$0xf]
      %v258 = vld [vmem:[%s1 + $0xe0] sm:$0xf]
      %v259 = vld [vmem:[%s1 + $0xe4] sm:$0xf]
      %v260 = vld [vmem:[%s1 + $0xe8] sm:$0xf]
      %v261 = vld [vmem:[%s1 + $0xec] sm:$0xf]
      %v262 = vld [vmem:[%s1 + $0xf0] sm:$0xf]
      %v263 = vld [vmem:[%s1 + $0xf4] sm:$0xf]
      %v264 = vld [vmem:[%s1 + $0xf8] sm:$0xf]
      %v265 = vld [vmem:[%s1 + $0xfc] sm:$0xf]
      %v266 = vld [vmem:[%s2] sm:$0x1]
      %v268 = vlaneseq
      %v269 = vshrl.u32 %v268, 7
      %v270 = vsub.s32 0, %v269
      %v271 = vrot.slane %v266, %v270
      %v297 = vunpack.c.l.b16 %v178
      %v298 = vunpack.c.h.b16 %v178
      %v299 = vunpack.c.l.b16 %v179
      %v300 = vunpack.c.h.b16 %v179
      %v301 = vunpack.c.l.b16 %v180
      %v302 = vunpack.c.h.b16 %v180
      %v303 = vunpack.c.l.b16 %v181
      %v304 = vunpack.c.h.b16 %v181
      %v305 = vunpack.c.l.b16 %v182
      %v306 = vunpack.c.h.b16 %v182
      %v307 = vunpack.c.l.b16 %v183
      %v308 = vunpack.c.h.b16 %v183
      %v309 = vunpack.c.l.b16 %v184
      %v310 = vunpack.c.h.b16 %v184
      %v311 = vunpack.c.l.b16 %v185
      %v312 = vunpack.c.h.b16 %v185
      %v313 = vunpack.c.l.b16 %v186
      %v314 = vunpack.c.h.b16 %v186
      %v315 = vunpack.c.l.b16 %v187
      %v316 = vunpack.c.h.b16 %v187
      %v317 = vunpack.c.l.b16 %v188
      %v318 = vunpack.c.h.b16 %v188
      %v319 = vunpack.c.l.b16 %v189
      %v320 = vunpack.c.h.b16 %v189
      %v321 = vunpack.c.l.b16 %v190
      %v322 = vunpack.c.h.b16 %v190
      %v323 = vunpack.c.l.b16 %v191
      %v324 = vunpack.c.h.b16 %v191
      %v325 = vunpack.c.l.b16 %v192
      %v326 = vunpack.c.h.b16 %v192
      %v327 = vunpack.c.l.b16 %v193
      %v328 = vunpack.c.h.b16 %v193
      %v329 = vunpack.c.l.b16 %v194
      %v330 = vunpack.c.h.b16 %v194
      %v331 = vunpack.c.l.b16 %v195
      %v332 = vunpack.c.h.b16 %v195
      %v333 = vunpack.c.l.b16 %v196
      %v334 = vunpack.c.h.b16 %v196
      %v335 = vunpack.c.l.b16 %v197
      %v336 = vunpack.c.h.b16 %v197
      %v337 = vunpack.c.l.b16 %v198
      %v338 = vunpack.c.h.b16 %v198
      %v339 = vunpack.c.l.b16 %v199
      %v340 = vunpack.c.h.b16 %v199
      %v341 = vunpack.c.l.b16 %v200
      %v342 = vunpack.c.h.b16 %v200
      %v343 = vunpack.c.l.b16 %v201
      %v344 = vunpack.c.h.b16 %v201
      %v345 = vpack.c.b16 %v301, %v297
      %v346 = vpack.c.b16 %v302, %v298
      %v347 = vpack.c.b16 %v303, %v299
      %v348 = vpack.c.b16 %v304, %v300
      %v349 = vpack.c.b16 %v309, %v305
      %v350 = vpack.c.b16 %v310, %v306
      %v351 = vpack.c.b16 %v311, %v307
      %v352 = vpack.c.b16 %v312, %v308
      %v353 = vpack.c.b16 %v317, %v313
      %v354 = vpack.c.b16 %v318, %v314
      %v355 = vpack.c.b16 %v319, %v315
      %v356 = vpack.c.b16 %v320, %v316
      %v357 = vpack.c.b16 %v325, %v321
      %v358 = vpack.c.b16 %v326, %v322
      %v359 = vpack.c.b16 %v327, %v323
      %v360 = vpack.c.b16 %v328, %v324
      %v361 = vpack.c.b16 %v333, %v329
      %v362 = vpack.c.b16 %v334, %v330
      %v363 = vpack.c.b16 %v335, %v331
      %v364 = vpack.c.b16 %v336, %v332
      %v365 = vpack.c.b16 %v341, %v337
      %v366 = vpack.c.b16 %v342, %v338
      %v367 = vpack.c.b16 %v343, %v339
      %v368 = vpack.c.b16 %v344, %v340
      %v457 = vunpack.c.l.b16 %v202
      %v458 = vunpack.c.l.b16 %v203
      %v459 = vunpack.c.l.b16 %v204
      %v460 = vunpack.c.l.b16 %v205
      %v461 = vunpack.c.l.b16 %v206
      %v462 = vunpack.c.l.b16 %v207
      %v463 = vunpack.c.l.b16 %v208
      %v464 = vunpack.c.l.b16 %v209
      %v465 = vunpack.c.l.b16 %v210
      %v466 = vunpack.c.l.b16 %v211
      %v467 = vunpack.c.l.b16 %v212
      %v468 = vunpack.c.l.b16 %v213
      %v469 = vunpack.c.l.b16 %v214
      %v470 = vunpack.c.l.b16 %v215
      %v471 = vunpack.c.l.b16 %v216
      %v472 = vunpack.c.l.b16 %v217
      %v473 = vunpack.c.l.b16 %v218
      %v474 = vunpack.c.l.b16 %v219
      %v475 = vunpack.c.l.b16 %v220
      %v476 = vunpack.c.l.b16 %v221
      %v477 = vunpack.c.l.b16 %v222
      %v478 = vunpack.c.l.b16 %v223
      %v479 = vunpack.c.l.b16 %v224
      %v480 = vunpack.c.l.b16 %v225
      %v481 = vunpack.c.l.b16 %v226
      %v482 = vunpack.c.l.b16 %v227
      %v483 = vunpack.c.l.b16 %v228
      %v484 = vunpack.c.l.b16 %v229
      %v485 = vunpack.c.l.b16 %v230
      %v486 = vunpack.c.l.b16 %v231
      %v487 = vunpack.c.l.b16 %v232
      %v488 = vunpack.c.l.b16 %v233
      %v489 = vunpack.c.l.b16 %v234
      %v490 = vunpack.c.l.b16 %v235
      %v491 = vunpack.c.l.b16 %v236
      %v492 = vunpack.c.l.b16 %v237
      %v493 = vunpack.c.l.b16 %v238
      %v494 = vunpack.c.l.b16 %v239
      %v495 = vunpack.c.l.b16 %v240
      %v496 = vunpack.c.l.b16 %v241
      %v497 = vunpack.c.l.b16 %v242
      %v498 = vunpack.c.l.b16 %v243
      %v499 = vunpack.c.l.b16 %v244
      %v500 = vunpack.c.l.b16 %v245
      %v501 = vunpack.c.l.b16 %v246
      %v502 = vunpack.c.l.b16 %v247
      %v503 = vunpack.c.l.b16 %v248
      %v504 = vunpack.c.l.b16 %v249
      %v505 = vunpack.c.l.b16 %v250
      %v506 = vunpack.c.l.b16 %v251
      %v507 = vunpack.c.l.b16 %v252
      %v508 = vunpack.c.l.b16 %v253
      %v509 = vunpack.c.l.b16 %v254
      %v510 = vunpack.c.l.b16 %v255
      %v511 = vunpack.c.l.b16 %v256
      %v512 = vunpack.c.l.b16 %v257
      %v513 = vunpack.c.l.b16 %v258
      %v514 = vunpack.c.l.b16 %v259
      %v515 = vunpack.c.l.b16 %v260
      %v516 = vunpack.c.l.b16 %v261
      %v517 = vunpack.c.l.b16 %v262
      %v518 = vunpack.c.l.b16 %v263
      %v519 = vunpack.c.l.b16 %v264
      %v520 = vunpack.c.l.b16 %v265
      %v521 = vpack.c.b16 %v458, %v457
      %v522 = vpack.c.b16 %v460, %v459
      %v523 = vpack.c.b16 %v462, %v461
      %v524 = vpack.c.b16 %v464, %v463
      %v525 = vpack.c.b16 %v466, %v465
      %v526 = vpack.c.b16 %v468, %v467
      %v527 = vpack.c.b16 %v470, %v469
      %v528 = vpack.c.b16 %v472, %v471
      %v529 = vpack.c.b16 %v474, %v473
      %v530 = vpack.c.b16 %v476, %v475
      %v531 = vpack.c.b16 %v478, %v477
      %v532 = vpack.c.b16 %v480, %v479
      %v533 = vpack.c.b16 %v482, %v481
      %v534 = vpack.c.b16 %v484, %v483
      %v535 = vpack.c.b16 %v486, %v485
      %v536 = vpack.c.b16 %v488, %v487
      %v537 = vpack.c.b16 %v490, %v489
      %v538 = vpack.c.b16 %v492, %v491
      %v539 = vpack.c.b16 %v494, %v493
      %v540 = vpack.c.b16 %v496, %v495
      %v541 = vpack.c.b16 %v498, %v497
      %v542 = vpack.c.b16 %v500, %v499
      %v543 = vpack.c.b16 %v502, %v501
      %v544 = vpack.c.b16 %v504, %v503
      %v545 = vpack.c.b16 %v506, %v505
      %v546 = vpack.c.b16 %v508, %v507
      %v547 = vpack.c.b16 %v510, %v509
      %v548 = vpack.c.b16 %v512, %v511
      %v549 = vpack.c.b16 %v514, %v513
      %v550 = vpack.c.b16 %v516, %v515
      %v551 = vpack.c.b16 %v518, %v517
      %v552 = vpack.c.b16 %v520, %v519
      %585 = vmatprep.subr.bf16.mxu0 0
      %586 = vmatpush1.bf16.msra.mxu0 %v521
      %587 = vmatprep.subr.bf16.mxu0 0
      %588 = vmatpush1.bf16.msra.mxu0 %v522
      %589 = vmatprep.subr.bf16.mxu0 0
      %590 = vmatpush1.bf16.msra.mxu0 %v523
      %591 = vmatprep.subr.bf16.mxu0 0
      %592 = vmatpush1.bf16.msra.mxu0 %v524
      %593 = vmatprep.subr.bf16.mxu0 0
      %594 = vmatpush1.bf16.msra.mxu0 %v525
      %595 = vmatprep.subr.bf16.mxu0 0
      %596 = vmatpush1.bf16.msra.mxu0 %v526
      %597 = vmatprep.subr.bf16.mxu0 0
      %598 = vmatpush1.bf16.msra.mxu0 %v527
      %599 = vmatprep.subr.bf16.mxu0 0
      %600 = vmatpush1.bf16.msra.mxu0 %v528
      %601 = vmatprep.subr.bf16.mxu0 0
      %602 = vmatpush1.bf16.msra.mxu0 %v529
      %603 = vmatprep.subr.bf16.mxu0 0
      %604 = vmatpush1.bf16.msra.mxu0 %v530
      %605 = vmatprep.subr.bf16.mxu0 0
      %606 = vmatpush1.bf16.msra.mxu0 %v531
      %607 = vmatprep.subr.bf16.mxu0 0
      %608 = vmatpush1.bf16.msra.mxu0 %v532
      %609 = vmatprep.subr.bf16.mxu0 0
      %610 = vmatpush1.bf16.msra.mxu0 %v533
      %611 = vmatprep.subr.bf16.mxu0 0
      %612 = vmatpush1.bf16.msra.mxu0 %v534
      %613 = vmatprep.subr.bf16.mxu0 0
      %614 = vmatpush1.bf16.msra.mxu0 %v535
      %615 = vmatprep.subr.bf16.mxu0 0
      %616 = vmatpush1.bf16.msra.mxu0 %v536
      %617 = vmatprep.mubr.bf16.mxu0 %v346
      %618 = vmatmul.mubr.bf16.gmra.mrb[0].mxu0 %v345
      %v619 = vpop.f32.mrb[0].mxu0
      %v620 = vadd.f32 %v271, %v619
      %v621 = vpop.f32.mrb[0].mxu0
      %v622 = vpop.f32.mrb[0].mxu0
      %v623 = vadd.f32 %v271, %v622
      %v624 = vpop.f32.mrb[0].mxu0
      %625 = vmatprep.mubr.bf16.mxu0 %v350
      %626 = vmatmul.mubr.bf16.gmra.mrb[0].mxu0 %v349
      %v627 = vpop.f32.mrb[0].mxu0
      %v628 = vadd.f32 %v271, %v627
      %v629 = vpop.f32.mrb[0].mxu0
      %v630 = vpop.f32.mrb[0].mxu0
      %v631 = vadd.f32 %v271, %v630
      %v632 = vpop.f32.mrb[0].mxu0
      %633 = vmatprep.mubr.bf16.mxu0 %v354
      %634 = vmatmul.mubr.bf16.gmra.mrb[0].mxu0 %v353
      %v635 = vpop.f32.mrb[0].mxu0
      %v636 = vadd.f32 %v271, %v635
      %v637 = vpop.f32.mrb[0].mxu0
      %v638 = vpop.f32.mrb[0].mxu0
      %v639 = vadd.f32 %v271, %v638
      %v640 = vpop.f32.mrb[0].mxu0
      %641 = vmatprep.mubr.bf16.mxu0 %v358
      %642 = vmatmul.mubr.bf16.gmra.mrb[0].mxu0 %v357
      %v643 = vpop.f32.mrb[0].mxu0
      %v644 = vadd.f32 %v271, %v643
      %v645 = vpop.f32.mrb[0].mxu0
      %v646 = vpop.f32.mrb[0].mxu0
      %v647 = vadd.f32 %v271, %v646
      %v648 = vpop.f32.mrb[0].mxu0
      %649 = vmatprep.mubr.bf16.mxu0 %v362
      %650 = vmatmul.mubr.bf16.gmra.mrb[0].mxu0 %v361
      %v651 = vpop.f32.mrb[0].mxu0
      %v652 = vadd.f32 %v271, %v651
      %v653 = vpop.f32.mrb[0].mxu0
      %v654 = vpop.f32.mrb[0].mxu0
      %v655 = vadd.f32 %v271, %v654
      %v656 = vpop.f32.mrb[0].mxu0
      %657 = vmatprep.mubr.bf16.mxu0 %v366
      %658 = vmatmul.mubr.bf16.gmra.mrb[0].mxu0 %v365
      %v659 = vpop.f32.mrb[0].mxu0
      %v660 = vadd.f32 %v271, %v659
      %v661 = vpop.f32.mrb[0].mxu0
      %v662 = vpop.f32.mrb[0].mxu0
      %v663 = vadd.f32 %v271, %v662
      %v664 = vpop.f32.mrb[0].mxu0
      %665 = vdwg.mxu0
      %666 = vmatprep.subr.bf16.mxu0 0
      %667 = vmatpush1.bf16.msra.mxu0 %v537
      %668 = vmatprep.subr.bf16.mxu0 0
      %669 = vmatpush1.bf16.msra.mxu0 %v538
      %670 = vmatprep.subr.bf16.mxu0 0
      %671 = vmatpush1.bf16.msra.mxu0 %v539
      %672 = vmatprep.subr.bf16.mxu0 0
      %673 = vmatpush1.bf16.msra.mxu0 %v540
      %674 = vmatprep.subr.bf16.mxu0 0
      %675 = vmatpush1.bf16.msra.mxu0 %v541
      %676 = vmatprep.subr.bf16.mxu0 0
      %677 = vmatpush1.bf16.msra.mxu0 %v542
      %678 = vmatprep.subr.bf16.mxu0 0
      %679 = vmatpush1.bf16.msra.mxu0 %v543
      %680 = vmatprep.subr.bf16.mxu0 0
      %681 = vmatpush1.bf16.msra.mxu0 %v544
      %682 = vmatprep.subr.bf16.mxu0 0
      %683 = vmatpush1.bf16.msra.mxu0 %v545
      %684 = vmatprep.subr.bf16.mxu0 0
      %685 = vmatpush1.bf16.msra.mxu0 %v546
      %686 = vmatprep.subr.bf16.mxu0 0
      %687 = vmatpush1.bf16.msra.mxu0 %v547
      %688 = vmatprep.subr.bf16.mxu0 0
      %689 = vmatpush1.bf16.msra.mxu0 %v548
      %690 = vmatprep.subr.bf16.mxu0 0
      %691 = vmatpush1.bf16.msra.mxu0 %v549
      %692 = vmatprep.subr.bf16.mxu0 0
      %693 = vmatpush1.bf16.msra.mxu0 %v550
      %694 = vmatprep.subr.bf16.mxu0 0
      %695 = vmatpush1.bf16.msra.mxu0 %v551
      %696 = vmatprep.subr.bf16.mxu0 0
      %697 = vmatpush1.bf16.msra.mxu0 %v552
      %698 = vmatprep.mubr.bf16.mxu0 %v348
      %699 = vmatmul.mubr.bf16.gmra.mrb[0].mxu0 %v347
      %v700 = vpop.f32.mrb[0].mxu0
      %v701 = vadd.f32 %v620, %v700
      %v702 = vpop.f32.mrb[0].mxu0
      %v703 = vpop.f32.mrb[0].mxu0
      %v704 = vadd.f32 %v623, %v703
      %v705 = vpop.f32.mrb[0].mxu0
      %706 = vmatprep.mubr.bf16.mxu0 %v352
      %707 = vmatmul.mubr.bf16.gmra.mrb[0].mxu0 %v351
      %v708 = vpop.f32.mrb[0].mxu0
      %v709 = vadd.f32 %v628, %v708
      %v710 = vpop.f32.mrb[0].mxu0
      %v711 = vpop.f32.mrb[0].mxu0
      %v712 = vadd.f32 %v631, %v711
      %v713 = vpop.f32.mrb[0].mxu0
      %714 = vmatprep.mubr.bf16.mxu0 %v356
      %715 = vmatmul.mubr.bf16.gmra.mrb[0].mxu0 %v355
      %v716 = vpop.f32.mrb[0].mxu0
      %v717 = vadd.f32 %v636, %v716
      %v718 = vpop.f32.mrb[0].mxu0
      %v719 = vpop.f32.mrb[0].mxu0
      %v720 = vadd.f32 %v639, %v719
      %v721 = vpop.f32.mrb[0].mxu0
      %722 = vmatprep.mubr.bf16.mxu0 %v360
      %723 = vmatmul.mubr.bf16.gmra.mrb[0].mxu0 %v359
      %v724 = vpop.f32.mrb[0].mxu0
      %v725 = vadd.f32 %v644, %v724
      %v726 = vpop.f32.mrb[0].mxu0
      %v727 = vpop.f32.mrb[0].mxu0
      %v728 = vadd.f32 %v647, %v727
      %v729 = vpop.f32.mrb[0].mxu0
      %730 = vmatprep.mubr.bf16.mxu0 %v364
      %731 = vmatmul.mubr.bf16.gmra.mrb[0].mxu0 %v363
      %v732 = vpop.f32.mrb[0].mxu0
      %v733 = vadd.f32 %v652, %v732
      %v734 = vpop.f32.mrb[0].mxu0
      %v735 = vpop.f32.mrb[0].mxu0
      %v736 = vadd.f32 %v655, %v735
      %v737 = vpop.f32.mrb[0].mxu0
      %738 = vmatprep.mubr.bf16.mxu0 %v368
      %739 = vmatmul.mubr.bf16.gmra.mrb[0].mxu0 %v367
      %v740 = vpop.f32.mrb[0].mxu0
      %v741 = vadd.f32 %v660, %v740
      %v742 = vpop.f32.mrb[0].mxu0
      %v743 = vpop.f32.mrb[0].mxu0
      %v744 = vadd.f32 %v663, %v743
      %v745 = vpop.f32.mrb[0].mxu0
      %746 = vdwg.mxu0
      %vm747 = vcmp.ge.f32.partialorder %v701, 0.0
      %vm748 = vcmp.ge.f32.partialorder %v704, 0.0
      %vm749 = vcmp.ge.f32.partialorder %v709, 0.0
      %vm750 = vcmp.ge.f32.partialorder %v712, 0.0
      %vm751 = vcmp.ge.f32.partialorder %v717, 0.0
      %vm752 = vcmp.ge.f32.partialorder %v720, 0.0
      %vm753 = vcmp.ge.f32.partialorder %v725, 0.0
      %vm754 = vcmp.ge.f32.partialorder %v728, 0.0
      %vm755 = vcmp.ge.f32.partialorder %v733, 0.0
      %vm756 = vcmp.ge.f32.partialorder %v736, 0.0
      %vm757 = vcmp.ge.f32.partialorder %v741, 0.0
      %vm758 = vcmp.ge.f32.partialorder %v744, 0.0
      %v759 = vmul.f32 %v701, 0.01
      %v760 = vmul.f32 %v704, 0.01
      %v761 = vmul.f32 %v709, 0.01
      %v762 = vmul.f32 %v712, 0.01
      %v763 = vmul.f32 %v717, 0.01
      %v764 = vmul.f32 %v720, 0.01
      %v765 = vmul.f32 %v725, 0.01
      %v766 = vmul.f32 %v728, 0.01
      %v767 = vmul.f32 %v733, 0.01
      %v768 = vmul.f32 %v736, 0.01
      %v769 = vmul.f32 %v741, 0.01
      %v770 = vmul.f32 %v744, 0.01
      %v771 = vsel %vm747, %v701, %v759
      %v772 = vsel %vm748, %v704, %v760
      %v773 = vsel %vm749, %v709, %v761
      %v774 = vsel %vm750, %v712, %v762
      %v775 = vsel %vm751, %v717, %v763
      %v776 = vsel %vm752, %v720, %v764
      %v777 = vsel %vm753, %v725, %v765
      %v778 = vsel %vm754, %v728, %v766
      %v779 = vsel %vm755, %v733, %v767
      %v780 = vsel %vm756, %v736, %v768
      %v781 = vsel %vm757, %v741, %v769
      %v782 = vsel %vm758, %v744, %v770
      %v783 = vpack.c.bf16 %v772, %v771
      %v784 = vpack.c.bf16 %v774, %v773
      %v785 = vpack.c.bf16 %v776, %v775
      %v786 = vpack.c.bf16 %v778, %v777
      %v787 = vpack.c.bf16 %v780, %v779
      %v788 = vpack.c.bf16 %v782, %v781
      %v795 = vunpack.c.l.b16 %v783
      %v796 = vunpack.c.h.b16 %v783
      %v797 = vunpack.c.l.b16 %v784
      %v798 = vunpack.c.h.b16 %v784
      %v799 = vunpack.c.l.b16 %v785
      %v800 = vunpack.c.h.b16 %v785
      %v801 = vunpack.c.l.b16 %v786
      %v802 = vunpack.c.h.b16 %v786
      %v803 = vunpack.c.l.b16 %v787
      %v804 = vunpack.c.h.b16 %v787
      %v805 = vunpack.c.l.b16 %v788
      %v806 = vunpack.c.h.b16 %v788
      %v807 = vpack.c.b16 %v795, %v795
      %v808 = vpack.c.b16 %v796, %v796
      %v809 = vpack.c.b16 %v797, %v797
      %v810 = vpack.c.b16 %v798, %v798
      %v811 = vpack.c.b16 %v799, %v799
      %v812 = vpack.c.b16 %v800, %v800
      %v813 = vpack.c.b16 %v801, %v801
      %v814 = vpack.c.b16 %v802, %v802
      %v815 = vpack.c.b16 %v803, %v803
      %v816 = vpack.c.b16 %v804, %v804
      %v817 = vpack.c.b16 %v805, %v805
      %v818 = vpack.c.b16 %v806, %v806
      %vm831 = vcmask 519168
      %832 = vst.msk [vmem:[%s175] sm:$0xf] %vm831, %v807
      %833 = vst.msk [vmem:[%s175 + $0x4] sm:$0xf] %vm831, %v808
      %834 = vst.msk [vmem:[%s175 + $0x8] sm:$0xf] %vm831, %v809
      %835 = vst.msk [vmem:[%s175 + $0xc] sm:$0xf] %vm831, %v810
      %836 = vst.msk [vmem:[%s175 + $0x10] sm:$0xf] %vm831, %v811
      %837 = vst.msk [vmem:[%s175 + $0x14] sm:$0xf] %vm831, %v812
      %838 = vst.msk [vmem:[%s175 + $0x18] sm:$0xf] %vm831, %v813
      %839 = vst.msk [vmem:[%s175 + $0x1c] sm:$0xf] %vm831, %v814
      %840 = vst.msk [vmem:[%s175 + $0x20] sm:$0xf] %vm831, %v815
      %841 = vst.msk [vmem:[%s175 + $0x24] sm:$0xf] %vm831, %v816
      %842 = vst.msk [vmem:[%s175 + $0x28] sm:$0xf] %vm831, %v817
      %843 = vst.msk [vmem:[%s175 + $0x2c] sm:$0xf] %vm831, %v818
      %s844 = smul.u32 12, %s14
      %p845 = scmp.lt.s32.totalorder %s844, 23
      %s846 = scalar_select %p845, %s844, 23
      %s847 = smul.addr %s846, 4
      %s848 = scalar_lea.vmem %s3, %s847
      // Predicated region
      $region33: #{stargan_discriminator.11} parent=31 // pred_check
        %p849 = pneg %p100
      $region34: #{stargan_discriminator.11} parent=31 // pred_check_branch
        %851 = sbr.rel (%p849) target = $region36
      $region35: #{stargan_discriminator.11} parent=31 // pred_region
        %s852 = smul.u32 12, %s14
      $region36: #{stargan_discriminator.11} parent=31 // pred_fallthru
        _
    $region32: #{stargan_discriminator.11} parent=5 // pred_fallthru
      _
    %p853 = scmp.le.s32.totalorder 2, %s9
    // Predicated region
    $region37: #{stargan_discriminator.11} parent=5 // pred_check
      %p854 = pneg %p853
    $region38: #{stargan_discriminator.11} parent=5 // pred_check_branch
      %856 = sbr.rel (%p854) target = $region40
    $region39: #{stargan_discriminator.11} parent=5 // pred_region
      %s857 = ssub.s32 %s9, 2
      // Predicated region
      $region41: #{stargan_discriminator.11} parent=39 // pred_check
        %p858 = pneg %p106
      $region42: #{stargan_discriminator.11} parent=39 // pred_check_branch
        %860 = sbr.rel (%p858) target = $region44
      $region43: #{stargan_discriminator.11} parent=39 // pred_region
        %s861 = smul.u32 12, %s15
        %p862 = scmp.lt.s32.totalorder %s861, 23
        %s863 = scalar_select %p862, %s861, 23
        %s864 = smul.addr %s863, 4
        %s865 = scalar_lea.vmem %s3, %s864
      $region44: #{stargan_discriminator.11} parent=39 // pred_fallthru
        _
    $region40: #{stargan_discriminator.11} parent=5 // pred_fallthru
      _
  $region6: #{stargan_discriminator.11} parent=0 // loop_footer
    %s13 = sadd.s32 1, %s9
  $region7: #{stargan_discriminator.11} parent=0 // loop_footer_branch
    %8 = sbr.rel target = $region3
  $region8: #{stargan_discriminator.11} parent=0 // loop_exit
    _

// kernel: stargan_discriminator.12
$region0: #{stargan_discriminator.12}
  #allocation0 [shape = 'u32[]', space=smem, size = 0x4, offset = 0x4, fixed_abs, tag = 'smem constant byte address 0x4 - core index']
  #allocation1 [shape = 'u32[144,128]{1,0:T(1,128)}', space=vmem, size = 0x12000, scoped, tag = 'internal scratch']
  %s0 = inlined_call_operand.vmem [shape: bf16[48,1024], index: 0, kind: input, shape index: {}]
  %s1 = inlined_call_operand.vmem [shape: bf16[1024,128], index: 1, kind: input, shape index: {}]
  %s2 = inlined_call_operand.vmem [shape: f32[1,128], index: 2, kind: input, shape index: {}]
  %s3 = inlined_call_operand.vmem [shape: bf16[48,128], index: 3, kind: output, shape index: {}]
  %s4 = sld [smem:[#allocation0]]
  $region22: #{stargan_discriminator.12} parent=0
    _
  %s6 = ssub.s32 1, %s4
  %s7 = scalar_select 0, %s6, %s4
  // Predicated region
  $region2: #{stargan_discriminator.12} parent=0 // pred_check
    _
  $region3: #{stargan_discriminator.12} parent=0 // pred_check_branch
    %9 = sbr.rel (0) target = $region5
  $region4: #{stargan_discriminator.12} parent=0 // pred_region
    _
  $region5: #{stargan_discriminator.12} parent=0 // pred_fallthru
    _
  // Predicated region
  $region6: #{stargan_discriminator.12} parent=0 // pred_check
    _
  $region7: #{stargan_discriminator.12} parent=0 // pred_check_branch
    %11 = sbr.rel (0) target = $region9
  $region8: #{stargan_discriminator.12} parent=0 // pred_region
    _
  $region9: #{stargan_discriminator.12} parent=0 // pred_fallthru
    _
  // Predicated region
  $region10: #{stargan_discriminator.12} parent=0 // pred_check
    _
  $region11: #{stargan_discriminator.12} parent=0 // pred_check_branch
    %13 = sbr.rel (0) target = $region13
  $region12: #{stargan_discriminator.12} parent=0 // pred_region
    _
  $region13: #{stargan_discriminator.12} parent=0 // pred_fallthru
    _
  %v15 = vld [vmem:[%s0] sm:$0xff]
  %v16 = vld [vmem:[%s0 + $0x8] sm:$0xff]
  %v17 = vld [vmem:[%s0 + $0x10] sm:$0xff]
  %v18 = vld [vmem:[%s0 + $0x18] sm:$0xff]
  %v19 = vld [vmem:[%s0 + $0x20] sm:$0xff]
  %v20 = vld [vmem:[%s0 + $0x28] sm:$0xff]
  %v21 = vld [vmem:[%s0 + $0x30] sm:$0xff]
  %v22 = vld [vmem:[%s0 + $0x38] sm:$0xff]
  %v23 = vld [vmem:[%s0 + $0x40] sm:$0xff]
  %v24 = vld [vmem:[%s0 + $0x48] sm:$0xff]
  %v25 = vld [vmem:[%s0 + $0x50] sm:$0xff]
  %v26 = vld [vmem:[%s0 + $0x58] sm:$0xff]
  %v27 = vld [vmem:[%s0 + $0x60] sm:$0xff]
  %v28 = vld [vmem:[%s0 + $0x68] sm:$0xff]
  %v29 = vld [vmem:[%s0 + $0x70] sm:$0xff]
  %v30 = vld [vmem:[%s0 + $0x78] sm:$0xff]
  %v31 = vld [vmem:[%s0 + $0x80] sm:$0xff]
  %v32 = vld [vmem:[%s0 + $0x88] sm:$0xff]
  %v33 = vld [vmem:[%s0 + $0x90] sm:$0xff]
  %v34 = vld [vmem:[%s0 + $0x98] sm:$0xff]
  %v35 = vld [vmem:[%s0 + $0xa0] sm:$0xff]
  %v36 = vld [vmem:[%s0 + $0xa8] sm:$0xff]
  %v37 = vld [vmem:[%s0 + $0xb0] sm:$0xff]
  %v38 = vld [vmem:[%s0 + $0xb8] sm:$0xff]
  %v39 = vld [vmem:[%s1] sm:$0xf]
  %v40 = vld [vmem:[%s1 + $0x4] sm:$0xf]
  %v41 = vld [vmem:[%s1 + $0x8] sm:$0xf]
  %v42 = vld [vmem:[%s1 + $0xc] sm:$0xf]
  %v43 = vld [vmem:[%s1 + $0x10] sm:$0xf]
  %v44 = vld [vmem:[%s1 + $0x14] sm:$0xf]
  %v45 = vld [vmem:[%s1 + $0x18] sm:$0xf]
  %v46 = vld [vmem:[%s1 + $0x1c] sm:$0xf]
  %v47 = vld [vmem:[%s1 + $0x20] sm:$0xf]
  %v48 = vld [vmem:[%s1 + $0x24] sm:$0xf]
  %v49 = vld [vmem:[%s1 + $0x28] sm:$0xf]
  %v50 = vld [vmem:[%s1 + $0x2c] sm:$0xf]
  %v51 = vld [vmem:[%s1 + $0x30] sm:$0xf]
  %v52 = vld [vmem:[%s1 + $0x34] sm:$0xf]
  %v53 = vld [vmem:[%s1 + $0x38] sm:$0xf]
  %v54 = vld [vmem:[%s1 + $0x3c] sm:$0xf]
  %v55 = vld [vmem:[%s1 + $0x40] sm:$0xf]
  %v56 = vld [vmem:[%s1 + $0x44] sm:$0xf]
  %v57 = vld [vmem:[%s1 + $0x48] sm:$0xf]
  %v58 = vld [vmem:[%s1 + $0x4c] sm:$0xf]
  %v59 = vld [vmem:[%s1 + $0x50] sm:$0xf]
  %v60 = vld [vmem:[%s1 + $0x54] sm:$0xf]
  %v61 = vld [vmem:[%s1 + $0x58] sm:$0xf]
  %v62 = vld [vmem:[%s1 + $0x5c] sm:$0xf]
  %v63 = vld [vmem:[%s1 + $0x60] sm:$0xf]
  %v64 = vld [vmem:[%s1 + $0x64] sm:$0xf]
  %v65 = vld [vmem:[%s1 + $0x68] sm:$0xf]
  %v66 = vld [vmem:[%s1 + $0x6c] sm:$0xf]
  %v67 = vld [vmem:[%s1 + $0x70] sm:$0xf]
  %v68 = vld [vmem:[%s1 + $0x74] sm:$0xf]
  %v69 = vld [vmem:[%s1 + $0x78] sm:$0xf]
  %v70 = vld [vmem:[%s1 + $0x7c] sm:$0xf]
  %v71 = vld [vmem:[%s1 + $0x80] sm:$0xf]
  %v72 = vld [vmem:[%s1 + $0x84] sm:$0xf]
  %v73 = vld [vmem:[%s1 + $0x88] sm:$0xf]
  %v74 = vld [vmem:[%s1 + $0x8c] sm:$0xf]
  %v75 = vld [vmem:[%s1 + $0x90] sm:$0xf]
  %v76 = vld [vmem:[%s1 + $0x94] sm:$0xf]
  %v77 = vld [vmem:[%s1 + $0x98] sm:$0xf]
  %v78 = vld [vmem:[%s1 + $0x9c] sm:$0xf]
  %v79 = vld [vmem:[%s1 + $0xa0] sm:$0xf]
  %v80 = vld [vmem:[%s1 + $0xa4] sm:$0xf]
  %v81 = vld [vmem:[%s1 + $0xa8] sm:$0xf]
  %v82 = vld [vmem:[%s1 + $0xac] sm:$0xf]
  %v83 = vld [vmem:[%s1 + $0xb0] sm:$0xf]
  %v84 = vld [vmem:[%s1 + $0xb4] sm:$0xf]
  %v85 = vld [vmem:[%s1 + $0xb8] sm:$0xf]
  %v86 = vld [vmem:[%s1 + $0xbc] sm:$0xf]
  %v87 = vld [vmem:[%s1 + $0xc0] sm:$0xf]
  %v88 = vld [vmem:[%s1 + $0xc4] sm:$0xf]
  %v89 = vld [vmem:[%s1 + $0xc8] sm:$0xf]
  %v90 = vld [vmem:[%s1 + $0xcc] sm:$0xf]
  %v91 = vld [vmem:[%s1 + $0xd0] sm:$0xf]
  %v92 = vld [vmem:[%s1 + $0xd4] sm:$0xf]
  %v93 = vld [vmem:[%s1 + $0xd8] sm:$0xf]
  %v94 = vld [vmem:[%s1 + $0xdc] sm:$0xf]
  %v95 = vld [vmem:[%s1 + $0xe0] sm:$0xf]
  %v96 = vld [vmem:[%s1 + $0xe4] sm:$0xf]
  %v97 = vld [vmem:[%s1 + $0xe8] sm:$0xf]
  %v98 = vld [vmem:[%s1 + $0xec] sm:$0xf]
  %v99 = vld [vmem:[%s1 + $0xf0] sm:$0xf]
  %v100 = vld [vmem:[%s1 + $0xf4] sm:$0xf]
  %v101 = vld [vmem:[%s1 + $0xf8] sm:$0xf]
  %v102 = vld [vmem:[%s1 + $0xfc] sm:$0xf]
  %v103 = vld [vmem:[%s1 + $0x100] sm:$0xf]
  %v104 = vld [vmem:[%s1 + $0x104] sm:$0xf]
  %v105 = vld [vmem:[%s1 + $0x108] sm:$0xf]
  %v106 = vld [vmem:[%s1 + $0x10c] sm:$0xf]
  %v107 = vld [vmem:[%s1 + $0x110] sm:$0xf]
  %v108 = vld [vmem:[%s1 + $0x114] sm:$0xf]
  %v109 = vld [vmem:[%s1 + $0x118] sm:$0xf]
  %v110 = vld [vmem:[%s1 + $0x11c] sm:$0xf]
  %v111 = vld [vmem:[%s1 + $0x120] sm:$0xf]
  %v112 = vld [vmem:[%s1 + $0x124] sm:$0xf]
  %v113 = vld [vmem:[%s1 + $0x128] sm:$0xf]
  %v114 = vld [vmem:[%s1 + $0x12c] sm:$0xf]
  %v115 = vld [vmem:[%s1 + $0x130] sm:$0xf]
  %v116 = vld [vmem:[%s1 + $0x134] sm:$0xf]
  %v117 = vld [vmem:[%s1 + $0x138] sm:$0xf]
  %v118 = vld [vmem:[%s1 + $0x13c] sm:$0xf]
  %v119 = vld [vmem:[%s1 + $0x140] sm:$0xf]
  %v120 = vld [vmem:[%s1 + $0x144] sm:$0xf]
  %v121 = vld [vmem:[%s1 + $0x148] sm:$0xf]
  %v122 = vld [vmem:[%s1 + $0x14c] sm:$0xf]
  %v123 = vld [vmem:[%s1 + $0x150] sm:$0xf]
  %v124 = vld [vmem:[%s1 + $0x154] sm:$0xf]
  %v125 = vld [vmem:[%s1 + $0x158] sm:$0xf]
  %v126 = vld [vmem:[%s1 + $0x15c] sm:$0xf]
  %v127 = vld [vmem:[%s1 + $0x160] sm:$0xf]
  %v128 = vld [vmem:[%s1 + $0x164] sm:$0xf]
  %v129 = vld [vmem:[%s1 + $0x168] sm:$0xf]
  %v130 = vld [vmem:[%s1 + $0x16c] sm:$0xf]
  %v131 = vld [vmem:[%s1 + $0x170] sm:$0xf]
  %v132 = vld [vmem:[%s1 + $0x174] sm:$0xf]
  %v133 = vld [vmem:[%s1 + $0x178] sm:$0xf]
  %v134 = vld [vmem:[%s1 + $0x17c] sm:$0xf]
  %v135 = vld [vmem:[%s1 + $0x180] sm:$0xf]
  %v136 = vld [vmem:[%s1 + $0x184] sm:$0xf]
  %v137 = vld [vmem:[%s1 + $0x188] sm:$0xf]
  %v138 = vld [vmem:[%s1 + $0x18c] sm:$0xf]
  %v139 = vld [vmem:[%s1 + $0x190] sm:$0xf]
  %v140 = vld [vmem:[%s1 + $0x194] sm:$0xf]
  %v141 = vld [vmem:[%s1 + $0x198] sm:$0xf]
  %v142 = vld [vmem:[%s1 + $0x19c] sm:$0xf]
  %v143 = vld [vmem:[%s1 + $0x1a0] sm:$0xf]
  %v144 = vld [vmem:[%s1 + $0x1a4] sm:$0xf]
  %v145 = vld [vmem:[%s1 + $0x1a8] sm:$0xf]
  %v146 = vld [vmem:[%s1 + $0x1ac] sm:$0xf]
  %v147 = vld [vmem:[%s1 + $0x1b0] sm:$0xf]
  %v148 = vld [vmem:[%s1 + $0x1b4] sm:$0xf]
  %v149 = vld [vmem:[%s1 + $0x1b8] sm:$0xf]
  %v150 = vld [vmem:[%s1 + $0x1bc] sm:$0xf]
  %v151 = vld [vmem:[%s1 + $0x1c0] sm:$0xf]
  %v152 = vld [vmem:[%s1 + $0x1c4] sm:$0xf]
  %v153 = vld [vmem:[%s1 + $0x1c8] sm:$0xf]
  %v154 = vld [vmem:[%s1 + $0x1cc] sm:$0xf]
  %v155 = vld [vmem:[%s1 + $0x1d0] sm:$0xf]
  %v156 = vld [vmem:[%s1 + $0x1d4] sm:$0xf]
  %v157 = vld [vmem:[%s1 + $0x1d8] sm:$0xf]
  %v158 = vld [vmem:[%s1 + $0x1dc] sm:$0xf]
  %v159 = vld [vmem:[%s1 + $0x1e0] sm:$0xf]
  %v160 = vld [vmem:[%s1 + $0x1e4] sm:$0xf]
  %v161 = vld [vmem:[%s1 + $0x1e8] sm:$0xf]
  %v162 = vld [vmem:[%s1 + $0x1ec] sm:$0xf]
  %v163 = vld [vmem:[%s1 + $0x1f0] sm:$0xf]
  %v164 = vld [vmem:[%s1 + $0x1f4] sm:$0xf]
  %v165 = vld [vmem:[%s1 + $0x1f8] sm:$0xf]
  %v166 = vld [vmem:[%s1 + $0x1fc] sm:$0xf]
  %v167 = vld [vmem:[%s2] sm:$0x1]
  %v169 = vlaneseq
  %v170 = vshrl.u32 %v169, 7
  %v171 = vsub.s32 0, %v170
  %v172 = vrot.slane %v167, %v171
  %v198 = vunpack.c.l.b16 %v15
  %v199 = vunpack.c.h.b16 %v15
  %v200 = vunpack.c.l.b16 %v16
  %v201 = vunpack.c.h.b16 %v16
  %v202 = vunpack.c.l.b16 %v17
  %v203 = vunpack.c.h.b16 %v17
  %v204 = vunpack.c.l.b16 %v18
  %v205 = vunpack.c.h.b16 %v18
  %v206 = vunpack.c.l.b16 %v19
  %v207 = vunpack.c.h.b16 %v19
  %v208 = vunpack.c.l.b16 %v20
  %v209 = vunpack.c.h.b16 %v20
  %v210 = vunpack.c.l.b16 %v21
  %v211 = vunpack.c.h.b16 %v21
  %v212 = vunpack.c.l.b16 %v22
  %v213 = vunpack.c.h.b16 %v22
  %v214 = vunpack.c.l.b16 %v23
  %v215 = vunpack.c.h.b16 %v23
  %v216 = vunpack.c.l.b16 %v24
  %v217 = vunpack.c.h.b16 %v24
  %v218 = vunpack.c.l.b16 %v25
  %v219 = vunpack.c.h.b16 %v25
  %v220 = vunpack.c.l.b16 %v26
  %v221 = vunpack.c.h.b16 %v26
  %v222 = vunpack.c.l.b16 %v27
  %v223 = vunpack.c.h.b16 %v27
  %v224 = vunpack.c.l.b16 %v28
  %v225 = vunpack.c.h.b16 %v28
  %v226 = vunpack.c.l.b16 %v29
  %v227 = vunpack.c.h.b16 %v29
  %v228 = vunpack.c.l.b16 %v30
  %v229 = vunpack.c.h.b16 %v30
  %v230 = vunpack.c.l.b16 %v31
  %v231 = vunpack.c.h.b16 %v31
  %v232 = vunpack.c.l.b16 %v32
  %v233 = vunpack.c.h.b16 %v32
  %v234 = vunpack.c.l.b16 %v33
  %v235 = vunpack.c.h.b16 %v33
  %v236 = vunpack.c.l.b16 %v34
  %v237 = vunpack.c.h.b16 %v34
  %v238 = vunpack.c.l.b16 %v35
  %v239 = vunpack.c.h.b16 %v35
  %v240 = vunpack.c.l.b16 %v36
  %v241 = vunpack.c.h.b16 %v36
  %v242 = vunpack.c.l.b16 %v37
  %v243 = vunpack.c.h.b16 %v37
  %v244 = vunpack.c.l.b16 %v38
  %v245 = vunpack.c.h.b16 %v38
  %v246 = vpack.c.b16 %v206, %v198
  %v247 = vpack.c.b16 %v207, %v199
  %v248 = vpack.c.b16 %v208, %v200
  %v249 = vpack.c.b16 %v209, %v201
  %v250 = vpack.c.b16 %v210, %v202
  %v251 = vpack.c.b16 %v211, %v203
  %v252 = vpack.c.b16 %v212, %v204
  %v253 = vpack.c.b16 %v213, %v205
  %v254 = vpack.c.b16 %v222, %v214
  %v255 = vpack.c.b16 %v223, %v215
  %v256 = vpack.c.b16 %v224, %v216
  %v257 = vpack.c.b16 %v225, %v217
  %v258 = vpack.c.b16 %v226, %v218
  %v259 = vpack.c.b16 %v227, %v219
  %v260 = vpack.c.b16 %v228, %v220
  %v261 = vpack.c.b16 %v229, %v221
  %v262 = vpack.c.b16 %v238, %v230
  %v263 = vpack.c.b16 %v239, %v231
  %v264 = vpack.c.b16 %v240, %v232
  %v265 = vpack.c.b16 %v241, %v233
  %v266 = vpack.c.b16 %v242, %v234
  %v267 = vpack.c.b16 %v243, %v235
  %v268 = vpack.c.b16 %v244, %v236
  %v269 = vpack.c.b16 %v245, %v237
  %v422 = vunpack.c.l.b16 %v39
  %v423 = vunpack.c.l.b16 %v40
  %v424 = vunpack.c.l.b16 %v41
  %v425 = vunpack.c.l.b16 %v42
  %v426 = vunpack.c.l.b16 %v43
  %v427 = vunpack.c.l.b16 %v44
  %v428 = vunpack.c.l.b16 %v45
  %v429 = vunpack.c.l.b16 %v46
  %v430 = vunpack.c.l.b16 %v47
  %v431 = vunpack.c.l.b16 %v48
  %v432 = vunpack.c.l.b16 %v49
  %v433 = vunpack.c.l.b16 %v50
  %v434 = vunpack.c.l.b16 %v51
  %v435 = vunpack.c.l.b16 %v52
  %v436 = vunpack.c.l.b16 %v53
  %v437 = vunpack.c.l.b16 %v54
  %v438 = vunpack.c.l.b16 %v55
  %v439 = vunpack.c.l.b16 %v56
  %v440 = vunpack.c.l.b16 %v57
  %v441 = vunpack.c.l.b16 %v58
  %v442 = vunpack.c.l.b16 %v59
  %v443 = vunpack.c.l.b16 %v60
  %v444 = vunpack.c.l.b16 %v61
  %v445 = vunpack.c.l.b16 %v62
  %v446 = vunpack.c.l.b16 %v63
  %v447 = vunpack.c.l.b16 %v64
  %v448 = vunpack.c.l.b16 %v65
  %v449 = vunpack.c.l.b16 %v66
  %v450 = vunpack.c.l.b16 %v67
  %v451 = vunpack.c.l.b16 %v68
  %v452 = vunpack.c.l.b16 %v69
  %v453 = vunpack.c.l.b16 %v70
  %v454 = vunpack.c.l.b16 %v71
  %v455 = vunpack.c.l.b16 %v72
  %v456 = vunpack.c.l.b16 %v73
  %v457 = vunpack.c.l.b16 %v74
  %v458 = vunpack.c.l.b16 %v75
  %v459 = vunpack.c.l.b16 %v76
  %v460 = vunpack.c.l.b16 %v77
  %v461 = vunpack.c.l.b16 %v78
  %v462 = vunpack.c.l.b16 %v79
  %v463 = vunpack.c.l.b16 %v80
  %v464 = vunpack.c.l.b16 %v81
  %v465 = vunpack.c.l.b16 %v82
  %v466 = vunpack.c.l.b16 %v83
  %v467 = vunpack.c.l.b16 %v84
  %v468 = vunpack.c.l.b16 %v85
  %v469 = vunpack.c.l.b16 %v86
  %v470 = vunpack.c.l.b16 %v87
  %v471 = vunpack.c.l.b16 %v88
  %v472 = vunpack.c.l.b16 %v89
  %v473 = vunpack.c.l.b16 %v90
  %v474 = vunpack.c.l.b16 %v91
  %v475 = vunpack.c.l.b16 %v92
  %v476 = vunpack.c.l.b16 %v93
  %v477 = vunpack.c.l.b16 %v94
  %v478 = vunpack.c.l.b16 %v95
  %v479 = vunpack.c.l.b16 %v96
  %v480 = vunpack.c.l.b16 %v97
  %v481 = vunpack.c.l.b16 %v98
  %v482 = vunpack.c.l.b16 %v99
  %v483 = vunpack.c.l.b16 %v100
  %v484 = vunpack.c.l.b16 %v101
  %v485 = vunpack.c.l.b16 %v102
  %v486 = vunpack.c.l.b16 %v103
  %v487 = vunpack.c.l.b16 %v104
  %v488 = vunpack.c.l.b16 %v105
  %v489 = vunpack.c.l.b16 %v106
  %v490 = vunpack.c.l.b16 %v107
  %v491 = vunpack.c.l.b16 %v108
  %v492 = vunpack.c.l.b16 %v109
  %v493 = vunpack.c.l.b16 %v110
  %v494 = vunpack.c.l.b16 %v111
  %v495 = vunpack.c.l.b16 %v112
  %v496 = vunpack.c.l.b16 %v113
  %v497 = vunpack.c.l.b16 %v114
  %v498 = vunpack.c.l.b16 %v115
  %v499 = vunpack.c.l.b16 %v116
  %v500 = vunpack.c.l.b16 %v117
  %v501 = vunpack.c.l.b16 %v118
  %v502 = vunpack.c.l.b16 %v119
  %v503 = vunpack.c.l.b16 %v120
  %v504 = vunpack.c.l.b16 %v121
  %v505 = vunpack.c.l.b16 %v122
  %v506 = vunpack.c.l.b16 %v123
  %v507 = vunpack.c.l.b16 %v124
  %v508 = vunpack.c.l.b16 %v125
  %v509 = vunpack.c.l.b16 %v126
  %v510 = vunpack.c.l.b16 %v127
  %v511 = vunpack.c.l.b16 %v128
  %v512 = vunpack.c.l.b16 %v129
  %v513 = vunpack.c.l.b16 %v130
  %v514 = vunpack.c.l.b16 %v131
  %v515 = vunpack.c.l.b16 %v132
  %v516 = vunpack.c.l.b16 %v133
  %v517 = vunpack.c.l.b16 %v134
  %v518 = vunpack.c.l.b16 %v135
  %v519 = vunpack.c.l.b16 %v136
  %v520 = vunpack.c.l.b16 %v137
  %v521 = vunpack.c.l.b16 %v138
  %v522 = vunpack.c.l.b16 %v139
  %v523 = vunpack.c.l.b16 %v140
  %v524 = vunpack.c.l.b16 %v141
  %v525 = vunpack.c.l.b16 %v142
  %v526 = vunpack.c.l.b16 %v143
  %v527 = vunpack.c.l.b16 %v144
  %v528 = vunpack.c.l.b16 %v145
  %v529 = vunpack.c.l.b16 %v146
  %v530 = vunpack.c.l.b16 %v147
  %v531 = vunpack.c.l.b16 %v148
  %v532 = vunpack.c.l.b16 %v149
  %v533 = vunpack.c.l.b16 %v150
  %v534 = vunpack.c.l.b16 %v151
  %v535 = vunpack.c.l.b16 %v152
  %v536 = vunpack.c.l.b16 %v153
  %v537 = vunpack.c.l.b16 %v154
  %v538 = vunpack.c.l.b16 %v155
  %v539 = vunpack.c.l.b16 %v156
  %v540 = vunpack.c.l.b16 %v157
  %v541 = vunpack.c.l.b16 %v158
  %v542 = vunpack.c.l.b16 %v159
  %v543 = vunpack.c.l.b16 %v160
  %v544 = vunpack.c.l.b16 %v161
  %v545 = vunpack.c.l.b16 %v162
  %v546 = vunpack.c.l.b16 %v163
  %v547 = vunpack.c.l.b16 %v164
  %v548 = vunpack.c.l.b16 %v165
  %v549 = vunpack.c.l.b16 %v166
  %v550 = vpack.c.b16 %v423, %v422
  %v551 = vpack.c.b16 %v425, %v424
  %v552 = vpack.c.b16 %v427, %v426
  %v553 = vpack.c.b16 %v429, %v428
  %v554 = vpack.c.b16 %v431, %v430
  %v555 = vpack.c.b16 %v433, %v432
  %v556 = vpack.c.b16 %v435, %v434
  %v557 = vpack.c.b16 %v437, %v436
  %v558 = vpack.c.b16 %v439, %v438
  %v559 = vpack.c.b16 %v441, %v440
  %v560 = vpack.c.b16 %v443, %v442
  %v561 = vpack.c.b16 %v445, %v444
  %v562 = vpack.c.b16 %v447, %v446
  %v563 = vpack.c.b16 %v449, %v448
  %v564 = vpack.c.b16 %v451, %v450
  %v565 = vpack.c.b16 %v453, %v452
  %v566 = vpack.c.b16 %v455, %v454
  %v567 = vpack.c.b16 %v457, %v456
  %v568 = vpack.c.b16 %v459, %v458
  %v569 = vpack.c.b16 %v461, %v460
  %v570 = vpack.c.b16 %v463, %v462
  %v571 = vpack.c.b16 %v465, %v464
  %v572 = vpack.c.b16 %v467, %v466
  %v573 = vpack.c.b16 %v469, %v468
  %v574 = vpack.c.b16 %v471, %v470
  %v575 = vpack.c.b16 %v473, %v472
  %v576 = vpack.c.b16 %v475, %v474
  %v577 = vpack.c.b16 %v477, %v476
  %v578 = vpack.c.b16 %v479, %v478
  %v579 = vpack.c.b16 %v481, %v480
  %v580 = vpack.c.b16 %v483, %v482
  %v581 = vpack.c.b16 %v485, %v484
  %v582 = vpack.c.b16 %v487, %v486
  %v583 = vpack.c.b16 %v489, %v488
  %v584 = vpack.c.b16 %v491, %v490
  %v585 = vpack.c.b16 %v493, %v492
  %v586 = vpack.c.b16 %v495, %v494
  %v587 = vpack.c.b16 %v497, %v496
  %v588 = vpack.c.b16 %v499, %v498
  %v589 = vpack.c.b16 %v501, %v500
  %v590 = vpack.c.b16 %v503, %v502
  %v591 = vpack.c.b16 %v505, %v504
  %v592 = vpack.c.b16 %v507, %v506
  %v593 = vpack.c.b16 %v509, %v508
  %v594 = vpack.c.b16 %v511, %v510
  %v595 = vpack.c.b16 %v513, %v512
  %v596 = vpack.c.b16 %v515, %v514
  %v597 = vpack.c.b16 %v517, %v516
  %v598 = vpack.c.b16 %v519, %v518
  %v599 = vpack.c.b16 %v521, %v520
  %v600 = vpack.c.b16 %v523, %v522
  %v601 = vpack.c.b16 %v525, %v524
  %v602 = vpack.c.b16 %v527, %v526
  %v603 = vpack.c.b16 %v529, %v528
  %v604 = vpack.c.b16 %v531, %v530
  %v605 = vpack.c.b16 %v533, %v532
  %v606 = vpack.c.b16 %v535, %v534
  %v607 = vpack.c.b16 %v537, %v536
  %v608 = vpack.c.b16 %v539, %v538
  %v609 = vpack.c.b16 %v541, %v540
  %v610 = vpack.c.b16 %v543, %v542
  %v611 = vpack.c.b16 %v545, %v544
  %v612 = vpack.c.b16 %v547, %v546
  %v613 = vpack.c.b16 %v549, %v548
  %678 = vmatprep.subr.bf16.mxu0 0
  %679 = vmatpush1.bf16.msra.mxu0 %v550
  %680 = vmatprep.subr.bf16.mxu0 0
  %681 = vmatpush1.bf16.msra.mxu0 %v551
  %682 = vmatprep.subr.bf16.mxu0 0
  %683 = vmatpush1.bf16.msra.mxu0 %v552
  %684 = vmatprep.subr.bf16.mxu0 0
  %685 = vmatpush1.bf16.msra.mxu0 %v553
  %686 = vmatprep.subr.bf16.mxu0 0
  %687 = vmatpush1.bf16.msra.mxu0 %v554
  %688 = vmatprep.subr.bf16.mxu0 0
  %689 = vmatpush1.bf16.msra.mxu0 %v555
  %690 = vmatprep.subr.bf16.mxu0 0
  %691 = vmatpush1.bf16.msra.mxu0 %v556
  %692 = vmatprep.subr.bf16.mxu0 0
  %693 = vmatpush1.bf16.msra.mxu0 %v557
  %694 = vmatprep.subr.bf16.mxu0 0
  %695 = vmatpush1.bf16.msra.mxu0 %v558
  %696 = vmatprep.subr.bf16.mxu0 0
  %697 = vmatpush1.bf16.msra.mxu0 %v559
  %698 = vmatprep.subr.bf16.mxu0 0
  %699 = vmatpush1.bf16.msra.mxu0 %v560
  %700 = vmatprep.subr.bf16.mxu0 0
  %701 = vmatpush1.bf16.msra.mxu0 %v561
  %702 = vmatprep.subr.bf16.mxu0 0
  %703 = vmatpush1.bf16.msra.mxu0 %v562
  %704 = vmatprep.subr.bf16.mxu0 0
  %705 = vmatpush1.bf16.msra.mxu0 %v563
  %706 = vmatprep.subr.bf16.mxu0 0
  %707 = vmatpush1.bf16.msra.mxu0 %v564
  %708 = vmatprep.subr.bf16.mxu0 0
  %709 = vmatpush1.bf16.msra.mxu0 %v565
  %710 = vmatprep.mubr.bf16.mxu0 %v247
  %711 = vmatmul.mubr.bf16.gmra.mrb[0].mxu0 %v246
  %v712 = vpop.f32.mrb[0].mxu0
  %v713 = vadd.f32 %v172, %v712
  %v714 = vpop.f32.mrb[0].mxu0
  %v715 = vpop.f32.mrb[0].mxu0
  %v716 = vadd.f32 %v172, %v715
  %v717 = vpop.f32.mrb[0].mxu0
  %718 = vmatprep.mubr.bf16.mxu0 %v255
  %719 = vmatmul.mubr.bf16.gmra.mrb[0].mxu0 %v254
  %v720 = vpop.f32.mrb[0].mxu0
  %v721 = vadd.f32 %v172, %v720
  %v722 = vpop.f32.mrb[0].mxu0
  %v723 = vpop.f32.mrb[0].mxu0
  %v724 = vadd.f32 %v172, %v723
  %v725 = vpop.f32.mrb[0].mxu0
  %726 = vmatprep.mubr.bf16.mxu0 %v263
  %727 = vmatmul.mubr.bf16.gmra.mrb[0].mxu0 %v262
  %v728 = vpop.f32.mrb[0].mxu0
  %v729 = vadd.f32 %v172, %v728
  %v730 = vpop.f32.mrb[0].mxu0
  %v731 = vpop.f32.mrb[0].mxu0
  %v732 = vadd.f32 %v172, %v731
  %v733 = vpop.f32.mrb[0].mxu0
  %734 = vdwg.mxu0
  %735 = vmatprep.subr.bf16.mxu0 0
  %736 = vmatpush1.bf16.msra.mxu0 %v566
  %737 = vmatprep.subr.bf16.mxu0 0
  %738 = vmatpush1.bf16.msra.mxu0 %v567
  %739 = vmatprep.subr.bf16.mxu0 0
  %740 = vmatpush1.bf16.msra.mxu0 %v568
  %741 = vmatprep.subr.bf16.mxu0 0
  %742 = vmatpush1.bf16.msra.mxu0 %v569
  %743 = vmatprep.subr.bf16.mxu0 0
  %744 = vmatpush1.bf16.msra.mxu0 %v570
  %745 = vmatprep.subr.bf16.mxu0 0
  %746 = vmatpush1.bf16.msra.mxu0 %v571
  %747 = vmatprep.subr.bf16.mxu0 0
  %748 = vmatpush1.bf16.msra.mxu0 %v572
  %749 = vmatprep.subr.bf16.mxu0 0
  %750 = vmatpush1.bf16.msra.mxu0 %v573
  %751 = vmatprep.subr.bf16.mxu0 0
  %752 = vmatpush1.bf16.msra.mxu0 %v574
  %753 = vmatprep.subr.bf16.mxu0 0
  %754 = vmatpush1.bf16.msra.mxu0 %v575
  %755 = vmatprep.subr.bf16.mxu0 0
  %756 = vmatpush1.bf16.msra.mxu0 %v576
  %757 = vmatprep.subr.bf16.mxu0 0
  %758 = vmatpush1.bf16.msra.mxu0 %v577
  %759 = vmatprep.subr.bf16.mxu0 0
  %760 = vmatpush1.bf16.msra.mxu0 %v578
  %761 = vmatprep.subr.bf16.mxu0 0
  %762 = vmatpush1.bf16.msra.mxu0 %v579
  %763 = vmatprep.subr.bf16.mxu0 0
  %764 = vmatpush1.bf16.msra.mxu0 %v580
  %765 = vmatprep.subr.bf16.mxu0 0
  %766 = vmatpush1.bf16.msra.mxu0 %v581
  %767 = vmatprep.mubr.bf16.mxu0 %v249
  %768 = vmatmul.mubr.bf16.gmra.mrb[0].mxu0 %v248
  %v769 = vpop.f32.mrb[0].mxu0
  %v770 = vadd.f32 %v713, %v769
  %v771 = vpop.f32.mrb[0].mxu0
  %v772 = vpop.f32.mrb[0].mxu0
  %v773 = vadd.f32 %v716, %v772
  %v774 = vpop.f32.mrb[0].mxu0
  %775 = vmatprep.mubr.bf16.mxu0 %v257
  %776 = vmatmul.mubr.bf16.gmra.mrb[0].mxu0 %v256
  %v777 = vpop.f32.mrb[0].mxu0
  %v778 = vadd.f32 %v721, %v777
  %v779 = vpop.f32.mrb[0].mxu0
  %v780 = vpop.f32.mrb[0].mxu0
  %v781 = vadd.f32 %v724, %v780
  %v782 = vpop.f32.mrb[0].mxu0
  %783 = vmatprep.mubr.bf16.mxu0 %v265
  %784 = vmatmul.mubr.bf16.gmra.mrb[0].mxu0 %v264
  %v785 = vpop.f32.mrb[0].mxu0
  %v786 = vadd.f32 %v729, %v785
  %v787 = vpop.f32.mrb[0].mxu0
  %v788 = vpop.f32.mrb[0].mxu0
  %v789 = vadd.f32 %v732, %v788
  %v790 = vpop.f32.mrb[0].mxu0
  %791 = vdwg.mxu0
  %792 = vmatprep.subr.bf16.mxu0 0
  %793 = vmatpush1.bf16.msra.mxu0 %v582
  %794 = vmatprep.subr.bf16.mxu0 0
  %795 = vmatpush1.bf16.msra.mxu0 %v583
  %796 = vmatprep.subr.bf16.mxu0 0
  %797 = vmatpush1.bf16.msra.mxu0 %v584
  %798 = vmatprep.subr.bf16.mxu0 0
  %799 = vmatpush1.bf16.msra.mxu0 %v585
  %800 = vmatprep.subr.bf16.mxu0 0
  %801 = vmatpush1.bf16.msra.mxu0 %v586
  %802 = vmatprep.subr.bf16.mxu0 0
  %803 = vmatpush1.bf16.msra.mxu0 %v587
  %804 = vmatprep.subr.bf16.mxu0 0
  %805 = vmatpush1.bf16.msra.mxu0 %v588
  %806 = vmatprep.subr.bf16.mxu0 0
  %807 = vmatpush1.bf16.msra.mxu0 %v589
  %808 = vmatprep.subr.bf16.mxu0 0
  %809 = vmatpush1.bf16.msra.mxu0 %v590
  %810 = vmatprep.subr.bf16.mxu0 0
  %811 = vmatpush1.bf16.msra.mxu0 %v591
  %812 = vmatprep.subr.bf16.mxu0 0
  %813 = vmatpush1.bf16.msra.mxu0 %v592
  %814 = vmatprep.subr.bf16.mxu0 0
  %815 = vmatpush1.bf16.msra.mxu0 %v593
  %816 = vmatprep.subr.bf16.mxu0 0
  %817 = vmatpush1.bf16.msra.mxu0 %v594
  %818 = vmatprep.subr.bf16.mxu0 0
  %819 = vmatpush1.bf16.msra.mxu0 %v595
  %820 = vmatprep.subr.bf16.mxu0 0
  %821 = vmatpush1.bf16.msra.mxu0 %v596
  %822 = vmatprep.subr.bf16.mxu0 0
  %823 = vmatpush1.bf16.msra.mxu0 %v597
  %824 = vmatprep.mubr.bf16.mxu0 %v251
  %825 = vmatmul.mubr.bf16.gmra.mrb[0].mxu0 %v250
  %v826 = vpop.f32.mrb[0].mxu0
  %v827 = vadd.f32 %v770, %v826
  %v828 = vpop.f32.mrb[0].mxu0
  %v829 = vpop.f32.mrb[0].mxu0
  %v830 = vadd.f32 %v773, %v829
  %v831 = vpop.f32.mrb[0].mxu0
  %832 = vmatprep.mubr.bf16.mxu0 %v259
  %833 = vmatmul.mubr.bf16.gmra.mrb[0].mxu0 %v258
  %v834 = vpop.f32.mrb[0].mxu0
  %v835 = vadd.f32 %v778, %v834
  %v836 = vpop.f32.mrb[0].mxu0
  %v837 = vpop.f32.mrb[0].mxu0
  %v838 = vadd.f32 %v781, %v837
  %v839 = vpop.f32.mrb[0].mxu0
  %840 = vmatprep.mubr.bf16.mxu0 %v267
  %841 = vmatmul.mubr.bf16.gmra.mrb[0].mxu0 %v266
  %v842 = vpop.f32.mrb[0].mxu0
  %v843 = vadd.f32 %v786, %v842
  %v844 = vpop.f32.mrb[0].mxu0
  %v845 = vpop.f32.mrb[0].mxu0
  %v846 = vadd.f32 %v789, %v845
  %v847 = vpop.f32.mrb[0].mxu0
  %848 = vdwg.mxu0
  %849 = vmatprep.subr.bf16.mxu0 0
  %850 = vmatpush1.bf16.msra.mxu0 %v598
  %851 = vmatprep.subr.bf16.mxu0 0
  %852 = vmatpush1.bf16.msra.mxu0 %v599
  %853 = vmatprep.subr.bf16.mxu0 0
  %854 = vmatpush1.bf16.msra.mxu0 %v600
  %855 = vmatprep.subr.bf16.mxu0 0
  %856 = vmatpush1.bf16.msra.mxu0 %v601
  %857 = vmatprep.subr.bf16.mxu0 0
  %858 = vmatpush1.bf16.msra.mxu0 %v602
  %859 = vmatprep.subr.bf16.mxu0 0
  %860 = vmatpush1.bf16.msra.mxu0 %v603
  %861 = vmatprep.subr.bf16.mxu0 0
  %862 = vmatpush1.bf16.msra.mxu0 %v604
  %863 = vmatprep.subr.bf16.mxu0 0
  %864 = vmatpush1.bf16.msra.mxu0 %v605
  %865 = vmatprep.subr.bf16.mxu0 0
  %866 = vmatpush1.bf16.msra.mxu0 %v606
  %867 = vmatprep.subr.bf16.mxu0 0
  %868 = vmatpush1.bf16.msra.mxu0 %v607
  %869 = vmatprep.subr.bf16.mxu0 0
  %870 = vmatpush1.bf16.msra.mxu0 %v608
  %871 = vmatprep.subr.bf16.mxu0 0
  %872 = vmatpush1.bf16.msra.mxu0 %v609
  %873 = vmatprep.subr.bf16.mxu0 0
  %874 = vmatpush1.bf16.msra.mxu0 %v610
  %875 = vmatprep.subr.bf16.mxu0 0
  %876 = vmatpush1.bf16.msra.mxu0 %v611
  %877 = vmatprep.subr.bf16.mxu0 0
  %878 = vmatpush1.bf16.msra.mxu0 %v612
  %879 = vmatprep.subr.bf16.mxu0 0
  %880 = vmatpush1.bf16.msra.mxu0 %v613
  %881 = vmatprep.mubr.bf16.mxu0 %v253
  %882 = vmatmul.mubr.bf16.gmra.mrb[0].mxu0 %v252
  %v883 = vpop.f32.mrb[0].mxu0
  %v884 = vadd.f32 %v827, %v883
  %v885 = vpop.f32.mrb[0].mxu0
  %v886 = vpop.f32.mrb[0].mxu0
  %v887 = vadd.f32 %v830, %v886
  %v888 = vpop.f32.mrb[0].mxu0
  %889 = vmatprep.mubr.bf16.mxu0 %v261
  %890 = vmatmul.mubr.bf16.gmra.mrb[0].mxu0 %v260
  %v891 = vpop.f32.mrb[0].mxu0
  %v892 = vadd.f32 %v835, %v891
  %v893 = vpop.f32.mrb[0].mxu0
  %v894 = vpop.f32.mrb[0].mxu0
  %v895 = vadd.f32 %v838, %v894
  %v896 = vpop.f32.mrb[0].mxu0
  %897 = vmatprep.mubr.bf16.mxu0 %v269
  %898 = vmatmul.mubr.bf16.gmra.mrb[0].mxu0 %v268
  %v899 = vpop.f32.mrb[0].mxu0
  %v900 = vadd.f32 %v843, %v899
  %v901 = vpop.f32.mrb[0].mxu0
  %v902 = vpop.f32.mrb[0].mxu0
  %v903 = vadd.f32 %v846, %v902
  %v904 = vpop.f32.mrb[0].mxu0
  %905 = vdwg.mxu0
  %vm906 = vcmp.ge.f32.partialorder %v884, 0.0
  %vm907 = vcmp.ge.f32.partialorder %v887, 0.0
  %vm908 = vcmp.ge.f32.partialorder %v892, 0.0
  %vm909 = vcmp.ge.f32.partialorder %v895, 0.0
  %vm910 = vcmp.ge.f32.partialorder %v900, 0.0
  %vm911 = vcmp.ge.f32.partialorder %v903, 0.0
  %v912 = vmul.f32 %v884, 0.01
  %v913 = vmul.f32 %v887, 0.01
  %v914 = vmul.f32 %v892, 0.01
  %v915 = vmul.f32 %v895, 0.01
  %v916 = vmul.f32 %v900, 0.01
  %v917 = vmul.f32 %v903, 0.01
  %v918 = vsel %vm906, %v884, %v912
  %v919 = vsel %vm907, %v887, %v913
  %v920 = vsel %vm908, %v892, %v914
  %v921 = vsel %vm909, %v895, %v915
  %v922 = vsel %vm910, %v900, %v916
  %v923 = vsel %vm911, %v903, %v917
  %v924 = vpack.c.bf16 %v919, %v918
  %v925 = vpack.c.bf16 %v921, %v920
  %v926 = vpack.c.bf16 %v923, %v922
  %v930 = vunpack.c.l.b16 %v924
  %v931 = vunpack.c.h.b16 %v924
  %v932 = vunpack.c.l.b16 %v925
  %v933 = vunpack.c.h.b16 %v925
  %v934 = vunpack.c.l.b16 %v926
  %v935 = vunpack.c.h.b16 %v926
  %v936 = vpack.c.b16 %v930, %v930
  %v937 = vpack.c.b16 %v931, %v931
  %v938 = vpack.c.b16 %v932, %v932
  %v939 = vpack.c.b16 %v933, %v933
  %v940 = vpack.c.b16 %v934, %v934
  %v941 = vpack.c.b16 %v935, %v935
  %948 = vst [vmem:[%s3] sm:$0xf] %v936
  %949 = vst [vmem:[%s3 + $0x4] sm:$0xf] %v937
  %950 = vst [vmem:[%s3 + $0x8] sm:$0xf] %v938
  %951 = vst [vmem:[%s3 + $0xc] sm:$0xf] %v939
  %952 = vst [vmem:[%s3 + $0x10] sm:$0xf] %v940
  %953 = vst [vmem:[%s3 + $0x14] sm:$0xf] %v941
  // Predicated region
  $region14: #{stargan_discriminator.12} parent=0 // pred_check
    _
  $region15: #{stargan_discriminator.12} parent=0 // pred_check_branch
    %955 = sbr.rel (0) target = $region17
  $region16: #{stargan_discriminator.12} parent=0 // pred_region
    _
  $region17: #{stargan_discriminator.12} parent=0 // pred_fallthru
    _
  // Predicated region
  $region18: #{stargan_discriminator.12} parent=0 // pred_check
    _
  $region19: #{stargan_discriminator.12} parent=0 // pred_check_branch
    %957 = sbr.rel (0) target = $region21
  $region20: #{stargan_discriminator.12} parent=0 // pred_region
    _
  $region21: #{stargan_discriminator.12} parent=0 // pred_fallthru
    _

// kernel: stargan_discriminator.13
$region0: #{stargan_discriminator.13}
  #allocation0 [shape = 'u32[]', space=smem, size = 0x4, offset = 0x4, fixed_abs, tag = 'smem constant byte address 0x4 - core index']
  #allocation1 [shape = 'u32[144,128]{1,0:T(1,128)}', space=vmem, size = 0x12000, scoped, tag = 'internal scratch']
  %s0 = inlined_call_operand.vmem [shape: bf16[16,3072], index: 0, kind: input, shape index: {}]
  %s1 = inlined_call_operand.vmem [shape: bf16[3072,2], index: 1, kind: input, shape index: {}]
  %s2 = inlined_call_operand.vmem [shape: f32[1,2], index: 2, kind: input, shape index: {}]
  %s3 = inlined_call_operand.vmem [shape: f32[16,2], index: 3, kind: output, shape index: {}]
  %s4 = sld [smem:[#allocation0]]
  $region22: #{stargan_discriminator.13} parent=0
    _
  %s6 = ssub.s32 1, %s4
  %s7 = scalar_select 0, %s6, %s4
  // Predicated region
  $region2: #{stargan_discriminator.13} parent=0 // pred_check
    _
  $region3: #{stargan_discriminator.13} parent=0 // pred_check_branch
    %9 = sbr.rel (0) target = $region5
  $region4: #{stargan_discriminator.13} parent=0 // pred_region
    _
  $region5: #{stargan_discriminator.13} parent=0 // pred_fallthru
    _
  // Predicated region
  $region6: #{stargan_discriminator.13} parent=0 // pred_check
    _
  $region7: #{stargan_discriminator.13} parent=0 // pred_check_branch
    %11 = sbr.rel (0) target = $region9
  $region8: #{stargan_discriminator.13} parent=0 // pred_region
    _
  $region9: #{stargan_discriminator.13} parent=0 // pred_fallthru
    _
  // Predicated region
  $region10: #{stargan_discriminator.13} parent=0 // pred_check
    _
  $region11: #{stargan_discriminator.13} parent=0 // pred_check_branch
    %13 = sbr.rel (0) target = $region13
  $region12: #{stargan_discriminator.13} parent=0 // pred_region
    _
  $region13: #{stargan_discriminator.13} parent=0 // pred_fallthru
    _
  %v15 = vld [vmem:[%s0] sm:$0xff]
  %v16 = vld [vmem:[%s0 + $0x8] sm:$0xff]
  %v17 = vld [vmem:[%s0 + $0x10] sm:$0xff]
  %v18 = vld [vmem:[%s0 + $0x18] sm:$0xff]
  %v19 = vld [vmem:[%s0 + $0x20] sm:$0xff]
  %v20 = vld [vmem:[%s0 + $0x28] sm:$0xff]
  %v21 = vld [vmem:[%s0 + $0x30] sm:$0xff]
  %v22 = vld [vmem:[%s0 + $0x38] sm:$0xff]
  %v23 = vld [vmem:[%s0 + $0x40] sm:$0xff]
  %v24 = vld [vmem:[%s0 + $0x48] sm:$0xff]
  %v25 = vld [vmem:[%s0 + $0x50] sm:$0xff]
  %v26 = vld [vmem:[%s0 + $0x58] sm:$0xff]
  %v27 = vld [vmem:[%s0 + $0x60] sm:$0xff]
  %v28 = vld [vmem:[%s0 + $0x68] sm:$0xff]
  %v29 = vld [vmem:[%s0 + $0x70] sm:$0xff]
  %v30 = vld [vmem:[%s0 + $0x78] sm:$0xff]
  %v31 = vld [vmem:[%s0 + $0x80] sm:$0xff]
  %v32 = vld [vmem:[%s0 + $0x88] sm:$0xff]
  %v33 = vld [vmem:[%s0 + $0x90] sm:$0xff]
  %v34 = vld [vmem:[%s0 + $0x98] sm:$0xff]
  %v35 = vld [vmem:[%s0 + $0xa0] sm:$0xff]
  %v36 = vld [vmem:[%s0 + $0xa8] sm:$0xff]
  %v37 = vld [vmem:[%s0 + $0xb0] sm:$0xff]
  %v38 = vld [vmem:[%s0 + $0xb8] sm:$0xff]
  %v39 = vld [vmem:[%s1] sm:$0xf]
  %v40 = vld [vmem:[%s1 + $0x4] sm:$0xf]
  %v41 = vld [vmem:[%s1 + $0x8] sm:$0xf]
  %v42 = vld [vmem:[%s1 + $0xc] sm:$0xf]
  %v43 = vld [vmem:[%s1 + $0x10] sm:$0xf]
  %v44 = vld [vmem:[%s1 + $0x14] sm:$0xf]
  %v45 = vld [vmem:[%s1 + $0x18] sm:$0xf]
  %v46 = vld [vmem:[%s1 + $0x1c] sm:$0xf]
  %v47 = vld [vmem:[%s1 + $0x20] sm:$0xf]
  %v48 = vld [vmem:[%s1 + $0x24] sm:$0xf]
  %v49 = vld [vmem:[%s1 + $0x28] sm:$0xf]
  %v50 = vld [vmem:[%s1 + $0x2c] sm:$0xf]
  %v51 = vld [vmem:[%s1 + $0x30] sm:$0xf]
  %v52 = vld [vmem:[%s1 + $0x34] sm:$0xf]
  %v53 = vld [vmem:[%s1 + $0x38] sm:$0xf]
  %v54 = vld [vmem:[%s1 + $0x3c] sm:$0xf]
  %v55 = vld [vmem:[%s1 + $0x40] sm:$0xf]
  %v56 = vld [vmem:[%s1 + $0x44] sm:$0xf]
  %v57 = vld [vmem:[%s1 + $0x48] sm:$0xf]
  %v58 = vld [vmem:[%s1 + $0x4c] sm:$0xf]
  %v59 = vld [vmem:[%s1 + $0x50] sm:$0xf]
  %v60 = vld [vmem:[%s1 + $0x54] sm:$0xf]
  %v61 = vld [vmem:[%s1 + $0x58] sm:$0xf]
  %v62 = vld [vmem:[%s1 + $0x5c] sm:$0xf]
  %v63 = vld [vmem:[%s1 + $0x60] sm:$0xf]
  %v64 = vld [vmem:[%s1 + $0x64] sm:$0xf]
  %v65 = vld [vmem:[%s1 + $0x68] sm:$0xf]
  %v66 = vld [vmem:[%s1 + $0x6c] sm:$0xf]
  %v67 = vld [vmem:[%s1 + $0x70] sm:$0xf]
  %v68 = vld [vmem:[%s1 + $0x74] sm:$0xf]
  %v69 = vld [vmem:[%s1 + $0x78] sm:$0xf]
  %v70 = vld [vmem:[%s1 + $0x7c] sm:$0xf]
  %v71 = vld [vmem:[%s1 + $0x80] sm:$0xf]
  %v72 = vld [vmem:[%s1 + $0x84] sm:$0xf]
  %v73 = vld [vmem:[%s1 + $0x88] sm:$0xf]
  %v74 = vld [vmem:[%s1 + $0x8c] sm:$0xf]
  %v75 = vld [vmem:[%s1 + $0x90] sm:$0xf]
  %v76 = vld [vmem:[%s1 + $0x94] sm:$0xf]
  %v77 = vld [vmem:[%s1 + $0x98] sm:$0xf]
  %v78 = vld [vmem:[%s1 + $0x9c] sm:$0xf]
  %v79 = vld [vmem:[%s1 + $0xa0] sm:$0xf]
  %v80 = vld [vmem:[%s1 + $0xa4] sm:$0xf]
  %v81 = vld [vmem:[%s1 + $0xa8] sm:$0xf]
  %v82 = vld [vmem:[%s1 + $0xac] sm:$0xf]
  %v83 = vld [vmem:[%s1 + $0xb0] sm:$0xf]
  %v84 = vld [vmem:[%s1 + $0xb4] sm:$0xf]
  %v85 = vld [vmem:[%s1 + $0xb8] sm:$0xf]
  %v86 = vld [vmem:[%s1 + $0xbc] sm:$0xf]
  %v87 = vld [vmem:[%s1 + $0xc0] sm:$0xf]
  %v88 = vld [vmem:[%s1 + $0xc4] sm:$0xf]
  %v89 = vld [vmem:[%s1 + $0xc8] sm:$0xf]
  %v90 = vld [vmem:[%s1 + $0xcc] sm:$0xf]
  %v91 = vld [vmem:[%s1 + $0xd0] sm:$0xf]
  %v92 = vld [vmem:[%s1 + $0xd4] sm:$0xf]
  %v93 = vld [vmem:[%s1 + $0xd8] sm:$0xf]
  %v94 = vld [vmem:[%s1 + $0xdc] sm:$0xf]
  %v95 = vld [vmem:[%s1 + $0xe0] sm:$0xf]
  %v96 = vld [vmem:[%s1 + $0xe4] sm:$0xf]
  %v97 = vld [vmem:[%s1 + $0xe8] sm:$0xf]
  %v98 = vld [vmem:[%s1 + $0xec] sm:$0xf]
  %v99 = vld [vmem:[%s1 + $0xf0] sm:$0xf]
  %v100 = vld [vmem:[%s1 + $0xf4] sm:$0xf]
  %v101 = vld [vmem:[%s1 + $0xf8] sm:$0xf]
  %v102 = vld [vmem:[%s1 + $0xfc] sm:$0xf]
  %v103 = vld [vmem:[%s1 + $0x100] sm:$0xf]
  %v104 = vld [vmem:[%s1 + $0x104] sm:$0xf]
  %v105 = vld [vmem:[%s1 + $0x108] sm:$0xf]
  %v106 = vld [vmem:[%s1 + $0x10c] sm:$0xf]
  %v107 = vld [vmem:[%s1 + $0x110] sm:$0xf]
  %v108 = vld [vmem:[%s1 + $0x114] sm:$0xf]
  %v109 = vld [vmem:[%s1 + $0x118] sm:$0xf]
  %v110 = vld [vmem:[%s1 + $0x11c] sm:$0xf]
  %v111 = vld [vmem:[%s1 + $0x120] sm:$0xf]
  %v112 = vld [vmem:[%s1 + $0x124] sm:$0xf]
  %v113 = vld [vmem:[%s1 + $0x128] sm:$0xf]
  %v114 = vld [vmem:[%s1 + $0x12c] sm:$0xf]
  %v115 = vld [vmem:[%s1 + $0x130] sm:$0xf]
  %v116 = vld [vmem:[%s1 + $0x134] sm:$0xf]
  %v117 = vld [vmem:[%s1 + $0x138] sm:$0xf]
  %v118 = vld [vmem:[%s1 + $0x13c] sm:$0xf]
  %v119 = vld [vmem:[%s1 + $0x140] sm:$0xf]
  %v120 = vld [vmem:[%s1 + $0x144] sm:$0xf]
  %v121 = vld [vmem:[%s1 + $0x148] sm:$0xf]
  %v122 = vld [vmem:[%s1 + $0x14c] sm:$0xf]
  %v123 = vld [vmem:[%s1 + $0x150] sm:$0xf]
  %v124 = vld [vmem:[%s1 + $0x154] sm:$0xf]
  %v125 = vld [vmem:[%s1 + $0x158] sm:$0xf]
  %v126 = vld [vmem:[%s1 + $0x15c] sm:$0xf]
  %v127 = vld [vmem:[%s1 + $0x160] sm:$0xf]
  %v128 = vld [vmem:[%s1 + $0x164] sm:$0xf]
  %v129 = vld [vmem:[%s1 + $0x168] sm:$0xf]
  %v130 = vld [vmem:[%s1 + $0x16c] sm:$0xf]
  %v131 = vld [vmem:[%s1 + $0x170] sm:$0xf]
  %v132 = vld [vmem:[%s1 + $0x174] sm:$0xf]
  %v133 = vld [vmem:[%s1 + $0x178] sm:$0xf]
  %v134 = vld [vmem:[%s1 + $0x17c] sm:$0xf]
  %v135 = vld [vmem:[%s1 + $0x180] sm:$0xf]
  %v136 = vld [vmem:[%s1 + $0x184] sm:$0xf]
  %v137 = vld [vmem:[%s1 + $0x188] sm:$0xf]
  %v138 = vld [vmem:[%s1 + $0x18c] sm:$0xf]
  %v139 = vld [vmem:[%s1 + $0x190] sm:$0xf]
  %v140 = vld [vmem:[%s1 + $0x194] sm:$0xf]
  %v141 = vld [vmem:[%s1 + $0x198] sm:$0xf]
  %v142 = vld [vmem:[%s1 + $0x19c] sm:$0xf]
  %v143 = vld [vmem:[%s1 + $0x1a0] sm:$0xf]
  %v144 = vld [vmem:[%s1 + $0x1a4] sm:$0xf]
  %v145 = vld [vmem:[%s1 + $0x1a8] sm:$0xf]
  %v146 = vld [vmem:[%s1 + $0x1ac] sm:$0xf]
  %v147 = vld [vmem:[%s1 + $0x1b0] sm:$0xf]
  %v148 = vld [vmem:[%s1 + $0x1b4] sm:$0xf]
  %v149 = vld [vmem:[%s1 + $0x1b8] sm:$0xf]
  %v150 = vld [vmem:[%s1 + $0x1bc] sm:$0xf]
  %v151 = vld [vmem:[%s1 + $0x1c0] sm:$0xf]
  %v152 = vld [vmem:[%s1 + $0x1c4] sm:$0xf]
  %v153 = vld [vmem:[%s1 + $0x1c8] sm:$0xf]
  %v154 = vld [vmem:[%s1 + $0x1cc] sm:$0xf]
  %v155 = vld [vmem:[%s1 + $0x1d0] sm:$0xf]
  %v156 = vld [vmem:[%s1 + $0x1d4] sm:$0xf]
  %v157 = vld [vmem:[%s1 + $0x1d8] sm:$0xf]
  %v158 = vld [vmem:[%s1 + $0x1dc] sm:$0xf]
  %v159 = vld [vmem:[%s1 + $0x1e0] sm:$0xf]
  %v160 = vld [vmem:[%s1 + $0x1e4] sm:$0xf]
  %v161 = vld [vmem:[%s1 + $0x1e8] sm:$0xf]
  %v162 = vld [vmem:[%s1 + $0x1ec] sm:$0xf]
  %v163 = vld [vmem:[%s1 + $0x1f0] sm:$0xf]
  %v164 = vld [vmem:[%s1 + $0x1f4] sm:$0xf]
  %v165 = vld [vmem:[%s1 + $0x1f8] sm:$0xf]
  %v166 = vld [vmem:[%s1 + $0x1fc] sm:$0xf]
  %v167 = vld [vmem:[%s1 + $0x200] sm:$0xf]
  %v168 = vld [vmem:[%s1 + $0x204] sm:$0xf]
  %v169 = vld [vmem:[%s1 + $0x208] sm:$0xf]
  %v170 = vld [vmem:[%s1 + $0x20c] sm:$0xf]
  %v171 = vld [vmem:[%s1 + $0x210] sm:$0xf]
  %v172 = vld [vmem:[%s1 + $0x214] sm:$0xf]
  %v173 = vld [vmem:[%s1 + $0x218] sm:$0xf]
  %v174 = vld [vmem:[%s1 + $0x21c] sm:$0xf]
  %v175 = vld [vmem:[%s1 + $0x220] sm:$0xf]
  %v176 = vld [vmem:[%s1 + $0x224] sm:$0xf]
  %v177 = vld [vmem:[%s1 + $0x228] sm:$0xf]
  %v178 = vld [vmem:[%s1 + $0x22c] sm:$0xf]
  %v179 = vld [vmem:[%s1 + $0x230] sm:$0xf]
  %v180 = vld [vmem:[%s1 + $0x234] sm:$0xf]
  %v181 = vld [vmem:[%s1 + $0x238] sm:$0xf]
  %v182 = vld [vmem:[%s1 + $0x23c] sm:$0xf]
  %v183 = vld [vmem:[%s1 + $0x240] sm:$0xf]
  %v184 = vld [vmem:[%s1 + $0x244] sm:$0xf]
  %v185 = vld [vmem:[%s1 + $0x248] sm:$0xf]
  %v186 = vld [vmem:[%s1 + $0x24c] sm:$0xf]
  %v187 = vld [vmem:[%s1 + $0x250] sm:$0xf]
  %v188 = vld [vmem:[%s1 + $0x254] sm:$0xf]
  %v189 = vld [vmem:[%s1 + $0x258] sm:$0xf]
  %v190 = vld [vmem:[%s1 + $0x25c] sm:$0xf]
  %v191 = vld [vmem:[%s1 + $0x260] sm:$0xf]
  %v192 = vld [vmem:[%s1 + $0x264] sm:$0xf]
  %v193 = vld [vmem:[%s1 + $0x268] sm:$0xf]
  %v194 = vld [vmem:[%s1 + $0x26c] sm:$0xf]
  %v195 = vld [vmem:[%s1 + $0x270] sm:$0xf]
  %v196 = vld [vmem:[%s1 + $0x274] sm:$0xf]
  %v197 = vld [vmem:[%s1 + $0x278] sm:$0xf]
  %v198 = vld [vmem:[%s1 + $0x27c] sm:$0xf]
  %v199 = vld [vmem:[%s1 + $0x280] sm:$0xf]
  %v200 = vld [vmem:[%s1 + $0x284] sm:$0xf]
  %v201 = vld [vmem:[%s1 + $0x288] sm:$0xf]
  %v202 = vld [vmem:[%s1 + $0x28c] sm:$0xf]
  %v203 = vld [vmem:[%s1 + $0x290] sm:$0xf]
  %v204 = vld [vmem:[%s1 + $0x294] sm:$0xf]
  %v205 = vld [vmem:[%s1 + $0x298] sm:$0xf]
  %v206 = vld [vmem:[%s1 + $0x29c] sm:$0xf]
  %v207 = vld [vmem:[%s1 + $0x2a0] sm:$0xf]
  %v208 = vld [vmem:[%s1 + $0x2a4] sm:$0xf]
  %v209 = vld [vmem:[%s1 + $0x2a8] sm:$0xf]
  %v210 = vld [vmem:[%s1 + $0x2ac] sm:$0xf]
  %v211 = vld [vmem:[%s1 + $0x2b0] sm:$0xf]
  %v212 = vld [vmem:[%s1 + $0x2b4] sm:$0xf]
  %v213 = vld [vmem:[%s1 + $0x2b8] sm:$0xf]
  %v214 = vld [vmem:[%s1 + $0x2bc] sm:$0xf]
  %v215 = vld [vmem:[%s1 + $0x2c0] sm:$0xf]
  %v216 = vld [vmem:[%s1 + $0x2c4] sm:$0xf]
  %v217 = vld [vmem:[%s1 + $0x2c8] sm:$0xf]
  %v218 = vld [vmem:[%s1 + $0x2cc] sm:$0xf]
  %v219 = vld [vmem:[%s1 + $0x2d0] sm:$0xf]
  %v220 = vld [vmem:[%s1 + $0x2d4] sm:$0xf]
  %v221 = vld [vmem:[%s1 + $0x2d8] sm:$0xf]
  %v222 = vld [vmem:[%s1 + $0x2dc] sm:$0xf]
  %v223 = vld [vmem:[%s1 + $0x2e0] sm:$0xf]
  %v224 = vld [vmem:[%s1 + $0x2e4] sm:$0xf]
  %v225 = vld [vmem:[%s1 + $0x2e8] sm:$0xf]
  %v226 = vld [vmem:[%s1 + $0x2ec] sm:$0xf]
  %v227 = vld [vmem:[%s1 + $0x2f0] sm:$0xf]
  %v228 = vld [vmem:[%s1 + $0x2f4] sm:$0xf]
  %v229 = vld [vmem:[%s1 + $0x2f8] sm:$0xf]
  %v230 = vld [vmem:[%s1 + $0x2fc] sm:$0xf]
  %v231 = vld [vmem:[%s1 + $0x300] sm:$0xf]
  %v232 = vld [vmem:[%s1 + $0x304] sm:$0xf]
  %v233 = vld [vmem:[%s1 + $0x308] sm:$0xf]
  %v234 = vld [vmem:[%s1 + $0x30c] sm:$0xf]
  %v235 = vld [vmem:[%s1 + $0x310] sm:$0xf]
  %v236 = vld [vmem:[%s1 + $0x314] sm:$0xf]
  %v237 = vld [vmem:[%s1 + $0x318] sm:$0xf]
  %v238 = vld [vmem:[%s1 + $0x31c] sm:$0xf]
  %v239 = vld [vmem:[%s1 + $0x320] sm:$0xf]
  %v240 = vld [vmem:[%s1 + $0x324] sm:$0xf]
  %v241 = vld [vmem:[%s1 + $0x328] sm:$0xf]
  %v242 = vld [vmem:[%s1 + $0x32c] sm:$0xf]
  %v243 = vld [vmem:[%s1 + $0x330] sm:$0xf]
  %v244 = vld [vmem:[%s1 + $0x334] sm:$0xf]
  %v245 = vld [vmem:[%s1 + $0x338] sm:$0xf]
  %v246 = vld [vmem:[%s1 + $0x33c] sm:$0xf]
  %v247 = vld [vmem:[%s1 + $0x340] sm:$0xf]
  %v248 = vld [vmem:[%s1 + $0x344] sm:$0xf]
  %v249 = vld [vmem:[%s1 + $0x348] sm:$0xf]
  %v250 = vld [vmem:[%s1 + $0x34c] sm:$0xf]
  %v251 = vld [vmem:[%s1 + $0x350] sm:$0xf]
  %v252 = vld [vmem:[%s1 + $0x354] sm:$0xf]
  %v253 = vld [vmem:[%s1 + $0x358] sm:$0xf]
  %v254 = vld [vmem:[%s1 + $0x35c] sm:$0xf]
  %v255 = vld [vmem:[%s1 + $0x360] sm:$0xf]
  %v256 = vld [vmem:[%s1 + $0x364] sm:$0xf]
  %v257 = vld [vmem:[%s1 + $0x368] sm:$0xf]
  %v258 = vld [vmem:[%s1 + $0x36c] sm:$0xf]
  %v259 = vld [vmem:[%s1 + $0x370] sm:$0xf]
  %v260 = vld [vmem:[%s1 + $0x374] sm:$0xf]
  %v261 = vld [vmem:[%s1 + $0x378] sm:$0xf]
  %v262 = vld [vmem:[%s1 + $0x37c] sm:$0xf]
  %v263 = vld [vmem:[%s1 + $0x380] sm:$0xf]
  %v264 = vld [vmem:[%s1 + $0x384] sm:$0xf]
  %v265 = vld [vmem:[%s1 + $0x388] sm:$0xf]
  %v266 = vld [vmem:[%s1 + $0x38c] sm:$0xf]
  %v267 = vld [vmem:[%s1 + $0x390] sm:$0xf]
  %v268 = vld [vmem:[%s1 + $0x394] sm:$0xf]
  %v269 = vld [vmem:[%s1 + $0x398] sm:$0xf]
  %v270 = vld [vmem:[%s1 + $0x39c] sm:$0xf]
  %v271 = vld [vmem:[%s1 + $0x3a0] sm:$0xf]
  %v272 = vld [vmem:[%s1 + $0x3a4] sm:$0xf]
  %v273 = vld [vmem:[%s1 + $0x3a8] sm:$0xf]
  %v274 = vld [vmem:[%s1 + $0x3ac] sm:$0xf]
  %v275 = vld [vmem:[%s1 + $0x3b0] sm:$0xf]
  %v276 = vld [vmem:[%s1 + $0x3b4] sm:$0xf]
  %v277 = vld [vmem:[%s1 + $0x3b8] sm:$0xf]
  %v278 = vld [vmem:[%s1 + $0x3bc] sm:$0xf]
  %v279 = vld [vmem:[%s1 + $0x3c0] sm:$0xf]
  %v280 = vld [vmem:[%s1 + $0x3c4] sm:$0xf]
  %v281 = vld [vmem:[%s1 + $0x3c8] sm:$0xf]
  %v282 = vld [vmem:[%s1 + $0x3cc] sm:$0xf]
  %v283 = vld [vmem:[%s1 + $0x3d0] sm:$0xf]
  %v284 = vld [vmem:[%s1 + $0x3d4] sm:$0xf]
  %v285 = vld [vmem:[%s1 + $0x3d8] sm:$0xf]
  %v286 = vld [vmem:[%s1 + $0x3dc] sm:$0xf]
  %v287 = vld [vmem:[%s1 + $0x3e0] sm:$0xf]
  %v288 = vld [vmem:[%s1 + $0x3e4] sm:$0xf]
  %v289 = vld [vmem:[%s1 + $0x3e8] sm:$0xf]
  %v290 = vld [vmem:[%s1 + $0x3ec] sm:$0xf]
  %v291 = vld [vmem:[%s1 + $0x3f0] sm:$0xf]
  %v292 = vld [vmem:[%s1 + $0x3f4] sm:$0xf]
  %v293 = vld [vmem:[%s1 + $0x3f8] sm:$0xf]
  %v294 = vld [vmem:[%s1 + $0x3fc] sm:$0xf]
  %v295 = vld [vmem:[%s1 + $0x400] sm:$0xf]
  %v296 = vld [vmem:[%s1 + $0x404] sm:$0xf]
  %v297 = vld [vmem:[%s1 + $0x408] sm:$0xf]
  %v298 = vld [vmem:[%s1 + $0x40c] sm:$0xf]
  %v299 = vld [vmem:[%s1 + $0x410] sm:$0xf]
  %v300 = vld [vmem:[%s1 + $0x414] sm:$0xf]
  %v301 = vld [vmem:[%s1 + $0x418] sm:$0xf]
  %v302 = vld [vmem:[%s1 + $0x41c] sm:$0xf]
  %v303 = vld [vmem:[%s1 + $0x420] sm:$0xf]
  %v304 = vld [vmem:[%s1 + $0x424] sm:$0xf]
  %v305 = vld [vmem:[%s1 + $0x428] sm:$0xf]
  %v306 = vld [vmem:[%s1 + $0x42c] sm:$0xf]
  %v307 = vld [vmem:[%s1 + $0x430] sm:$0xf]
  %v308 = vld [vmem:[%s1 + $0x434] sm:$0xf]
  %v309 = vld [vmem:[%s1 + $0x438] sm:$0xf]
  %v310 = vld [vmem:[%s1 + $0x43c] sm:$0xf]
  %v311 = vld [vmem:[%s1 + $0x440] sm:$0xf]
  %v312 = vld [vmem:[%s1 + $0x444] sm:$0xf]
  %v313 = vld [vmem:[%s1 + $0x448] sm:$0xf]
  %v314 = vld [vmem:[%s1 + $0x44c] sm:$0xf]
  %v315 = vld [vmem:[%s1 + $0x450] sm:$0xf]
  %v316 = vld [vmem:[%s1 + $0x454] sm:$0xf]
  %v317 = vld [vmem:[%s1 + $0x458] sm:$0xf]
  %v318 = vld [vmem:[%s1 + $0x45c] sm:$0xf]
  %v319 = vld [vmem:[%s1 + $0x460] sm:$0xf]
  %v320 = vld [vmem:[%s1 + $0x464] sm:$0xf]
  %v321 = vld [vmem:[%s1 + $0x468] sm:$0xf]
  %v322 = vld [vmem:[%s1 + $0x46c] sm:$0xf]
  %v323 = vld [vmem:[%s1 + $0x470] sm:$0xf]
  %v324 = vld [vmem:[%s1 + $0x474] sm:$0xf]
  %v325 = vld [vmem:[%s1 + $0x478] sm:$0xf]
  %v326 = vld [vmem:[%s1 + $0x47c] sm:$0xf]
  %v327 = vld [vmem:[%s1 + $0x480] sm:$0xf]
  %v328 = vld [vmem:[%s1 + $0x484] sm:$0xf]
  %v329 = vld [vmem:[%s1 + $0x488] sm:$0xf]
  %v330 = vld [vmem:[%s1 + $0x48c] sm:$0xf]
  %v331 = vld [vmem:[%s1 + $0x490] sm:$0xf]
  %v332 = vld [vmem:[%s1 + $0x494] sm:$0xf]
  %v333 = vld [vmem:[%s1 + $0x498] sm:$0xf]
  %v334 = vld [vmem:[%s1 + $0x49c] sm:$0xf]
  %v335 = vld [vmem:[%s1 + $0x4a0] sm:$0xf]
  %v336 = vld [vmem:[%s1 + $0x4a4] sm:$0xf]
  %v337 = vld [vmem:[%s1 + $0x4a8] sm:$0xf]
  %v338 = vld [vmem:[%s1 + $0x4ac] sm:$0xf]
  %v339 = vld [vmem:[%s1 + $0x4b0] sm:$0xf]
  %v340 = vld [vmem:[%s1 + $0x4b4] sm:$0xf]
  %v341 = vld [vmem:[%s1 + $0x4b8] sm:$0xf]
  %v342 = vld [vmem:[%s1 + $0x4bc] sm:$0xf]
  %v343 = vld [vmem:[%s1 + $0x4c0] sm:$0xf]
  %v344 = vld [vmem:[%s1 + $0x4c4] sm:$0xf]
  %v345 = vld [vmem:[%s1 + $0x4c8] sm:$0xf]
  %v346 = vld [vmem:[%s1 + $0x4cc] sm:$0xf]
  %v347 = vld [vmem:[%s1 + $0x4d0] sm:$0xf]
  %v348 = vld [vmem:[%s1 + $0x4d4] sm:$0xf]
  %v349 = vld [vmem:[%s1 + $0x4d8] sm:$0xf]
  %v350 = vld [vmem:[%s1 + $0x4dc] sm:$0xf]
  %v351 = vld [vmem:[%s1 + $0x4e0] sm:$0xf]
  %v352 = vld [vmem:[%s1 + $0x4e4] sm:$0xf]
  %v353 = vld [vmem:[%s1 + $0x4e8] sm:$0xf]
  %v354 = vld [vmem:[%s1 + $0x4ec] sm:$0xf]
  %v355 = vld [vmem:[%s1 + $0x4f0] sm:$0xf]
  %v356 = vld [vmem:[%s1 + $0x4f4] sm:$0xf]
  %v357 = vld [vmem:[%s1 + $0x4f8] sm:$0xf]
  %v358 = vld [vmem:[%s1 + $0x4fc] sm:$0xf]
  %v359 = vld [vmem:[%s1 + $0x500] sm:$0xf]
  %v360 = vld [vmem:[%s1 + $0x504] sm:$0xf]
  %v361 = vld [vmem:[%s1 + $0x508] sm:$0xf]
  %v362 = vld [vmem:[%s1 + $0x50c] sm:$0xf]
  %v363 = vld [vmem:[%s1 + $0x510] sm:$0xf]
  %v364 = vld [vmem:[%s1 + $0x514] sm:$0xf]
  %v365 = vld [vmem:[%s1 + $0x518] sm:$0xf]
  %v366 = vld [vmem:[%s1 + $0x51c] sm:$0xf]
  %v367 = vld [vmem:[%s1 + $0x520] sm:$0xf]
  %v368 = vld [vmem:[%s1 + $0x524] sm:$0xf]
  %v369 = vld [vmem:[%s1 + $0x528] sm:$0xf]
  %v370 = vld [vmem:[%s1 + $0x52c] sm:$0xf]
  %v371 = vld [vmem:[%s1 + $0x530] sm:$0xf]
  %v372 = vld [vmem:[%s1 + $0x534] sm:$0xf]
  %v373 = vld [vmem:[%s1 + $0x538] sm:$0xf]
  %v374 = vld [vmem:[%s1 + $0x53c] sm:$0xf]
  %v375 = vld [vmem:[%s1 + $0x540] sm:$0xf]
  %v376 = vld [vmem:[%s1 + $0x544] sm:$0xf]
  %v377 = vld [vmem:[%s1 + $0x548] sm:$0xf]
  %v378 = vld [vmem:[%s1 + $0x54c] sm:$0xf]
  %v379 = vld [vmem:[%s1 + $0x550] sm:$0xf]
  %v380 = vld [vmem:[%s1 + $0x554] sm:$0xf]
  %v381 = vld [vmem:[%s1 + $0x558] sm:$0xf]
  %v382 = vld [vmem:[%s1 + $0x55c] sm:$0xf]
  %v383 = vld [vmem:[%s1 + $0x560] sm:$0xf]
  %v384 = vld [vmem:[%s1 + $0x564] sm:$0xf]
  %v385 = vld [vmem:[%s1 + $0x568] sm:$0xf]
  %v386 = vld [vmem:[%s1 + $0x56c] sm:$0xf]
  %v387 = vld [vmem:[%s1 + $0x570] sm:$0xf]
  %v388 = vld [vmem:[%s1 + $0x574] sm:$0xf]
  %v389 = vld [vmem:[%s1 + $0x578] sm:$0xf]
  %v390 = vld [vmem:[%s1 + $0x57c] sm:$0xf]
  %v391 = vld [vmem:[%s1 + $0x580] sm:$0xf]
  %v392 = vld [vmem:[%s1 + $0x584] sm:$0xf]
  %v393 = vld [vmem:[%s1 + $0x588] sm:$0xf]
  %v394 = vld [vmem:[%s1 + $0x58c] sm:$0xf]
  %v395 = vld [vmem:[%s1 + $0x590] sm:$0xf]
  %v396 = vld [vmem:[%s1 + $0x594] sm:$0xf]
  %v397 = vld [vmem:[%s1 + $0x598] sm:$0xf]
  %v398 = vld [vmem:[%s1 + $0x59c] sm:$0xf]
  %v399 = vld [vmem:[%s1 + $0x5a0] sm:$0xf]
  %v400 = vld [vmem:[%s1 + $0x5a4] sm:$0xf]
  %v401 = vld [vmem:[%s1 + $0x5a8] sm:$0xf]
  %v402 = vld [vmem:[%s1 + $0x5ac] sm:$0xf]
  %v403 = vld [vmem:[%s1 + $0x5b0] sm:$0xf]
  %v404 = vld [vmem:[%s1 + $0x5b4] sm:$0xf]
  %v405 = vld [vmem:[%s1 + $0x5b8] sm:$0xf]
  %v406 = vld [vmem:[%s1 + $0x5bc] sm:$0xf]
  %v407 = vld [vmem:[%s1 + $0x5c0] sm:$0xf]
  %v408 = vld [vmem:[%s1 + $0x5c4] sm:$0xf]
  %v409 = vld [vmem:[%s1 + $0x5c8] sm:$0xf]
  %v410 = vld [vmem:[%s1 + $0x5cc] sm:$0xf]
  %v411 = vld [vmem:[%s1 + $0x5d0] sm:$0xf]
  %v412 = vld [vmem:[%s1 + $0x5d4] sm:$0xf]
  %v413 = vld [vmem:[%s1 + $0x5d8] sm:$0xf]
  %v414 = vld [vmem:[%s1 + $0x5dc] sm:$0xf]
  %v415 = vld [vmem:[%s1 + $0x5e0] sm:$0xf]
  %v416 = vld [vmem:[%s1 + $0x5e4] sm:$0xf]
  %v417 = vld [vmem:[%s1 + $0x5e8] sm:$0xf]
  %v418 = vld [vmem:[%s1 + $0x5ec] sm:$0xf]
  %v419 = vld [vmem:[%s1 + $0x5f0] sm:$0xf]
  %v420 = vld [vmem:[%s1 + $0x5f4] sm:$0xf]
  %v421 = vld [vmem:[%s1 + $0x5f8] sm:$0xf]
  %v422 = vld [vmem:[%s1 + $0x5fc] sm:$0xf]
  %v423 = vld [vmem:[%s2] sm:$0x1]
  %v425 = vlaneseq
  %v426 = vshrl.u32 %v425, 7
  %v427 = vsub.s32 0, %v426
  %v428 = vrot.slane %v423, %v427
  %v454 = vunpack.c.l.b16 %v15
  %v455 = vunpack.c.h.b16 %v15
  %v456 = vunpack.c.l.b16 %v16
  %v457 = vunpack.c.h.b16 %v16
  %v458 = vunpack.c.l.b16 %v17
  %v459 = vunpack.c.h.b16 %v17
  %v460 = vunpack.c.l.b16 %v18
  %v461 = vunpack.c.h.b16 %v18
  %v462 = vunpack.c.l.b16 %v19
  %v463 = vunpack.c.h.b16 %v19
  %v464 = vunpack.c.l.b16 %v20
  %v465 = vunpack.c.h.b16 %v20
  %v466 = vunpack.c.l.b16 %v21
  %v467 = vunpack.c.h.b16 %v21
  %v468 = vunpack.c.l.b16 %v22
  %v469 = vunpack.c.h.b16 %v22
  %v470 = vunpack.c.l.b16 %v23
  %v471 = vunpack.c.h.b16 %v23
  %v472 = vunpack.c.l.b16 %v24
  %v473 = vunpack.c.h.b16 %v24
  %v474 = vunpack.c.l.b16 %v25
  %v475 = vunpack.c.h.b16 %v25
  %v476 = vunpack.c.l.b16 %v26
  %v477 = vunpack.c.h.b16 %v26
  %v478 = vunpack.c.l.b16 %v27
  %v479 = vunpack.c.h.b16 %v27
  %v480 = vunpack.c.l.b16 %v28
  %v481 = vunpack.c.h.b16 %v28
  %v482 = vunpack.c.l.b16 %v29
  %v483 = vunpack.c.h.b16 %v29
  %v484 = vunpack.c.l.b16 %v30
  %v485 = vunpack.c.h.b16 %v30
  %v486 = vunpack.c.l.b16 %v31
  %v487 = vunpack.c.h.b16 %v31
  %v488 = vunpack.c.l.b16 %v32
  %v489 = vunpack.c.h.b16 %v32
  %v490 = vunpack.c.l.b16 %v33
  %v491 = vunpack.c.h.b16 %v33
  %v492 = vunpack.c.l.b16 %v34
  %v493 = vunpack.c.h.b16 %v34
  %v494 = vunpack.c.l.b16 %v35
  %v495 = vunpack.c.h.b16 %v35
  %v496 = vunpack.c.l.b16 %v36
  %v497 = vunpack.c.h.b16 %v36
  %v498 = vunpack.c.l.b16 %v37
  %v499 = vunpack.c.h.b16 %v37
  %v500 = vunpack.c.l.b16 %v38
  %v501 = vunpack.c.h.b16 %v38
  %v502 = vpack.c.b16 %v478, %v454
  %v503 = vpack.c.b16 %v479, %v455
  %v504 = vpack.c.b16 %v480, %v456
  %v505 = vpack.c.b16 %v481, %v457
  %v506 = vpack.c.b16 %v482, %v458
  %v507 = vpack.c.b16 %v483, %v459
  %v508 = vpack.c.b16 %v484, %v460
  %v509 = vpack.c.b16 %v485, %v461
  %v510 = vpack.c.b16 %v486, %v462
  %v511 = vpack.c.b16 %v487, %v463
  %v512 = vpack.c.b16 %v488, %v464
  %v513 = vpack.c.b16 %v489, %v465
  %v514 = vpack.c.b16 %v490, %v466
  %v515 = vpack.c.b16 %v491, %v467
  %v516 = vpack.c.b16 %v492, %v468
  %v517 = vpack.c.b16 %v493, %v469
  %v518 = vpack.c.b16 %v494, %v470
  %v519 = vpack.c.b16 %v495, %v471
  %v520 = vpack.c.b16 %v496, %v472
  %v521 = vpack.c.b16 %v497, %v473
  %v522 = vpack.c.b16 %v498, %v474
  %v523 = vpack.c.b16 %v499, %v475
  %v524 = vpack.c.b16 %v500, %v476
  %v525 = vpack.c.b16 %v501, %v477
  %v934 = vunpack.c.l.b16 %v39
  %v935 = vunpack.c.l.b16 %v40
  %v936 = vunpack.c.l.b16 %v41
  %v937 = vunpack.c.l.b16 %v42
  %v938 = vunpack.c.l.b16 %v43
  %v939 = vunpack.c.l.b16 %v44
  %v940 = vunpack.c.l.b16 %v45
  %v941 = vunpack.c.l.b16 %v46
  %v942 = vunpack.c.l.b16 %v47
  %v943 = vunpack.c.l.b16 %v48
  %v944 = vunpack.c.l.b16 %v49
  %v945 = vunpack.c.l.b16 %v50
  %v946 = vunpack.c.l.b16 %v51
  %v947 = vunpack.c.l.b16 %v52
  %v948 = vunpack.c.l.b16 %v53
  %v949 = vunpack.c.l.b16 %v54
  %v950 = vunpack.c.l.b16 %v55
  %v951 = vunpack.c.l.b16 %v56
  %v952 = vunpack.c.l.b16 %v57
  %v953 = vunpack.c.l.b16 %v58
  %v954 = vunpack.c.l.b16 %v59
  %v955 = vunpack.c.l.b16 %v60
  %v956 = vunpack.c.l.b16 %v61
  %v957 = vunpack.c.l.b16 %v62
  %v958 = vunpack.c.l.b16 %v63
  %v959 = vunpack.c.l.b16 %v64
  %v960 = vunpack.c.l.b16 %v65
  %v961 = vunpack.c.l.b16 %v66
  %v962 = vunpack.c.l.b16 %v67
  %v963 = vunpack.c.l.b16 %v68
  %v964 = vunpack.c.l.b16 %v69
  %v965 = vunpack.c.l.b16 %v70
  %v966 = vunpack.c.l.b16 %v71
  %v967 = vunpack.c.l.b16 %v72
  %v968 = vunpack.c.l.b16 %v73
  %v969 = vunpack.c.l.b16 %v74
  %v970 = vunpack.c.l.b16 %v75
  %v971 = vunpack.c.l.b16 %v76
  %v972 = vunpack.c.l.b16 %v77
  %v973 = vunpack.c.l.b16 %v78
  %v974 = vunpack.c.l.b16 %v79
  %v975 = vunpack.c.l.b16 %v80
  %v976 = vunpack.c.l.b16 %v81
  %v977 = vunpack.c.l.b16 %v82
  %v978 = vunpack.c.l.b16 %v83
  %v979 = vunpack.c.l.b16 %v84
  %v980 = vunpack.c.l.b16 %v85
  %v981 = vunpack.c.l.b16 %v86
  %v982 = vunpack.c.l.b16 %v87
  %v983 = vunpack.c.l.b16 %v88
  %v984 = vunpack.c.l.b16 %v89
  %v985 = vunpack.c.l.b16 %v90
  %v986 = vunpack.c.l.b16 %v91
  %v987 = vunpack.c.l.b16 %v92
  %v988 = vunpack.c.l.b16 %v93
  %v989 = vunpack.c.l.b16 %v94
  %v990 = vunpack.c.l.b16 %v95
  %v991 = vunpack.c.l.b16 %v96
  %v992 = vunpack.c.l.b16 %v97
  %v993 = vunpack.c.l.b16 %v98
  %v994 = vunpack.c.l.b16 %v99
  %v995 = vunpack.c.l.b16 %v100
  %v996 = vunpack.c.l.b16 %v101
  %v997 = vunpack.c.l.b16 %v102
  %v998 = vunpack.c.l.b16 %v103
  %v999 = vunpack.c.l.b16 %v104
  %v1000 = vunpack.c.l.b16 %v105
  %v1001 = vunpack.c.l.b16 %v106
  %v1002 = vunpack.c.l.b16 %v107
  %v1003 = vunpack.c.l.b16 %v108
  %v1004 = vunpack.c.l.b16 %v109
  %v1005 = vunpack.c.l.b16 %v110
  %v1006 = vunpack.c.l.b16 %v111
  %v1007 = vunpack.c.l.b16 %v112
  %v1008 = vunpack.c.l.b16 %v113
  %v1009 = vunpack.c.l.b16 %v114
  %v1010 = vunpack.c.l.b16 %v115
  %v1011 = vunpack.c.l.b16 %v116
  %v1012 = vunpack.c.l.b16 %v117
  %v1013 = vunpack.c.l.b16 %v118
  %v1014 = vunpack.c.l.b16 %v119
  %v1015 = vunpack.c.l.b16 %v120
  %v1016 = vunpack.c.l.b16 %v121
  %v1017 = vunpack.c.l.b16 %v122
  %v1018 = vunpack.c.l.b16 %v123
  %v1019 = vunpack.c.l.b16 %v124
  %v1020 = vunpack.c.l.b16 %v125
  %v1021 = vunpack.c.l.b16 %v126
  %v1022 = vunpack.c.l.b16 %v127
  %v1023 = vunpack.c.l.b16 %v128
  %v1024 = vunpack.c.l.b16 %v129
  %v1025 = vunpack.c.l.b16 %v130
  %v1026 = vunpack.c.l.b16 %v131
  %v1027 = vunpack.c.l.b16 %v132
  %v1028 = vunpack.c.l.b16 %v133
  %v1029 = vunpack.c.l.b16 %v134
  %v1030 = vunpack.c.l.b16 %v135
  %v1031 = vunpack.c.l.b16 %v136
  %v1032 = vunpack.c.l.b16 %v137
  %v1033 = vunpack.c.l.b16 %v138
  %v1034 = vunpack.c.l.b16 %v139
  %v1035 = vunpack.c.l.b16 %v140
  %v1036 = vunpack.c.l.b16 %v141
  %v1037 = vunpack.c.l.b16 %v142
  %v1038 = vunpack.c.l.b16 %v143
  %v1039 = vunpack.c.l.b16 %v144
  %v1040 = vunpack.c.l.b16 %v145
  %v1041 = vunpack.c.l.b16 %v146
  %v1042 = vunpack.c.l.b16 %v147
  %v1043 = vunpack.c.l.b16 %v148
  %v1044 = vunpack.c.l.b16 %v149
  %v1045 = vunpack.c.l.b16 %v150
  %v1046 = vunpack.c.l.b16 %v151
  %v1047 = vunpack.c.l.b16 %v152
  %v1048 = vunpack.c.l.b16 %v153
  %v1049 = vunpack.c.l.b16 %v154
  %v1050 = vunpack.c.l.b16 %v155
  %v1051 = vunpack.c.l.b16 %v156
  %v1052 = vunpack.c.l.b16 %v157
  %v1053 = vunpack.c.l.b16 %v158
  %v1054 = vunpack.c.l.b16 %v159
  %v1055 = vunpack.c.l.b16 %v160
  %v1056 = vunpack.c.l.b16 %v161
  %v1057 = vunpack.c.l.b16 %v162
  %v1058 = vunpack.c.l.b16 %v163
  %v1059 = vunpack.c.l.b16 %v164
  %v1060 = vunpack.c.l.b16 %v165
  %v1061 = vunpack.c.l.b16 %v166
  %v1062 = vunpack.c.l.b16 %v167
  %v1063 = vunpack.c.l.b16 %v168
  %v1064 = vunpack.c.l.b16 %v169
  %v1065 = vunpack.c.l.b16 %v170
  %v1066 = vunpack.c.l.b16 %v171
  %v1067 = vunpack.c.l.b16 %v172
  %v1068 = vunpack.c.l.b16 %v173
  %v1069 = vunpack.c.l.b16 %v174
  %v1070 = vunpack.c.l.b16 %v175
  %v1071 = vunpack.c.l.b16 %v176
  %v1072 = vunpack.c.l.b16 %v177
  %v1073 = vunpack.c.l.b16 %v178
  %v1074 = vunpack.c.l.b16 %v179
  %v1075 = vunpack.c.l.b16 %v180
  %v1076 = vunpack.c.l.b16 %v181
  %v1077 = vunpack.c.l.b16 %v182
  %v1078 = vunpack.c.l.b16 %v183
  %v1079 = vunpack.c.l.b16 %v184
  %v1080 = vunpack.c.l.b16 %v185
  %v1081 = vunpack.c.l.b16 %v186
  %v1082 = vunpack.c.l.b16 %v187
  %v1083 = vunpack.c.l.b16 %v188
  %v1084 = vunpack.c.l.b16 %v189
  %v1085 = vunpack.c.l.b16 %v190
  %v1086 = vunpack.c.l.b16 %v191
  %v1087 = vunpack.c.l.b16 %v192
  %v1088 = vunpack.c.l.b16 %v193
  %v1089 = vunpack.c.l.b16 %v194
  %v1090 = vunpack.c.l.b16 %v195
  %v1091 = vunpack.c.l.b16 %v196
  %v1092 = vunpack.c.l.b16 %v197
  %v1093 = vunpack.c.l.b16 %v198
  %v1094 = vunpack.c.l.b16 %v199
  %v1095 = vunpack.c.l.b16 %v200
  %v1096 = vunpack.c.l.b16 %v201
  %v1097 = vunpack.c.l.b16 %v202
  %v1098 = vunpack.c.l.b16 %v203
  %v1099 = vunpack.c.l.b16 %v204
  %v1100 = vunpack.c.l.b16 %v205
  %v1101 = vunpack.c.l.b16 %v206
  %v1102 = vunpack.c.l.b16 %v207
  %v1103 = vunpack.c.l.b16 %v208
  %v1104 = vunpack.c.l.b16 %v209
  %v1105 = vunpack.c.l.b16 %v210
  %v1106 = vunpack.c.l.b16 %v211
  %v1107 = vunpack.c.l.b16 %v212
  %v1108 = vunpack.c.l.b16 %v213
  %v1109 = vunpack.c.l.b16 %v214
  %v1110 = vunpack.c.l.b16 %v215
  %v1111 = vunpack.c.l.b16 %v216
  %v1112 = vunpack.c.l.b16 %v217
  %v1113 = vunpack.c.l.b16 %v218
  %v1114 = vunpack.c.l.b16 %v219
  %v1115 = vunpack.c.l.b16 %v220
  %v1116 = vunpack.c.l.b16 %v221
  %v1117 = vunpack.c.l.b16 %v222
  %v1118 = vunpack.c.l.b16 %v223
  %v1119 = vunpack.c.l.b16 %v224
  %v1120 = vunpack.c.l.b16 %v225
  %v1121 = vunpack.c.l.b16 %v226
  %v1122 = vunpack.c.l.b16 %v227
  %v1123 = vunpack.c.l.b16 %v228
  %v1124 = vunpack.c.l.b16 %v229
  %v1125 = vunpack.c.l.b16 %v230
  %v1126 = vunpack.c.l.b16 %v231
  %v1127 = vunpack.c.l.b16 %v232
  %v1128 = vunpack.c.l.b16 %v233
  %v1129 = vunpack.c.l.b16 %v234
  %v1130 = vunpack.c.l.b16 %v235
  %v1131 = vunpack.c.l.b16 %v236
  %v1132 = vunpack.c.l.b16 %v237
  %v1133 = vunpack.c.l.b16 %v238
  %v1134 = vunpack.c.l.b16 %v239
  %v1135 = vunpack.c.l.b16 %v240
  %v1136 = vunpack.c.l.b16 %v241
  %v1137 = vunpack.c.l.b16 %v242
  %v1138 = vunpack.c.l.b16 %v243
  %v1139 = vunpack.c.l.b16 %v244
  %v1140 = vunpack.c.l.b16 %v245
  %v1141 = vunpack.c.l.b16 %v246
  %v1142 = vunpack.c.l.b16 %v247
  %v1143 = vunpack.c.l.b16 %v248
  %v1144 = vunpack.c.l.b16 %v249
  %v1145 = vunpack.c.l.b16 %v250
  %v1146 = vunpack.c.l.b16 %v251
  %v1147 = vunpack.c.l.b16 %v252
  %v1148 = vunpack.c.l.b16 %v253
  %v1149 = vunpack.c.l.b16 %v254
  %v1150 = vunpack.c.l.b16 %v255
  %v1151 = vunpack.c.l.b16 %v256
  %v1152 = vunpack.c.l.b16 %v257
  %v1153 = vunpack.c.l.b16 %v258
  %v1154 = vunpack.c.l.b16 %v259
  %v1155 = vunpack.c.l.b16 %v260
  %v1156 = vunpack.c.l.b16 %v261
  %v1157 = vunpack.c.l.b16 %v262
  %v1158 = vunpack.c.l.b16 %v263
  %v1159 = vunpack.c.l.b16 %v264
  %v1160 = vunpack.c.l.b16 %v265
  %v1161 = vunpack.c.l.b16 %v266
  %v1162 = vunpack.c.l.b16 %v267
  %v1163 = vunpack.c.l.b16 %v268
  %v1164 = vunpack.c.l.b16 %v269
  %v1165 = vunpack.c.l.b16 %v270
  %v1166 = vunpack.c.l.b16 %v271
  %v1167 = vunpack.c.l.b16 %v272
  %v1168 = vunpack.c.l.b16 %v273
  %v1169 = vunpack.c.l.b16 %v274
  %v1170 = vunpack.c.l.b16 %v275
  %v1171 = vunpack.c.l.b16 %v276
  %v1172 = vunpack.c.l.b16 %v277
  %v1173 = vunpack.c.l.b16 %v278
  %v1174 = vunpack.c.l.b16 %v279
  %v1175 = vunpack.c.l.b16 %v280
  %v1176 = vunpack.c.l.b16 %v281
  %v1177 = vunpack.c.l.b16 %v282
  %v1178 = vunpack.c.l.b16 %v283
  %v1179 = vunpack.c.l.b16 %v284
  %v1180 = vunpack.c.l.b16 %v285
  %v1181 = vunpack.c.l.b16 %v286
  %v1182 = vunpack.c.l.b16 %v287
  %v1183 = vunpack.c.l.b16 %v288
  %v1184 = vunpack.c.l.b16 %v289
  %v1185 = vunpack.c.l.b16 %v290
  %v1186 = vunpack.c.l.b16 %v291
  %v1187 = vunpack.c.l.b16 %v292
  %v1188 = vunpack.c.l.b16 %v293
  %v1189 = vunpack.c.l.b16 %v294
  %v1190 = vunpack.c.l.b16 %v295
  %v1191 = vunpack.c.l.b16 %v296
  %v1192 = vunpack.c.l.b16 %v297
  %v1193 = vunpack.c.l.b16 %v298
  %v1194 = vunpack.c.l.b16 %v299
  %v1195 = vunpack.c.l.b16 %v300
  %v1196 = vunpack.c.l.b16 %v301
  %v1197 = vunpack.c.l.b16 %v302
  %v1198 = vunpack.c.l.b16 %v303
  %v1199 = vunpack.c.l.b16 %v304
  %v1200 = vunpack.c.l.b16 %v305
  %v1201 = vunpack.c.l.b16 %v306
  %v1202 = vunpack.c.l.b16 %v307
  %v1203 = vunpack.c.l.b16 %v308
  %v1204 = vunpack.c.l.b16 %v309
  %v1205 = vunpack.c.l.b16 %v310
  %v1206 = vunpack.c.l.b16 %v311
  %v1207 = vunpack.c.l.b16 %v312
  %v1208 = vunpack.c.l.b16 %v313
  %v1209 = vunpack.c.l.b16 %v314
  %v1210 = vunpack.c.l.b16 %v315
  %v1211 = vunpack.c.l.b16 %v316
  %v1212 = vunpack.c.l.b16 %v317
  %v1213 = vunpack.c.l.b16 %v318
  %v1214 = vunpack.c.l.b16 %v319
  %v1215 = vunpack.c.l.b16 %v320
  %v1216 = vunpack.c.l.b16 %v321
  %v1217 = vunpack.c.l.b16 %v322
  %v1218 = vunpack.c.l.b16 %v323
  %v1219 = vunpack.c.l.b16 %v324
  %v1220 = vunpack.c.l.b16 %v325
  %v1221 = vunpack.c.l.b16 %v326
  %v1222 = vunpack.c.l.b16 %v327
  %v1223 = vunpack.c.l.b16 %v328
  %v1224 = vunpack.c.l.b16 %v329
  %v1225 = vunpack.c.l.b16 %v330
  %v1226 = vunpack.c.l.b16 %v331
  %v1227 = vunpack.c.l.b16 %v332
  %v1228 = vunpack.c.l.b16 %v333
  %v1229 = vunpack.c.l.b16 %v334
  %v1230 = vunpack.c.l.b16 %v335
  %v1231 = vunpack.c.l.b16 %v336
  %v1232 = vunpack.c.l.b16 %v337
  %v1233 = vunpack.c.l.b16 %v338
  %v1234 = vunpack.c.l.b16 %v339
  %v1235 = vunpack.c.l.b16 %v340
  %v1236 = vunpack.c.l.b16 %v341
  %v1237 = vunpack.c.l.b16 %v342
  %v1238 = vunpack.c.l.b16 %v343
  %v1239 = vunpack.c.l.b16 %v344
  %v1240 = vunpack.c.l.b16 %v345
  %v1241 = vunpack.c.l.b16 %v346
  %v1242 = vunpack.c.l.b16 %v347
  %v1243 = vunpack.c.l.b16 %v348
  %v1244 = vunpack.c.l.b16 %v349
  %v1245 = vunpack.c.l.b16 %v350
  %v1246 = vunpack.c.l.b16 %v351
  %v1247 = vunpack.c.l.b16 %v352
  %v1248 = vunpack.c.l.b16 %v353
  %v1249 = vunpack.c.l.b16 %v354
  %v1250 = vunpack.c.l.b16 %v355
  %v1251 = vunpack.c.l.b16 %v356
  %v1252 = vunpack.c.l.b16 %v357
  %v1253 = vunpack.c.l.b16 %v358
  %v1254 = vunpack.c.l.b16 %v359
  %v1255 = vunpack.c.l.b16 %v360
  %v1256 = vunpack.c.l.b16 %v361
  %v1257 = vunpack.c.l.b16 %v362
  %v1258 = vunpack.c.l.b16 %v363
  %v1259 = vunpack.c.l.b16 %v364
  %v1260 = vunpack.c.l.b16 %v365
  %v1261 = vunpack.c.l.b16 %v366
  %v1262 = vunpack.c.l.b16 %v367
  %v1263 = vunpack.c.l.b16 %v368
  %v1264 = vunpack.c.l.b16 %v369
  %v1265 = vunpack.c.l.b16 %v370
  %v1266 = vunpack.c.l.b16 %v371
  %v1267 = vunpack.c.l.b16 %v372
  %v1268 = vunpack.c.l.b16 %v373
  %v1269 = vunpack.c.l.b16 %v374
  %v1270 = vunpack.c.l.b16 %v375
  %v1271 = vunpack.c.l.b16 %v376
  %v1272 = vunpack.c.l.b16 %v377
  %v1273 = vunpack.c.l.b16 %v378
  %v1274 = vunpack.c.l.b16 %v379
  %v1275 = vunpack.c.l.b16 %v380
  %v1276 = vunpack.c.l.b16 %v381
  %v1277 = vunpack.c.l.b16 %v382
  %v1278 = vunpack.c.l.b16 %v383
  %v1279 = vunpack.c.l.b16 %v384
  %v1280 = vunpack.c.l.b16 %v385
  %v1281 = vunpack.c.l.b16 %v386
  %v1282 = vunpack.c.l.b16 %v387
  %v1283 = vunpack.c.l.b16 %v388
  %v1284 = vunpack.c.l.b16 %v389
  %v1285 = vunpack.c.l.b16 %v390
  %v1286 = vunpack.c.l.b16 %v391
  %v1287 = vunpack.c.l.b16 %v392
  %v1288 = vunpack.c.l.b16 %v393
  %v1289 = vunpack.c.l.b16 %v394
  %v1290 = vunpack.c.l.b16 %v395
  %v1291 = vunpack.c.l.b16 %v396
  %v1292 = vunpack.c.l.b16 %v397
  %v1293 = vunpack.c.l.b16 %v398
  %v1294 = vunpack.c.l.b16 %v399
  %v1295 = vunpack.c.l.b16 %v400
  %v1296 = vunpack.c.l.b16 %v401
  %v1297 = vunpack.c.l.b16 %v402
  %v1298 = vunpack.c.l.b16 %v403
  %v1299 = vunpack.c.l.b16 %v404
  %v1300 = vunpack.c.l.b16 %v405
  %v1301 = vunpack.c.l.b16 %v406
  %v1302 = vunpack.c.l.b16 %v407
  %v1303 = vunpack.c.l.b16 %v408
  %v1304 = vunpack.c.l.b16 %v409
  %v1305 = vunpack.c.l.b16 %v410
  %v1306 = vunpack.c.l.b16 %v411
  %v1307 = vunpack.c.l.b16 %v412
  %v1308 = vunpack.c.l.b16 %v413
  %v1309 = vunpack.c.l.b16 %v414
  %v1310 = vunpack.c.l.b16 %v415
  %v1311 = vunpack.c.l.b16 %v416
  %v1312 = vunpack.c.l.b16 %v417
  %v1313 = vunpack.c.l.b16 %v418
  %v1314 = vunpack.c.l.b16 %v419
  %v1315 = vunpack.c.l.b16 %v420
  %v1316 = vunpack.c.l.b16 %v421
  %v1317 = vunpack.c.l.b16 %v422
  %v1318 = vpack.c.b16 %v935, %v934
  %v1319 = vpack.c.b16 %v937, %v936
  %v1320 = vpack.c.b16 %v939, %v938
  %v1321 = vpack.c.b16 %v941, %v940
  %v1322 = vpack.c.b16 %v943, %v942
  %v1323 = vpack.c.b16 %v945, %v944
  %v1324 = vpack.c.b16 %v947, %v946
  %v1325 = vpack.c.b16 %v949, %v948
  %v1326 = vpack.c.b16 %v951, %v950
  %v1327 = vpack.c.b16 %v953, %v952
  %v1328 = vpack.c.b16 %v955, %v954
  %v1329 = vpack.c.b16 %v957, %v956
  %v1330 = vpack.c.b16 %v959, %v958
  %v1331 = vpack.c.b16 %v961, %v960
  %v1332 = vpack.c.b16 %v963, %v962
  %v1333 = vpack.c.b16 %v965, %v964
  %v1334 = vpack.c.b16 %v967, %v966
  %v1335 = vpack.c.b16 %v969, %v968
  %v1336 = vpack.c.b16 %v971, %v970
  %v1337 = vpack.c.b16 %v973, %v972
  %v1338 = vpack.c.b16 %v975, %v974
  %v1339 = vpack.c.b16 %v977, %v976
  %v1340 = vpack.c.b16 %v979, %v978
  %v1341 = vpack.c.b16 %v981, %v980
  %v1342 = vpack.c.b16 %v983, %v982
  %v1343 = vpack.c.b16 %v985, %v984
  %v1344 = vpack.c.b16 %v987, %v986
  %v1345 = vpack.c.b16 %v989, %v988
  %v1346 = vpack.c.b16 %v991, %v990
  %v1347 = vpack.c.b16 %v993, %v992
  %v1348 = vpack.c.b16 %v995, %v994
  %v1349 = vpack.c.b16 %v997, %v996
  %v1350 = vpack.c.b16 %v999, %v998
  %v1351 = vpack.c.b16 %v1001, %v1000
  %v1352 = vpack.c.b16 %v1003, %v1002
  %v1353 = vpack.c.b16 %v1005, %v1004
  %v1354 = vpack.c.b16 %v1007, %v1006
  %v1355 = vpack.c.b16 %v1009, %v1008
  %v1356 = vpack.c.b16 %v1011, %v1010
  %v1357 = vpack.c.b16 %v1013, %v1012
  %v1358 = vpack.c.b16 %v1015, %v1014
  %v1359 = vpack.c.b16 %v1017, %v1016
  %v1360 = vpack.c.b16 %v1019, %v1018
  %v1361 = vpack.c.b16 %v1021, %v1020
  %v1362 = vpack.c.b16 %v1023, %v1022
  %v1363 = vpack.c.b16 %v1025, %v1024
  %v1364 = vpack.c.b16 %v1027, %v1026
  %v1365 = vpack.c.b16 %v1029, %v1028
  %v1366 = vpack.c.b16 %v1031, %v1030
  %v1367 = vpack.c.b16 %v1033, %v1032
  %v1368 = vpack.c.b16 %v1035, %v1034
  %v1369 = vpack.c.b16 %v1037, %v1036
  %v1370 = vpack.c.b16 %v1039, %v1038
  %v1371 = vpack.c.b16 %v1041, %v1040
  %v1372 = vpack.c.b16 %v1043, %v1042
  %v1373 = vpack.c.b16 %v1045, %v1044
  %v1374 = vpack.c.b16 %v1047, %v1046
  %v1375 = vpack.c.b16 %v1049, %v1048
  %v1376 = vpack.c.b16 %v1051, %v1050
  %v1377 = vpack.c.b16 %v1053, %v1052
  %v1378 = vpack.c.b16 %v1055, %v1054
  %v1379 = vpack.c.b16 %v1057, %v1056
  %v1380 = vpack.c.b16 %v1059, %v1058
  %v1381 = vpack.c.b16 %v1061, %v1060
  %v1382 = vpack.c.b16 %v1063, %v1062
  %v1383 = vpack.c.b16 %v1065, %v1064
  %v1384 = vpack.c.b16 %v1067, %v1066
  %v1385 = vpack.c.b16 %v1069, %v1068
  %v1386 = vpack.c.b16 %v1071, %v1070
  %v1387 = vpack.c.b16 %v1073, %v1072
  %v1388 = vpack.c.b16 %v1075, %v1074
  %v1389 = vpack.c.b16 %v1077, %v1076
  %v1390 = vpack.c.b16 %v1079, %v1078
  %v1391 = vpack.c.b16 %v1081, %v1080
  %v1392 = vpack.c.b16 %v1083, %v1082
  %v1393 = vpack.c.b16 %v1085, %v1084
  %v1394 = vpack.c.b16 %v1087, %v1086
  %v1395 = vpack.c.b16 %v1089, %v1088
  %v1396 = vpack.c.b16 %v1091, %v1090
  %v1397 = vpack.c.b16 %v1093, %v1092
  %v1398 = vpack.c.b16 %v1095, %v1094
  %v1399 = vpack.c.b16 %v1097, %v1096
  %v1400 = vpack.c.b16 %v1099, %v1098
  %v1401 = vpack.c.b16 %v1101, %v1100
  %v1402 = vpack.c.b16 %v1103, %v1102
  %v1403 = vpack.c.b16 %v1105, %v1104
  %v1404 = vpack.c.b16 %v1107, %v1106
  %v1405 = vpack.c.b16 %v1109, %v1108
  %v1406 = vpack.c.b16 %v1111, %v1110
  %v1407 = vpack.c.b16 %v1113, %v1112
  %v1408 = vpack.c.b16 %v1115, %v1114
  %v1409 = vpack.c.b16 %v1117, %v1116
  %v1410 = vpack.c.b16 %v1119, %v1118
  %v1411 = vpack.c.b16 %v1121, %v1120
  %v1412 = vpack.c.b16 %v1123, %v1122
  %v1413 = vpack.c.b16 %v1125, %v1124
  %v1414 = vpack.c.b16 %v1127, %v1126
  %v1415 = vpack.c.b16 %v1129, %v1128
  %v1416 = vpack.c.b16 %v1131, %v1130
  %v1417 = vpack.c.b16 %v1133, %v1132
  %v1418 = vpack.c.b16 %v1135, %v1134
  %v1419 = vpack.c.b16 %v1137, %v1136
  %v1420 = vpack.c.b16 %v1139, %v1138
  %v1421 = vpack.c.b16 %v1141, %v1140
  %v1422 = vpack.c.b16 %v1143, %v1142
  %v1423 = vpack.c.b16 %v1145, %v1144
  %v1424 = vpack.c.b16 %v1147, %v1146
  %v1425 = vpack.c.b16 %v1149, %v1148
  %v1426 = vpack.c.b16 %v1151, %v1150
  %v1427 = vpack.c.b16 %v1153, %v1152
  %v1428 = vpack.c.b16 %v1155, %v1154
  %v1429 = vpack.c.b16 %v1157, %v1156
  %v1430 = vpack.c.b16 %v1159, %v1158
  %v1431 = vpack.c.b16 %v1161, %v1160
  %v1432 = vpack.c.b16 %v1163, %v1162
  %v1433 = vpack.c.b16 %v1165, %v1164
  %v1434 = vpack.c.b16 %v1167, %v1166
  %v1435 = vpack.c.b16 %v1169, %v1168
  %v1436 = vpack.c.b16 %v1171, %v1170
  %v1437 = vpack.c.b16 %v1173, %v1172
  %v1438 = vpack.c.b16 %v1175, %v1174
  %v1439 = vpack.c.b16 %v1177, %v1176
  %v1440 = vpack.c.b16 %v1179, %v1178
  %v1441 = vpack.c.b16 %v1181, %v1180
  %v1442 = vpack.c.b16 %v1183, %v1182
  %v1443 = vpack.c.b16 %v1185, %v1184
  %v1444 = vpack.c.b16 %v1187, %v1186
  %v1445 = vpack.c.b16 %v1189, %v1188
  %v1446 = vpack.c.b16 %v1191, %v1190
  %v1447 = vpack.c.b16 %v1193, %v1192
  %v1448 = vpack.c.b16 %v1195, %v1194
  %v1449 = vpack.c.b16 %v1197, %v1196
  %v1450 = vpack.c.b16 %v1199, %v1198
  %v1451 = vpack.c.b16 %v1201, %v1200
  %v1452 = vpack.c.b16 %v1203, %v1202
  %v1453 = vpack.c.b16 %v1205, %v1204
  %v1454 = vpack.c.b16 %v1207, %v1206
  %v1455 = vpack.c.b16 %v1209, %v1208
  %v1456 = vpack.c.b16 %v1211, %v1210
  %v1457 = vpack.c.b16 %v1213, %v1212
  %v1458 = vpack.c.b16 %v1215, %v1214
  %v1459 = vpack.c.b16 %v1217, %v1216
  %v1460 = vpack.c.b16 %v1219, %v1218
  %v1461 = vpack.c.b16 %v1221, %v1220
  %v1462 = vpack.c.b16 %v1223, %v1222
  %v1463 = vpack.c.b16 %v1225, %v1224
  %v1464 = vpack.c.b16 %v1227, %v1226
  %v1465 = vpack.c.b16 %v1229, %v1228
  %v1466 = vpack.c.b16 %v1231, %v1230
  %v1467 = vpack.c.b16 %v1233, %v1232
  %v1468 = vpack.c.b16 %v1235, %v1234
  %v1469 = vpack.c.b16 %v1237, %v1236
  %v1470 = vpack.c.b16 %v1239, %v1238
  %v1471 = vpack.c.b16 %v1241, %v1240
  %v1472 = vpack.c.b16 %v1243, %v1242
  %v1473 = vpack.c.b16 %v1245, %v1244
  %v1474 = vpack.c.b16 %v1247, %v1246
  %v1475 = vpack.c.b16 %v1249, %v1248
  %v1476 = vpack.c.b16 %v1251, %v1250
  %v1477 = vpack.c.b16 %v1253, %v1252
  %v1478 = vpack.c.b16 %v1255, %v1254
  %v1479 = vpack.c.b16 %v1257, %v1256
  %v1480 = vpack.c.b16 %v1259, %v1258
  %v1481 = vpack.c.b16 %v1261, %v1260
  %v1482 = vpack.c.b16 %v1263, %v1262
  %v1483 = vpack.c.b16 %v1265, %v1264
  %v1484 = vpack.c.b16 %v1267, %v1266
  %v1485 = vpack.c.b16 %v1269, %v1268
  %v1486 = vpack.c.b16 %v1271, %v1270
  %v1487 = vpack.c.b16 %v1273, %v1272
  %v1488 = vpack.c.b16 %v1275, %v1274
  %v1489 = vpack.c.b16 %v1277, %v1276
  %v1490 = vpack.c.b16 %v1279, %v1278
  %v1491 = vpack.c.b16 %v1281, %v1280
  %v1492 = vpack.c.b16 %v1283, %v1282
  %v1493 = vpack.c.b16 %v1285, %v1284
  %v1494 = vpack.c.b16 %v1287, %v1286
  %v1495 = vpack.c.b16 %v1289, %v1288
  %v1496 = vpack.c.b16 %v1291, %v1290
  %v1497 = vpack.c.b16 %v1293, %v1292
  %v1498 = vpack.c.b16 %v1295, %v1294
  %v1499 = vpack.c.b16 %v1297, %v1296
  %v1500 = vpack.c.b16 %v1299, %v1298
  %v1501 = vpack.c.b16 %v1301, %v1300
  %v1502 = vpack.c.b16 %v1303, %v1302
  %v1503 = vpack.c.b16 %v1305, %v1304
  %v1504 = vpack.c.b16 %v1307, %v1306
  %v1505 = vpack.c.b16 %v1309, %v1308
  %v1506 = vpack.c.b16 %v1311, %v1310
  %v1507 = vpack.c.b16 %v1313, %v1312
  %v1508 = vpack.c.b16 %v1315, %v1314
  %v1509 = vpack.c.b16 %v1317, %v1316
  %1702 = vmatprep.subr.bf16.mxu0 0
  %1703 = vmatpush1.bf16.msra.mxu0 %v1318
  %1704 = vmatprep.subr.bf16.mxu0 0
  %1705 = vmatpush1.bf16.msra.mxu0 %v1319
  %1706 = vmatprep.subr.bf16.mxu0 0
  %1707 = vmatpush1.bf16.msra.mxu0 %v1320
  %1708 = vmatprep.subr.bf16.mxu0 0
  %1709 = vmatpush1.bf16.msra.mxu0 %v1321
  %1710 = vmatprep.subr.bf16.mxu0 0
  %1711 = vmatpush1.bf16.msra.mxu0 %v1322
  %1712 = vmatprep.subr.bf16.mxu0 0
  %1713 = vmatpush1.bf16.msra.mxu0 %v1323
  %1714 = vmatprep.subr.bf16.mxu0 0
  %1715 = vmatpush1.bf16.msra.mxu0 %v1324
  %1716 = vmatprep.subr.bf16.mxu0 0
  %1717 = vmatpush1.bf16.msra.mxu0 %v1325
  %1718 = vmatprep.subr.bf16.mxu0 0
  %1719 = vmatpush1.bf16.msra.mxu0 %v1326
  %1720 = vmatprep.subr.bf16.mxu0 0
  %1721 = vmatpush1.bf16.msra.mxu0 %v1327
  %1722 = vmatprep.subr.bf16.mxu0 0
  %1723 = vmatpush1.bf16.msra.mxu0 %v1328
  %1724 = vmatprep.subr.bf16.mxu0 0
  %1725 = vmatpush1.bf16.msra.mxu0 %v1329
  %1726 = vmatprep.subr.bf16.mxu0 0
  %1727 = vmatpush1.bf16.msra.mxu0 %v1330
  %1728 = vmatprep.subr.bf16.mxu0 0
  %1729 = vmatpush1.bf16.msra.mxu0 %v1331
  %1730 = vmatprep.subr.bf16.mxu0 0
  %1731 = vmatpush1.bf16.msra.mxu0 %v1332
  %1732 = vmatprep.subr.bf16.mxu0 0
  %1733 = vmatpush1.bf16.msra.mxu0 %v1333
  %1734 = vmatprep.mubr.bf16.mxu0 %v503
  %1735 = vmatmul.mubr.bf16.gmra.mrb[0].mxu0 %v502
  %v1736 = vpop.f32.mrb[0].mxu0
  %v1737 = vadd.f32 %v428, %v1736
  %v1738 = vpop.f32.mrb[0].mxu0
  %v1739 = vpop.f32.mrb[0].mxu0
  %v1740 = vadd.f32 %v428, %v1739
  %v1741 = vpop.f32.mrb[0].mxu0
  %1742 = vdwg.mxu0
  %1743 = vmatprep.subr.bf16.mxu0 0
  %1744 = vmatpush1.bf16.msra.mxu0 %v1334
  %1745 = vmatprep.subr.bf16.mxu0 0
  %1746 = vmatpush1.bf16.msra.mxu0 %v1335
  %1747 = vmatprep.subr.bf16.mxu0 0
  %1748 = vmatpush1.bf16.msra.mxu0 %v1336
  %1749 = vmatprep.subr.bf16.mxu0 0
  %1750 = vmatpush1.bf16.msra.mxu0 %v1337
  %1751 = vmatprep.subr.bf16.mxu0 0
  %1752 = vmatpush1.bf16.msra.mxu0 %v1338
  %1753 = vmatprep.subr.bf16.mxu0 0
  %1754 = vmatpush1.bf16.msra.mxu0 %v1339
  %1755 = vmatprep.subr.bf16.mxu0 0
  %1756 = vmatpush1.bf16.msra.mxu0 %v1340
  %1757 = vmatprep.subr.bf16.mxu0 0
  %1758 = vmatpush1.bf16.msra.mxu0 %v1341
  %1759 = vmatprep.subr.bf16.mxu0 0
  %1760 = vmatpush1.bf16.msra.mxu0 %v1342
  %1761 = vmatprep.subr.bf16.mxu0 0
  %1762 = vmatpush1.bf16.msra.mxu0 %v1343
  %1763 = vmatprep.subr.bf16.mxu0 0
  %1764 = vmatpush1.bf16.msra.mxu0 %v1344
  %1765 = vmatprep.subr.bf16.mxu0 0
  %1766 = vmatpush1.bf16.msra.mxu0 %v1345
  %1767 = vmatprep.subr.bf16.mxu0 0
  %1768 = vmatpush1.bf16.msra.mxu0 %v1346
  %1769 = vmatprep.subr.bf16.mxu0 0
  %1770 = vmatpush1.bf16.msra.mxu0 %v1347
  %1771 = vmatprep.subr.bf16.mxu0 0
  %1772 = vmatpush1.bf16.msra.mxu0 %v1348
  %1773 = vmatprep.subr.bf16.mxu0 0
  %1774 = vmatpush1.bf16.msra.mxu0 %v1349
  %1775 = vmatprep.mubr.bf16.mxu0 %v505
  %1776 = vmatmul.mubr.bf16.gmra.mrb[0].mxu0 %v504
  %v1777 = vpop.f32.mrb[0].mxu0
  %v1778 = vadd.f32 %v1737, %v1777
  %v1779 = vpop.f32.mrb[0].mxu0
  %v1780 = vpop.f32.mrb[0].mxu0
  %v1781 = vadd.f32 %v1740, %v1780
  %v1782 = vpop.f32.mrb[0].mxu0
  %1783 = vdwg.mxu0
  %1784 = vmatprep.subr.bf16.mxu0 0
  %1785 = vmatpush1.bf16.msra.mxu0 %v1350
  %1786 = vmatprep.subr.bf16.mxu0 0
  %1787 = vmatpush1.bf16.msra.mxu0 %v1351
  %1788 = vmatprep.subr.bf16.mxu0 0
  %1789 = vmatpush1.bf16.msra.mxu0 %v1352
  %1790 = vmatprep.subr.bf16.mxu0 0
  %1791 = vmatpush1.bf16.msra.mxu0 %v1353
  %1792 = vmatprep.subr.bf16.mxu0 0
  %1793 = vmatpush1.bf16.msra.mxu0 %v1354
  %1794 = vmatprep.subr.bf16.mxu0 0
  %1795 = vmatpush1.bf16.msra.mxu0 %v1355
  %1796 = vmatprep.subr.bf16.mxu0 0
  %1797 = vmatpush1.bf16.msra.mxu0 %v1356
  %1798 = vmatprep.subr.bf16.mxu0 0
  %1799 = vmatpush1.bf16.msra.mxu0 %v1357
  %1800 = vmatprep.subr.bf16.mxu0 0
  %1801 = vmatpush1.bf16.msra.mxu0 %v1358
  %1802 = vmatprep.subr.bf16.mxu0 0
  %1803 = vmatpush1.bf16.msra.mxu0 %v1359
  %1804 = vmatprep.subr.bf16.mxu0 0
  %1805 = vmatpush1.bf16.msra.mxu0 %v1360
  %1806 = vmatprep.subr.bf16.mxu0 0
  %1807 = vmatpush1.bf16.msra.mxu0 %v1361
  %1808 = vmatprep.subr.bf16.mxu0 0
  %1809 = vmatpush1.bf16.msra.mxu0 %v1362
  %1810 = vmatprep.subr.bf16.mxu0 0
  %1811 = vmatpush1.bf16.msra.mxu0 %v1363
  %1812 = vmatprep.subr.bf16.mxu0 0
  %1813 = vmatpush1.bf16.msra.mxu0 %v1364
  %1814 = vmatprep.subr.bf16.mxu0 0
  %1815 = vmatpush1.bf16.msra.mxu0 %v1365
  %1816 = vmatprep.mubr.bf16.mxu0 %v507
  %1817 = vmatmul.mubr.bf16.gmra.mrb[0].mxu0 %v506
  %v1818 = vpop.f32.mrb[0].mxu0
  %v1819 = vadd.f32 %v1778, %v1818
  %v1820 = vpop.f32.mrb[0].mxu0
  %v1821 = vpop.f32.mrb[0].mxu0
  %v1822 = vadd.f32 %v1781, %v1821
  %v1823 = vpop.f32.mrb[0].mxu0
  %1824 = vdwg.mxu0
  %1825 = vmatprep.subr.bf16.mxu0 0
  %1826 = vmatpush1.bf16.msra.mxu0 %v1366
  %1827 = vmatprep.subr.bf16.mxu0 0
  %1828 = vmatpush1.bf16.msra.mxu0 %v1367
  %1829 = vmatprep.subr.bf16.mxu0 0
  %1830 = vmatpush1.bf16.msra.mxu0 %v1368
  %1831 = vmatprep.subr.bf16.mxu0 0
  %1832 = vmatpush1.bf16.msra.mxu0 %v1369
  %1833 = vmatprep.subr.bf16.mxu0 0
  %1834 = vmatpush1.bf16.msra.mxu0 %v1370
  %1835 = vmatprep.subr.bf16.mxu0 0
  %1836 = vmatpush1.bf16.msra.mxu0 %v1371
  %1837 = vmatprep.subr.bf16.mxu0 0
  %1838 = vmatpush1.bf16.msra.mxu0 %v1372
  %1839 = vmatprep.subr.bf16.mxu0 0
  %1840 = vmatpush1.bf16.msra.mxu0 %v1373
  %1841 = vmatprep.subr.bf16.mxu0 0
  %1842 = vmatpush1.bf16.msra.mxu0 %v1374
  %1843 = vmatprep.subr.bf16.mxu0 0
  %1844 = vmatpush1.bf16.msra.mxu0 %v1375
  %1845 = vmatprep.subr.bf16.mxu0 0
  %1846 = vmatpush1.bf16.msra.mxu0 %v1376
  %1847 = vmatprep.subr.bf16.mxu0 0
  %1848 = vmatpush1.bf16.msra.mxu0 %v1377
  %1849 = vmatprep.subr.bf16.mxu0 0
  %1850 = vmatpush1.bf16.msra.mxu0 %v1378
  %1851 = vmatprep.subr.bf16.mxu0 0
  %1852 = vmatpush1.bf16.msra.mxu0 %v1379
  %1853 = vmatprep.subr.bf16.mxu0 0
  %1854 = vmatpush1.bf16.msra.mxu0 %v1380
  %1855 = vmatprep.subr.bf16.mxu0 0
  %1856 = vmatpush1.bf16.msra.mxu0 %v1381
  %1857 = vmatprep.mubr.bf16.mxu0 %v509
  %1858 = vmatmul.mubr.bf16.gmra.mrb[0].mxu0 %v508
  %v1859 = vpop.f32.mrb[0].mxu0
  %v1860 = vadd.f32 %v1819, %v1859
  %v1861 = vpop.f32.mrb[0].mxu0
  %v1862 = vpop.f32.mrb[0].mxu0
  %v1863 = vadd.f32 %v1822, %v1862
  %v1864 = vpop.f32.mrb[0].mxu0
  %1865 = vdwg.mxu0
  %1866 = vmatprep.subr.bf16.mxu0 0
  %1867 = vmatpush1.bf16.msra.mxu0 %v1382
  %1868 = vmatprep.subr.bf16.mxu0 0
  %1869 = vmatpush1.bf16.msra.mxu0 %v1383
  %1870 = vmatprep.subr.bf16.mxu0 0
  %1871 = vmatpush1.bf16.msra.mxu0 %v1384
  %1872 = vmatprep.subr.bf16.mxu0 0
  %1873 = vmatpush1.bf16.msra.mxu0 %v1385
  %1874 = vmatprep.subr.bf16.mxu0 0
  %1875 = vmatpush1.bf16.msra.mxu0 %v1386
  %1876 = vmatprep.subr.bf16.mxu0 0
  %1877 = vmatpush1.bf16.msra.mxu0 %v1387
  %1878 = vmatprep.subr.bf16.mxu0 0
  %1879 = vmatpush1.bf16.msra.mxu0 %v1388
  %1880 = vmatprep.subr.bf16.mxu0 0
  %1881 = vmatpush1.bf16.msra.mxu0 %v1389
  %1882 = vmatprep.subr.bf16.mxu0 0
  %1883 = vmatpush1.bf16.msra.mxu0 %v1390
  %1884 = vmatprep.subr.bf16.mxu0 0
  %1885 = vmatpush1.bf16.msra.mxu0 %v1391
  %1886 = vmatprep.subr.bf16.mxu0 0
  %1887 = vmatpush1.bf16.msra.mxu0 %v1392
  %1888 = vmatprep.subr.bf16.mxu0 0
  %1889 = vmatpush1.bf16.msra.mxu0 %v1393
  %1890 = vmatprep.subr.bf16.mxu0 0
  %1891 = vmatpush1.bf16.msra.mxu0 %v1394
  %1892 = vmatprep.subr.bf16.mxu0 0
  %1893 = vmatpush1.bf16.msra.mxu0 %v1395
  %1894 = vmatprep.subr.bf16.mxu0 0
  %1895 = vmatpush1.bf16.msra.mxu0 %v1396
  %1896 = vmatprep.subr.bf16.mxu0 0
  %1897 = vmatpush1.bf16.msra.mxu0 %v1397
  %1898 = vmatprep.mubr.bf16.mxu0 %v511
  %1899 = vmatmul.mubr.bf16.gmra.mrb[0].mxu0 %v510
  %v1900 = vpop.f32.mrb[0].mxu0
  %v1901 = vadd.f32 %v1860, %v1900
  %v1902 = vpop.f32.mrb[0].mxu0
  %v1903 = vpop.f32.mrb[0].mxu0
  %v1904 = vadd.f32 %v1863, %v1903
  %v1905 = vpop.f32.mrb[0].mxu0
  %1906 = vdwg.mxu0
  %1907 = vmatprep.subr.bf16.mxu0 0
  %1908 = vmatpush1.bf16.msra.mxu0 %v1398
  %1909 = vmatprep.subr.bf16.mxu0 0
  %1910 = vmatpush1.bf16.msra.mxu0 %v1399
  %1911 = vmatprep.subr.bf16.mxu0 0
  %1912 = vmatpush1.bf16.msra.mxu0 %v1400
  %1913 = vmatprep.subr.bf16.mxu0 0
  %1914 = vmatpush1.bf16.msra.mxu0 %v1401
  %1915 = vmatprep.subr.bf16.mxu0 0
  %1916 = vmatpush1.bf16.msra.mxu0 %v1402
  %1917 = vmatprep.subr.bf16.mxu0 0
  %1918 = vmatpush1.bf16.msra.mxu0 %v1403
  %1919 = vmatprep.subr.bf16.mxu0 0
  %1920 = vmatpush1.bf16.msra.mxu0 %v1404
  %1921 = vmatprep.subr.bf16.mxu0 0
  %1922 = vmatpush1.bf16.msra.mxu0 %v1405
  %1923 = vmatprep.subr.bf16.mxu0 0
  %1924 = vmatpush1.bf16.msra.mxu0 %v1406
  %1925 = vmatprep.subr.bf16.mxu0 0
  %1926 = vmatpush1.bf16.msra.mxu0 %v1407
  %1927 = vmatprep.subr.bf16.mxu0 0
  %1928 = vmatpush1.bf16.msra.mxu0 %v1408
  %1929 = vmatprep.subr.bf16.mxu0 0
  %1930 = vmatpush1.bf16.msra.mxu0 %v1409
  %1931 = vmatprep.subr.bf16.mxu0 0
  %1932 = vmatpush1.bf16.msra.mxu0 %v1410
  %1933 = vmatprep.subr.bf16.mxu0 0
  %1934 = vmatpush1.bf16.msra.mxu0 %v1411
  %1935 = vmatprep.subr.bf16.mxu0 0
  %1936 = vmatpush1.bf16.msra.mxu0 %v1412
  %1937 = vmatprep.subr.bf16.mxu0 0
  %1938 = vmatpush1.bf16.msra.mxu0 %v1413
  %1939 = vmatprep.mubr.bf16.mxu0 %v513
  %1940 = vmatmul.mubr.bf16.gmra.mrb[0].mxu0 %v512
  %v1941 = vpop.f32.mrb[0].mxu0
  %v1942 = vadd.f32 %v1901, %v1941
  %v1943 = vpop.f32.mrb[0].mxu0
  %v1944 = vpop.f32.mrb[0].mxu0
  %v1945 = vadd.f32 %v1904, %v1944
  %v1946 = vpop.f32.mrb[0].mxu0
  %1947 = vdwg.mxu0
  %1948 = vmatprep.subr.bf16.mxu0 0
  %1949 = vmatpush1.bf16.msra.mxu0 %v1414
  %1950 = vmatprep.subr.bf16.mxu0 0
  %1951 = vmatpush1.bf16.msra.mxu0 %v1415
  %1952 = vmatprep.subr.bf16.mxu0 0
  %1953 = vmatpush1.bf16.msra.mxu0 %v1416
  %1954 = vmatprep.subr.bf16.mxu0 0
  %1955 = vmatpush1.bf16.msra.mxu0 %v1417
  %1956 = vmatprep.subr.bf16.mxu0 0
  %1957 = vmatpush1.bf16.msra.mxu0 %v1418
  %1958 = vmatprep.subr.bf16.mxu0 0
  %1959 = vmatpush1.bf16.msra.mxu0 %v1419
  %1960 = vmatprep.subr.bf16.mxu0 0
  %1961 = vmatpush1.bf16.msra.mxu0 %v1420
  %1962 = vmatprep.subr.bf16.mxu0 0
  %1963 = vmatpush1.bf16.msra.mxu0 %v1421
  %1964 = vmatprep.subr.bf16.mxu0 0
  %1965 = vmatpush1.bf16.msra.mxu0 %v1422
  %1966 = vmatprep.subr.bf16.mxu0 0
  %1967 = vmatpush1.bf16.msra.mxu0 %v1423
  %1968 = vmatprep.subr.bf16.mxu0 0
  %1969 = vmatpush1.bf16.msra.mxu0 %v1424
  %1970 = vmatprep.subr.bf16.mxu0 0
  %1971 = vmatpush1.bf16.msra.mxu0 %v1425
  %1972 = vmatprep.subr.bf16.mxu0 0
  %1973 = vmatpush1.bf16.msra.mxu0 %v1426
  %1974 = vmatprep.subr.bf16.mxu0 0
  %1975 = vmatpush1.bf16.msra.mxu0 %v1427
  %1976 = vmatprep.subr.bf16.mxu0 0
  %1977 = vmatpush1.bf16.msra.mxu0 %v1428
  %1978 = vmatprep.subr.bf16.mxu0 0
  %1979 = vmatpush1.bf16.msra.mxu0 %v1429
  %1980 = vmatprep.mubr.bf16.mxu0 %v515
  %1981 = vmatmul.mubr.bf16.gmra.mrb[0].mxu0 %v514
  %v1982 = vpop.f32.mrb[0].mxu0
  %v1983 = vadd.f32 %v1942, %v1982
  %v1984 = vpop.f32.mrb[0].mxu0
  %v1985 = vpop.f32.mrb[0].mxu0
  %v1986 = vadd.f32 %v1945, %v1985
  %v1987 = vpop.f32.mrb[0].mxu0
  %1988 = vdwg.mxu0
  %1989 = vmatprep.subr.bf16.mxu0 0
  %1990 = vmatpush1.bf16.msra.mxu0 %v1430
  %1991 = vmatprep.subr.bf16.mxu0 0
  %1992 = vmatpush1.bf16.msra.mxu0 %v1431
  %1993 = vmatprep.subr.bf16.mxu0 0
  %1994 = vmatpush1.bf16.msra.mxu0 %v1432
  %1995 = vmatprep.subr.bf16.mxu0 0
  %1996 = vmatpush1.bf16.msra.mxu0 %v1433
  %1997 = vmatprep.subr.bf16.mxu0 0
  %1998 = vmatpush1.bf16.msra.mxu0 %v1434
  %1999 = vmatprep.subr.bf16.mxu0 0
  %2000 = vmatpush1.bf16.msra.mxu0 %v1435
  %2001 = vmatprep.subr.bf16.mxu0 0
  %2002 = vmatpush1.bf16.msra.mxu0 %v1436
  %2003 = vmatprep.subr.bf16.mxu0 0
  %2004 = vmatpush1.bf16.msra.mxu0 %v1437
  %2005 = vmatprep.subr.bf16.mxu0 0
  %2006 = vmatpush1.bf16.msra.mxu0 %v1438
  %2007 = vmatprep.subr.bf16.mxu0 0
  %2008 = vmatpush1.bf16.msra.mxu0 %v1439
  %2009 = vmatprep.subr.bf16.mxu0 0
  %2010 = vmatpush1.bf16.msra.mxu0 %v1440
  %2011 = vmatprep.subr.bf16.mxu0 0
  %2012 = vmatpush1.bf16.msra.mxu0 %v1441
  %2013 = vmatprep.subr.bf16.mxu0 0
  %2014 = vmatpush1.bf16.msra.mxu0 %v1442
  %2015 = vmatprep.subr.bf16.mxu0 0
  %2016 = vmatpush1.bf16.msra.mxu0 %v1443
  %2017 = vmatprep.subr.bf16.mxu0 0
  %2018 = vmatpush1.bf16.msra.mxu0 %v1444
  %2019 = vmatprep.subr.bf16.mxu0 0
  %2020 = vmatpush1.bf16.msra.mxu0 %v1445
  %2021 = vmatprep.mubr.bf16.mxu0 %v517
  %2022 = vmatmul.mubr.bf16.gmra.mrb[0].mxu0 %v516
  %v2023 = vpop.f32.mrb[0].mxu0
  %v2024 = vadd.f32 %v1983, %v2023
  %v2025 = vpop.f32.mrb[0].mxu0
  %v2026 = vpop.f32.mrb[0].mxu0
  %v2027 = vadd.f32 %v1986, %v2026
  %v2028 = vpop.f32.mrb[0].mxu0
  %2029 = vdwg.mxu0
  %2030 = vmatprep.subr.bf16.mxu0 0
  %2031 = vmatpush1.bf16.msra.mxu0 %v1446
  %2032 = vmatprep.subr.bf16.mxu0 0
  %2033 = vmatpush1.bf16.msra.mxu0 %v1447
  %2034 = vmatprep.subr.bf16.mxu0 0
  %2035 = vmatpush1.bf16.msra.mxu0 %v1448
  %2036 = vmatprep.subr.bf16.mxu0 0
  %2037 = vmatpush1.bf16.msra.mxu0 %v1449
  %2038 = vmatprep.subr.bf16.mxu0 0
  %2039 = vmatpush1.bf16.msra.mxu0 %v1450
  %2040 = vmatprep.subr.bf16.mxu0 0
  %2041 = vmatpush1.bf16.msra.mxu0 %v1451
  %2042 = vmatprep.subr.bf16.mxu0 0
  %2043 = vmatpush1.bf16.msra.mxu0 %v1452
  %2044 = vmatprep.subr.bf16.mxu0 0
  %2045 = vmatpush1.bf16.msra.mxu0 %v1453
  %2046 = vmatprep.subr.bf16.mxu0 0
  %2047 = vmatpush1.bf16.msra.mxu0 %v1454
  %2048 = vmatprep.subr.bf16.mxu0 0
  %2049 = vmatpush1.bf16.msra.mxu0 %v1455
  %2050 = vmatprep.subr.bf16.mxu0 0
  %2051 = vmatpush1.bf16.msra.mxu0 %v1456
  %2052 = vmatprep.subr.bf16.mxu0 0
  %2053 = vmatpush1.bf16.msra.mxu0 %v1457
  %2054 = vmatprep.subr.bf16.mxu0 0
  %2055 = vmatpush1.bf16.msra.mxu0 %v1458
  %2056 = vmatprep.subr.bf16.mxu0 0
  %2057 = vmatpush1.bf16.msra.mxu0 %v1459
  %2058 = vmatprep.subr.bf16.mxu0 0
  %2059 = vmatpush1.bf16.msra.mxu0 %v1460
  %2060 = vmatprep.subr.bf16.mxu0 0
  %2061 = vmatpush1.bf16.msra.mxu0 %v1461
  %2062 = vmatprep.mubr.bf16.mxu0 %v519
  %2063 = vmatmul.mubr.bf16.gmra.mrb[0].mxu0 %v518
  %v2064 = vpop.f32.mrb[0].mxu0
  %v2065 = vadd.f32 %v2024, %v2064
  %v2066 = vpop.f32.mrb[0].mxu0
  %v2067 = vpop.f32.mrb[0].mxu0
  %v2068 = vadd.f32 %v2027, %v2067
  %v2069 = vpop.f32.mrb[0].mxu0
  %2070 = vdwg.mxu0
  %2071 = vmatprep.subr.bf16.mxu0 0
  %2072 = vmatpush1.bf16.msra.mxu0 %v1462
  %2073 = vmatprep.subr.bf16.mxu0 0
  %2074 = vmatpush1.bf16.msra.mxu0 %v1463
  %2075 = vmatprep.subr.bf16.mxu0 0
  %2076 = vmatpush1.bf16.msra.mxu0 %v1464
  %2077 = vmatprep.subr.bf16.mxu0 0
  %2078 = vmatpush1.bf16.msra.mxu0 %v1465
  %2079 = vmatprep.subr.bf16.mxu0 0
  %2080 = vmatpush1.bf16.msra.mxu0 %v1466
  %2081 = vmatprep.subr.bf16.mxu0 0
  %2082 = vmatpush1.bf16.msra.mxu0 %v1467
  %2083 = vmatprep.subr.bf16.mxu0 0
  %2084 = vmatpush1.bf16.msra.mxu0 %v1468
  %2085 = vmatprep.subr.bf16.mxu0 0
  %2086 = vmatpush1.bf16.msra.mxu0 %v1469
  %2087 = vmatprep.subr.bf16.mxu0 0
  %2088 = vmatpush1.bf16.msra.mxu0 %v1470
  %2089 = vmatprep.subr.bf16.mxu0 0
  %2090 = vmatpush1.bf16.msra.mxu0 %v1471
  %2091 = vmatprep.subr.bf16.mxu0 0
  %2092 = vmatpush1.bf16.msra.mxu0 %v1472
  %2093 = vmatprep.subr.bf16.mxu0 0
  %2094 = vmatpush1.bf16.msra.mxu0 %v1473
  %2095 = vmatprep.subr.bf16.mxu0 0
  %2096 = vmatpush1.bf16.msra.mxu0 %v1474
  %2097 = vmatprep.subr.bf16.mxu0 0
  %2098 = vmatpush1.bf16.msra.mxu0 %v1475
  %2099 = vmatprep.subr.bf16.mxu0 0
  %2100 = vmatpush1.bf16.msra.mxu0 %v1476
  %2101 = vmatprep.subr.bf16.mxu0 0
  %2102 = vmatpush1.bf16.msra.mxu0 %v1477
  %2103 = vmatprep.mubr.bf16.mxu0 %v521
  %2104 = vmatmul.mubr.bf16.gmra.mrb[0].mxu0 %v520
  %v2105 = vpop.f32.mrb[0].mxu0
  %v2106 = vadd.f32 %v2065, %v2105
  %v2107 = vpop.f32.mrb[0].mxu0
  %v2108 = vpop.f32.mrb[0].mxu0
  %v2109 = vadd.f32 %v2068, %v2108
  %v2110 = vpop.f32.mrb[0].mxu0
  %2111 = vdwg.mxu0
  %2112 = vmatprep.subr.bf16.mxu0 0
  %2113 = vmatpush1.bf16.msra.mxu0 %v1478
  %2114 = vmatprep.subr.bf16.mxu0 0
  %2115 = vmatpush1.bf16.msra.mxu0 %v1479
  %2116 = vmatprep.subr.bf16.mxu0 0
  %2117 = vmatpush1.bf16.msra.mxu0 %v1480
  %2118 = vmatprep.subr.bf16.mxu0 0
  %2119 = vmatpush1.bf16.msra.mxu0 %v1481
  %2120 = vmatprep.subr.bf16.mxu0 0
  %2121 = vmatpush1.bf16.msra.mxu0 %v1482
  %2122 = vmatprep.subr.bf16.mxu0 0
  %2123 = vmatpush1.bf16.msra.mxu0 %v1483
  %2124 = vmatprep.subr.bf16.mxu0 0
  %2125 = vmatpush1.bf16.msra.mxu0 %v1484
  %2126 = vmatprep.subr.bf16.mxu0 0
  %2127 = vmatpush1.bf16.msra.mxu0 %v1485
  %2128 = vmatprep.subr.bf16.mxu0 0
  %2129 = vmatpush1.bf16.msra.mxu0 %v1486
  %2130 = vmatprep.subr.bf16.mxu0 0
  %2131 = vmatpush1.bf16.msra.mxu0 %v1487
  %2132 = vmatprep.subr.bf16.mxu0 0
  %2133 = vmatpush1.bf16.msra.mxu0 %v1488
  %2134 = vmatprep.subr.bf16.mxu0 0
  %2135 = vmatpush1.bf16.msra.mxu0 %v1489
  %2136 = vmatprep.subr.bf16.mxu0 0
  %2137 = vmatpush1.bf16.msra.mxu0 %v1490
  %2138 = vmatprep.subr.bf16.mxu0 0
  %2139 = vmatpush1.bf16.msra.mxu0 %v1491
  %2140 = vmatprep.subr.bf16.mxu0 0
  %2141 = vmatpush1.bf16.msra.mxu0 %v1492
  %2142 = vmatprep.subr.bf16.mxu0 0
  %2143 = vmatpush1.bf16.msra.mxu0 %v1493
  %2144 = vmatprep.mubr.bf16.mxu0 %v523
  %2145 = vmatmul.mubr.bf16.gmra.mrb[0].mxu0 %v522
  %v2146 = vpop.f32.mrb[0].mxu0
  %v2147 = vadd.f32 %v2106, %v2146
  %v2148 = vpop.f32.mrb[0].mxu0
  %v2149 = vpop.f32.mrb[0].mxu0
  %v2150 = vadd.f32 %v2109, %v2149
  %v2151 = vpop.f32.mrb[0].mxu0
  %2152 = vdwg.mxu0
  %2153 = vmatprep.subr.bf16.mxu0 0
  %2154 = vmatpush1.bf16.msra.mxu0 %v1494
  %2155 = vmatprep.subr.bf16.mxu0 0
  %2156 = vmatpush1.bf16.msra.mxu0 %v1495
  %2157 = vmatprep.subr.bf16.mxu0 0
  %2158 = vmatpush1.bf16.msra.mxu0 %v1496
  %2159 = vmatprep.subr.bf16.mxu0 0
  %2160 = vmatpush1.bf16.msra.mxu0 %v1497
  %2161 = vmatprep.subr.bf16.mxu0 0
  %2162 = vmatpush1.bf16.msra.mxu0 %v1498
  %2163 = vmatprep.subr.bf16.mxu0 0
  %2164 = vmatpush1.bf16.msra.mxu0 %v1499
  %2165 = vmatprep.subr.bf16.mxu0 0
  %2166 = vmatpush1.bf16.msra.mxu0 %v1500
  %2167 = vmatprep.subr.bf16.mxu0 0
  %2168 = vmatpush1.bf16.msra.mxu0 %v1501
  %2169 = vmatprep.subr.bf16.mxu0 0
  %2170 = vmatpush1.bf16.msra.mxu0 %v1502
  %2171 = vmatprep.subr.bf16.mxu0 0
  %2172 = vmatpush1.bf16.msra.mxu0 %v1503
  %2173 = vmatprep.subr.bf16.mxu0 0
  %2174 = vmatpush1.bf16.msra.mxu0 %v1504
  %2175 = vmatprep.subr.bf16.mxu0 0
  %2176 = vmatpush1.bf16.msra.mxu0 %v1505
  %2177 = vmatprep.subr.bf16.mxu0 0
  %2178 = vmatpush1.bf16.msra.mxu0 %v1506
  %2179 = vmatprep.subr.bf16.mxu0 0
  %2180 = vmatpush1.bf16.msra.mxu0 %v1507
  %2181 = vmatprep.subr.bf16.mxu0 0
  %2182 = vmatpush1.bf16.msra.mxu0 %v1508
  %2183 = vmatprep.subr.bf16.mxu0 0
  %2184 = vmatpush1.bf16.msra.mxu0 %v1509
  %2185 = vmatprep.mubr.bf16.mxu0 %v525
  %2186 = vmatmul.mubr.bf16.gmra.mrb[0].mxu0 %v524
  %v2187 = vpop.f32.mrb[0].mxu0
  %v2188 = vadd.f32 %v2147, %v2187
  %v2189 = vpop.f32.mrb[0].mxu0
  %v2190 = vpop.f32.mrb[0].mxu0
  %v2191 = vadd.f32 %v2150, %v2190
  %v2192 = vpop.f32.mrb[0].mxu0
  %2193 = vdwg.mxu0
  %vm2194 = vcmask 15360
  %2195 = vst.msk [vmem:[%s3] sm:$0xff] %vm2194, %v2188
  %2196 = vst.msk [vmem:[%s3 + $0x8] sm:$0xff] %vm2194, %v2191
  // Predicated region
  $region14: #{stargan_discriminator.13} parent=0 // pred_check
    _
  $region15: #{stargan_discriminator.13} parent=0 // pred_check_branch
    %2198 = sbr.rel (0) target = $region17
  $region16: #{stargan_discriminator.13} parent=0 // pred_region
    _
  $region17: #{stargan_discriminator.13} parent=0 // pred_fallthru
    _
  // Predicated region
  $region18: #{stargan_discriminator.13} parent=0 // pred_check
    _
  $region19: #{stargan_discriminator.13} parent=0 // pred_check_branch
    %2200 = sbr.rel (0) target = $region21
  $region20: #{stargan_discriminator.13} parent=0 // pred_region
    _
  $region21: #{stargan_discriminator.13} parent=0 // pred_fallthru
    _

</llo_original>
